<compile_context>
chip_gen: v7x
topology: tpu7x:2x2x1
jax: 0.10.0
libtpu: 0.0.40
codegen_flags: <defaults>
</compile_context>

<pallas_src>
import functools

import jax
import jax.numpy as jnp
from jax import lax
from jax.experimental import pallas as pl
from jax.experimental.pallas import tpu as pltpu

EPS = 1e-5  # RMSNorm2d default


def _resblock_kernel(x_ref, w1_ref, w2_ref, g1_ref, b1_ref, g2_ref, b2_ref, mask_ref,
                     o_ref, acc1, xpad2, acc2, *, H, W, K):
    # x_ref   : (1, P, Cin)  f32, P = (H+3)*(W+2), zero-padded flattened NHWC image
    # w1_ref  : (K*K, Cin, Cmid) bf16     w2_ref: (K*K, Cmid, Cout) bf16
    # g/b refs: (1, C) f32                mask_ref: (M, 1) f32 (1 on valid cols, 0 on wrap cols)
    # o_ref   : (1, M, Cout) f32, M = H*(W+2)
    # acc1    : (M, Cmid) f32   xpad2: (base+P, Cmid) f32   acc2: (M, Cout) f32
    Wp = W + 2
    M = H * Wp
    base = (-(Wp + 1)) % 8          # makes the conv2-input store sublane-aligned

    # ---------------- conv1: K*K shifted matmuls on the MXU, f32 accumulation ----------------
    acc1[...] = jnp.zeros_like(acc1)
    for kh in range(K):
        for kw in range(K):
            off = kh * Wp + kw      # static offset into the flattened padded image
            a = x_ref[0, off:off + M, :].astype(jnp.bfloat16)
            acc1[...] += jnp.dot(a, w1_ref[kh * K + kw],
                                 preferred_element_type=jnp.float32)

    # ---------------- RMSNorm2d (over channels) + affine + ReLU, in f32 ----------------
    y1 = acc1[...]
    y1 = y1 * lax.rsqrt(jnp.mean(y1 * y1, axis=-1, keepdims=True) + EPS)
    y1 = jnp.maximum(y1 * g1_ref[...] + b1_ref[...], 0.0)
    y1 = y1 * mask_ref[...]         # zero the 2 wrap columns -> they become conv2's W padding

    # ---------------- rebuild conv2's zero-padded input entirely in VMEM ----------------
    xpad2[...] = jnp.zeros_like(xpad2)
    xpad2[base + Wp + 1: base + Wp + 1 + M, :] = y1   # aligned store (base+Wp+1 ≡ 0 mod 8)

    # ---------------- conv2 ----------------
    acc2[...] = jnp.zeros_like(acc2)
    for kh in range(K):
        for kw in range(K):
            off = base + kh * Wp + kw
            a = xpad2[off:off + M, :].astype(jnp.bfloat16)
            acc2[...] += jnp.dot(a, w2_ref[kh * K + kw],
                                 preferred_element_type=jnp.float32)

    # ---------------- RMSNorm2d + affine (no activation) + fused residual ----------------
    y2 = acc2[...]
    y2 = y2 * lax.rsqrt(jnp.mean(y2 * y2, axis=-1, keepdims=True) + EPS)
    y2 = y2 * g2_ref[...] + b2_ref[...]
    res = x_ref[0, Wp + 1: Wp + 1 + M, :]             # original pixel (h,w) lives at q + Wp + 1
    o_ref[0, :, :] = (y2 + res).astype(o_ref.dtype)


def resblock_pallas(x, w1, g1, b1, w2, g2, b2):
    """ResBlock forward. x: [N, Cin, H, W] (NCHW, f32, PyTorch layout).
       w1: [Cmid, Cin, 3, 3], w2: [Cout, Cmid, 3, 3], g*/b*: per-channel RMSNorm affine."""
    N, Cin, H, W = x.shape
    Cmid = w1.shape[0]
    Cout = w2.shape[0]
    K = w1.shape[2]
    assert K == 3 and Cout == Cin, "ResBlock: 3x3 convs and Cout == Cin (identity shortcut)"

    Wp = W + 2
    M = H * Wp                      # rows of the output slab (2 wrap cols per row, discarded)
    P = (H + 3) * Wp                # padded flattened rows (+1 extra bottom row of headroom)
    base = (-(Wp + 1)) % 8
    P2 = base + P

    # --- boundary-only layout glue: NCHW -> NHWC, pad once, flatten ---
    x_nhwc = jnp.transpose(x, (0, 2, 3, 1))
    xp = jnp.pad(x_nhwc, ((0, 0), (1, 2), (1, 1), (0, 0)))      # zero pad: H (1,2), W (1,1)
    xf = xp.reshape(N, P, Cin)                                   # f32; cast to bf16 in-kernel

    # torch weight [Cout, Cin, kh, kw] -> per-tap matrices [K*K, Cin, Cout], bf16 for the MXU
    w1_taps = jnp.transpose(w1, (2, 3, 1, 0)).reshape(K * K, Cin, Cmid).astype(jnp.bfloat16)
    w2_taps = jnp.transpose(w2, (2, 3, 1, 0)).reshape(K * K, Cmid, Cout).astype(jnp.bfloat16)
    g1r = g1.reshape(1, Cmid).astype(jnp.float32)
    b1r = b1.reshape(1, Cmid).astype(jnp.float32)
    g2r = g2.reshape(1, Cout).astype(jnp.float32)
    b2r = b2.reshape(1, Cout).astype(jnp.float32)
    # valid-column mask over the slab rows (column index = q mod (W+2); cols >= W are wrap cols)
    mask = (jnp.arange(M, dtype=jnp.int32) % Wp < W).astype(jnp.float32).reshape(M, 1)

    kernel = functools.partial(_resblock_kernel, H=H, W=W, K=K)
    out_flat = pl.pallas_call(
        kernel,
        out_shape=jax.ShapeDtypeStruct((N, M, Cout), jnp.float32),
        grid_spec=pltpu.PrefetchScalarGridSpec(
            num_scalar_prefetch=0,
            grid=(N,),
            in_specs=[
                pl.BlockSpec((1, P, Cin), lambda n: (n, 0, 0)),          # padded image slab
                pl.BlockSpec((K * K, Cin, Cmid), lambda n: (0, 0, 0)),   # conv1 taps (constant)
                pl.BlockSpec((K * K, Cmid, Cout), lambda n: (0, 0, 0)),  # conv2 taps (constant)
                pl.BlockSpec((1, Cmid), lambda n: (0, 0)),               # gamma1
                pl.BlockSpec((1, Cmid), lambda n: (0, 0)),               # beta1
                pl.BlockSpec((1, Cout), lambda n: (0, 0)),               # gamma2
                pl.BlockSpec((1, Cout), lambda n: (0, 0)),               # beta2
                pl.BlockSpec((M, 1), lambda n: (0, 0)),                  # valid-column mask
            ],
            out_specs=pl.BlockSpec((1, M, Cout), lambda n: (n, 0, 0)),
            scratch_shapes=[
                pltpu.VMEM((M, Cmid), jnp.float32),    # conv1 f32 accumulator
                pltpu.VMEM((P2, Cmid), jnp.float32),   # conv2 zero-padded input (built in VMEM)
                pltpu.VMEM((M, Cout), jnp.float32),    # conv2 f32 accumulator
            ],
        ),
        compiler_params=pltpu.CompilerParams(
            dimension_semantics=("parallel",),
            vmem_limit_bytes=32 * 1024 * 1024,
        ),
    )(xf, w1_taps, w2_taps, g1r, b1r, g2r, b2r, mask)

    # drop the 2 wrap columns, back to NCHW at the boundary
    out = out_flat.reshape(N, H, Wp, Cout)[:, :, :W, :]
    return jnp.transpose(out, (0, 3, 1, 2))


def _reference(x, w1, g1, b1, w2, g2, b2):
    """Plain-JAX reference with the same bf16 quantization points as the kernel."""
    bf = lambda a: a.astype(jnp.bfloat16).astype(jnp.float32)

    def conv_rms(xin, w, g, b, relu):
        y = lax.conv_general_dilated(bf(xin), bf(w), (1, 1), "SAME",
                                     dimension_numbers=("NCHW", "OIHW", "NCHW"),
                                     preferred_element_type=jnp.float32)
        y = y * lax.rsqrt(jnp.mean(jnp.square(y), axis=1, keepdims=True) + EPS)
        y = y * g.reshape(1, -1, 1, 1) + b.reshape(1, -1, 1, 1)
        return jnp.maximum(y, 0.0) if relu else y

    h = conv_rms(x, w1, g1, b1, relu=True)
    return conv_rms(h, w2, g2, b2, relu=False) + x


if __name__ == "__main__":
    key = jax.random.PRNGKey(0)
    k_x, k_w1, k_g1, k_b1, k_w2, k_g2, k_b2 = jax.random.split(key, 7)

    N, Cin, H, W = 2, 4, 16, 16
    Cmid, Cout, K = 8, 4, 3          # ResBlock(in=4, out=4, mid_channels=8)

    x = jax.random.normal(k_x, (N, Cin, H, W), dtype=jnp.float32)
    w1 = jax.random.normal(k_w1, (Cmid, Cin, K, K), dtype=jnp.float32) * 0.1
    g1 = 1.0 + 0.1 * jax.random.normal(k_g1, (Cmid,), dtype=jnp.float32)
    b1 = 0.1 * jax.random.normal(k_b1, (Cmid,), dtype=jnp.float32)
    w2 = jax.random.normal(k_w2, (Cout, Cmid, K, K), dtype=jnp.float32) * 0.1
    g2 = 1.0 + 0.1 * jax.random.normal(k_g2, (Cout,), dtype=jnp.float32)
    b2 = 0.1 * jax.random.normal(k_b2, (Cout,), dtype=jnp.float32)

    out = resblock_pallas(x, w1, g1, b1, w2, g2, b2)
    out = jax.block_until_ready(out)

    ref = _reference(x, w1, g1, b1, w2, g2, b2)
    assert out.shape == (N, Cout, H, W)
    assert jnp.allclose(out, ref, atol=1e-2, rtol=1e-2), float(jnp.max(jnp.abs(out - ref)))

    print("KERNEL_OK")
</pallas_src>

<mosaic_0001>
module attributes {stable_mosaic.version = 11 : i64} {
  func.func @_resblock_kernel(%arg0: i32, %arg1: memref<1x342x4xf32, #tpu.memory_space<vmem>>, %arg2: memref<9x4x8xbf16, #tpu.memory_space<vmem>>, %arg3: memref<9x8x4xbf16, #tpu.memory_space<vmem>>, %arg4: memref<1x8xf32, #tpu.memory_space<vmem>>, %arg5: memref<1x8xf32, #tpu.memory_space<vmem>>, %arg6: memref<1x4xf32, #tpu.memory_space<vmem>>, %arg7: memref<1x4xf32, #tpu.memory_space<vmem>>, %arg8: memref<288x1xf32, #tpu.memory_space<vmem>>, %arg9: memref<1x288x4xf32, #tpu.memory_space<vmem>>, %arg10: memref<288x8xf32, #tpu.memory_space<vmem>>, %arg11: memref<347x8xf32, #tpu.memory_space<vmem>>, %arg12: memref<288x4xf32, #tpu.memory_space<vmem>>) attributes {dimension_semantics = [#tpu.dimension_semantics<parallel>], iteration_bounds = array<i64: 2>, scalar_prefetch = 0 : i64, scratch_operands = 3 : i64, tpu.core_type = #tpu.core_type<tc>, window_params = [{transform_indices = @transform_0, window_bounds = array<i64: 1, 342, 4>}, {pipeline_mode = #tpu.pipeline_mode<synchronous>, transform_indices = @transform_1, window_bounds = array<i64: 9, 4, 8>}, {pipeline_mode = #tpu.pipeline_mode<synchronous>, transform_indices = @transform_2, window_bounds = array<i64: 9, 8, 4>}, {pipeline_mode = #tpu.pipeline_mode<synchronous>, transform_indices = @transform_3, window_bounds = array<i64: 1, 8>}, {pipeline_mode = #tpu.pipeline_mode<synchronous>, transform_indices = @transform_4, window_bounds = array<i64: 1, 8>}, {pipeline_mode = #tpu.pipeline_mode<synchronous>, transform_indices = @transform_5, window_bounds = array<i64: 1, 4>}, {pipeline_mode = #tpu.pipeline_mode<synchronous>, transform_indices = @transform_6, window_bounds = array<i64: 1, 4>}, {pipeline_mode = #tpu.pipeline_mode<synchronous>, transform_indices = @transform_7, window_bounds = array<i64: 288, 1>}, {transform_indices = @transform_8, window_bounds = array<i64: 1, 288, 4>}]} {
    %cst = arith.constant 0.000000e+00 : f32
    %0 = vector.broadcast %cst : f32 to vector<288x8xf32>
    %c0 = arith.constant 0 : index
    %c0_0 = arith.constant 0 : index
    %1 = vector.load %arg10[%c0, %c0_0] : memref<288x8xf32, #tpu.memory_space<vmem>>, vector<288x8xf32>
    tpu.vector_store %arg10[%c0, %c0_0], %0 {strides = array<i32>} : memref<288x8xf32, #tpu.memory_space<vmem>>, vector<288x8xf32>,
    %c0_1 = arith.constant 0 : index
    %c0_2 = arith.constant 0 : index
    %c0_3 = arith.constant 0 : index
    %2 = vector.load %arg1[%c0_1, %c0_2, %c0_3] : memref<1x342x4xf32, #tpu.memory_space<vmem>>, vector<1x288x4xf32>
    %3 = vector.shape_cast %2 : vector<1x288x4xf32> to vector<288x4xf32>
    %4 = arith.truncf %3 : vector<288x4xf32> to vector<288x4xbf16>
    %c0_4 = arith.constant 0 : index
    %c0_5 = arith.constant 0 : index
    %5 = vector.load %arg10[%c0_4, %c0_5] : memref<288x8xf32, #tpu.memory_space<vmem>>, vector<288x8xf32>
    %c0_6 = arith.constant 0 : index
    %c0_7 = arith.constant 0 : index
    %c0_8 = arith.constant 0 : index
    %6 = vector.load %arg2[%c0_6, %c0_7, %c0_8] : memref<9x4x8xbf16, #tpu.memory_space<vmem>>, vector<1x4x8xbf16>
    %7 = vector.shape_cast %6 : vector<1x4x8xbf16> to vector<4x8xbf16>
    %cst_9 = arith.constant dense<0.000000e+00> : vector<288x8xf32>
    %8 = tpu.matmul %4, %7, %cst_9 {dimension_numbers = #tpu.dot_dimension_numbers<[1], [0], [0], [1], [0, 0, 1, 1], [], []>} : vector<288x4xbf16>, vector<4x8xbf16>, vector<288x8xf32> -> vector<288x8xf32>
    %9 = arith.addf %5, %8 : vector<288x8xf32>
    %c0_10 = arith.constant 0 : index
    %c0_11 = arith.constant 0 : index
    %10 = vector.load %arg10[%c0_10, %c0_11] : memref<288x8xf32, #tpu.memory_space<vmem>>, vector<288x8xf32>
    tpu.vector_store %arg10[%c0_10, %c0_11], %9 {strides = array<i32>} : memref<288x8xf32, #tpu.memory_space<vmem>>, vector<288x8xf32>,
    %c0_12 = arith.constant 0 : index
    %c1 = arith.constant 1 : index
    %c0_13 = arith.constant 0 : index
    %11 = vector.load %arg1[%c0_12, %c1, %c0_13] : memref<1x342x4xf32, #tpu.memory_space<vmem>>, vector<1x288x4xf32>
    %12 = vector.shape_cast %11 : vector<1x288x4xf32> to vector<288x4xf32>
    %13 = arith.truncf %12 : vector<288x4xf32> to vector<288x4xbf16>
    %c0_14 = arith.constant 0 : index
    %c0_15 = arith.constant 0 : index
    %14 = vector.load %arg10[%c0_14, %c0_15] : memref<288x8xf32, #tpu.memory_space<vmem>>, vector<288x8xf32>
    %c1_16 = arith.constant 1 : index
    %c0_17 = arith.constant 0 : index
    %c0_18 = arith.constant 0 : index
    %15 = vector.load %arg2[%c1_16, %c0_17, %c0_18] : memref<9x4x8xbf16, #tpu.memory_space<vmem>>, vector<1x4x8xbf16>
    %16 = vector.shape_cast %15 : vector<1x4x8xbf16> to vector<4x8xbf16>
    %cst_19 = arith.constant dense<0.000000e+00> : vector<288x8xf32>
    %17 = tpu.matmul %13, %16, %cst_19 {dimension_numbers = #tpu.dot_dimension_numbers<[1], [0], [0], [1], [0, 0, 1, 1], [], []>} : vector<288x4xbf16>, vector<4x8xbf16>, vector<288x8xf32> -> vector<288x8xf32>
    %18 = arith.addf %14, %17 : vector<288x8xf32>
    %c0_20 = arith.constant 0 : index
    %c0_21 = arith.constant 0 : index
    %19 = vector.load %arg10[%c0_20, %c0_21] : memref<288x8xf32, #tpu.memory_space<vmem>>, vector<288x8xf32>
    tpu.vector_store %arg10[%c0_20, %c0_21], %18 {strides = array<i32>} : memref<288x8xf32, #tpu.memory_space<vmem>>, vector<288x8xf32>,
    %c0_22 = arith.constant 0 : index
    %c2 = arith.constant 2 : index
    %c0_23 = arith.constant 0 : index
    %20 = vector.load %arg1[%c0_22, %c2, %c0_23] : memref<1x342x4xf32, #tpu.memory_space<vmem>>, vector<1x288x4xf32>
    %21 = vector.shape_cast %20 : vector<1x288x4xf32> to vector<288x4xf32>
    %22 = arith.truncf %21 : vector<288x4xf32> to vector<288x4xbf16>
    %c0_24 = arith.constant 0 : index
    %c0_25 = arith.constant 0 : index
    %23 = vector.load %arg10[%c0_24, %c0_25] : memref<288x8xf32, #tpu.memory_space<vmem>>, vector<288x8xf32>
    %c2_26 = arith.constant 2 : index
    %c0_27 = arith.constant 0 : index
    %c0_28 = arith.constant 0 : index
    %24 = vector.load %arg2[%c2_26, %c0_27, %c0_28] : memref<9x4x8xbf16, #tpu.memory_space<vmem>>, vector<1x4x8xbf16>
    %25 = vector.shape_cast %24 : vector<1x4x8xbf16> to vector<4x8xbf16>
    %cst_29 = arith.constant dense<0.000000e+00> : vector<288x8xf32>
    %26 = tpu.matmul %22, %25, %cst_29 {dimension_numbers = #tpu.dot_dimension_numbers<[1], [0], [0], [1], [0, 0, 1, 1], [], []>} : vector<288x4xbf16>, vector<4x8xbf16>, vector<288x8xf32> -> vector<288x8xf32>
    %27 = arith.addf %23, %26 : vector<288x8xf32>
    %c0_30 = arith.constant 0 : index
    %c0_31 = arith.constant 0 : index
    %28 = vector.load %arg10[%c0_30, %c0_31] : memref<288x8xf32, #tpu.memory_space<vmem>>, vector<288x8xf32>
    tpu.vector_store %arg10[%c0_30, %c0_31], %27 {strides = array<i32>} : memref<288x8xf32, #tpu.memory_space<vmem>>, vector<288x8xf32>,
    %c0_32 = arith.constant 0 : index
    %c18 = arith.constant 18 : index
    %c0_33 = arith.constant 0 : index
    %29 = vector.load %arg1[%c0_32, %c18, %c0_33] : memref<1x342x4xf32, #tpu.memory_space<vmem>>, vector<1x288x4xf32>
    %30 = vector.shape_cast %29 : vector<1x288x4xf32> to vector<288x4xf32>
    %31 = arith.truncf %30 : vector<288x4xf32> to vector<288x4xbf16>
    %c0_34 = arith.constant 0 : index
    %c0_35 = arith.constant 0 : index
    %32 = vector.load %arg10[%c0_34, %c0_35] : memref<288x8xf32, #tpu.memory_space<vmem>>, vector<288x8xf32>
    %c3 = arith.constant 3 : index
    %c0_36 = arith.constant 0 : index
    %c0_37 = arith.constant 0 : index
    %33 = vector.load %arg2[%c3, %c0_36, %c0_37] : memref<9x4x8xbf16, #tpu.memory_space<vmem>>, vector<1x4x8xbf16>
    %34 = vector.shape_cast %33 : vector<1x4x8xbf16> to vector<4x8xbf16>
    %cst_38 = arith.constant dense<0.000000e+00> : vector<288x8xf32>
    %35 = tpu.matmul %31, %34, %cst_38 {dimension_numbers = #tpu.dot_dimension_numbers<[1], [0], [0], [1], [0, 0, 1, 1], [], []>} : vector<288x4xbf16>, vector<4x8xbf16>, vector<288x8xf32> -> vector<288x8xf32>
    %36 = arith.addf %32, %35 : vector<288x8xf32>
    %c0_39 = arith.constant 0 : index
    %c0_40 = arith.constant 0 : index
    %37 = vector.load %arg10[%c0_39, %c0_40] : memref<288x8xf32, #tpu.memory_space<vmem>>, vector<288x8xf32>
    tpu.vector_store %arg10[%c0_39, %c0_40], %36 {strides = array<i32>} : memref<288x8xf32, #tpu.memory_space<vmem>>, vector<288x8xf32>,
    %c0_41 = arith.constant 0 : index
    %c19 = arith.constant 19 : index
    %c0_42 = arith.constant 0 : index
    %38 = vector.load %arg1[%c0_41, %c19, %c0_42] : memref<1x342x4xf32, #tpu.memory_space<vmem>>, vector<1x288x4xf32>
    %39 = vector.shape_cast %38 : vector<1x288x4xf32> to vector<288x4xf32>
    %40 = arith.truncf %39 : vector<288x4xf32> to vector<288x4xbf16>
    %c0_43 = arith.constant 0 : index
    %c0_44 = arith.constant 0 : index
    %41 = vector.load %arg10[%c0_43, %c0_44] : memref<288x8xf32, #tpu.memory_space<vmem>>, vector<288x8xf32>
    %c4 = arith.constant 4 : index
    %c0_45 = arith.constant 0 : index
    %c0_46 = arith.constant 0 : index
    %42 = vector.load %arg2[%c4, %c0_45, %c0_46] : memref<9x4x8xbf16, #tpu.memory_space<vmem>>, vector<1x4x8xbf16>
    %43 = vector.shape_cast %42 : vector<1x4x8xbf16> to vector<4x8xbf16>
    %cst_47 = arith.constant dense<0.000000e+00> : vector<288x8xf32>
    %44 = tpu.matmul %40, %43, %cst_47 {dimension_numbers = #tpu.dot_dimension_numbers<[1], [0], [0], [1], [0, 0, 1, 1], [], []>} : vector<288x4xbf16>, vector<4x8xbf16>, vector<288x8xf32> -> vector<288x8xf32>
    %45 = arith.addf %41, %44 : vector<288x8xf32>
    %c0_48 = arith.constant 0 : index
    %c0_49 = arith.constant 0 : index
    %46 = vector.load %arg10[%c0_48, %c0_49] : memref<288x8xf32, #tpu.memory_space<vmem>>, vector<288x8xf32>
    tpu.vector_store %arg10[%c0_48, %c0_49], %45 {strides = array<i32>} : memref<288x8xf32, #tpu.memory_space<vmem>>, vector<288x8xf32>,
    %c0_50 = arith.constant 0 : index
    %c20 = arith.constant 20 : index
    %c0_51 = arith.constant 0 : index
    %47 = vector.load %arg1[%c0_50, %c20, %c0_51] : memref<1x342x4xf32, #tpu.memory_space<vmem>>, vector<1x288x4xf32>
    %48 = vector.shape_cast %47 : vector<1x288x4xf32> to vector<288x4xf32>
    %49 = arith.truncf %48 : vector<288x4xf32> to vector<288x4xbf16>
    %c0_52 = arith.constant 0 : index
    %c0_53 = arith.constant 0 : index
    %50 = vector.load %arg10[%c0_52, %c0_53] : memref<288x8xf32, #tpu.memory_space<vmem>>, vector<288x8xf32>
    %c5 = arith.constant 5 : index
    %c0_54 = arith.constant 0 : index
    %c0_55 = arith.constant 0 : index
    %51 = vector.load %arg2[%c5, %c0_54, %c0_55] : memref<9x4x8xbf16, #tpu.memory_space<vmem>>, vector<1x4x8xbf16>
    %52 = vector.shape_cast %51 : vector<1x4x8xbf16> to vector<4x8xbf16>
    %cst_56 = arith.constant dense<0.000000e+00> : vector<288x8xf32>
    %53 = tpu.matmul %49, %52, %cst_56 {dimension_numbers = #tpu.dot_dimension_numbers<[1], [0], [0], [1], [0, 0, 1, 1], [], []>} : vector<288x4xbf16>, vector<4x8xbf16>, vector<288x8xf32> -> vector<288x8xf32>
    %54 = arith.addf %50, %53 : vector<288x8xf32>
    %c0_57 = arith.constant 0 : index
    %c0_58 = arith.constant 0 : index
    %55 = vector.load %arg10[%c0_57, %c0_58] : memref<288x8xf32, #tpu.memory_space<vmem>>, vector<288x8xf32>
    tpu.vector_store %arg10[%c0_57, %c0_58], %54 {strides = array<i32>} : memref<288x8xf32, #tpu.memory_space<vmem>>, vector<288x8xf32>,
    %c0_59 = arith.constant 0 : index
    %c36 = arith.constant 36 : index
    %c0_60 = arith.constant 0 : index
    %56 = vector.load %arg1[%c0_59, %c36, %c0_60] : memref<1x342x4xf32, #tpu.memory_space<vmem>>, vector<1x288x4xf32>
    %57 = vector.shape_cast %56 : vector<1x288x4xf32> to vector<288x4xf32>
    %58 = arith.truncf %57 : vector<288x4xf32> to vector<288x4xbf16>
    %c0_61 = arith.constant 0 : index
    %c0_62 = arith.constant 0 : index
    %59 = vector.load %arg10[%c0_61, %c0_62] : memref<288x8xf32, #tpu.memory_space<vmem>>, vector<288x8xf32>
    %c6 = arith.constant 6 : index
    %c0_63 = arith.constant 0 : index
    %c0_64 = arith.constant 0 : index
    %60 = vector.load %arg2[%c6, %c0_63, %c0_64] : memref<9x4x8xbf16, #tpu.memory_space<vmem>>, vector<1x4x8xbf16>
    %61 = vector.shape_cast %60 : vector<1x4x8xbf16> to vector<4x8xbf16>
    %cst_65 = arith.constant dense<0.000000e+00> : vector<288x8xf32>
    %62 = tpu.matmul %58, %61, %cst_65 {dimension_numbers = #tpu.dot_dimension_numbers<[1], [0], [0], [1], [0, 0, 1, 1], [], []>} : vector<288x4xbf16>, vector<4x8xbf16>, vector<288x8xf32> -> vector<288x8xf32>
    %63 = arith.addf %59, %62 : vector<288x8xf32>
    %c0_66 = arith.constant 0 : index
    %c0_67 = arith.constant 0 : index
    %64 = vector.load %arg10[%c0_66, %c0_67] : memref<288x8xf32, #tpu.memory_space<vmem>>, vector<288x8xf32>
    tpu.vector_store %arg10[%c0_66, %c0_67], %63 {strides = array<i32>} : memref<288x8xf32, #tpu.memory_space<vmem>>, vector<288x8xf32>,
    %c0_68 = arith.constant 0 : index
    %c37 = arith.constant 37 : index
    %c0_69 = arith.constant 0 : index
    %65 = vector.load %arg1[%c0_68, %c37, %c0_69] : memref<1x342x4xf32, #tpu.memory_space<vmem>>, vector<1x288x4xf32>
    %66 = vector.shape_cast %65 : vector<1x288x4xf32> to vector<288x4xf32>
    %67 = arith.truncf %66 : vector<288x4xf32> to vector<288x4xbf16>
    %c0_70 = arith.constant 0 : index
    %c0_71 = arith.constant 0 : index
    %68 = vector.load %arg10[%c0_70, %c0_71] : memref<288x8xf32, #tpu.memory_space<vmem>>, vector<288x8xf32>
    %c7 = arith.constant 7 : index
    %c0_72 = arith.constant 0 : index
    %c0_73 = arith.constant 0 : index
    %69 = vector.load %arg2[%c7, %c0_72, %c0_73] : memref<9x4x8xbf16, #tpu.memory_space<vmem>>, vector<1x4x8xbf16>
    %70 = vector.shape_cast %69 : vector<1x4x8xbf16> to vector<4x8xbf16>
    %cst_74 = arith.constant dense<0.000000e+00> : vector<288x8xf32>
    %71 = tpu.matmul %67, %70, %cst_74 {dimension_numbers = #tpu.dot_dimension_numbers<[1], [0], [0], [1], [0, 0, 1, 1], [], []>} : vector<288x4xbf16>, vector<4x8xbf16>, vector<288x8xf32> -> vector<288x8xf32>
    %72 = arith.addf %68, %71 : vector<288x8xf32>
    %c0_75 = arith.constant 0 : index
    %c0_76 = arith.constant 0 : index
    %73 = vector.load %arg10[%c0_75, %c0_76] : memref<288x8xf32, #tpu.memory_space<vmem>>, vector<288x8xf32>
    tpu.vector_store %arg10[%c0_75, %c0_76], %72 {strides = array<i32>} : memref<288x8xf32, #tpu.memory_space<vmem>>, vector<288x8xf32>,
    %c0_77 = arith.constant 0 : index
    %c38 = arith.constant 38 : index
    %c0_78 = arith.constant 0 : index
    %74 = vector.load %arg1[%c0_77, %c38, %c0_78] : memref<1x342x4xf32, #tpu.memory_space<vmem>>, vector<1x288x4xf32>
    %75 = vector.shape_cast %74 : vector<1x288x4xf32> to vector<288x4xf32>
    %76 = arith.truncf %75 : vector<288x4xf32> to vector<288x4xbf16>
    %c0_79 = arith.constant 0 : index
    %c0_80 = arith.constant 0 : index
    %77 = vector.load %arg10[%c0_79, %c0_80] : memref<288x8xf32, #tpu.memory_space<vmem>>, vector<288x8xf32>
    %c8 = arith.constant 8 : index
    %c0_81 = arith.constant 0 : index
    %c0_82 = arith.constant 0 : index
    %78 = vector.load %arg2[%c8, %c0_81, %c0_82] : memref<9x4x8xbf16, #tpu.memory_space<vmem>>, vector<1x4x8xbf16>
    %79 = vector.shape_cast %78 : vector<1x4x8xbf16> to vector<4x8xbf16>
    %cst_83 = arith.constant dense<0.000000e+00> : vector<288x8xf32>
    %80 = tpu.matmul %76, %79, %cst_83 {dimension_numbers = #tpu.dot_dimension_numbers<[1], [0], [0], [1], [0, 0, 1, 1], [], []>} : vector<288x4xbf16>, vector<4x8xbf16>, vector<288x8xf32> -> vector<288x8xf32>
    %81 = arith.addf %77, %80 : vector<288x8xf32>
    %c0_84 = arith.constant 0 : index
    %c0_85 = arith.constant 0 : index
    %82 = vector.load %arg10[%c0_84, %c0_85] : memref<288x8xf32, #tpu.memory_space<vmem>>, vector<288x8xf32>
    tpu.vector_store %arg10[%c0_84, %c0_85], %81 {strides = array<i32>} : memref<288x8xf32, #tpu.memory_space<vmem>>, vector<288x8xf32>,
    %c0_86 = arith.constant 0 : index
    %c0_87 = arith.constant 0 : index
    %83 = vector.load %arg10[%c0_86, %c0_87] : memref<288x8xf32, #tpu.memory_space<vmem>>, vector<288x8xf32>
    %84 = arith.mulf %83, %83 : vector<288x8xf32>
    %cst_88 = arith.constant dense<0.000000e+00> : vector<288xf32>
    %85 = vector.multi_reduction <add>, %84, %cst_88 [1] : vector<288x8xf32> to vector<288xf32>
    %86 = vector.shape_cast %85 : vector<288xf32> to vector<288x1xf32>
    %cst_89 = arith.constant 8.000000e+00 : f32
    %87 = vector.broadcast %cst_89 : f32 to vector<288x1xf32>
    %88 = arith.divf %86, %87 : vector<288x1xf32>
    %cst_90 = arith.constant 9.99999974E-6 : f32
    %89 = vector.broadcast %cst_90 : f32 to vector<288x1xf32>
    %90 = arith.addf %88, %89 : vector<288x1xf32>
    %91 = math.rsqrt %90 : vector<288x1xf32>
    %92 = vector.broadcast %91 : vector<288x1xf32> to vector<288x8xf32>
    %93 = arith.mulf %83, %92 : vector<288x8xf32>
    %c0_91 = arith.constant 0 : index
    %c0_92 = arith.constant 0 : index
    %94 = vector.load %arg4[%c0_91, %c0_92] : memref<1x8xf32, #tpu.memory_space<vmem>>, vector<1x8xf32>
    %95 = vector.broadcast %94 : vector<1x8xf32> to vector<288x8xf32>
    %96 = arith.mulf %93, %95 : vector<288x8xf32>
    %c0_93 = arith.constant 0 : index
    %c0_94 = arith.constant 0 : index
    %97 = vector.load %arg5[%c0_93, %c0_94] : memref<1x8xf32, #tpu.memory_space<vmem>>, vector<1x8xf32>
    %98 = vector.broadcast %97 : vector<1x8xf32> to vector<288x8xf32>
    %99 = arith.addf %96, %98 : vector<288x8xf32>
    %cst_95 = arith.constant 0.000000e+00 : f32
    %100 = vector.broadcast %cst_95 : f32 to vector<288x8xf32>
    %101 = arith.maximumf %99, %100 : vector<288x8xf32>
    %c0_96 = arith.constant 0 : index
    %c0_97 = arith.constant 0 : index
    %102 = vector.load %arg8[%c0_96, %c0_97] : memref<288x1xf32, #tpu.memory_space<vmem>>, vector<288x1xf32>
    %103 = vector.broadcast %102 : vector<288x1xf32> to vector<288x8xf32>
    %104 = arith.mulf %101, %103 : vector<288x8xf32>
    %cst_98 = arith.constant 0.000000e+00 : f32
    %105 = vector.broadcast %cst_98 : f32 to vector<347x8xf32>
    %c0_99 = arith.constant 0 : index
    %c0_100 = arith.constant 0 : index
    %106 = vector.load %arg11[%c0_99, %c0_100] : memref<347x8xf32, #tpu.memory_space<vmem>>, vector<347x8xf32>
    tpu.vector_store %arg11[%c0_99, %c0_100], %105 {strides = array<i32>} : memref<347x8xf32, #tpu.memory_space<vmem>>, vector<347x8xf32>,
    %c24 = arith.constant 24 : index
    %c0_101 = arith.constant 0 : index
    %107 = vector.load %arg11[%c24, %c0_101] : memref<347x8xf32, #tpu.memory_space<vmem>>, vector<288x8xf32>
    tpu.vector_store %arg11[%c24, %c0_101], %104 {strides = array<i32>} : memref<347x8xf32, #tpu.memory_space<vmem>>, vector<288x8xf32>,
    %cst_102 = arith.constant 0.000000e+00 : f32
    %108 = vector.broadcast %cst_102 : f32 to vector<288x4xf32>
    %c0_103 = arith.constant 0 : index
    %c0_104 = arith.constant 0 : index
    %109 = vector.load %arg12[%c0_103, %c0_104] : memref<288x4xf32, #tpu.memory_space<vmem>>, vector<288x4xf32>
    tpu.vector_store %arg12[%c0_103, %c0_104], %108 {strides = array<i32>} : memref<288x4xf32, #tpu.memory_space<vmem>>, vector<288x4xf32>,
    %c5_105 = arith.constant 5 : index
    %c0_106 = arith.constant 0 : index
    %110 = vector.load %arg11[%c5_105, %c0_106] : memref<347x8xf32, #tpu.memory_space<vmem>>, vector<288x8xf32>
    %111 = arith.truncf %110 : vector<288x8xf32> to vector<288x8xbf16>
    %c0_107 = arith.constant 0 : index
    %c0_108 = arith.constant 0 : index
    %112 = vector.load %arg12[%c0_107, %c0_108] : memref<288x4xf32, #tpu.memory_space<vmem>>, vector<288x4xf32>
    %c0_109 = arith.constant 0 : index
    %c0_110 = arith.constant 0 : index
    %c0_111 = arith.constant 0 : index
    %113 = vector.load %arg3[%c0_109, %c0_110, %c0_111] : memref<9x8x4xbf16, #tpu.memory_space<vmem>>, vector<1x8x4xbf16>
    %114 = vector.shape_cast %113 : vector<1x8x4xbf16> to vector<8x4xbf16>
    %cst_112 = arith.constant dense<0.000000e+00> : vector<288x4xf32>
    %115 = tpu.matmul %111, %114, %cst_112 {dimension_numbers = #tpu.dot_dimension_numbers<[1], [0], [0], [1], [0, 0, 1, 1], [], []>} : vector<288x8xbf16>, vector<8x4xbf16>, vector<288x4xf32> -> vector<288x4xf32>
    %116 = arith.addf %112, %115 : vector<288x4xf32>
    %c0_113 = arith.constant 0 : index
    %c0_114 = arith.constant 0 : index
    %117 = vector.load %arg12[%c0_113, %c0_114] : memref<288x4xf32, #tpu.memory_space<vmem>>, vector<288x4xf32>
    tpu.vector_store %arg12[%c0_113, %c0_114], %116 {strides = array<i32>} : memref<288x4xf32, #tpu.memory_space<vmem>>, vector<288x4xf32>,
    %c6_115 = arith.constant 6 : index
    %c0_116 = arith.constant 0 : index
    %118 = vector.load %arg11[%c6_115, %c0_116] : memref<347x8xf32, #tpu.memory_space<vmem>>, vector<288x8xf32>
    %119 = arith.truncf %118 : vector<288x8xf32> to vector<288x8xbf16>
    %c0_117 = arith.constant 0 : index
    %c0_118 = arith.constant 0 : index
    %120 = vector.load %arg12[%c0_117, %c0_118] : memref<288x4xf32, #tpu.memory_space<vmem>>, vector<288x4xf32>
    %c1_119 = arith.constant 1 : index
    %c0_120 = arith.constant 0 : index
    %c0_121 = arith.constant 0 : index
    %121 = vector.load %arg3[%c1_119, %c0_120, %c0_121] : memref<9x8x4xbf16, #tpu.memory_space<vmem>>, vector<1x8x4xbf16>
    %122 = vector.shape_cast %121 : vector<1x8x4xbf16> to vector<8x4xbf16>
    %cst_122 = arith.constant dense<0.000000e+00> : vector<288x4xf32>
    %123 = tpu.matmul %119, %122, %cst_122 {dimension_numbers = #tpu.dot_dimension_numbers<[1], [0], [0], [1], [0, 0, 1, 1], [], []>} : vector<288x8xbf16>, vector<8x4xbf16>, vector<288x4xf32> -> vector<288x4xf32>
    %124 = arith.addf %120, %123 : vector<288x4xf32>
    %c0_123 = arith.constant 0 : index
    %c0_124 = arith.constant 0 : index
    %125 = vector.load %arg12[%c0_123, %c0_124] : memref<288x4xf32, #tpu.memory_space<vmem>>, vector<288x4xf32>
    tpu.vector_store %arg12[%c0_123, %c0_124], %124 {strides = array<i32>} : memref<288x4xf32, #tpu.memory_space<vmem>>, vector<288x4xf32>,
    %c7_125 = arith.constant 7 : index
    %c0_126 = arith.constant 0 : index
    %126 = vector.load %arg11[%c7_125, %c0_126] : memref<347x8xf32, #tpu.memory_space<vmem>>, vector<288x8xf32>
    %127 = arith.truncf %126 : vector<288x8xf32> to vector<288x8xbf16>
    %c0_127 = arith.constant 0 : index
    %c0_128 = arith.constant 0 : index
    %128 = vector.load %arg12[%c0_127, %c0_128] : memref<288x4xf32, #tpu.memory_space<vmem>>, vector<288x4xf32>
    %c2_129 = arith.constant 2 : index
    %c0_130 = arith.constant 0 : index
    %c0_131 = arith.constant 0 : index
    %129 = vector.load %arg3[%c2_129, %c0_130, %c0_131] : memref<9x8x4xbf16, #tpu.memory_space<vmem>>, vector<1x8x4xbf16>
    %130 = vector.shape_cast %129 : vector<1x8x4xbf16> to vector<8x4xbf16>
    %cst_132 = arith.constant dense<0.000000e+00> : vector<288x4xf32>
    %131 = tpu.matmul %127, %130, %cst_132 {dimension_numbers = #tpu.dot_dimension_numbers<[1], [0], [0], [1], [0, 0, 1, 1], [], []>} : vector<288x8xbf16>, vector<8x4xbf16>, vector<288x4xf32> -> vector<288x4xf32>
    %132 = arith.addf %128, %131 : vector<288x4xf32>
    %c0_133 = arith.constant 0 : index
    %c0_134 = arith.constant 0 : index
    %133 = vector.load %arg12[%c0_133, %c0_134] : memref<288x4xf32, #tpu.memory_space<vmem>>, vector<288x4xf32>
    tpu.vector_store %arg12[%c0_133, %c0_134], %132 {strides = array<i32>} : memref<288x4xf32, #tpu.memory_space<vmem>>, vector<288x4xf32>,
    %c23 = arith.constant 23 : index
    %c0_135 = arith.constant 0 : index
    %134 = vector.load %arg11[%c23, %c0_135] : memref<347x8xf32, #tpu.memory_space<vmem>>, vector<288x8xf32>
    %135 = arith.truncf %134 : vector<288x8xf32> to vector<288x8xbf16>
    %c0_136 = arith.constant 0 : index
    %c0_137 = arith.constant 0 : index
    %136 = vector.load %arg12[%c0_136, %c0_137] : memref<288x4xf32, #tpu.memory_space<vmem>>, vector<288x4xf32>
    %c3_138 = arith.constant 3 : index
    %c0_139 = arith.constant 0 : index
    %c0_140 = arith.constant 0 : index
    %137 = vector.load %arg3[%c3_138, %c0_139, %c0_140] : memref<9x8x4xbf16, #tpu.memory_space<vmem>>, vector<1x8x4xbf16>
    %138 = vector.shape_cast %137 : vector<1x8x4xbf16> to vector<8x4xbf16>
    %cst_141 = arith.constant dense<0.000000e+00> : vector<288x4xf32>
    %139 = tpu.matmul %135, %138, %cst_141 {dimension_numbers = #tpu.dot_dimension_numbers<[1], [0], [0], [1], [0, 0, 1, 1], [], []>} : vector<288x8xbf16>, vector<8x4xbf16>, vector<288x4xf32> -> vector<288x4xf32>
    %140 = arith.addf %136, %139 : vector<288x4xf32>
    %c0_142 = arith.constant 0 : index
    %c0_143 = arith.constant 0 : index
    %141 = vector.load %arg12[%c0_142, %c0_143] : memref<288x4xf32, #tpu.memory_space<vmem>>, vector<288x4xf32>
    tpu.vector_store %arg12[%c0_142, %c0_143], %140 {strides = array<i32>} : memref<288x4xf32, #tpu.memory_space<vmem>>, vector<288x4xf32>,
    %c24_144 = arith.constant 24 : index
    %c0_145 = arith.constant 0 : index
    %142 = vector.load %arg11[%c24_144, %c0_145] : memref<347x8xf32, #tpu.memory_space<vmem>>, vector<288x8xf32>
    %143 = arith.truncf %142 : vector<288x8xf32> to vector<288x8xbf16>
    %c0_146 = arith.constant 0 : index
    %c0_147 = arith.constant 0 : index
    %144 = vector.load %arg12[%c0_146, %c0_147] : memref<288x4xf32, #tpu.memory_space<vmem>>, vector<288x4xf32>
    %c4_148 = arith.constant 4 : index
    %c0_149 = arith.constant 0 : index
    %c0_150 = arith.constant 0 : index
    %145 = vector.load %arg3[%c4_148, %c0_149, %c0_150] : memref<9x8x4xbf16, #tpu.memory_space<vmem>>, vector<1x8x4xbf16>
    %146 = vector.shape_cast %145 : vector<1x8x4xbf16> to vector<8x4xbf16>
    %cst_151 = arith.constant dense<0.000000e+00> : vector<288x4xf32>
    %147 = tpu.matmul %143, %146, %cst_151 {dimension_numbers = #tpu.dot_dimension_numbers<[1], [0], [0], [1], [0, 0, 1, 1], [], []>} : vector<288x8xbf16>, vector<8x4xbf16>, vector<288x4xf32> -> vector<288x4xf32>
    %148 = arith.addf %144, %147 : vector<288x4xf32>
    %c0_152 = arith.constant 0 : index
    %c0_153 = arith.constant 0 : index
    %149 = vector.load %arg12[%c0_152, %c0_153] : memref<288x4xf32, #tpu.memory_space<vmem>>, vector<288x4xf32>
    tpu.vector_store %arg12[%c0_152, %c0_153], %148 {strides = array<i32>} : memref<288x4xf32, #tpu.memory_space<vmem>>, vector<288x4xf32>,
    %c25 = arith.constant 25 : index
    %c0_154 = arith.constant 0 : index
    %150 = vector.load %arg11[%c25, %c0_154] : memref<347x8xf32, #tpu.memory_space<vmem>>, vector<288x8xf32>
    %151 = arith.truncf %150 : vector<288x8xf32> to vector<288x8xbf16>
    %c0_155 = arith.constant 0 : index
    %c0_156 = arith.constant 0 : index
    %152 = vector.load %arg12[%c0_155, %c0_156] : memref<288x4xf32, #tpu.memory_space<vmem>>, vector<288x4xf32>
    %c5_157 = arith.constant 5 : index
    %c0_158 = arith.constant 0 : index
    %c0_159 = arith.constant 0 : index
    %153 = vector.load %arg3[%c5_157, %c0_158, %c0_159] : memref<9x8x4xbf16, #tpu.memory_space<vmem>>, vector<1x8x4xbf16>
    %154 = vector.shape_cast %153 : vector<1x8x4xbf16> to vector<8x4xbf16>
    %cst_160 = arith.constant dense<0.000000e+00> : vector<288x4xf32>
    %155 = tpu.matmul %151, %154, %cst_160 {dimension_numbers = #tpu.dot_dimension_numbers<[1], [0], [0], [1], [0, 0, 1, 1], [], []>} : vector<288x8xbf16>, vector<8x4xbf16>, vector<288x4xf32> -> vector<288x4xf32>
    %156 = arith.addf %152, %155 : vector<288x4xf32>
    %c0_161 = arith.constant 0 : index
    %c0_162 = arith.constant 0 : index
    %157 = vector.load %arg12[%c0_161, %c0_162] : memref<288x4xf32, #tpu.memory_space<vmem>>, vector<288x4xf32>
    tpu.vector_store %arg12[%c0_161, %c0_162], %156 {strides = array<i32>} : memref<288x4xf32, #tpu.memory_space<vmem>>, vector<288x4xf32>,
    %c41 = arith.constant 41 : index
    %c0_163 = arith.constant 0 : index
    %158 = vector.load %arg11[%c41, %c0_163] : memref<347x8xf32, #tpu.memory_space<vmem>>, vector<288x8xf32>
    %159 = arith.truncf %158 : vector<288x8xf32> to vector<288x8xbf16>
    %c0_164 = arith.constant 0 : index
    %c0_165 = arith.constant 0 : index
    %160 = vector.load %arg12[%c0_164, %c0_165] : memref<288x4xf32, #tpu.memory_space<vmem>>, vector<288x4xf32>
    %c6_166 = arith.constant 6 : index
    %c0_167 = arith.constant 0 : index
    %c0_168 = arith.constant 0 : index
    %161 = vector.load %arg3[%c6_166, %c0_167, %c0_168] : memref<9x8x4xbf16, #tpu.memory_space<vmem>>, vector<1x8x4xbf16>
    %162 = vector.shape_cast %161 : vector<1x8x4xbf16> to vector<8x4xbf16>
    %cst_169 = arith.constant dense<0.000000e+00> : vector<288x4xf32>
    %163 = tpu.matmul %159, %162, %cst_169 {dimension_numbers = #tpu.dot_dimension_numbers<[1], [0], [0], [1], [0, 0, 1, 1], [], []>} : vector<288x8xbf16>, vector<8x4xbf16>, vector<288x4xf32> -> vector<288x4xf32>
    %164 = arith.addf %160, %163 : vector<288x4xf32>
    %c0_170 = arith.constant 0 : index
    %c0_171 = arith.constant 0 : index
    %165 = vector.load %arg12[%c0_170, %c0_171] : memref<288x4xf32, #tpu.memory_space<vmem>>, vector<288x4xf32>
    tpu.vector_store %arg12[%c0_170, %c0_171], %164 {strides = array<i32>} : memref<288x4xf32, #tpu.memory_space<vmem>>, vector<288x4xf32>,
    %c42 = arith.constant 42 : index
    %c0_172 = arith.constant 0 : index
    %166 = vector.load %arg11[%c42, %c0_172] : memref<347x8xf32, #tpu.memory_space<vmem>>, vector<288x8xf32>
    %167 = arith.truncf %166 : vector<288x8xf32> to vector<288x8xbf16>
    %c0_173 = arith.constant 0 : index
    %c0_174 = arith.constant 0 : index
    %168 = vector.load %arg12[%c0_173, %c0_174] : memref<288x4xf32, #tpu.memory_space<vmem>>, vector<288x4xf32>
    %c7_175 = arith.constant 7 : index
    %c0_176 = arith.constant 0 : index
    %c0_177 = arith.constant 0 : index
    %169 = vector.load %arg3[%c7_175, %c0_176, %c0_177] : memref<9x8x4xbf16, #tpu.memory_space<vmem>>, vector<1x8x4xbf16>
    %170 = vector.shape_cast %169 : vector<1x8x4xbf16> to vector<8x4xbf16>
    %cst_178 = arith.constant dense<0.000000e+00> : vector<288x4xf32>
    %171 = tpu.matmul %167, %170, %cst_178 {dimension_numbers = #tpu.dot_dimension_numbers<[1], [0], [0], [1], [0, 0, 1, 1], [], []>} : vector<288x8xbf16>, vector<8x4xbf16>, vector<288x4xf32> -> vector<288x4xf32>
    %172 = arith.addf %168, %171 : vector<288x4xf32>
    %c0_179 = arith.constant 0 : index
    %c0_180 = arith.constant 0 : index
    %173 = vector.load %arg12[%c0_179, %c0_180] : memref<288x4xf32, #tpu.memory_space<vmem>>, vector<288x4xf32>
    tpu.vector_store %arg12[%c0_179, %c0_180], %172 {strides = array<i32>} : memref<288x4xf32, #tpu.memory_space<vmem>>, vector<288x4xf32>,
    %c43 = arith.constant 43 : index
    %c0_181 = arith.constant 0 : index
    %174 = vector.load %arg11[%c43, %c0_181] : memref<347x8xf32, #tpu.memory_space<vmem>>, vector<288x8xf32>
    %175 = arith.truncf %174 : vector<288x8xf32> to vector<288x8xbf16>
    %c0_182 = arith.constant 0 : index
    %c0_183 = arith.constant 0 : index
    %176 = vector.load %arg12[%c0_182, %c0_183] : memref<288x4xf32, #tpu.memory_space<vmem>>, vector<288x4xf32>
    %c8_184 = arith.constant 8 : index
    %c0_185 = arith.constant 0 : index
    %c0_186 = arith.constant 0 : index
    %177 = vector.load %arg3[%c8_184, %c0_185, %c0_186] : memref<9x8x4xbf16, #tpu.memory_space<vmem>>, vector<1x8x4xbf16>
    %178 = vector.shape_cast %177 : vector<1x8x4xbf16> to vector<8x4xbf16>
    %cst_187 = arith.constant dense<0.000000e+00> : vector<288x4xf32>
    %179 = tpu.matmul %175, %178, %cst_187 {dimension_numbers = #tpu.dot_dimension_numbers<[1], [0], [0], [1], [0, 0, 1, 1], [], []>} : vector<288x8xbf16>, vector<8x4xbf16>, vector<288x4xf32> -> vector<288x4xf32>
    %180 = arith.addf %176, %179 : vector<288x4xf32>
    %c0_188 = arith.constant 0 : index
    %c0_189 = arith.constant 0 : index
    %181 = vector.load %arg12[%c0_188, %c0_189] : memref<288x4xf32, #tpu.memory_space<vmem>>, vector<288x4xf32>
    tpu.vector_store %arg12[%c0_188, %c0_189], %180 {strides = array<i32>} : memref<288x4xf32, #tpu.memory_space<vmem>>, vector<288x4xf32>,
    %c0_190 = arith.constant 0 : index
    %c0_191 = arith.constant 0 : index
    %182 = vector.load %arg12[%c0_190, %c0_191] : memref<288x4xf32, #tpu.memory_space<vmem>>, vector<288x4xf32>
    %183 = arith.mulf %182, %182 : vector<288x4xf32>
    %cst_192 = arith.constant dense<0.000000e+00> : vector<288xf32>
    %184 = vector.multi_reduction <add>, %183, %cst_192 [1] : vector<288x4xf32> to vector<288xf32>
    %185 = vector.shape_cast %184 : vector<288xf32> to vector<288x1xf32>
    %cst_193 = arith.constant 4.000000e+00 : f32
    %186 = vector.broadcast %cst_193 : f32 to vector<288x1xf32>
    %187 = arith.divf %185, %186 : vector<288x1xf32>
    %cst_194 = arith.constant 9.99999974E-6 : f32
    %188 = vector.broadcast %cst_194 : f32 to vector<288x1xf32>
    %189 = arith.addf %187, %188 : vector<288x1xf32>
    %190 = math.rsqrt %189 : vector<288x1xf32>
    %191 = vector.broadcast %190 : vector<288x1xf32> to vector<288x4xf32>
    %192 = arith.mulf %182, %191 : vector<288x4xf32>
    %c0_195 = arith.constant 0 : index
    %c0_196 = arith.constant 0 : index
    %193 = vector.load %arg6[%c0_195, %c0_196] : memref<1x4xf32, #tpu.memory_space<vmem>>, vector<1x4xf32>
    %194 = vector.broadcast %193 : vector<1x4xf32> to vector<288x4xf32>
    %195 = arith.mulf %192, %194 : vector<288x4xf32>
    %c0_197 = arith.constant 0 : index
    %c0_198 = arith.constant 0 : index
    %196 = vector.load %arg7[%c0_197, %c0_198] : memref<1x4xf32, #tpu.memory_space<vmem>>, vector<1x4xf32>
    %197 = vector.broadcast %196 : vector<1x4xf32> to vector<288x4xf32>
    %198 = arith.addf %195, %197 : vector<288x4xf32>
    %c0_199 = arith.constant 0 : index
    %c19_200 = arith.constant 19 : index
    %c0_201 = arith.constant 0 : index
    %199 = vector.load %arg1[%c0_199, %c19_200, %c0_201] : memref<1x342x4xf32, #tpu.memory_space<vmem>>, vector<1x288x4xf32>
    %200 = vector.shape_cast %199 : vector<1x288x4xf32> to vector<288x4xf32>
    %201 = arith.addf %198, %200 : vector<288x4xf32>
    %c0_202 = arith.constant 0 : index
    %c0_203 = arith.constant 0 : index
    %c0_204 = arith.constant 0 : index
    %202 = vector.load %arg9[%c0_202, %c0_203, %c0_204] : memref<1x288x4xf32, #tpu.memory_space<vmem>>, vector<1x288x4xf32>
    %203 = vector.shape_cast %202 : vector<1x288x4xf32> to vector<288x4xf32>
    %204 = vector.shape_cast %201 : vector<288x4xf32> to vector<1x288x4xf32>
    tpu.vector_store %arg9[%c0_202, %c0_203, %c0_204], %204 {strides = array<i32>} : memref<1x288x4xf32, #tpu.memory_space<vmem>>, vector<1x288x4xf32>,
    return
  }
  func.func @transform_0(%arg0: i32) -> (i32, i32, i32) {
    %c0_i32 = arith.constant 0 : i32
    %c0_i32_0 = arith.constant 0 : i32
    %c0_i32_1 = arith.constant 0 : i32
    return %arg0, %c0_i32, %c0_i32_0 : i32, i32, i32
  }
  func.func @transform_1(%arg0: i32) -> (i32, i32, i32) {
    %c0_i32 = arith.constant 0 : i32
    %c0_i32_0 = arith.constant 0 : i32
    %c0_i32_1 = arith.constant 0 : i32
    %c0_i32_2 = arith.constant 0 : i32
    return %c0_i32, %c0_i32_0, %c0_i32_1 : i32, i32, i32
  }
  func.func @transform_2(%arg0: i32) -> (i32, i32, i32) {
    %c0_i32 = arith.constant 0 : i32
    %c0_i32_0 = arith.constant 0 : i32
    %c0_i32_1 = arith.constant 0 : i32
    %c0_i32_2 = arith.constant 0 : i32
    return %c0_i32, %c0_i32_0, %c0_i32_1 : i32, i32, i32
  }
  func.func @transform_3(%arg0: i32) -> (i32, i32) {
    %c0_i32 = arith.constant 0 : i32
    %c0_i32_0 = arith.constant 0 : i32
    %c0_i32_1 = arith.constant 0 : i32
    return %c0_i32, %c0_i32_0 : i32, i32
  }
  func.func @transform_4(%arg0: i32) -> (i32, i32) {
    %c0_i32 = arith.constant 0 : i32
    %c0_i32_0 = arith.constant 0 : i32
    %c0_i32_1 = arith.constant 0 : i32
    return %c0_i32, %c0_i32_0 : i32, i32
  }
  func.func @transform_5(%arg0: i32) -> (i32, i32) {
    %c0_i32 = arith.constant 0 : i32
    %c0_i32_0 = arith.constant 0 : i32
    %c0_i32_1 = arith.constant 0 : i32
    return %c0_i32, %c0_i32_0 : i32, i32
  }
  func.func @transform_6(%arg0: i32) -> (i32, i32) {
    %c0_i32 = arith.constant 0 : i32
    %c0_i32_0 = arith.constant 0 : i32
    %c0_i32_1 = arith.constant 0 : i32
    return %c0_i32, %c0_i32_0 : i32, i32
  }
  func.func @transform_7(%arg0: i32) -> (i32, i32) {
    %c0_i32 = arith.constant 0 : i32
    %c0_i32_0 = arith.constant 0 : i32
    %c0_i32_1 = arith.constant 0 : i32
    return %c0_i32, %c0_i32_0 : i32, i32
  }
  func.func @transform_8(%arg0: i32) -> (i32, i32, i32) {
    %c0_i32 = arith.constant 0 : i32
    %c0_i32_0 = arith.constant 0 : i32
    %c0_i32_1 = arith.constant 0 : i32
    return %arg0, %c0_i32, %c0_i32_0 : i32, i32, i32
  }
}

</mosaic_0001>

<llo_original>
// kernel: tpu_custom_call.1
$region0: #{tpu_custom_call.1}
  #allocation0 [shape = 'u32[]', space=smem, size = 0x4, offset = 0x4, fixed_abs, tag = 'smem constant byte address 0x4 - core index']
  #allocation1 [shape = 'u32[144,128]{1,0:T(1,128)}', space=vmem, size = 0x12000, scoped, tag = 'internal scratch']
  #allocation2 [shape = 'f32[288,8]{1,0:T(8,128)}', space=vmem, size = 0x24000, scoped, tag = 'scratch operand']
  #allocation3 [shape = 'f32[347,8]{1,0:T(8,128)}', space=vmem, size = 0x2c000, scoped, tag = 'scratch operand']
  #allocation4 [shape = 'f32[288,4]{1,0:T(8,128)}', space=vmem, size = 0x24000, scoped, tag = 'scratch operand']
  %s0 = inlined_call_operand.vmem [shape: f32[2,342,4], index: 0, kind: input, shape index: {}]
  %s1 = inlined_call_operand.vmem [shape: bf16[9,4,8], index: 1, kind: input, shape index: {}]
  %s2 = inlined_call_operand.vmem [shape: bf16[9,8,4], index: 2, kind: input, shape index: {}]
  %s3 = inlined_call_operand.vmem [shape: f32[1,8], index: 3, kind: input, shape index: {}]
  %s4 = inlined_call_operand.vmem [shape: f32[1,8], index: 4, kind: input, shape index: {}]
  %s5 = inlined_call_operand.vmem [shape: f32[1,4], index: 5, kind: input, shape index: {}]
  %s6 = inlined_call_operand.vmem [shape: f32[1,4], index: 6, kind: input, shape index: {}]
  %s7 = inlined_call_operand.vmem [shape: f32[288,1], index: 7, kind: input, shape index: {}]
  %s8 = inlined_call_operand.vmem [shape: f32[2,288,4], index: 8, kind: output, shape index: {}]
  %s9 = sld [smem:[#allocation0]]
  $region65: #{tpu_custom_call.1} parent=0
    _
  %s11 = ssub.s32 1, %s9
  %s12 = scalar_select 0, %s11, %s9
  loop: start=0, step=1, limit=4
  $region2: #{tpu_custom_call.1} parent=0 // loop_pre_header
    _
  $region3: #{tpu_custom_call.1} parent=0 // loop_header
    %s14 = sphi 0, %s18
    %p15 = scmp.ge.s32.totalorder %s14, 4
    %s24 = sphi 0, %s26
    %s27 = sphi 0, %s24
    %s28 = sphi 0, %s27
    %s44 = sphi 0, %s28
    %s48 = sphi 0, %s48
    %s50 = sphi 0, %s48
    %s51 = sphi 0, %s50
    %s65 = sphi 0, %s51
    %s69 = sphi 0, %s69
    %s71 = sphi 0, %s69
    %s72 = sphi 0, %s71
    %s86 = sphi 0, %s72
    %s90 = sphi 0, %s90
    %s92 = sphi 0, %s90
    %s93 = sphi 0, %s92
    %s107 = sphi 0, %s93
    %s111 = sphi 0, %s111
    %s113 = sphi 0, %s111
    %s114 = sphi 0, %s113
    %s128 = sphi 0, %s114
    %s132 = sphi 0, %s132
    %s134 = sphi 0, %s132
    %s135 = sphi 0, %s134
    %s149 = sphi 0, %s135
    %s153 = sphi 0, %s153
    %s155 = sphi 0, %s153
    %s156 = sphi 0, %s155
    %s170 = sphi 0, %s156
    %s174 = sphi 0, %s174
    %s176 = sphi 0, %s174
    %s177 = sphi 0, %s176
    %s191 = sphi 0, %s177
    %s197 = sphi 0, %s199
    %s200 = sphi 0, %s197
    %s201 = sphi 0, %s200
    %s217 = sphi 0, %s201
  $region4: #{tpu_custom_call.1} parent=0 // loop_header_branch
    %17 = sbr.rel (%p15) target = $region8
  $region5: #{tpu_custom_call.1} parent=0 // loop_body
    %s19 = ssub.s32 %s14, 1
    %s20 = ssub.s32 %s14, 2
    %s21 = sadd.s32 %s14, 1
    %s22 = ssub.s32 %s14, %s21
    %p23 = scmp.eq.s32.totalorder %s22, 0
    %s25 = sadd.s32 %s24, 1
    %s26 = scalar_select %p23, %s24, %s25
    %p29 = pneg %p23
    %p30 = scmp.eq.s32.totalorder %s14, 1
    %p31 = por %p29, %p30
    %p32 = scmp.ne.s32.totalorder %s24, %s27
    %p33 = scmp.eq.s32.totalorder %s14, 0
    %p34 = por %p32, %p33
    %p35 = scmp.ne.s32.totalorder %s24, %s27
    %p36 = scmp.eq.s32.totalorder %s19, 1
    %p37 = por %p35, %p36
    %p38 = scmp.ne.s32.totalorder %s27, %s28
    %p39 = scmp.eq.s32.totalorder %s19, 0
    %p40 = por %p38, %p39
    %p41 = scmp.ne.s32.totalorder %s27, %s28
    %p42 = scmp.eq.s32.totalorder %s20, 1
    %p43 = por %p41, %p42
    %p45 = scmp.ne.s32.totalorder %s28, %s44
    %p46 = scmp.eq.s32.totalorder %s20, 0
    %p47 = por %p45, %p46
    %s49 = sadd.s32 %s48, 1
    %p52 = scmp.eq.s32.totalorder %s14, 1
    %p53 = scmp.ne.s32.totalorder %s48, %s50
    %p54 = scmp.eq.s32.totalorder %s14, 0
    %p55 = por %p53, %p54
    %p56 = scmp.ne.s32.totalorder %s48, %s50
    %p57 = scmp.eq.s32.totalorder %s19, 1
    %p58 = por %p56, %p57
    %p59 = scmp.ne.s32.totalorder %s50, %s51
    %p60 = scmp.eq.s32.totalorder %s19, 0
    %p61 = por %p59, %p60
    %p62 = scmp.ne.s32.totalorder %s50, %s51
    %p63 = scmp.eq.s32.totalorder %s20, 1
    %p64 = por %p62, %p63
    %p66 = scmp.ne.s32.totalorder %s51, %s65
    %p67 = scmp.eq.s32.totalorder %s20, 0
    %p68 = por %p66, %p67
    %s70 = sadd.s32 %s69, 1
    %p73 = scmp.eq.s32.totalorder %s14, 1
    %p74 = scmp.ne.s32.totalorder %s69, %s71
    %p75 = scmp.eq.s32.totalorder %s14, 0
    %p76 = por %p74, %p75
    %p77 = scmp.ne.s32.totalorder %s69, %s71
    %p78 = scmp.eq.s32.totalorder %s19, 1
    %p79 = por %p77, %p78
    %p80 = scmp.ne.s32.totalorder %s71, %s72
    %p81 = scmp.eq.s32.totalorder %s19, 0
    %p82 = por %p80, %p81
    %p83 = scmp.ne.s32.totalorder %s71, %s72
    %p84 = scmp.eq.s32.totalorder %s20, 1
    %p85 = por %p83, %p84
    %p87 = scmp.ne.s32.totalorder %s72, %s86
    %p88 = scmp.eq.s32.totalorder %s20, 0
    %p89 = por %p87, %p88
    %s91 = sadd.s32 %s90, 1
    %p94 = scmp.eq.s32.totalorder %s14, 1
    %p95 = scmp.ne.s32.totalorder %s90, %s92
    %p96 = scmp.eq.s32.totalorder %s14, 0
    %p97 = por %p95, %p96
    %p98 = scmp.ne.s32.totalorder %s90, %s92
    %p99 = scmp.eq.s32.totalorder %s19, 1
    %p100 = por %p98, %p99
    %p101 = scmp.ne.s32.totalorder %s92, %s93
    %p102 = scmp.eq.s32.totalorder %s19, 0
    %p103 = por %p101, %p102
    %p104 = scmp.ne.s32.totalorder %s92, %s93
    %p105 = scmp.eq.s32.totalorder %s20, 1
    %p106 = por %p104, %p105
    %p108 = scmp.ne.s32.totalorder %s93, %s107
    %p109 = scmp.eq.s32.totalorder %s20, 0
    %p110 = por %p108, %p109
    %s112 = sadd.s32 %s111, 1
    %p115 = scmp.eq.s32.totalorder %s14, 1
    %p116 = scmp.ne.s32.totalorder %s111, %s113
    %p117 = scmp.eq.s32.totalorder %s14, 0
    %p118 = por %p116, %p117
    %p119 = scmp.ne.s32.totalorder %s111, %s113
    %p120 = scmp.eq.s32.totalorder %s19, 1
    %p121 = por %p119, %p120
    %p122 = scmp.ne.s32.totalorder %s113, %s114
    %p123 = scmp.eq.s32.totalorder %s19, 0
    %p124 = por %p122, %p123
    %p125 = scmp.ne.s32.totalorder %s113, %s114
    %p126 = scmp.eq.s32.totalorder %s20, 1
    %p127 = por %p125, %p126
    %p129 = scmp.ne.s32.totalorder %s114, %s128
    %p130 = scmp.eq.s32.totalorder %s20, 0
    %p131 = por %p129, %p130
    %s133 = sadd.s32 %s132, 1
    %p136 = scmp.eq.s32.totalorder %s14, 1
    %p137 = scmp.ne.s32.totalorder %s132, %s134
    %p138 = scmp.eq.s32.totalorder %s14, 0
    %p139 = por %p137, %p138
    %p140 = scmp.ne.s32.totalorder %s132, %s134
    %p141 = scmp.eq.s32.totalorder %s19, 1
    %p142 = por %p140, %p141
    %p143 = scmp.ne.s32.totalorder %s134, %s135
    %p144 = scmp.eq.s32.totalorder %s19, 0
    %p145 = por %p143, %p144
    %p146 = scmp.ne.s32.totalorder %s134, %s135
    %p147 = scmp.eq.s32.totalorder %s20, 1
    %p148 = por %p146, %p147
    %p150 = scmp.ne.s32.totalorder %s135, %s149
    %p151 = scmp.eq.s32.totalorder %s20, 0
    %p152 = por %p150, %p151
    %s154 = sadd.s32 %s153, 1
    %p157 = scmp.eq.s32.totalorder %s14, 1
    %p158 = scmp.ne.s32.totalorder %s153, %s155
    %p159 = scmp.eq.s32.totalorder %s14, 0
    %p160 = por %p158, %p159
    %p161 = scmp.ne.s32.totalorder %s153, %s155
    %p162 = scmp.eq.s32.totalorder %s19, 1
    %p163 = por %p161, %p162
    %p164 = scmp.ne.s32.totalorder %s155, %s156
    %p165 = scmp.eq.s32.totalorder %s19, 0
    %p166 = por %p164, %p165
    %p167 = scmp.ne.s32.totalorder %s155, %s156
    %p168 = scmp.eq.s32.totalorder %s20, 1
    %p169 = por %p167, %p168
    %p171 = scmp.ne.s32.totalorder %s156, %s170
    %p172 = scmp.eq.s32.totalorder %s20, 0
    %p173 = por %p171, %p172
    %s175 = sadd.s32 %s174, 1
    %p178 = scmp.eq.s32.totalorder %s14, 1
    %p179 = scmp.ne.s32.totalorder %s174, %s176
    %p180 = scmp.eq.s32.totalorder %s14, 0
    %p181 = por %p179, %p180
    %p182 = scmp.ne.s32.totalorder %s174, %s176
    %p183 = scmp.eq.s32.totalorder %s19, 1
    %p184 = por %p182, %p183
    %p185 = scmp.ne.s32.totalorder %s176, %s177
    %p186 = scmp.eq.s32.totalorder %s19, 0
    %p187 = por %p185, %p186
    %p188 = scmp.ne.s32.totalorder %s176, %s177
    %p189 = scmp.eq.s32.totalorder %s20, 1
    %p190 = por %p188, %p189
    %p192 = scmp.ne.s32.totalorder %s177, %s191
    %p193 = scmp.eq.s32.totalorder %s20, 0
    %p194 = por %p192, %p193
    %s195 = ssub.s32 %s14, %s21
    %p196 = scmp.eq.s32.totalorder %s195, 0
    %s198 = sadd.s32 %s197, 1
    %s199 = scalar_select %p196, %s197, %s198
    %p202 = pneg %p196
    %p203 = scmp.eq.s32.totalorder %s14, 1
    %p204 = por %p202, %p203
    %p205 = scmp.ne.s32.totalorder %s197, %s200
    %p206 = scmp.eq.s32.totalorder %s14, 0
    %p207 = por %p205, %p206
    %p208 = scmp.ne.s32.totalorder %s197, %s200
    %p209 = scmp.eq.s32.totalorder %s19, 1
    %p210 = por %p208, %p209
    %p211 = scmp.ne.s32.totalorder %s200, %s201
    %p212 = scmp.eq.s32.totalorder %s19, 0
    %p213 = por %p211, %p212
    %p214 = scmp.ne.s32.totalorder %s200, %s201
    %p215 = scmp.eq.s32.totalorder %s20, 1
    %p216 = por %p214, %p215
    %p218 = scmp.ne.s32.totalorder %s201, %s217
    %p219 = scmp.eq.s32.totalorder %s20, 0
    %p220 = por %p218, %p219
    %p221 = scmp.le.s32.totalorder 1, %s14
    %p222 = scmp.lt.s32.totalorder %s14, 3
    %p223 = pnand %p221, %p222
    %p224 = pneg %p223
    // Predicated region
    $region9: #{tpu_custom_call.1} parent=5 // pred_check
      _
    $region10: #{tpu_custom_call.1} parent=5 // pred_check_branch
      %226 = sbr.rel (%p223) target = $region12
    $region11: #{tpu_custom_call.1} parent=5 // pred_region
      %s227 = ssub.s32 %s14, 1
      // Predicated region
      $region13: #{tpu_custom_call.1} parent=11 // pred_check
        %p228 = pneg %p61
      $region14: #{tpu_custom_call.1} parent=11 // pred_check_branch
        %230 = sbr.rel (%p228) target = $region16
      $region15: #{tpu_custom_call.1} parent=11 // pred_region
        _
      $region16: #{tpu_custom_call.1} parent=11 // pred_fallthru
        _
      // Predicated region
      $region17: #{tpu_custom_call.1} parent=11 // pred_check
        %p231 = pneg %p82
      $region18: #{tpu_custom_call.1} parent=11 // pred_check_branch
        %233 = sbr.rel (%p231) target = $region20
      $region19: #{tpu_custom_call.1} parent=11 // pred_region
        _
      $region20: #{tpu_custom_call.1} parent=11 // pred_fallthru
        _
      // Predicated region
      $region21: #{tpu_custom_call.1} parent=11 // pred_check
        %p234 = pneg %p103
      $region22: #{tpu_custom_call.1} parent=11 // pred_check_branch
        %236 = sbr.rel (%p234) target = $region24
      $region23: #{tpu_custom_call.1} parent=11 // pred_region
        _
      $region24: #{tpu_custom_call.1} parent=11 // pred_fallthru
        _
      // Predicated region
      $region25: #{tpu_custom_call.1} parent=11 // pred_check
        %p237 = pneg %p124
      $region26: #{tpu_custom_call.1} parent=11 // pred_check_branch
        %239 = sbr.rel (%p237) target = $region28
      $region27: #{tpu_custom_call.1} parent=11 // pred_region
        _
      $region28: #{tpu_custom_call.1} parent=11 // pred_fallthru
        _
      // Predicated region
      $region29: #{tpu_custom_call.1} parent=11 // pred_check
        %p240 = pneg %p145
      $region30: #{tpu_custom_call.1} parent=11 // pred_check_branch
        %242 = sbr.rel (%p240) target = $region32
      $region31: #{tpu_custom_call.1} parent=11 // pred_region
        _
      $region32: #{tpu_custom_call.1} parent=11 // pred_fallthru
        _
      // Predicated region
      $region33: #{tpu_custom_call.1} parent=11 // pred_check
        %p243 = pneg %p166
      $region34: #{tpu_custom_call.1} parent=11 // pred_check_branch
        %245 = sbr.rel (%p243) target = $region36
      $region35: #{tpu_custom_call.1} parent=11 // pred_region
        _
      $region36: #{tpu_custom_call.1} parent=11 // pred_fallthru
        _
      // Predicated region
      $region37: #{tpu_custom_call.1} parent=11 // pred_check
        %p246 = pneg %p187
      $region38: #{tpu_custom_call.1} parent=11 // pred_check_branch
        %248 = sbr.rel (%p246) target = $region40
      $region39: #{tpu_custom_call.1} parent=11 // pred_region
        _
      $region40: #{tpu_custom_call.1} parent=11 // pred_fallthru
        _
    $region12: #{tpu_custom_call.1} parent=5 // pred_fallthru
      _
    %p249 = scmp.lt.s32.totalorder %s14, 2
    // Predicated region
    $region41: #{tpu_custom_call.1} parent=5 // pred_check
      %p250 = pneg %p249
    $region42: #{tpu_custom_call.1} parent=5 // pred_check_branch
      %252 = sbr.rel (%p250) target = $region44
    $region43: #{tpu_custom_call.1} parent=5 // pred_region
      // Predicated region
      $region45: #{tpu_custom_call.1} parent=43 // pred_check
        %p253 = pneg %p34
      $region46: #{tpu_custom_call.1} parent=43 // pred_check_branch
        %255 = sbr.rel (%p253) target = $region48
      $region47: #{tpu_custom_call.1} parent=43 // pred_region
        %p256 = scmp.lt.s32.totalorder %s14, 1
        %s257 = scalar_select %p256, %s14, 1
        %s258 = smul.addr %s257, 43
        %s259 = smul.addr %s258, 8
        %s260 = scalar_lea.vmem %s0, %s259
      $region48: #{tpu_custom_call.1} parent=43 // pred_fallthru
        _
    $region44: #{tpu_custom_call.1} parent=5 // pred_fallthru
      _
    %p261 = scmp.le.s32.totalorder 1, %s14
    %p262 = scmp.lt.s32.totalorder %s14, 3
    %p263 = pnand %p261, %p262
    %p264 = pneg %p263
    // Predicated region
    $region49: #{tpu_custom_call.1} parent=5 // pred_check
      _
    $region50: #{tpu_custom_call.1} parent=5 // pred_check_branch
      %266 = sbr.rel (%p263) target = $region52
    $region51: #{tpu_custom_call.1} parent=5 // pred_region
      %s267 = ssub.s32 %s14, 1
      %p268 = scmp.lt.s32.totalorder %s19, 1
      %s269 = scalar_select %p268, %s19, 1
      %s270 = smul.addr %s269, 43
      %s271 = smul.addr %s270, 8
      %s272 = scalar_lea.vmem %s0, %s271
      %p273 = pneg %p40
      %p274 = pneg %p37
      %p275 = pneg %p61
      %p276 = pneg %p58
      %p277 = pneg %p82
      %p278 = pneg %p79
      %p279 = pneg %p103
      %p280 = pneg %p100
      %p281 = pneg %p124
      %p282 = pneg %p121
      %p283 = pneg %p145
      %p284 = pneg %p142
      %p285 = pneg %p166
      %p286 = pneg %p163
      %p287 = pneg %p187
      %p288 = pneg %p184
      %p289 = pneg %p213
      %p290 = pneg %p210
      %p291 = scmp.lt.s32.totalorder %s19, 1
      %s292 = scalar_select %p291, %s19, 1
      %s293 = smul.addr %s292, 36
      %s294 = smul.addr %s293, 8
      %s295 = scalar_lea.vmem %s8, %s294
      %p296 = scmp.lt.s32.totalorder %s19, 1
      %s297 = scalar_select %p296, %s19, 1
      %s298 = smul.addr %s297, 43
      %s299 = smul.addr %s298, 8
      %s300 = scalar_lea.vmem %s0, %s299
      %p301 = scmp.lt.s32.totalorder %s19, 1
      %s302 = scalar_select %p301, %s19, 1
      %s303 = smul.addr %s302, 36
      %s304 = smul.addr %s303, 8
      %s305 = scalar_lea.vmem %s8, %s304
      %vm307 = vcmask 64512
      %308 = vst.msk [vmem:[#allocation2] sm:$0xff] %vm307, 0.0
      %309 = vst.msk [vmem:[#allocation2 + $0x8] sm:$0xff] %vm307, 0.0
      %310 = vst.msk [vmem:[#allocation2 + $0x10] sm:$0xff] %vm307, 0.0
      %311 = vst.msk [vmem:[#allocation2 + $0x18] sm:$0xff] %vm307, 0.0
      %312 = vst.msk [vmem:[#allocation2 + $0x20] sm:$0xff] %vm307, 0.0
      %313 = vst.msk [vmem:[#allocation2 + $0x28] sm:$0xff] %vm307, 0.0
      %314 = vst.msk [vmem:[#allocation2 + $0x30] sm:$0xff] %vm307, 0.0
      %315 = vst.msk [vmem:[#allocation2 + $0x38] sm:$0xff] %vm307, 0.0
      %316 = vst.msk [vmem:[#allocation2 + $0x40] sm:$0xff] %vm307, 0.0
      %317 = vst.msk [vmem:[#allocation2 + $0x48] sm:$0xff] %vm307, 0.0
      %318 = vst.msk [vmem:[#allocation2 + $0x50] sm:$0xff] %vm307, 0.0
      %319 = vst.msk [vmem:[#allocation2 + $0x58] sm:$0xff] %vm307, 0.0
      %320 = vst.msk [vmem:[#allocation2 + $0x60] sm:$0xff] %vm307, 0.0
      %321 = vst.msk [vmem:[#allocation2 + $0x68] sm:$0xff] %vm307, 0.0
      %322 = vst.msk [vmem:[#allocation2 + $0x70] sm:$0xff] %vm307, 0.0
      %323 = vst.msk [vmem:[#allocation2 + $0x78] sm:$0xff] %vm307, 0.0
      %324 = vst.msk [vmem:[#allocation2 + $0x80] sm:$0xff] %vm307, 0.0
      %325 = vst.msk [vmem:[#allocation2 + $0x88] sm:$0xff] %vm307, 0.0
      %326 = vst.msk [vmem:[#allocation2 + $0x90] sm:$0xff] %vm307, 0.0
      %327 = vst.msk [vmem:[#allocation2 + $0x98] sm:$0xff] %vm307, 0.0
      %328 = vst.msk [vmem:[#allocation2 + $0xa0] sm:$0xff] %vm307, 0.0
      %329 = vst.msk [vmem:[#allocation2 + $0xa8] sm:$0xff] %vm307, 0.0
      %330 = vst.msk [vmem:[#allocation2 + $0xb0] sm:$0xff] %vm307, 0.0
      %331 = vst.msk [vmem:[#allocation2 + $0xb8] sm:$0xff] %vm307, 0.0
      %332 = vst.msk [vmem:[#allocation2 + $0xc0] sm:$0xff] %vm307, 0.0
      %333 = vst.msk [vmem:[#allocation2 + $0xc8] sm:$0xff] %vm307, 0.0
      %334 = vst.msk [vmem:[#allocation2 + $0xd0] sm:$0xff] %vm307, 0.0
      %335 = vst.msk [vmem:[#allocation2 + $0xd8] sm:$0xff] %vm307, 0.0
      %336 = vst.msk [vmem:[#allocation2 + $0xe0] sm:$0xff] %vm307, 0.0
      %337 = vst.msk [vmem:[#allocation2 + $0xe8] sm:$0xff] %vm307, 0.0
      %338 = vst.msk [vmem:[#allocation2 + $0xf0] sm:$0xff] %vm307, 0.0
      %339 = vst.msk [vmem:[#allocation2 + $0xf8] sm:$0xff] %vm307, 0.0
      %340 = vst.msk [vmem:[#allocation2 + $0x100] sm:$0xff] %vm307, 0.0
      %341 = vst.msk [vmem:[#allocation2 + $0x108] sm:$0xff] %vm307, 0.0
      %342 = vst.msk [vmem:[#allocation2 + $0x110] sm:$0xff] %vm307, 0.0
      %343 = vst.msk [vmem:[#allocation2 + $0x118] sm:$0xff] %vm307, 0.0
      %v344 = vld [vmem:[%s300] sm:$0xff]
      %v345 = vld [vmem:[%s300 + $0x8] sm:$0xff]
      %v346 = vld [vmem:[%s300 + $0x10] sm:$0xff]
      %v347 = vld [vmem:[%s300 + $0x18] sm:$0xff]
      %v348 = vld [vmem:[%s300 + $0x20] sm:$0xff]
      %v349 = vld [vmem:[%s300 + $0x28] sm:$0xff]
      %v350 = vld [vmem:[%s300 + $0x30] sm:$0xff]
      %v351 = vld [vmem:[%s300 + $0x38] sm:$0xff]
      %v352 = vld [vmem:[%s300 + $0x40] sm:$0xff]
      %v353 = vld [vmem:[%s300 + $0x48] sm:$0xff]
      %v354 = vld [vmem:[%s300 + $0x50] sm:$0xff]
      %v355 = vld [vmem:[%s300 + $0x58] sm:$0xff]
      %v356 = vld [vmem:[%s300 + $0x60] sm:$0xff]
      %v357 = vld [vmem:[%s300 + $0x68] sm:$0xff]
      %v358 = vld [vmem:[%s300 + $0x70] sm:$0xff]
      %v359 = vld [vmem:[%s300 + $0x78] sm:$0xff]
      %v360 = vld [vmem:[%s300 + $0x80] sm:$0xff]
      %v361 = vld [vmem:[%s300 + $0x88] sm:$0xff]
      %v362 = vld [vmem:[%s300 + $0x90] sm:$0xff]
      %v363 = vld [vmem:[%s300 + $0x98] sm:$0xff]
      %v364 = vld [vmem:[%s300 + $0xa0] sm:$0xff]
      %v365 = vld [vmem:[%s300 + $0xa8] sm:$0xff]
      %v366 = vld [vmem:[%s300 + $0xb0] sm:$0xff]
      %v367 = vld [vmem:[%s300 + $0xb8] sm:$0xff]
      %v368 = vld [vmem:[%s300 + $0xc0] sm:$0xff]
      %v369 = vld [vmem:[%s300 + $0xc8] sm:$0xff]
      %v370 = vld [vmem:[%s300 + $0xd0] sm:$0xff]
      %v371 = vld [vmem:[%s300 + $0xd8] sm:$0xff]
      %v372 = vld [vmem:[%s300 + $0xe0] sm:$0xff]
      %v373 = vld [vmem:[%s300 + $0xe8] sm:$0xff]
      %v374 = vld [vmem:[%s300 + $0xf0] sm:$0xff]
      %v375 = vld [vmem:[%s300 + $0xf8] sm:$0xff]
      %v376 = vld [vmem:[%s300 + $0x100] sm:$0xff]
      %v377 = vld [vmem:[%s300 + $0x108] sm:$0xff]
      %v378 = vld [vmem:[%s300 + $0x110] sm:$0xff]
      %v379 = vld [vmem:[%s300 + $0x118] sm:$0xff]
      %v380 = vpack.c.bf16 %v345, %v344
      %v381 = vpack.c.bf16 %v347, %v346
      %v382 = vpack.c.bf16 %v349, %v348
      %v383 = vpack.c.bf16 %v351, %v350
      %v384 = vpack.c.bf16 %v353, %v352
      %v385 = vpack.c.bf16 %v355, %v354
      %v386 = vpack.c.bf16 %v357, %v356
      %v387 = vpack.c.bf16 %v359, %v358
      %v388 = vpack.c.bf16 %v361, %v360
      %v389 = vpack.c.bf16 %v363, %v362
      %v390 = vpack.c.bf16 %v365, %v364
      %v391 = vpack.c.bf16 %v367, %v366
      %v392 = vpack.c.bf16 %v369, %v368
      %v393 = vpack.c.bf16 %v371, %v370
      %v394 = vpack.c.bf16 %v373, %v372
      %v395 = vpack.c.bf16 %v375, %v374
      %v396 = vpack.c.bf16 %v377, %v376
      %v397 = vpack.c.bf16 %v379, %v378
      %v398 = vld [vmem:[#allocation2] sm:$0xff]
      %v399 = vld [vmem:[#allocation2 + $0x8] sm:$0xff]
      %v400 = vld [vmem:[#allocation2 + $0x10] sm:$0xff]
      %v401 = vld [vmem:[#allocation2 + $0x18] sm:$0xff]
      %v402 = vld [vmem:[#allocation2 + $0x20] sm:$0xff]
      %v403 = vld [vmem:[#allocation2 + $0x28] sm:$0xff]
      %v404 = vld [vmem:[#allocation2 + $0x30] sm:$0xff]
      %v405 = vld [vmem:[#allocation2 + $0x38] sm:$0xff]
      %v406 = vld [vmem:[#allocation2 + $0x40] sm:$0xff]
      %v407 = vld [vmem:[#allocation2 + $0x48] sm:$0xff]
      %v408 = vld [vmem:[#allocation2 + $0x50] sm:$0xff]
      %v409 = vld [vmem:[#allocation2 + $0x58] sm:$0xff]
      %v410 = vld [vmem:[#allocation2 + $0x60] sm:$0xff]
      %v411 = vld [vmem:[#allocation2 + $0x68] sm:$0xff]
      %v412 = vld [vmem:[#allocation2 + $0x70] sm:$0xff]
      %v413 = vld [vmem:[#allocation2 + $0x78] sm:$0xff]
      %v414 = vld [vmem:[#allocation2 + $0x80] sm:$0xff]
      %v415 = vld [vmem:[#allocation2 + $0x88] sm:$0xff]
      %v416 = vld [vmem:[#allocation2 + $0x90] sm:$0xff]
      %v417 = vld [vmem:[#allocation2 + $0x98] sm:$0xff]
      %v418 = vld [vmem:[#allocation2 + $0xa0] sm:$0xff]
      %v419 = vld [vmem:[#allocation2 + $0xa8] sm:$0xff]
      %v420 = vld [vmem:[#allocation2 + $0xb0] sm:$0xff]
      %v421 = vld [vmem:[#allocation2 + $0xb8] sm:$0xff]
      %v422 = vld [vmem:[#allocation2 + $0xc0] sm:$0xff]
      %v423 = vld [vmem:[#allocation2 + $0xc8] sm:$0xff]
      %v424 = vld [vmem:[#allocation2 + $0xd0] sm:$0xff]
      %v425 = vld [vmem:[#allocation2 + $0xd8] sm:$0xff]
      %v426 = vld [vmem:[#allocation2 + $0xe0] sm:$0xff]
      %v427 = vld [vmem:[#allocation2 + $0xe8] sm:$0xff]
      %v428 = vld [vmem:[#allocation2 + $0xf0] sm:$0xff]
      %v429 = vld [vmem:[#allocation2 + $0xf8] sm:$0xff]
      %v430 = vld [vmem:[#allocation2 + $0x100] sm:$0xff]
      %v431 = vld [vmem:[#allocation2 + $0x108] sm:$0xff]
      %v432 = vld [vmem:[#allocation2 + $0x110] sm:$0xff]
      %v433 = vld [vmem:[#allocation2 + $0x118] sm:$0xff]
      %v434 = vld [vmem:[%s1] sm:$0x3]
      %vm435 = vcmask 31744
      %v437 = vsel %vm435, %v380, 0
      %v440 = vsel %vm435, %v381, 0
      %v443 = vsel %vm435, %v382, 0
      %v446 = vsel %vm435, %v383, 0
      %v449 = vsel %vm435, %v384, 0
      %v452 = vsel %vm435, %v385, 0
      %v455 = vsel %vm435, %v386, 0
      %v458 = vsel %vm435, %v387, 0
      %v461 = vsel %vm435, %v388, 0
      %v464 = vsel %vm435, %v389, 0
      %v467 = vsel %vm435, %v390, 0
      %v470 = vsel %vm435, %v391, 0
      %v473 = vsel %vm435, %v392, 0
      %v476 = vsel %vm435, %v393, 0
      %v479 = vsel %vm435, %v394, 0
      %v482 = vsel %vm435, %v395, 0
      %v485 = vsel %vm435, %v396, 0
      %v488 = vsel %vm435, %v397, 0
      %vm490 = vcmask 1041408
      %v492 = vsel %vm490, %v434, 0
      %494 = vmatprep.subr.bf16.mxu0 0
      %495 = vmatpush1.bf16.msra.mxu0 %v492
      %496 = vmatprep.subr.bf16.mxu0 0
      %497 = vmatpush1.bf16.msra.mxu0 0
      %498 = vmatprep.subr.bf16.mxu0 0
      %499 = vmatpush1.bf16.msra.mxu0 0
      %500 = vmatprep.subr.bf16.mxu0 0
      %501 = vmatpush1.bf16.msra.mxu0 0
      %502 = vmatprep.subr.bf16.mxu0 0
      %503 = vmatpush1.bf16.msra.mxu0 0
      %504 = vmatprep.subr.bf16.mxu0 0
      %505 = vmatpush1.bf16.msra.mxu0 0
      %506 = vmatprep.subr.bf16.mxu0 0
      %507 = vmatpush1.bf16.msra.mxu0 0
      %508 = vmatprep.subr.bf16.mxu0 0
      %509 = vmatpush1.bf16.msra.mxu0 0
      %510 = vmatprep.subr.bf16.mxu0 0
      %511 = vmatpush1.bf16.msra.mxu0 0
      %512 = vmatprep.subr.bf16.mxu0 0
      %513 = vmatpush1.bf16.msra.mxu0 0
      %514 = vmatprep.subr.bf16.mxu0 0
      %515 = vmatpush1.bf16.msra.mxu0 0
      %516 = vmatprep.subr.bf16.mxu0 0
      %517 = vmatpush1.bf16.msra.mxu0 0
      %518 = vmatprep.subr.bf16.mxu0 0
      %519 = vmatpush1.bf16.msra.mxu0 0
      %520 = vmatprep.subr.bf16.mxu0 0
      %521 = vmatpush1.bf16.msra.mxu0 0
      %522 = vmatprep.subr.bf16.mxu0 0
      %523 = vmatpush1.bf16.msra.mxu0 0
      %524 = vmatprep.subr.bf16.mxu0 0
      %525 = vmatpush1.bf16.msra.mxu0 0
      %526 = vmatprep.mubr.bf16.mxu0 0
      %527 = vmatmul.mubr.bf16.gmra.mrb[0].mxu0 %v437
      %v528 = vpop.f32.mrb[0].mxu0
      %v529 = vadd.f32 0.0, %v528
      %v530 = vpop.f32.mrb[0].mxu0
      %v531 = vpop.f32.mrb[0].mxu0
      %v532 = vadd.f32 0.0, %v531
      %v533 = vpop.f32.mrb[0].mxu0
      %534 = vmatprep.mubr.bf16.mxu0 0
      %535 = vmatmul.mubr.bf16.gmra.mrb[0].mxu0 %v440
      %v536 = vpop.f32.mrb[0].mxu0
      %v537 = vadd.f32 0.0, %v536
      %v538 = vpop.f32.mrb[0].mxu0
      %v539 = vpop.f32.mrb[0].mxu0
      %v540 = vadd.f32 0.0, %v539
      %v541 = vpop.f32.mrb[0].mxu0
      %542 = vmatprep.mubr.bf16.mxu0 0
      %543 = vmatmul.mubr.bf16.gmra.mrb[0].mxu0 %v443
      %v544 = vpop.f32.mrb[0].mxu0
      %v545 = vadd.f32 0.0, %v544
      %v546 = vpop.f32.mrb[0].mxu0
      %v547 = vpop.f32.mrb[0].mxu0
      %v548 = vadd.f32 0.0, %v547
      %v549 = vpop.f32.mrb[0].mxu0
      %550 = vmatprep.mubr.bf16.mxu0 0
      %551 = vmatmul.mubr.bf16.gmra.mrb[0].mxu0 %v446
      %v552 = vpop.f32.mrb[0].mxu0
      %v553 = vadd.f32 0.0, %v552
      %v554 = vpop.f32.mrb[0].mxu0
      %v555 = vpop.f32.mrb[0].mxu0
      %v556 = vadd.f32 0.0, %v555
      %v557 = vpop.f32.mrb[0].mxu0
      %558 = vmatprep.mubr.bf16.mxu0 0
      %559 = vmatmul.mubr.bf16.gmra.mrb[0].mxu0 %v449
      %v560 = vpop.f32.mrb[0].mxu0
      %v561 = vadd.f32 0.0, %v560
      %v562 = vpop.f32.mrb[0].mxu0
      %v563 = vpop.f32.mrb[0].mxu0
      %v564 = vadd.f32 0.0, %v563
      %v565 = vpop.f32.mrb[0].mxu0
      %566 = vmatprep.mubr.bf16.mxu0 0
      %567 = vmatmul.mubr.bf16.gmra.mrb[0].mxu0 %v452
      %v568 = vpop.f32.mrb[0].mxu0
      %v569 = vadd.f32 0.0, %v568
      %v570 = vpop.f32.mrb[0].mxu0
      %v571 = vpop.f32.mrb[0].mxu0
      %v572 = vadd.f32 0.0, %v571
      %v573 = vpop.f32.mrb[0].mxu0
      %574 = vmatprep.mubr.bf16.mxu0 0
      %575 = vmatmul.mubr.bf16.gmra.mrb[0].mxu0 %v455
      %v576 = vpop.f32.mrb[0].mxu0
      %v577 = vadd.f32 0.0, %v576
      %v578 = vpop.f32.mrb[0].mxu0
      %v579 = vpop.f32.mrb[0].mxu0
      %v580 = vadd.f32 0.0, %v579
      %v581 = vpop.f32.mrb[0].mxu0
      %582 = vmatprep.mubr.bf16.mxu0 0
      %583 = vmatmul.mubr.bf16.gmra.mrb[0].mxu0 %v458
      %v584 = vpop.f32.mrb[0].mxu0
      %v585 = vadd.f32 0.0, %v584
      %v586 = vpop.f32.mrb[0].mxu0
      %v587 = vpop.f32.mrb[0].mxu0
      %v588 = vadd.f32 0.0, %v587
      %v589 = vpop.f32.mrb[0].mxu0
      %590 = vmatprep.mubr.bf16.mxu0 0
      %591 = vmatmul.mubr.bf16.gmra.mrb[0].mxu0 %v461
      %v592 = vpop.f32.mrb[0].mxu0
      %v593 = vadd.f32 0.0, %v592
      %v594 = vpop.f32.mrb[0].mxu0
      %v595 = vpop.f32.mrb[0].mxu0
      %v596 = vadd.f32 0.0, %v595
      %v597 = vpop.f32.mrb[0].mxu0
      %598 = vmatprep.mubr.bf16.mxu0 0
      %599 = vmatmul.mubr.bf16.gmra.mrb[0].mxu0 %v464
      %v600 = vpop.f32.mrb[0].mxu0
      %v601 = vadd.f32 0.0, %v600
      %v602 = vpop.f32.mrb[0].mxu0
      %v603 = vpop.f32.mrb[0].mxu0
      %v604 = vadd.f32 0.0, %v603
      %v605 = vpop.f32.mrb[0].mxu0
      %606 = vmatprep.mubr.bf16.mxu0 0
      %607 = vmatmul.mubr.bf16.gmra.mrb[0].mxu0 %v467
      %v608 = vpop.f32.mrb[0].mxu0
      %v609 = vadd.f32 0.0, %v608
      %v610 = vpop.f32.mrb[0].mxu0
      %v611 = vpop.f32.mrb[0].mxu0
      %v612 = vadd.f32 0.0, %v611
      %v613 = vpop.f32.mrb[0].mxu0
      %614 = vmatprep.mubr.bf16.mxu0 0
      %615 = vmatmul.mubr.bf16.gmra.mrb[0].mxu0 %v470
      %v616 = vpop.f32.mrb[0].mxu0
      %v617 = vadd.f32 0.0, %v616
      %v618 = vpop.f32.mrb[0].mxu0
      %v619 = vpop.f32.mrb[0].mxu0
      %v620 = vadd.f32 0.0, %v619
      %v621 = vpop.f32.mrb[0].mxu0
      %622 = vmatprep.mubr.bf16.mxu0 0
      %623 = vmatmul.mubr.bf16.gmra.mrb[0].mxu0 %v473
      %v624 = vpop.f32.mrb[0].mxu0
      %v625 = vadd.f32 0.0, %v624
      %v626 = vpop.f32.mrb[0].mxu0
      %v627 = vpop.f32.mrb[0].mxu0
      %v628 = vadd.f32 0.0, %v627
      %v629 = vpop.f32.mrb[0].mxu0
      %630 = vmatprep.mubr.bf16.mxu0 0
      %631 = vmatmul.mubr.bf16.gmra.mrb[0].mxu0 %v476
      %v632 = vpop.f32.mrb[0].mxu0
      %v633 = vadd.f32 0.0, %v632
      %v634 = vpop.f32.mrb[0].mxu0
      %v635 = vpop.f32.mrb[0].mxu0
      %v636 = vadd.f32 0.0, %v635
      %v637 = vpop.f32.mrb[0].mxu0
      %638 = vmatprep.mubr.bf16.mxu0 0
      %639 = vmatmul.mubr.bf16.gmra.mrb[0].mxu0 %v479
      %v640 = vpop.f32.mrb[0].mxu0
      %v641 = vadd.f32 0.0, %v640
      %v642 = vpop.f32.mrb[0].mxu0
      %v643 = vpop.f32.mrb[0].mxu0
      %v644 = vadd.f32 0.0, %v643
      %v645 = vpop.f32.mrb[0].mxu0
      %646 = vmatprep.mubr.bf16.mxu0 0
      %647 = vmatmul.mubr.bf16.gmra.mrb[0].mxu0 %v482
      %v648 = vpop.f32.mrb[0].mxu0
      %v649 = vadd.f32 0.0, %v648
      %v650 = vpop.f32.mrb[0].mxu0
      %v651 = vpop.f32.mrb[0].mxu0
      %v652 = vadd.f32 0.0, %v651
      %v653 = vpop.f32.mrb[0].mxu0
      %654 = vmatprep.mubr.bf16.mxu0 0
      %655 = vmatmul.mubr.bf16.gmra.mrb[0].mxu0 %v485
      %v656 = vpop.f32.mrb[0].mxu0
      %v657 = vadd.f32 0.0, %v656
      %v658 = vpop.f32.mrb[0].mxu0
      %v659 = vpop.f32.mrb[0].mxu0
      %v660 = vadd.f32 0.0, %v659
      %v661 = vpop.f32.mrb[0].mxu0
      %662 = vmatprep.mubr.bf16.mxu0 0
      %663 = vmatmul.mubr.bf16.gmra.mrb[0].mxu0 %v488
      %v664 = vpop.f32.mrb[0].mxu0
      %v665 = vadd.f32 0.0, %v664
      %v666 = vpop.f32.mrb[0].mxu0
      %v667 = vpop.f32.mrb[0].mxu0
      %v668 = vadd.f32 0.0, %v667
      %v669 = vpop.f32.mrb[0].mxu0
      %670 = vdwg.mxu0
      %v671 = vadd.f32 %v398, %v529
      %v672 = vadd.f32 %v399, %v532
      %v673 = vadd.f32 %v400, %v537
      %v674 = vadd.f32 %v401, %v540
      %v675 = vadd.f32 %v402, %v545
      %v676 = vadd.f32 %v403, %v548
      %v677 = vadd.f32 %v404, %v553
      %v678 = vadd.f32 %v405, %v556
      %v679 = vadd.f32 %v406, %v561
      %v680 = vadd.f32 %v407, %v564
      %v681 = vadd.f32 %v408, %v569
      %v682 = vadd.f32 %v409, %v572
      %v683 = vadd.f32 %v410, %v577
      %v684 = vadd.f32 %v411, %v580
      %v685 = vadd.f32 %v412, %v585
      %v686 = vadd.f32 %v413, %v588
      %v687 = vadd.f32 %v414, %v593
      %v688 = vadd.f32 %v415, %v596
      %v689 = vadd.f32 %v416, %v601
      %v690 = vadd.f32 %v417, %v604
      %v691 = vadd.f32 %v418, %v609
      %v692 = vadd.f32 %v419, %v612
      %v693 = vadd.f32 %v420, %v617
      %v694 = vadd.f32 %v421, %v620
      %v695 = vadd.f32 %v422, %v625
      %v696 = vadd.f32 %v423, %v628
      %v697 = vadd.f32 %v424, %v633
      %v698 = vadd.f32 %v425, %v636
      %v699 = vadd.f32 %v426, %v641
      %v700 = vadd.f32 %v427, %v644
      %v701 = vadd.f32 %v428, %v649
      %v702 = vadd.f32 %v429, %v652
      %v703 = vadd.f32 %v430, %v657
      %v704 = vadd.f32 %v431, %v660
      %v705 = vadd.f32 %v432, %v665
      %v706 = vadd.f32 %v433, %v668
      %707 = vst.msk [vmem:[#allocation2] sm:$0xff] %vm307, %v671
      %708 = vst.msk [vmem:[#allocation2 + $0x8] sm:$0xff] %vm307, %v672
      %709 = vst.msk [vmem:[#allocation2 + $0x10] sm:$0xff] %vm307, %v673
      %710 = vst.msk [vmem:[#allocation2 + $0x18] sm:$0xff] %vm307, %v674
      %711 = vst.msk [vmem:[#allocation2 + $0x20] sm:$0xff] %vm307, %v675
      %712 = vst.msk [vmem:[#allocation2 + $0x28] sm:$0xff] %vm307, %v676
      %713 = vst.msk [vmem:[#allocation2 + $0x30] sm:$0xff] %vm307, %v677
      %714 = vst.msk [vmem:[#allocation2 + $0x38] sm:$0xff] %vm307, %v678
      %715 = vst.msk [vmem:[#allocation2 + $0x40] sm:$0xff] %vm307, %v679
      %716 = vst.msk [vmem:[#allocation2 + $0x48] sm:$0xff] %vm307, %v680
      %717 = vst.msk [vmem:[#allocation2 + $0x50] sm:$0xff] %vm307, %v681
      %718 = vst.msk [vmem:[#allocation2 + $0x58] sm:$0xff] %vm307, %v682
      %719 = vst.msk [vmem:[#allocation2 + $0x60] sm:$0xff] %vm307, %v683
      %720 = vst.msk [vmem:[#allocation2 + $0x68] sm:$0xff] %vm307, %v684
      %721 = vst.msk [vmem:[#allocation2 + $0x70] sm:$0xff] %vm307, %v685
      %722 = vst.msk [vmem:[#allocation2 + $0x78] sm:$0xff] %vm307, %v686
      %723 = vst.msk [vmem:[#allocation2 + $0x80] sm:$0xff] %vm307, %v687
      %724 = vst.msk [vmem:[#allocation2 + $0x88] sm:$0xff] %vm307, %v688
      %725 = vst.msk [vmem:[#allocation2 + $0x90] sm:$0xff] %vm307, %v689
      %726 = vst.msk [vmem:[#allocation2 + $0x98] sm:$0xff] %vm307, %v690
      %727 = vst.msk [vmem:[#allocation2 + $0xa0] sm:$0xff] %vm307, %v691
      %728 = vst.msk [vmem:[#allocation2 + $0xa8] sm:$0xff] %vm307, %v692
      %729 = vst.msk [vmem:[#allocation2 + $0xb0] sm:$0xff] %vm307, %v693
      %730 = vst.msk [vmem:[#allocation2 + $0xb8] sm:$0xff] %vm307, %v694
      %731 = vst.msk [vmem:[#allocation2 + $0xc0] sm:$0xff] %vm307, %v695
      %732 = vst.msk [vmem:[#allocation2 + $0xc8] sm:$0xff] %vm307, %v696
      %733 = vst.msk [vmem:[#allocation2 + $0xd0] sm:$0xff] %vm307, %v697
      %734 = vst.msk [vmem:[#allocation2 + $0xd8] sm:$0xff] %vm307, %v698
      %735 = vst.msk [vmem:[#allocation2 + $0xe0] sm:$0xff] %vm307, %v699
      %736 = vst.msk [vmem:[#allocation2 + $0xe8] sm:$0xff] %vm307, %v700
      %737 = vst.msk [vmem:[#allocation2 + $0xf0] sm:$0xff] %vm307, %v701
      %738 = vst.msk [vmem:[#allocation2 + $0xf8] sm:$0xff] %vm307, %v702
      %739 = vst.msk [vmem:[#allocation2 + $0x100] sm:$0xff] %vm307, %v703
      %740 = vst.msk [vmem:[#allocation2 + $0x108] sm:$0xff] %vm307, %v704
      %741 = vst.msk [vmem:[#allocation2 + $0x110] sm:$0xff] %vm307, %v705
      %742 = vst.msk [vmem:[#allocation2 + $0x118] sm:$0xff] %vm307, %v706
      %v743 = vld [vmem:[%s300 + $0x1] sm:$0xff]
      %v744 = vld [vmem:[%s300 + $0x9] sm:$0xff]
      %v745 = vld [vmem:[%s300 + $0x11] sm:$0xff]
      %v746 = vld [vmem:[%s300 + $0x19] sm:$0xff]
      %v747 = vld [vmem:[%s300 + $0x21] sm:$0xff]
      %v748 = vld [vmem:[%s300 + $0x29] sm:$0xff]
      %v749 = vld [vmem:[%s300 + $0x31] sm:$0xff]
      %v750 = vld [vmem:[%s300 + $0x39] sm:$0xff]
      %v751 = vld [vmem:[%s300 + $0x41] sm:$0xff]
      %v752 = vld [vmem:[%s300 + $0x49] sm:$0xff]
      %v753 = vld [vmem:[%s300 + $0x51] sm:$0xff]
      %v754 = vld [vmem:[%s300 + $0x59] sm:$0xff]
      %v755 = vld [vmem:[%s300 + $0x61] sm:$0xff]
      %v756 = vld [vmem:[%s300 + $0x69] sm:$0xff]
      %v757 = vld [vmem:[%s300 + $0x71] sm:$0xff]
      %v758 = vld [vmem:[%s300 + $0x79] sm:$0xff]
      %v759 = vld [vmem:[%s300 + $0x81] sm:$0xff]
      %v760 = vld [vmem:[%s300 + $0x89] sm:$0xff]
      %v761 = vld [vmem:[%s300 + $0x91] sm:$0xff]
      %v762 = vld [vmem:[%s300 + $0x99] sm:$0xff]
      %v763 = vld [vmem:[%s300 + $0xa1] sm:$0xff]
      %v764 = vld [vmem:[%s300 + $0xa9] sm:$0xff]
      %v765 = vld [vmem:[%s300 + $0xb1] sm:$0xff]
      %v766 = vld [vmem:[%s300 + $0xb9] sm:$0xff]
      %v767 = vld [vmem:[%s300 + $0xc1] sm:$0xff]
      %v768 = vld [vmem:[%s300 + $0xc9] sm:$0xff]
      %v769 = vld [vmem:[%s300 + $0xd1] sm:$0xff]
      %v770 = vld [vmem:[%s300 + $0xd9] sm:$0xff]
      %v771 = vld [vmem:[%s300 + $0xe1] sm:$0xff]
      %v772 = vld [vmem:[%s300 + $0xe9] sm:$0xff]
      %v773 = vld [vmem:[%s300 + $0xf1] sm:$0xff]
      %v774 = vld [vmem:[%s300 + $0xf9] sm:$0xff]
      %v775 = vld [vmem:[%s300 + $0x101] sm:$0xff]
      %v776 = vld [vmem:[%s300 + $0x109] sm:$0xff]
      %v777 = vld [vmem:[%s300 + $0x111] sm:$0xff]
      %v778 = vld [vmem:[%s300 + $0x119] sm:$0xff]
      %v779 = vpack.c.bf16 %v744, %v743
      %v780 = vpack.c.bf16 %v746, %v745
      %v781 = vpack.c.bf16 %v748, %v747
      %v782 = vpack.c.bf16 %v750, %v749
      %v783 = vpack.c.bf16 %v752, %v751
      %v784 = vpack.c.bf16 %v754, %v753
      %v785 = vpack.c.bf16 %v756, %v755
      %v786 = vpack.c.bf16 %v758, %v757
      %v787 = vpack.c.bf16 %v760, %v759
      %v788 = vpack.c.bf16 %v762, %v761
      %v789 = vpack.c.bf16 %v764, %v763
      %v790 = vpack.c.bf16 %v766, %v765
      %v791 = vpack.c.bf16 %v768, %v767
      %v792 = vpack.c.bf16 %v770, %v769
      %v793 = vpack.c.bf16 %v772, %v771
      %v794 = vpack.c.bf16 %v774, %v773
      %v795 = vpack.c.bf16 %v776, %v775
      %v796 = vpack.c.bf16 %v778, %v777
      %v797 = vld [vmem:[#allocation2] sm:$0xff]
      %v798 = vld [vmem:[#allocation2 + $0x8] sm:$0xff]
      %v799 = vld [vmem:[#allocation2 + $0x10] sm:$0xff]
      %v800 = vld [vmem:[#allocation2 + $0x18] sm:$0xff]
      %v801 = vld [vmem:[#allocation2 + $0x20] sm:$0xff]
      %v802 = vld [vmem:[#allocation2 + $0x28] sm:$0xff]
      %v803 = vld [vmem:[#allocation2 + $0x30] sm:$0xff]
      %v804 = vld [vmem:[#allocation2 + $0x38] sm:$0xff]
      %v805 = vld [vmem:[#allocation2 + $0x40] sm:$0xff]
      %v806 = vld [vmem:[#allocation2 + $0x48] sm:$0xff]
      %v807 = vld [vmem:[#allocation2 + $0x50] sm:$0xff]
      %v808 = vld [vmem:[#allocation2 + $0x58] sm:$0xff]
      %v809 = vld [vmem:[#allocation2 + $0x60] sm:$0xff]
      %v810 = vld [vmem:[#allocation2 + $0x68] sm:$0xff]
      %v811 = vld [vmem:[#allocation2 + $0x70] sm:$0xff]
      %v812 = vld [vmem:[#allocation2 + $0x78] sm:$0xff]
      %v813 = vld [vmem:[#allocation2 + $0x80] sm:$0xff]
      %v814 = vld [vmem:[#allocation2 + $0x88] sm:$0xff]
      %v815 = vld [vmem:[#allocation2 + $0x90] sm:$0xff]
      %v816 = vld [vmem:[#allocation2 + $0x98] sm:$0xff]
      %v817 = vld [vmem:[#allocation2 + $0xa0] sm:$0xff]
      %v818 = vld [vmem:[#allocation2 + $0xa8] sm:$0xff]
      %v819 = vld [vmem:[#allocation2 + $0xb0] sm:$0xff]
      %v820 = vld [vmem:[#allocation2 + $0xb8] sm:$0xff]
      %v821 = vld [vmem:[#allocation2 + $0xc0] sm:$0xff]
      %v822 = vld [vmem:[#allocation2 + $0xc8] sm:$0xff]
      %v823 = vld [vmem:[#allocation2 + $0xd0] sm:$0xff]
      %v824 = vld [vmem:[#allocation2 + $0xd8] sm:$0xff]
      %v825 = vld [vmem:[#allocation2 + $0xe0] sm:$0xff]
      %v826 = vld [vmem:[#allocation2 + $0xe8] sm:$0xff]
      %v827 = vld [vmem:[#allocation2 + $0xf0] sm:$0xff]
      %v828 = vld [vmem:[#allocation2 + $0xf8] sm:$0xff]
      %v829 = vld [vmem:[#allocation2 + $0x100] sm:$0xff]
      %v830 = vld [vmem:[#allocation2 + $0x108] sm:$0xff]
      %v831 = vld [vmem:[#allocation2 + $0x110] sm:$0xff]
      %v832 = vld [vmem:[#allocation2 + $0x118] sm:$0xff]
      %s833 = scalar_lea.vmem %s1, 2
      %v834 = vld [vmem:[%s833] sm:$0x3]
      %v836 = vsel %vm435, %v779, 0
      %v839 = vsel %vm435, %v780, 0
      %v842 = vsel %vm435, %v781, 0
      %v845 = vsel %vm435, %v782, 0
      %v848 = vsel %vm435, %v783, 0
      %v851 = vsel %vm435, %v784, 0
      %v854 = vsel %vm435, %v785, 0
      %v857 = vsel %vm435, %v786, 0
      %v860 = vsel %vm435, %v787, 0
      %v863 = vsel %vm435, %v788, 0
      %v866 = vsel %vm435, %v789, 0
      %v869 = vsel %vm435, %v790, 0
      %v872 = vsel %vm435, %v791, 0
      %v875 = vsel %vm435, %v792, 0
      %v878 = vsel %vm435, %v793, 0
      %v881 = vsel %vm435, %v794, 0
      %v884 = vsel %vm435, %v795, 0
      %v887 = vsel %vm435, %v796, 0
      %v890 = vsel %vm490, %v834, 0
      %892 = vmatprep.subr.bf16.mxu0 0
      %893 = vmatpush1.bf16.msra.mxu0 %v890
      %894 = vmatprep.subr.bf16.mxu0 0
      %895 = vmatpush1.bf16.msra.mxu0 0
      %896 = vmatprep.subr.bf16.mxu0 0
      %897 = vmatpush1.bf16.msra.mxu0 0
      %898 = vmatprep.subr.bf16.mxu0 0
      %899 = vmatpush1.bf16.msra.mxu0 0
      %900 = vmatprep.subr.bf16.mxu0 0
      %901 = vmatpush1.bf16.msra.mxu0 0
      %902 = vmatprep.subr.bf16.mxu0 0
      %903 = vmatpush1.bf16.msra.mxu0 0
      %904 = vmatprep.subr.bf16.mxu0 0
      %905 = vmatpush1.bf16.msra.mxu0 0
      %906 = vmatprep.subr.bf16.mxu0 0
      %907 = vmatpush1.bf16.msra.mxu0 0
      %908 = vmatprep.subr.bf16.mxu0 0
      %909 = vmatpush1.bf16.msra.mxu0 0
      %910 = vmatprep.subr.bf16.mxu0 0
      %911 = vmatpush1.bf16.msra.mxu0 0
      %912 = vmatprep.subr.bf16.mxu0 0
      %913 = vmatpush1.bf16.msra.mxu0 0
      %914 = vmatprep.subr.bf16.mxu0 0
      %915 = vmatpush1.bf16.msra.mxu0 0
      %916 = vmatprep.subr.bf16.mxu0 0
      %917 = vmatpush1.bf16.msra.mxu0 0
      %918 = vmatprep.subr.bf16.mxu0 0
      %919 = vmatpush1.bf16.msra.mxu0 0
      %920 = vmatprep.subr.bf16.mxu0 0
      %921 = vmatpush1.bf16.msra.mxu0 0
      %922 = vmatprep.subr.bf16.mxu0 0
      %923 = vmatpush1.bf16.msra.mxu0 0
      %924 = vmatprep.mubr.bf16.mxu0 0
      %925 = vmatmul.mubr.bf16.gmra.mrb[0].mxu0 %v836
      %v926 = vpop.f32.mrb[0].mxu0
      %v927 = vadd.f32 0.0, %v926
      %v928 = vpop.f32.mrb[0].mxu0
      %v929 = vpop.f32.mrb[0].mxu0
      %v930 = vadd.f32 0.0, %v929
      %v931 = vpop.f32.mrb[0].mxu0
      %932 = vmatprep.mubr.bf16.mxu0 0
      %933 = vmatmul.mubr.bf16.gmra.mrb[0].mxu0 %v839
      %v934 = vpop.f32.mrb[0].mxu0
      %v935 = vadd.f32 0.0, %v934
      %v936 = vpop.f32.mrb[0].mxu0
      %v937 = vpop.f32.mrb[0].mxu0
      %v938 = vadd.f32 0.0, %v937
      %v939 = vpop.f32.mrb[0].mxu0
      %940 = vmatprep.mubr.bf16.mxu0 0
      %941 = vmatmul.mubr.bf16.gmra.mrb[0].mxu0 %v842
      %v942 = vpop.f32.mrb[0].mxu0
      %v943 = vadd.f32 0.0, %v942
      %v944 = vpop.f32.mrb[0].mxu0
      %v945 = vpop.f32.mrb[0].mxu0
      %v946 = vadd.f32 0.0, %v945
      %v947 = vpop.f32.mrb[0].mxu0
      %948 = vmatprep.mubr.bf16.mxu0 0
      %949 = vmatmul.mubr.bf16.gmra.mrb[0].mxu0 %v845
      %v950 = vpop.f32.mrb[0].mxu0
      %v951 = vadd.f32 0.0, %v950
      %v952 = vpop.f32.mrb[0].mxu0
      %v953 = vpop.f32.mrb[0].mxu0
      %v954 = vadd.f32 0.0, %v953
      %v955 = vpop.f32.mrb[0].mxu0
      %956 = vmatprep.mubr.bf16.mxu0 0
      %957 = vmatmul.mubr.bf16.gmra.mrb[0].mxu0 %v848
      %v958 = vpop.f32.mrb[0].mxu0
      %v959 = vadd.f32 0.0, %v958
      %v960 = vpop.f32.mrb[0].mxu0
      %v961 = vpop.f32.mrb[0].mxu0
      %v962 = vadd.f32 0.0, %v961
      %v963 = vpop.f32.mrb[0].mxu0
      %964 = vmatprep.mubr.bf16.mxu0 0
      %965 = vmatmul.mubr.bf16.gmra.mrb[0].mxu0 %v851
      %v966 = vpop.f32.mrb[0].mxu0
      %v967 = vadd.f32 0.0, %v966
      %v968 = vpop.f32.mrb[0].mxu0
      %v969 = vpop.f32.mrb[0].mxu0
      %v970 = vadd.f32 0.0, %v969
      %v971 = vpop.f32.mrb[0].mxu0
      %972 = vmatprep.mubr.bf16.mxu0 0
      %973 = vmatmul.mubr.bf16.gmra.mrb[0].mxu0 %v854
      %v974 = vpop.f32.mrb[0].mxu0
      %v975 = vadd.f32 0.0, %v974
      %v976 = vpop.f32.mrb[0].mxu0
      %v977 = vpop.f32.mrb[0].mxu0
      %v978 = vadd.f32 0.0, %v977
      %v979 = vpop.f32.mrb[0].mxu0
      %980 = vmatprep.mubr.bf16.mxu0 0
      %981 = vmatmul.mubr.bf16.gmra.mrb[0].mxu0 %v857
      %v982 = vpop.f32.mrb[0].mxu0
      %v983 = vadd.f32 0.0, %v982
      %v984 = vpop.f32.mrb[0].mxu0
      %v985 = vpop.f32.mrb[0].mxu0
      %v986 = vadd.f32 0.0, %v985
      %v987 = vpop.f32.mrb[0].mxu0
      %988 = vmatprep.mubr.bf16.mxu0 0
      %989 = vmatmul.mubr.bf16.gmra.mrb[0].mxu0 %v860
      %v990 = vpop.f32.mrb[0].mxu0
      %v991 = vadd.f32 0.0, %v990
      %v992 = vpop.f32.mrb[0].mxu0
      %v993 = vpop.f32.mrb[0].mxu0
      %v994 = vadd.f32 0.0, %v993
      %v995 = vpop.f32.mrb[0].mxu0
      %996 = vmatprep.mubr.bf16.mxu0 0
      %997 = vmatmul.mubr.bf16.gmra.mrb[0].mxu0 %v863
      %v998 = vpop.f32.mrb[0].mxu0
      %v999 = vadd.f32 0.0, %v998
      %v1000 = vpop.f32.mrb[0].mxu0
      %v1001 = vpop.f32.mrb[0].mxu0
      %v1002 = vadd.f32 0.0, %v1001
      %v1003 = vpop.f32.mrb[0].mxu0
      %1004 = vmatprep.mubr.bf16.mxu0 0
      %1005 = vmatmul.mubr.bf16.gmra.mrb[0].mxu0 %v866
      %v1006 = vpop.f32.mrb[0].mxu0
      %v1007 = vadd.f32 0.0, %v1006
      %v1008 = vpop.f32.mrb[0].mxu0
      %v1009 = vpop.f32.mrb[0].mxu0
      %v1010 = vadd.f32 0.0, %v1009
      %v1011 = vpop.f32.mrb[0].mxu0
      %1012 = vmatprep.mubr.bf16.mxu0 0
      %1013 = vmatmul.mubr.bf16.gmra.mrb[0].mxu0 %v869
      %v1014 = vpop.f32.mrb[0].mxu0
      %v1015 = vadd.f32 0.0, %v1014
      %v1016 = vpop.f32.mrb[0].mxu0
      %v1017 = vpop.f32.mrb[0].mxu0
      %v1018 = vadd.f32 0.0, %v1017
      %v1019 = vpop.f32.mrb[0].mxu0
      %1020 = vmatprep.mubr.bf16.mxu0 0
      %1021 = vmatmul.mubr.bf16.gmra.mrb[0].mxu0 %v872
      %v1022 = vpop.f32.mrb[0].mxu0
      %v1023 = vadd.f32 0.0, %v1022
      %v1024 = vpop.f32.mrb[0].mxu0
      %v1025 = vpop.f32.mrb[0].mxu0
      %v1026 = vadd.f32 0.0, %v1025
      %v1027 = vpop.f32.mrb[0].mxu0
      %1028 = vmatprep.mubr.bf16.mxu0 0
      %1029 = vmatmul.mubr.bf16.gmra.mrb[0].mxu0 %v875
      %v1030 = vpop.f32.mrb[0].mxu0
      %v1031 = vadd.f32 0.0, %v1030
      %v1032 = vpop.f32.mrb[0].mxu0
      %v1033 = vpop.f32.mrb[0].mxu0
      %v1034 = vadd.f32 0.0, %v1033
      %v1035 = vpop.f32.mrb[0].mxu0
      %1036 = vmatprep.mubr.bf16.mxu0 0
      %1037 = vmatmul.mubr.bf16.gmra.mrb[0].mxu0 %v878
      %v1038 = vpop.f32.mrb[0].mxu0
      %v1039 = vadd.f32 0.0, %v1038
      %v1040 = vpop.f32.mrb[0].mxu0
      %v1041 = vpop.f32.mrb[0].mxu0
      %v1042 = vadd.f32 0.0, %v1041
      %v1043 = vpop.f32.mrb[0].mxu0
      %1044 = vmatprep.mubr.bf16.mxu0 0
      %1045 = vmatmul.mubr.bf16.gmra.mrb[0].mxu0 %v881
      %v1046 = vpop.f32.mrb[0].mxu0
      %v1047 = vadd.f32 0.0, %v1046
      %v1048 = vpop.f32.mrb[0].mxu0
      %v1049 = vpop.f32.mrb[0].mxu0
      %v1050 = vadd.f32 0.0, %v1049
      %v1051 = vpop.f32.mrb[0].mxu0
      %1052 = vmatprep.mubr.bf16.mxu0 0
      %1053 = vmatmul.mubr.bf16.gmra.mrb[0].mxu0 %v884
      %v1054 = vpop.f32.mrb[0].mxu0
      %v1055 = vadd.f32 0.0, %v1054
      %v1056 = vpop.f32.mrb[0].mxu0
      %v1057 = vpop.f32.mrb[0].mxu0
      %v1058 = vadd.f32 0.0, %v1057
      %v1059 = vpop.f32.mrb[0].mxu0
      %1060 = vmatprep.mubr.bf16.mxu0 0
      %1061 = vmatmul.mubr.bf16.gmra.mrb[0].mxu0 %v887
      %v1062 = vpop.f32.mrb[0].mxu0
      %v1063 = vadd.f32 0.0, %v1062
      %v1064 = vpop.f32.mrb[0].mxu0
      %v1065 = vpop.f32.mrb[0].mxu0
      %v1066 = vadd.f32 0.0, %v1065
      %v1067 = vpop.f32.mrb[0].mxu0
      %1068 = vdwg.mxu0
      %v1069 = vadd.f32 %v797, %v927
      %v1070 = vadd.f32 %v798, %v930
      %v1071 = vadd.f32 %v799, %v935
      %v1072 = vadd.f32 %v800, %v938
      %v1073 = vadd.f32 %v801, %v943
      %v1074 = vadd.f32 %v802, %v946
      %v1075 = vadd.f32 %v803, %v951
      %v1076 = vadd.f32 %v804, %v954
      %v1077 = vadd.f32 %v805, %v959
      %v1078 = vadd.f32 %v806, %v962
      %v1079 = vadd.f32 %v807, %v967
      %v1080 = vadd.f32 %v808, %v970
      %v1081 = vadd.f32 %v809, %v975
      %v1082 = vadd.f32 %v810, %v978
      %v1083 = vadd.f32 %v811, %v983
      %v1084 = vadd.f32 %v812, %v986
      %v1085 = vadd.f32 %v813, %v991
      %v1086 = vadd.f32 %v814, %v994
      %v1087 = vadd.f32 %v815, %v999
      %v1088 = vadd.f32 %v816, %v1002
      %v1089 = vadd.f32 %v817, %v1007
      %v1090 = vadd.f32 %v818, %v1010
      %v1091 = vadd.f32 %v819, %v1015
      %v1092 = vadd.f32 %v820, %v1018
      %v1093 = vadd.f32 %v821, %v1023
      %v1094 = vadd.f32 %v822, %v1026
      %v1095 = vadd.f32 %v823, %v1031
      %v1096 = vadd.f32 %v824, %v1034
      %v1097 = vadd.f32 %v825, %v1039
      %v1098 = vadd.f32 %v826, %v1042
      %v1099 = vadd.f32 %v827, %v1047
      %v1100 = vadd.f32 %v828, %v1050
      %v1101 = vadd.f32 %v829, %v1055
      %v1102 = vadd.f32 %v830, %v1058
      %v1103 = vadd.f32 %v831, %v1063
      %v1104 = vadd.f32 %v832, %v1066
      %1105 = vst.msk [vmem:[#allocation2] sm:$0xff] %vm307, %v1069
      %1106 = vst.msk [vmem:[#allocation2 + $0x8] sm:$0xff] %vm307, %v1070
      %1107 = vst.msk [vmem:[#allocation2 + $0x10] sm:$0xff] %vm307, %v1071
      %1108 = vst.msk [vmem:[#allocation2 + $0x18] sm:$0xff] %vm307, %v1072
      %1109 = vst.msk [vmem:[#allocation2 + $0x20] sm:$0xff] %vm307, %v1073
      %1110 = vst.msk [vmem:[#allocation2 + $0x28] sm:$0xff] %vm307, %v1074
      %1111 = vst.msk [vmem:[#allocation2 + $0x30] sm:$0xff] %vm307, %v1075
      %1112 = vst.msk [vmem:[#allocation2 + $0x38] sm:$0xff] %vm307, %v1076
      %1113 = vst.msk [vmem:[#allocation2 + $0x40] sm:$0xff] %vm307, %v1077
      %1114 = vst.msk [vmem:[#allocation2 + $0x48] sm:$0xff] %vm307, %v1078
      %1115 = vst.msk [vmem:[#allocation2 + $0x50] sm:$0xff] %vm307, %v1079
      %1116 = vst.msk [vmem:[#allocation2 + $0x58] sm:$0xff] %vm307, %v1080
      %1117 = vst.msk [vmem:[#allocation2 + $0x60] sm:$0xff] %vm307, %v1081
      %1118 = vst.msk [vmem:[#allocation2 + $0x68] sm:$0xff] %vm307, %v1082
      %1119 = vst.msk [vmem:[#allocation2 + $0x70] sm:$0xff] %vm307, %v1083
      %1120 = vst.msk [vmem:[#allocation2 + $0x78] sm:$0xff] %vm307, %v1084
      %1121 = vst.msk [vmem:[#allocation2 + $0x80] sm:$0xff] %vm307, %v1085
      %1122 = vst.msk [vmem:[#allocation2 + $0x88] sm:$0xff] %vm307, %v1086
      %1123 = vst.msk [vmem:[#allocation2 + $0x90] sm:$0xff] %vm307, %v1087
      %1124 = vst.msk [vmem:[#allocation2 + $0x98] sm:$0xff] %vm307, %v1088
      %1125 = vst.msk [vmem:[#allocation2 + $0xa0] sm:$0xff] %vm307, %v1089
      %1126 = vst.msk [vmem:[#allocation2 + $0xa8] sm:$0xff] %vm307, %v1090
      %1127 = vst.msk [vmem:[#allocation2 + $0xb0] sm:$0xff] %vm307, %v1091
      %1128 = vst.msk [vmem:[#allocation2 + $0xb8] sm:$0xff] %vm307, %v1092
      %1129 = vst.msk [vmem:[#allocation2 + $0xc0] sm:$0xff] %vm307, %v1093
      %1130 = vst.msk [vmem:[#allocation2 + $0xc8] sm:$0xff] %vm307, %v1094
      %1131 = vst.msk [vmem:[#allocation2 + $0xd0] sm:$0xff] %vm307, %v1095
      %1132 = vst.msk [vmem:[#allocation2 + $0xd8] sm:$0xff] %vm307, %v1096
      %1133 = vst.msk [vmem:[#allocation2 + $0xe0] sm:$0xff] %vm307, %v1097
      %1134 = vst.msk [vmem:[#allocation2 + $0xe8] sm:$0xff] %vm307, %v1098
      %1135 = vst.msk [vmem:[#allocation2 + $0xf0] sm:$0xff] %vm307, %v1099
      %1136 = vst.msk [vmem:[#allocation2 + $0xf8] sm:$0xff] %vm307, %v1100
      %1137 = vst.msk [vmem:[#allocation2 + $0x100] sm:$0xff] %vm307, %v1101
      %1138 = vst.msk [vmem:[#allocation2 + $0x108] sm:$0xff] %vm307, %v1102
      %1139 = vst.msk [vmem:[#allocation2 + $0x110] sm:$0xff] %vm307, %v1103
      %1140 = vst.msk [vmem:[#allocation2 + $0x118] sm:$0xff] %vm307, %v1104
      %v1141 = vld [vmem:[%s300 + $0x2] sm:$0xff]
      %v1142 = vld [vmem:[%s300 + $0xa] sm:$0xff]
      %v1143 = vld [vmem:[%s300 + $0x12] sm:$0xff]
      %v1144 = vld [vmem:[%s300 + $0x1a] sm:$0xff]
      %v1145 = vld [vmem:[%s300 + $0x22] sm:$0xff]
      %v1146 = vld [vmem:[%s300 + $0x2a] sm:$0xff]
      %v1147 = vld [vmem:[%s300 + $0x32] sm:$0xff]
      %v1148 = vld [vmem:[%s300 + $0x3a] sm:$0xff]
      %v1149 = vld [vmem:[%s300 + $0x42] sm:$0xff]
      %v1150 = vld [vmem:[%s300 + $0x4a] sm:$0xff]
      %v1151 = vld [vmem:[%s300 + $0x52] sm:$0xff]
      %v1152 = vld [vmem:[%s300 + $0x5a] sm:$0xff]
      %v1153 = vld [vmem:[%s300 + $0x62] sm:$0xff]
      %v1154 = vld [vmem:[%s300 + $0x6a] sm:$0xff]
      %v1155 = vld [vmem:[%s300 + $0x72] sm:$0xff]
      %v1156 = vld [vmem:[%s300 + $0x7a] sm:$0xff]
      %v1157 = vld [vmem:[%s300 + $0x82] sm:$0xff]
      %v1158 = vld [vmem:[%s300 + $0x8a] sm:$0xff]
      %v1159 = vld [vmem:[%s300 + $0x92] sm:$0xff]
      %v1160 = vld [vmem:[%s300 + $0x9a] sm:$0xff]
      %v1161 = vld [vmem:[%s300 + $0xa2] sm:$0xff]
      %v1162 = vld [vmem:[%s300 + $0xaa] sm:$0xff]
      %v1163 = vld [vmem:[%s300 + $0xb2] sm:$0xff]
      %v1164 = vld [vmem:[%s300 + $0xba] sm:$0xff]
      %v1165 = vld [vmem:[%s300 + $0xc2] sm:$0xff]
      %v1166 = vld [vmem:[%s300 + $0xca] sm:$0xff]
      %v1167 = vld [vmem:[%s300 + $0xd2] sm:$0xff]
      %v1168 = vld [vmem:[%s300 + $0xda] sm:$0xff]
      %v1169 = vld [vmem:[%s300 + $0xe2] sm:$0xff]
      %v1170 = vld [vmem:[%s300 + $0xea] sm:$0xff]
      %v1171 = vld [vmem:[%s300 + $0xf2] sm:$0xff]
      %v1172 = vld [vmem:[%s300 + $0xfa] sm:$0xff]
      %v1173 = vld [vmem:[%s300 + $0x102] sm:$0xff]
      %v1174 = vld [vmem:[%s300 + $0x10a] sm:$0xff]
      %v1175 = vld [vmem:[%s300 + $0x112] sm:$0xff]
      %v1176 = vld [vmem:[%s300 + $0x11a] sm:$0xff]
      %v1177 = vpack.c.bf16 %v1142, %v1141
      %v1178 = vpack.c.bf16 %v1144, %v1143
      %v1179 = vpack.c.bf16 %v1146, %v1145
      %v1180 = vpack.c.bf16 %v1148, %v1147
      %v1181 = vpack.c.bf16 %v1150, %v1149
      %v1182 = vpack.c.bf16 %v1152, %v1151
      %v1183 = vpack.c.bf16 %v1154, %v1153
      %v1184 = vpack.c.bf16 %v1156, %v1155
      %v1185 = vpack.c.bf16 %v1158, %v1157
      %v1186 = vpack.c.bf16 %v1160, %v1159
      %v1187 = vpack.c.bf16 %v1162, %v1161
      %v1188 = vpack.c.bf16 %v1164, %v1163
      %v1189 = vpack.c.bf16 %v1166, %v1165
      %v1190 = vpack.c.bf16 %v1168, %v1167
      %v1191 = vpack.c.bf16 %v1170, %v1169
      %v1192 = vpack.c.bf16 %v1172, %v1171
      %v1193 = vpack.c.bf16 %v1174, %v1173
      %v1194 = vpack.c.bf16 %v1176, %v1175
      %v1195 = vld [vmem:[#allocation2] sm:$0xff]
      %v1196 = vld [vmem:[#allocation2 + $0x8] sm:$0xff]
      %v1197 = vld [vmem:[#allocation2 + $0x10] sm:$0xff]
      %v1198 = vld [vmem:[#allocation2 + $0x18] sm:$0xff]
      %v1199 = vld [vmem:[#allocation2 + $0x20] sm:$0xff]
      %v1200 = vld [vmem:[#allocation2 + $0x28] sm:$0xff]
      %v1201 = vld [vmem:[#allocation2 + $0x30] sm:$0xff]
      %v1202 = vld [vmem:[#allocation2 + $0x38] sm:$0xff]
      %v1203 = vld [vmem:[#allocation2 + $0x40] sm:$0xff]
      %v1204 = vld [vmem:[#allocation2 + $0x48] sm:$0xff]
      %v1205 = vld [vmem:[#allocation2 + $0x50] sm:$0xff]
      %v1206 = vld [vmem:[#allocation2 + $0x58] sm:$0xff]
      %v1207 = vld [vmem:[#allocation2 + $0x60] sm:$0xff]
      %v1208 = vld [vmem:[#allocation2 + $0x68] sm:$0xff]
      %v1209 = vld [vmem:[#allocation2 + $0x70] sm:$0xff]
      %v1210 = vld [vmem:[#allocation2 + $0x78] sm:$0xff]
      %v1211 = vld [vmem:[#allocation2 + $0x80] sm:$0xff]
      %v1212 = vld [vmem:[#allocation2 + $0x88] sm:$0xff]
      %v1213 = vld [vmem:[#allocation2 + $0x90] sm:$0xff]
      %v1214 = vld [vmem:[#allocation2 + $0x98] sm:$0xff]
      %v1215 = vld [vmem:[#allocation2 + $0xa0] sm:$0xff]
      %v1216 = vld [vmem:[#allocation2 + $0xa8] sm:$0xff]
      %v1217 = vld [vmem:[#allocation2 + $0xb0] sm:$0xff]
      %v1218 = vld [vmem:[#allocation2 + $0xb8] sm:$0xff]
      %v1219 = vld [vmem:[#allocation2 + $0xc0] sm:$0xff]
      %v1220 = vld [vmem:[#allocation2 + $0xc8] sm:$0xff]
      %v1221 = vld [vmem:[#allocation2 + $0xd0] sm:$0xff]
      %v1222 = vld [vmem:[#allocation2 + $0xd8] sm:$0xff]
      %v1223 = vld [vmem:[#allocation2 + $0xe0] sm:$0xff]
      %v1224 = vld [vmem:[#allocation2 + $0xe8] sm:$0xff]
      %v1225 = vld [vmem:[#allocation2 + $0xf0] sm:$0xff]
      %v1226 = vld [vmem:[#allocation2 + $0xf8] sm:$0xff]
      %v1227 = vld [vmem:[#allocation2 + $0x100] sm:$0xff]
      %v1228 = vld [vmem:[#allocation2 + $0x108] sm:$0xff]
      %v1229 = vld [vmem:[#allocation2 + $0x110] sm:$0xff]
      %v1230 = vld [vmem:[#allocation2 + $0x118] sm:$0xff]
      %s1231 = scalar_lea.vmem %s1, 4
      %v1232 = vld [vmem:[%s1231] sm:$0x3]
      %v1234 = vsel %vm435, %v1177, 0
      %v1237 = vsel %vm435, %v1178, 0
      %v1240 = vsel %vm435, %v1179, 0
      %v1243 = vsel %vm435, %v1180, 0
      %v1246 = vsel %vm435, %v1181, 0
      %v1249 = vsel %vm435, %v1182, 0
      %v1252 = vsel %vm435, %v1183, 0
      %v1255 = vsel %vm435, %v1184, 0
      %v1258 = vsel %vm435, %v1185, 0
      %v1261 = vsel %vm435, %v1186, 0
      %v1264 = vsel %vm435, %v1187, 0
      %v1267 = vsel %vm435, %v1188, 0
      %v1270 = vsel %vm435, %v1189, 0
      %v1273 = vsel %vm435, %v1190, 0
      %v1276 = vsel %vm435, %v1191, 0
      %v1279 = vsel %vm435, %v1192, 0
      %v1282 = vsel %vm435, %v1193, 0
      %v1285 = vsel %vm435, %v1194, 0
      %v1288 = vsel %vm490, %v1232, 0
      %1290 = vmatprep.subr.bf16.mxu0 0
      %1291 = vmatpush1.bf16.msra.mxu0 %v1288
      %1292 = vmatprep.subr.bf16.mxu0 0
      %1293 = vmatpush1.bf16.msra.mxu0 0
      %1294 = vmatprep.subr.bf16.mxu0 0
      %1295 = vmatpush1.bf16.msra.mxu0 0
      %1296 = vmatprep.subr.bf16.mxu0 0
      %1297 = vmatpush1.bf16.msra.mxu0 0
      %1298 = vmatprep.subr.bf16.mxu0 0
      %1299 = vmatpush1.bf16.msra.mxu0 0
      %1300 = vmatprep.subr.bf16.mxu0 0
      %1301 = vmatpush1.bf16.msra.mxu0 0
      %1302 = vmatprep.subr.bf16.mxu0 0
      %1303 = vmatpush1.bf16.msra.mxu0 0
      %1304 = vmatprep.subr.bf16.mxu0 0
      %1305 = vmatpush1.bf16.msra.mxu0 0
      %1306 = vmatprep.subr.bf16.mxu0 0
      %1307 = vmatpush1.bf16.msra.mxu0 0
      %1308 = vmatprep.subr.bf16.mxu0 0
      %1309 = vmatpush1.bf16.msra.mxu0 0
      %1310 = vmatprep.subr.bf16.mxu0 0
      %1311 = vmatpush1.bf16.msra.mxu0 0
      %1312 = vmatprep.subr.bf16.mxu0 0
      %1313 = vmatpush1.bf16.msra.mxu0 0
      %1314 = vmatprep.subr.bf16.mxu0 0
      %1315 = vmatpush1.bf16.msra.mxu0 0
      %1316 = vmatprep.subr.bf16.mxu0 0
      %1317 = vmatpush1.bf16.msra.mxu0 0
      %1318 = vmatprep.subr.bf16.mxu0 0
      %1319 = vmatpush1.bf16.msra.mxu0 0
      %1320 = vmatprep.subr.bf16.mxu0 0
      %1321 = vmatpush1.bf16.msra.mxu0 0
      %1322 = vmatprep.mubr.bf16.mxu0 0
      %1323 = vmatmul.mubr.bf16.gmra.mrb[0].mxu0 %v1234
      %v1324 = vpop.f32.mrb[0].mxu0
      %v1325 = vadd.f32 0.0, %v1324
      %v1326 = vpop.f32.mrb[0].mxu0
      %v1327 = vpop.f32.mrb[0].mxu0
      %v1328 = vadd.f32 0.0, %v1327
      %v1329 = vpop.f32.mrb[0].mxu0
      %1330 = vmatprep.mubr.bf16.mxu0 0
      %1331 = vmatmul.mubr.bf16.gmra.mrb[0].mxu0 %v1237
      %v1332 = vpop.f32.mrb[0].mxu0
      %v1333 = vadd.f32 0.0, %v1332
      %v1334 = vpop.f32.mrb[0].mxu0
      %v1335 = vpop.f32.mrb[0].mxu0
      %v1336 = vadd.f32 0.0, %v1335
      %v1337 = vpop.f32.mrb[0].mxu0
      %1338 = vmatprep.mubr.bf16.mxu0 0
      %1339 = vmatmul.mubr.bf16.gmra.mrb[0].mxu0 %v1240
      %v1340 = vpop.f32.mrb[0].mxu0
      %v1341 = vadd.f32 0.0, %v1340
      %v1342 = vpop.f32.mrb[0].mxu0
      %v1343 = vpop.f32.mrb[0].mxu0
      %v1344 = vadd.f32 0.0, %v1343
      %v1345 = vpop.f32.mrb[0].mxu0
      %1346 = vmatprep.mubr.bf16.mxu0 0
      %1347 = vmatmul.mubr.bf16.gmra.mrb[0].mxu0 %v1243
      %v1348 = vpop.f32.mrb[0].mxu0
      %v1349 = vadd.f32 0.0, %v1348
      %v1350 = vpop.f32.mrb[0].mxu0
      %v1351 = vpop.f32.mrb[0].mxu0
      %v1352 = vadd.f32 0.0, %v1351
      %v1353 = vpop.f32.mrb[0].mxu0
      %1354 = vmatprep.mubr.bf16.mxu0 0
      %1355 = vmatmul.mubr.bf16.gmra.mrb[0].mxu0 %v1246
      %v1356 = vpop.f32.mrb[0].mxu0
      %v1357 = vadd.f32 0.0, %v1356
      %v1358 = vpop.f32.mrb[0].mxu0
      %v1359 = vpop.f32.mrb[0].mxu0
      %v1360 = vadd.f32 0.0, %v1359
      %v1361 = vpop.f32.mrb[0].mxu0
      %1362 = vmatprep.mubr.bf16.mxu0 0
      %1363 = vmatmul.mubr.bf16.gmra.mrb[0].mxu0 %v1249
      %v1364 = vpop.f32.mrb[0].mxu0
      %v1365 = vadd.f32 0.0, %v1364
      %v1366 = vpop.f32.mrb[0].mxu0
      %v1367 = vpop.f32.mrb[0].mxu0
      %v1368 = vadd.f32 0.0, %v1367
      %v1369 = vpop.f32.mrb[0].mxu0
      %1370 = vmatprep.mubr.bf16.mxu0 0
      %1371 = vmatmul.mubr.bf16.gmra.mrb[0].mxu0 %v1252
      %v1372 = vpop.f32.mrb[0].mxu0
      %v1373 = vadd.f32 0.0, %v1372
      %v1374 = vpop.f32.mrb[0].mxu0
      %v1375 = vpop.f32.mrb[0].mxu0
      %v1376 = vadd.f32 0.0, %v1375
      %v1377 = vpop.f32.mrb[0].mxu0
      %1378 = vmatprep.mubr.bf16.mxu0 0
      %1379 = vmatmul.mubr.bf16.gmra.mrb[0].mxu0 %v1255
      %v1380 = vpop.f32.mrb[0].mxu0
      %v1381 = vadd.f32 0.0, %v1380
      %v1382 = vpop.f32.mrb[0].mxu0
      %v1383 = vpop.f32.mrb[0].mxu0
      %v1384 = vadd.f32 0.0, %v1383
      %v1385 = vpop.f32.mrb[0].mxu0
      %1386 = vmatprep.mubr.bf16.mxu0 0
      %1387 = vmatmul.mubr.bf16.gmra.mrb[0].mxu0 %v1258
      %v1388 = vpop.f32.mrb[0].mxu0
      %v1389 = vadd.f32 0.0, %v1388
      %v1390 = vpop.f32.mrb[0].mxu0
      %v1391 = vpop.f32.mrb[0].mxu0
      %v1392 = vadd.f32 0.0, %v1391
      %v1393 = vpop.f32.mrb[0].mxu0
      %1394 = vmatprep.mubr.bf16.mxu0 0
      %1395 = vmatmul.mubr.bf16.gmra.mrb[0].mxu0 %v1261
      %v1396 = vpop.f32.mrb[0].mxu0
      %v1397 = vadd.f32 0.0, %v1396
      %v1398 = vpop.f32.mrb[0].mxu0
      %v1399 = vpop.f32.mrb[0].mxu0
      %v1400 = vadd.f32 0.0, %v1399
      %v1401 = vpop.f32.mrb[0].mxu0
      %1402 = vmatprep.mubr.bf16.mxu0 0
      %1403 = vmatmul.mubr.bf16.gmra.mrb[0].mxu0 %v1264
      %v1404 = vpop.f32.mrb[0].mxu0
      %v1405 = vadd.f32 0.0, %v1404
      %v1406 = vpop.f32.mrb[0].mxu0
      %v1407 = vpop.f32.mrb[0].mxu0
      %v1408 = vadd.f32 0.0, %v1407
      %v1409 = vpop.f32.mrb[0].mxu0
      %1410 = vmatprep.mubr.bf16.mxu0 0
      %1411 = vmatmul.mubr.bf16.gmra.mrb[0].mxu0 %v1267
      %v1412 = vpop.f32.mrb[0].mxu0
      %v1413 = vadd.f32 0.0, %v1412
      %v1414 = vpop.f32.mrb[0].mxu0
      %v1415 = vpop.f32.mrb[0].mxu0
      %v1416 = vadd.f32 0.0, %v1415
      %v1417 = vpop.f32.mrb[0].mxu0
      %1418 = vmatprep.mubr.bf16.mxu0 0
      %1419 = vmatmul.mubr.bf16.gmra.mrb[0].mxu0 %v1270
      %v1420 = vpop.f32.mrb[0].mxu0
      %v1421 = vadd.f32 0.0, %v1420
      %v1422 = vpop.f32.mrb[0].mxu0
      %v1423 = vpop.f32.mrb[0].mxu0
      %v1424 = vadd.f32 0.0, %v1423
      %v1425 = vpop.f32.mrb[0].mxu0
      %1426 = vmatprep.mubr.bf16.mxu0 0
      %1427 = vmatmul.mubr.bf16.gmra.mrb[0].mxu0 %v1273
      %v1428 = vpop.f32.mrb[0].mxu0
      %v1429 = vadd.f32 0.0, %v1428
      %v1430 = vpop.f32.mrb[0].mxu0
      %v1431 = vpop.f32.mrb[0].mxu0
      %v1432 = vadd.f32 0.0, %v1431
      %v1433 = vpop.f32.mrb[0].mxu0
      %1434 = vmatprep.mubr.bf16.mxu0 0
      %1435 = vmatmul.mubr.bf16.gmra.mrb[0].mxu0 %v1276
      %v1436 = vpop.f32.mrb[0].mxu0
      %v1437 = vadd.f32 0.0, %v1436
      %v1438 = vpop.f32.mrb[0].mxu0
      %v1439 = vpop.f32.mrb[0].mxu0
      %v1440 = vadd.f32 0.0, %v1439
      %v1441 = vpop.f32.mrb[0].mxu0
      %1442 = vmatprep.mubr.bf16.mxu0 0
      %1443 = vmatmul.mubr.bf16.gmra.mrb[0].mxu0 %v1279
      %v1444 = vpop.f32.mrb[0].mxu0
      %v1445 = vadd.f32 0.0, %v1444
      %v1446 = vpop.f32.mrb[0].mxu0
      %v1447 = vpop.f32.mrb[0].mxu0
      %v1448 = vadd.f32 0.0, %v1447
      %v1449 = vpop.f32.mrb[0].mxu0
      %1450 = vmatprep.mubr.bf16.mxu0 0
      %1451 = vmatmul.mubr.bf16.gmra.mrb[0].mxu0 %v1282
      %v1452 = vpop.f32.mrb[0].mxu0
      %v1453 = vadd.f32 0.0, %v1452
      %v1454 = vpop.f32.mrb[0].mxu0
      %v1455 = vpop.f32.mrb[0].mxu0
      %v1456 = vadd.f32 0.0, %v1455
      %v1457 = vpop.f32.mrb[0].mxu0
      %1458 = vmatprep.mubr.bf16.mxu0 0
      %1459 = vmatmul.mubr.bf16.gmra.mrb[0].mxu0 %v1285
      %v1460 = vpop.f32.mrb[0].mxu0
      %v1461 = vadd.f32 0.0, %v1460
      %v1462 = vpop.f32.mrb[0].mxu0
      %v1463 = vpop.f32.mrb[0].mxu0
      %v1464 = vadd.f32 0.0, %v1463
      %v1465 = vpop.f32.mrb[0].mxu0
      %1466 = vdwg.mxu0
      %v1467 = vadd.f32 %v1195, %v1325
      %v1468 = vadd.f32 %v1196, %v1328
      %v1469 = vadd.f32 %v1197, %v1333
      %v1470 = vadd.f32 %v1198, %v1336
      %v1471 = vadd.f32 %v1199, %v1341
      %v1472 = vadd.f32 %v1200, %v1344
      %v1473 = vadd.f32 %v1201, %v1349
      %v1474 = vadd.f32 %v1202, %v1352
      %v1475 = vadd.f32 %v1203, %v1357
      %v1476 = vadd.f32 %v1204, %v1360
      %v1477 = vadd.f32 %v1205, %v1365
      %v1478 = vadd.f32 %v1206, %v1368
      %v1479 = vadd.f32 %v1207, %v1373
      %v1480 = vadd.f32 %v1208, %v1376
      %v1481 = vadd.f32 %v1209, %v1381
      %v1482 = vadd.f32 %v1210, %v1384
      %v1483 = vadd.f32 %v1211, %v1389
      %v1484 = vadd.f32 %v1212, %v1392
      %v1485 = vadd.f32 %v1213, %v1397
      %v1486 = vadd.f32 %v1214, %v1400
      %v1487 = vadd.f32 %v1215, %v1405
      %v1488 = vadd.f32 %v1216, %v1408
      %v1489 = vadd.f32 %v1217, %v1413
      %v1490 = vadd.f32 %v1218, %v1416
      %v1491 = vadd.f32 %v1219, %v1421
      %v1492 = vadd.f32 %v1220, %v1424
      %v1493 = vadd.f32 %v1221, %v1429
      %v1494 = vadd.f32 %v1222, %v1432
      %v1495 = vadd.f32 %v1223, %v1437
      %v1496 = vadd.f32 %v1224, %v1440
      %v1497 = vadd.f32 %v1225, %v1445
      %v1498 = vadd.f32 %v1226, %v1448
      %v1499 = vadd.f32 %v1227, %v1453
      %v1500 = vadd.f32 %v1228, %v1456
      %v1501 = vadd.f32 %v1229, %v1461
      %v1502 = vadd.f32 %v1230, %v1464
      %1503 = vst.msk [vmem:[#allocation2] sm:$0xff] %vm307, %v1467
      %1504 = vst.msk [vmem:[#allocation2 + $0x8] sm:$0xff] %vm307, %v1468
      %1505 = vst.msk [vmem:[#allocation2 + $0x10] sm:$0xff] %vm307, %v1469
      %1506 = vst.msk [vmem:[#allocation2 + $0x18] sm:$0xff] %vm307, %v1470
      %1507 = vst.msk [vmem:[#allocation2 + $0x20] sm:$0xff] %vm307, %v1471
      %1508 = vst.msk [vmem:[#allocation2 + $0x28] sm:$0xff] %vm307, %v1472
      %1509 = vst.msk [vmem:[#allocation2 + $0x30] sm:$0xff] %vm307, %v1473
      %1510 = vst.msk [vmem:[#allocation2 + $0x38] sm:$0xff] %vm307, %v1474
      %1511 = vst.msk [vmem:[#allocation2 + $0x40] sm:$0xff] %vm307, %v1475
      %1512 = vst.msk [vmem:[#allocation2 + $0x48] sm:$0xff] %vm307, %v1476
      %1513 = vst.msk [vmem:[#allocation2 + $0x50] sm:$0xff] %vm307, %v1477
      %1514 = vst.msk [vmem:[#allocation2 + $0x58] sm:$0xff] %vm307, %v1478
      %1515 = vst.msk [vmem:[#allocation2 + $0x60] sm:$0xff] %vm307, %v1479
      %1516 = vst.msk [vmem:[#allocation2 + $0x68] sm:$0xff] %vm307, %v1480
      %1517 = vst.msk [vmem:[#allocation2 + $0x70] sm:$0xff] %vm307, %v1481
      %1518 = vst.msk [vmem:[#allocation2 + $0x78] sm:$0xff] %vm307, %v1482
      %1519 = vst.msk [vmem:[#allocation2 + $0x80] sm:$0xff] %vm307, %v1483
      %1520 = vst.msk [vmem:[#allocation2 + $0x88] sm:$0xff] %vm307, %v1484
      %1521 = vst.msk [vmem:[#allocation2 + $0x90] sm:$0xff] %vm307, %v1485
      %1522 = vst.msk [vmem:[#allocation2 + $0x98] sm:$0xff] %vm307, %v1486
      %1523 = vst.msk [vmem:[#allocation2 + $0xa0] sm:$0xff] %vm307, %v1487
      %1524 = vst.msk [vmem:[#allocation2 + $0xa8] sm:$0xff] %vm307, %v1488
      %1525 = vst.msk [vmem:[#allocation2 + $0xb0] sm:$0xff] %vm307, %v1489
      %1526 = vst.msk [vmem:[#allocation2 + $0xb8] sm:$0xff] %vm307, %v1490
      %1527 = vst.msk [vmem:[#allocation2 + $0xc0] sm:$0xff] %vm307, %v1491
      %1528 = vst.msk [vmem:[#allocation2 + $0xc8] sm:$0xff] %vm307, %v1492
      %1529 = vst.msk [vmem:[#allocation2 + $0xd0] sm:$0xff] %vm307, %v1493
      %1530 = vst.msk [vmem:[#allocation2 + $0xd8] sm:$0xff] %vm307, %v1494
      %1531 = vst.msk [vmem:[#allocation2 + $0xe0] sm:$0xff] %vm307, %v1495
      %1532 = vst.msk [vmem:[#allocation2 + $0xe8] sm:$0xff] %vm307, %v1496
      %1533 = vst.msk [vmem:[#allocation2 + $0xf0] sm:$0xff] %vm307, %v1497
      %1534 = vst.msk [vmem:[#allocation2 + $0xf8] sm:$0xff] %vm307, %v1498
      %1535 = vst.msk [vmem:[#allocation2 + $0x100] sm:$0xff] %vm307, %v1499
      %1536 = vst.msk [vmem:[#allocation2 + $0x108] sm:$0xff] %vm307, %v1500
      %1537 = vst.msk [vmem:[#allocation2 + $0x110] sm:$0xff] %vm307, %v1501
      %1538 = vst.msk [vmem:[#allocation2 + $0x118] sm:$0xff] %vm307, %v1502
      %v1539 = vld [vmem:[%s300 + $0x12] sm:$0xff]
      %v1540 = vld [vmem:[%s300 + $0x1a] sm:$0xff]
      %v1541 = vld [vmem:[%s300 + $0x22] sm:$0xff]
      %v1542 = vld [vmem:[%s300 + $0x2a] sm:$0xff]
      %v1543 = vld [vmem:[%s300 + $0x32] sm:$0xff]
      %v1544 = vld [vmem:[%s300 + $0x3a] sm:$0xff]
      %v1545 = vld [vmem:[%s300 + $0x42] sm:$0xff]
      %v1546 = vld [vmem:[%s300 + $0x4a] sm:$0xff]
      %v1547 = vld [vmem:[%s300 + $0x52] sm:$0xff]
      %v1548 = vld [vmem:[%s300 + $0x5a] sm:$0xff]
      %v1549 = vld [vmem:[%s300 + $0x62] sm:$0xff]
      %v1550 = vld [vmem:[%s300 + $0x6a] sm:$0xff]
      %v1551 = vld [vmem:[%s300 + $0x72] sm:$0xff]
      %v1552 = vld [vmem:[%s300 + $0x7a] sm:$0xff]
      %v1553 = vld [vmem:[%s300 + $0x82] sm:$0xff]
      %v1554 = vld [vmem:[%s300 + $0x8a] sm:$0xff]
      %v1555 = vld [vmem:[%s300 + $0x92] sm:$0xff]
      %v1556 = vld [vmem:[%s300 + $0x9a] sm:$0xff]
      %v1557 = vld [vmem:[%s300 + $0xa2] sm:$0xff]
      %v1558 = vld [vmem:[%s300 + $0xaa] sm:$0xff]
      %v1559 = vld [vmem:[%s300 + $0xb2] sm:$0xff]
      %v1560 = vld [vmem:[%s300 + $0xba] sm:$0xff]
      %v1561 = vld [vmem:[%s300 + $0xc2] sm:$0xff]
      %v1562 = vld [vmem:[%s300 + $0xca] sm:$0xff]
      %v1563 = vld [vmem:[%s300 + $0xd2] sm:$0xff]
      %v1564 = vld [vmem:[%s300 + $0xda] sm:$0xff]
      %v1565 = vld [vmem:[%s300 + $0xe2] sm:$0xff]
      %v1566 = vld [vmem:[%s300 + $0xea] sm:$0xff]
      %v1567 = vld [vmem:[%s300 + $0xf2] sm:$0xff]
      %v1568 = vld [vmem:[%s300 + $0xfa] sm:$0xff]
      %v1569 = vld [vmem:[%s300 + $0x102] sm:$0xff]
      %v1570 = vld [vmem:[%s300 + $0x10a] sm:$0xff]
      %v1571 = vld [vmem:[%s300 + $0x112] sm:$0xff]
      %v1572 = vld [vmem:[%s300 + $0x11a] sm:$0xff]
      %v1573 = vld [vmem:[%s300 + $0x122] sm:$0xff]
      %v1574 = vld [vmem:[%s300 + $0x12a] sm:$0xff]
      %v1575 = vpack.c.bf16 %v1540, %v1539
      %v1576 = vpack.c.bf16 %v1542, %v1541
      %v1577 = vpack.c.bf16 %v1544, %v1543
      %v1578 = vpack.c.bf16 %v1546, %v1545
      %v1579 = vpack.c.bf16 %v1548, %v1547
      %v1580 = vpack.c.bf16 %v1550, %v1549
      %v1581 = vpack.c.bf16 %v1552, %v1551
      %v1582 = vpack.c.bf16 %v1554, %v1553
      %v1583 = vpack.c.bf16 %v1556, %v1555
      %v1584 = vpack.c.bf16 %v1558, %v1557
      %v1585 = vpack.c.bf16 %v1560, %v1559
      %v1586 = vpack.c.bf16 %v1562, %v1561
      %v1587 = vpack.c.bf16 %v1564, %v1563
      %v1588 = vpack.c.bf16 %v1566, %v1565
      %v1589 = vpack.c.bf16 %v1568, %v1567
      %v1590 = vpack.c.bf16 %v1570, %v1569
      %v1591 = vpack.c.bf16 %v1572, %v1571
      %v1592 = vpack.c.bf16 %v1574, %v1573
      %v1593 = vld [vmem:[#allocation2] sm:$0xff]
      %v1594 = vld [vmem:[#allocation2 + $0x8] sm:$0xff]
      %v1595 = vld [vmem:[#allocation2 + $0x10] sm:$0xff]
      %v1596 = vld [vmem:[#allocation2 + $0x18] sm:$0xff]
      %v1597 = vld [vmem:[#allocation2 + $0x20] sm:$0xff]
      %v1598 = vld [vmem:[#allocation2 + $0x28] sm:$0xff]
      %v1599 = vld [vmem:[#allocation2 + $0x30] sm:$0xff]
      %v1600 = vld [vmem:[#allocation2 + $0x38] sm:$0xff]
      %v1601 = vld [vmem:[#allocation2 + $0x40] sm:$0xff]
      %v1602 = vld [vmem:[#allocation2 + $0x48] sm:$0xff]
      %v1603 = vld [vmem:[#allocation2 + $0x50] sm:$0xff]
      %v1604 = vld [vmem:[#allocation2 + $0x58] sm:$0xff]
      %v1605 = vld [vmem:[#allocation2 + $0x60] sm:$0xff]
      %v1606 = vld [vmem:[#allocation2 + $0x68] sm:$0xff]
      %v1607 = vld [vmem:[#allocation2 + $0x70] sm:$0xff]
      %v1608 = vld [vmem:[#allocation2 + $0x78] sm:$0xff]
      %v1609 = vld [vmem:[#allocation2 + $0x80] sm:$0xff]
      %v1610 = vld [vmem:[#allocation2 + $0x88] sm:$0xff]
      %v1611 = vld [vmem:[#allocation2 + $0x90] sm:$0xff]
      %v1612 = vld [vmem:[#allocation2 + $0x98] sm:$0xff]
      %v1613 = vld [vmem:[#allocation2 + $0xa0] sm:$0xff]
      %v1614 = vld [vmem:[#allocation2 + $0xa8] sm:$0xff]
      %v1615 = vld [vmem:[#allocation2 + $0xb0] sm:$0xff]
      %v1616 = vld [vmem:[#allocation2 + $0xb8] sm:$0xff]
      %v1617 = vld [vmem:[#allocation2 + $0xc0] sm:$0xff]
      %v1618 = vld [vmem:[#allocation2 + $0xc8] sm:$0xff]
      %v1619 = vld [vmem:[#allocation2 + $0xd0] sm:$0xff]
      %v1620 = vld [vmem:[#allocation2 + $0xd8] sm:$0xff]
      %v1621 = vld [vmem:[#allocation2 + $0xe0] sm:$0xff]
      %v1622 = vld [vmem:[#allocation2 + $0xe8] sm:$0xff]
      %v1623 = vld [vmem:[#allocation2 + $0xf0] sm:$0xff]
      %v1624 = vld [vmem:[#allocation2 + $0xf8] sm:$0xff]
      %v1625 = vld [vmem:[#allocation2 + $0x100] sm:$0xff]
      %v1626 = vld [vmem:[#allocation2 + $0x108] sm:$0xff]
      %v1627 = vld [vmem:[#allocation2 + $0x110] sm:$0xff]
      %v1628 = vld [vmem:[#allocation2 + $0x118] sm:$0xff]
      %s1629 = scalar_lea.vmem %s1, 6
      %v1630 = vld [vmem:[%s1629] sm:$0x3]
      %v1632 = vsel %vm435, %v1575, 0
      %v1635 = vsel %vm435, %v1576, 0
      %v1638 = vsel %vm435, %v1577, 0
      %v1641 = vsel %vm435, %v1578, 0
      %v1644 = vsel %vm435, %v1579, 0
      %v1647 = vsel %vm435, %v1580, 0
      %v1650 = vsel %vm435, %v1581, 0
      %v1653 = vsel %vm435, %v1582, 0
      %v1656 = vsel %vm435, %v1583, 0
      %v1659 = vsel %vm435, %v1584, 0
      %v1662 = vsel %vm435, %v1585, 0
      %v1665 = vsel %vm435, %v1586, 0
      %v1668 = vsel %vm435, %v1587, 0
      %v1671 = vsel %vm435, %v1588, 0
      %v1674 = vsel %vm435, %v1589, 0
      %v1677 = vsel %vm435, %v1590, 0
      %v1680 = vsel %vm435, %v1591, 0
      %v1683 = vsel %vm435, %v1592, 0
      %v1686 = vsel %vm490, %v1630, 0
      %1688 = vmatprep.subr.bf16.mxu0 0
      %1689 = vmatpush1.bf16.msra.mxu0 %v1686
      %1690 = vmatprep.subr.bf16.mxu0 0
      %1691 = vmatpush1.bf16.msra.mxu0 0
      %1692 = vmatprep.subr.bf16.mxu0 0
      %1693 = vmatpush1.bf16.msra.mxu0 0
      %1694 = vmatprep.subr.bf16.mxu0 0
      %1695 = vmatpush1.bf16.msra.mxu0 0
      %1696 = vmatprep.subr.bf16.mxu0 0
      %1697 = vmatpush1.bf16.msra.mxu0 0
      %1698 = vmatprep.subr.bf16.mxu0 0
      %1699 = vmatpush1.bf16.msra.mxu0 0
      %1700 = vmatprep.subr.bf16.mxu0 0
      %1701 = vmatpush1.bf16.msra.mxu0 0
      %1702 = vmatprep.subr.bf16.mxu0 0
      %1703 = vmatpush1.bf16.msra.mxu0 0
      %1704 = vmatprep.subr.bf16.mxu0 0
      %1705 = vmatpush1.bf16.msra.mxu0 0
      %1706 = vmatprep.subr.bf16.mxu0 0
      %1707 = vmatpush1.bf16.msra.mxu0 0
      %1708 = vmatprep.subr.bf16.mxu0 0
      %1709 = vmatpush1.bf16.msra.mxu0 0
      %1710 = vmatprep.subr.bf16.mxu0 0
      %1711 = vmatpush1.bf16.msra.mxu0 0
      %1712 = vmatprep.subr.bf16.mxu0 0
      %1713 = vmatpush1.bf16.msra.mxu0 0
      %1714 = vmatprep.subr.bf16.mxu0 0
      %1715 = vmatpush1.bf16.msra.mxu0 0
      %1716 = vmatprep.subr.bf16.mxu0 0
      %1717 = vmatpush1.bf16.msra.mxu0 0
      %1718 = vmatprep.subr.bf16.mxu0 0
      %1719 = vmatpush1.bf16.msra.mxu0 0
      %1720 = vmatprep.mubr.bf16.mxu0 0
      %1721 = vmatmul.mubr.bf16.gmra.mrb[0].mxu0 %v1632
      %v1722 = vpop.f32.mrb[0].mxu0
      %v1723 = vadd.f32 0.0, %v1722
      %v1724 = vpop.f32.mrb[0].mxu0
      %v1725 = vpop.f32.mrb[0].mxu0
      %v1726 = vadd.f32 0.0, %v1725
      %v1727 = vpop.f32.mrb[0].mxu0
      %1728 = vmatprep.mubr.bf16.mxu0 0
      %1729 = vmatmul.mubr.bf16.gmra.mrb[0].mxu0 %v1635
      %v1730 = vpop.f32.mrb[0].mxu0
      %v1731 = vadd.f32 0.0, %v1730
      %v1732 = vpop.f32.mrb[0].mxu0
      %v1733 = vpop.f32.mrb[0].mxu0
      %v1734 = vadd.f32 0.0, %v1733
      %v1735 = vpop.f32.mrb[0].mxu0
      %1736 = vmatprep.mubr.bf16.mxu0 0
      %1737 = vmatmul.mubr.bf16.gmra.mrb[0].mxu0 %v1638
      %v1738 = vpop.f32.mrb[0].mxu0
      %v1739 = vadd.f32 0.0, %v1738
      %v1740 = vpop.f32.mrb[0].mxu0
      %v1741 = vpop.f32.mrb[0].mxu0
      %v1742 = vadd.f32 0.0, %v1741
      %v1743 = vpop.f32.mrb[0].mxu0
      %1744 = vmatprep.mubr.bf16.mxu0 0
      %1745 = vmatmul.mubr.bf16.gmra.mrb[0].mxu0 %v1641
      %v1746 = vpop.f32.mrb[0].mxu0
      %v1747 = vadd.f32 0.0, %v1746
      %v1748 = vpop.f32.mrb[0].mxu0
      %v1749 = vpop.f32.mrb[0].mxu0
      %v1750 = vadd.f32 0.0, %v1749
      %v1751 = vpop.f32.mrb[0].mxu0
      %1752 = vmatprep.mubr.bf16.mxu0 0
      %1753 = vmatmul.mubr.bf16.gmra.mrb[0].mxu0 %v1644
      %v1754 = vpop.f32.mrb[0].mxu0
      %v1755 = vadd.f32 0.0, %v1754
      %v1756 = vpop.f32.mrb[0].mxu0
      %v1757 = vpop.f32.mrb[0].mxu0
      %v1758 = vadd.f32 0.0, %v1757
      %v1759 = vpop.f32.mrb[0].mxu0
      %1760 = vmatprep.mubr.bf16.mxu0 0
      %1761 = vmatmul.mubr.bf16.gmra.mrb[0].mxu0 %v1647
      %v1762 = vpop.f32.mrb[0].mxu0
      %v1763 = vadd.f32 0.0, %v1762
      %v1764 = vpop.f32.mrb[0].mxu0
      %v1765 = vpop.f32.mrb[0].mxu0
      %v1766 = vadd.f32 0.0, %v1765
      %v1767 = vpop.f32.mrb[0].mxu0
      %1768 = vmatprep.mubr.bf16.mxu0 0
      %1769 = vmatmul.mubr.bf16.gmra.mrb[0].mxu0 %v1650
      %v1770 = vpop.f32.mrb[0].mxu0
      %v1771 = vadd.f32 0.0, %v1770
      %v1772 = vpop.f32.mrb[0].mxu0
      %v1773 = vpop.f32.mrb[0].mxu0
      %v1774 = vadd.f32 0.0, %v1773
      %v1775 = vpop.f32.mrb[0].mxu0
      %1776 = vmatprep.mubr.bf16.mxu0 0
      %1777 = vmatmul.mubr.bf16.gmra.mrb[0].mxu0 %v1653
      %v1778 = vpop.f32.mrb[0].mxu0
      %v1779 = vadd.f32 0.0, %v1778
      %v1780 = vpop.f32.mrb[0].mxu0
      %v1781 = vpop.f32.mrb[0].mxu0
      %v1782 = vadd.f32 0.0, %v1781
      %v1783 = vpop.f32.mrb[0].mxu0
      %1784 = vmatprep.mubr.bf16.mxu0 0
      %1785 = vmatmul.mubr.bf16.gmra.mrb[0].mxu0 %v1656
      %v1786 = vpop.f32.mrb[0].mxu0
      %v1787 = vadd.f32 0.0, %v1786
      %v1788 = vpop.f32.mrb[0].mxu0
      %v1789 = vpop.f32.mrb[0].mxu0
      %v1790 = vadd.f32 0.0, %v1789
      %v1791 = vpop.f32.mrb[0].mxu0
      %1792 = vmatprep.mubr.bf16.mxu0 0
      %1793 = vmatmul.mubr.bf16.gmra.mrb[0].mxu0 %v1659
      %v1794 = vpop.f32.mrb[0].mxu0
      %v1795 = vadd.f32 0.0, %v1794
      %v1796 = vpop.f32.mrb[0].mxu0
      %v1797 = vpop.f32.mrb[0].mxu0
      %v1798 = vadd.f32 0.0, %v1797
      %v1799 = vpop.f32.mrb[0].mxu0
      %1800 = vmatprep.mubr.bf16.mxu0 0
      %1801 = vmatmul.mubr.bf16.gmra.mrb[0].mxu0 %v1662
      %v1802 = vpop.f32.mrb[0].mxu0
      %v1803 = vadd.f32 0.0, %v1802
      %v1804 = vpop.f32.mrb[0].mxu0
      %v1805 = vpop.f32.mrb[0].mxu0
      %v1806 = vadd.f32 0.0, %v1805
      %v1807 = vpop.f32.mrb[0].mxu0
      %1808 = vmatprep.mubr.bf16.mxu0 0
      %1809 = vmatmul.mubr.bf16.gmra.mrb[0].mxu0 %v1665
      %v1810 = vpop.f32.mrb[0].mxu0
      %v1811 = vadd.f32 0.0, %v1810
      %v1812 = vpop.f32.mrb[0].mxu0
      %v1813 = vpop.f32.mrb[0].mxu0
      %v1814 = vadd.f32 0.0, %v1813
      %v1815 = vpop.f32.mrb[0].mxu0
      %1816 = vmatprep.mubr.bf16.mxu0 0
      %1817 = vmatmul.mubr.bf16.gmra.mrb[0].mxu0 %v1668
      %v1818 = vpop.f32.mrb[0].mxu0
      %v1819 = vadd.f32 0.0, %v1818
      %v1820 = vpop.f32.mrb[0].mxu0
      %v1821 = vpop.f32.mrb[0].mxu0
      %v1822 = vadd.f32 0.0, %v1821
      %v1823 = vpop.f32.mrb[0].mxu0
      %1824 = vmatprep.mubr.bf16.mxu0 0
      %1825 = vmatmul.mubr.bf16.gmra.mrb[0].mxu0 %v1671
      %v1826 = vpop.f32.mrb[0].mxu0
      %v1827 = vadd.f32 0.0, %v1826
      %v1828 = vpop.f32.mrb[0].mxu0
      %v1829 = vpop.f32.mrb[0].mxu0
      %v1830 = vadd.f32 0.0, %v1829
      %v1831 = vpop.f32.mrb[0].mxu0
      %1832 = vmatprep.mubr.bf16.mxu0 0
      %1833 = vmatmul.mubr.bf16.gmra.mrb[0].mxu0 %v1674
      %v1834 = vpop.f32.mrb[0].mxu0
      %v1835 = vadd.f32 0.0, %v1834
      %v1836 = vpop.f32.mrb[0].mxu0
      %v1837 = vpop.f32.mrb[0].mxu0
      %v1838 = vadd.f32 0.0, %v1837
      %v1839 = vpop.f32.mrb[0].mxu0
      %1840 = vmatprep.mubr.bf16.mxu0 0
      %1841 = vmatmul.mubr.bf16.gmra.mrb[0].mxu0 %v1677
      %v1842 = vpop.f32.mrb[0].mxu0
      %v1843 = vadd.f32 0.0, %v1842
      %v1844 = vpop.f32.mrb[0].mxu0
      %v1845 = vpop.f32.mrb[0].mxu0
      %v1846 = vadd.f32 0.0, %v1845
      %v1847 = vpop.f32.mrb[0].mxu0
      %1848 = vmatprep.mubr.bf16.mxu0 0
      %1849 = vmatmul.mubr.bf16.gmra.mrb[0].mxu0 %v1680
      %v1850 = vpop.f32.mrb[0].mxu0
      %v1851 = vadd.f32 0.0, %v1850
      %v1852 = vpop.f32.mrb[0].mxu0
      %v1853 = vpop.f32.mrb[0].mxu0
      %v1854 = vadd.f32 0.0, %v1853
      %v1855 = vpop.f32.mrb[0].mxu0
      %1856 = vmatprep.mubr.bf16.mxu0 0
      %1857 = vmatmul.mubr.bf16.gmra.mrb[0].mxu0 %v1683
      %v1858 = vpop.f32.mrb[0].mxu0
      %v1859 = vadd.f32 0.0, %v1858
      %v1860 = vpop.f32.mrb[0].mxu0
      %v1861 = vpop.f32.mrb[0].mxu0
      %v1862 = vadd.f32 0.0, %v1861
      %v1863 = vpop.f32.mrb[0].mxu0
      %1864 = vdwg.mxu0
      %v1865 = vadd.f32 %v1593, %v1723
      %v1866 = vadd.f32 %v1594, %v1726
      %v1867 = vadd.f32 %v1595, %v1731
      %v1868 = vadd.f32 %v1596, %v1734
      %v1869 = vadd.f32 %v1597, %v1739
      %v1870 = vadd.f32 %v1598, %v1742
      %v1871 = vadd.f32 %v1599, %v1747
      %v1872 = vadd.f32 %v1600, %v1750
      %v1873 = vadd.f32 %v1601, %v1755
      %v1874 = vadd.f32 %v1602, %v1758
      %v1875 = vadd.f32 %v1603, %v1763
      %v1876 = vadd.f32 %v1604, %v1766
      %v1877 = vadd.f32 %v1605, %v1771
      %v1878 = vadd.f32 %v1606, %v1774
      %v1879 = vadd.f32 %v1607, %v1779
      %v1880 = vadd.f32 %v1608, %v1782
      %v1881 = vadd.f32 %v1609, %v1787
      %v1882 = vadd.f32 %v1610, %v1790
      %v1883 = vadd.f32 %v1611, %v1795
      %v1884 = vadd.f32 %v1612, %v1798
      %v1885 = vadd.f32 %v1613, %v1803
      %v1886 = vadd.f32 %v1614, %v1806
      %v1887 = vadd.f32 %v1615, %v1811
      %v1888 = vadd.f32 %v1616, %v1814
      %v1889 = vadd.f32 %v1617, %v1819
      %v1890 = vadd.f32 %v1618, %v1822
      %v1891 = vadd.f32 %v1619, %v1827
      %v1892 = vadd.f32 %v1620, %v1830
      %v1893 = vadd.f32 %v1621, %v1835
      %v1894 = vadd.f32 %v1622, %v1838
      %v1895 = vadd.f32 %v1623, %v1843
      %v1896 = vadd.f32 %v1624, %v1846
      %v1897 = vadd.f32 %v1625, %v1851
      %v1898 = vadd.f32 %v1626, %v1854
      %v1899 = vadd.f32 %v1627, %v1859
      %v1900 = vadd.f32 %v1628, %v1862
      %1901 = vst.msk [vmem:[#allocation2] sm:$0xff] %vm307, %v1865
      %1902 = vst.msk [vmem:[#allocation2 + $0x8] sm:$0xff] %vm307, %v1866
      %1903 = vst.msk [vmem:[#allocation2 + $0x10] sm:$0xff] %vm307, %v1867
      %1904 = vst.msk [vmem:[#allocation2 + $0x18] sm:$0xff] %vm307, %v1868
      %1905 = vst.msk [vmem:[#allocation2 + $0x20] sm:$0xff] %vm307, %v1869
      %1906 = vst.msk [vmem:[#allocation2 + $0x28] sm:$0xff] %vm307, %v1870
      %1907 = vst.msk [vmem:[#allocation2 + $0x30] sm:$0xff] %vm307, %v1871
      %1908 = vst.msk [vmem:[#allocation2 + $0x38] sm:$0xff] %vm307, %v1872
      %1909 = vst.msk [vmem:[#allocation2 + $0x40] sm:$0xff] %vm307, %v1873
      %1910 = vst.msk [vmem:[#allocation2 + $0x48] sm:$0xff] %vm307, %v1874
      %1911 = vst.msk [vmem:[#allocation2 + $0x50] sm:$0xff] %vm307, %v1875
      %1912 = vst.msk [vmem:[#allocation2 + $0x58] sm:$0xff] %vm307, %v1876
      %1913 = vst.msk [vmem:[#allocation2 + $0x60] sm:$0xff] %vm307, %v1877
      %1914 = vst.msk [vmem:[#allocation2 + $0x68] sm:$0xff] %vm307, %v1878
      %1915 = vst.msk [vmem:[#allocation2 + $0x70] sm:$0xff] %vm307, %v1879
      %1916 = vst.msk [vmem:[#allocation2 + $0x78] sm:$0xff] %vm307, %v1880
      %1917 = vst.msk [vmem:[#allocation2 + $0x80] sm:$0xff] %vm307, %v1881
      %1918 = vst.msk [vmem:[#allocation2 + $0x88] sm:$0xff] %vm307, %v1882
      %1919 = vst.msk [vmem:[#allocation2 + $0x90] sm:$0xff] %vm307, %v1883
      %1920 = vst.msk [vmem:[#allocation2 + $0x98] sm:$0xff] %vm307, %v1884
      %1921 = vst.msk [vmem:[#allocation2 + $0xa0] sm:$0xff] %vm307, %v1885
      %1922 = vst.msk [vmem:[#allocation2 + $0xa8] sm:$0xff] %vm307, %v1886
      %1923 = vst.msk [vmem:[#allocation2 + $0xb0] sm:$0xff] %vm307, %v1887
      %1924 = vst.msk [vmem:[#allocation2 + $0xb8] sm:$0xff] %vm307, %v1888
      %1925 = vst.msk [vmem:[#allocation2 + $0xc0] sm:$0xff] %vm307, %v1889
      %1926 = vst.msk [vmem:[#allocation2 + $0xc8] sm:$0xff] %vm307, %v1890
      %1927 = vst.msk [vmem:[#allocation2 + $0xd0] sm:$0xff] %vm307, %v1891
      %1928 = vst.msk [vmem:[#allocation2 + $0xd8] sm:$0xff] %vm307, %v1892
      %1929 = vst.msk [vmem:[#allocation2 + $0xe0] sm:$0xff] %vm307, %v1893
      %1930 = vst.msk [vmem:[#allocation2 + $0xe8] sm:$0xff] %vm307, %v1894
      %1931 = vst.msk [vmem:[#allocation2 + $0xf0] sm:$0xff] %vm307, %v1895
      %1932 = vst.msk [vmem:[#allocation2 + $0xf8] sm:$0xff] %vm307, %v1896
      %1933 = vst.msk [vmem:[#allocation2 + $0x100] sm:$0xff] %vm307, %v1897
      %1934 = vst.msk [vmem:[#allocation2 + $0x108] sm:$0xff] %vm307, %v1898
      %1935 = vst.msk [vmem:[#allocation2 + $0x110] sm:$0xff] %vm307, %v1899
      %1936 = vst.msk [vmem:[#allocation2 + $0x118] sm:$0xff] %vm307, %v1900
      %v1937 = vld [vmem:[%s300 + $0x13] sm:$0xff]
      %v1938 = vld [vmem:[%s300 + $0x1b] sm:$0xff]
      %v1939 = vld [vmem:[%s300 + $0x23] sm:$0xff]
      %v1940 = vld [vmem:[%s300 + $0x2b] sm:$0xff]
      %v1941 = vld [vmem:[%s300 + $0x33] sm:$0xff]
      %v1942 = vld [vmem:[%s300 + $0x3b] sm:$0xff]
      %v1943 = vld [vmem:[%s300 + $0x43] sm:$0xff]
      %v1944 = vld [vmem:[%s300 + $0x4b] sm:$0xff]
      %v1945 = vld [vmem:[%s300 + $0x53] sm:$0xff]
      %v1946 = vld [vmem:[%s300 + $0x5b] sm:$0xff]
      %v1947 = vld [vmem:[%s300 + $0x63] sm:$0xff]
      %v1948 = vld [vmem:[%s300 + $0x6b] sm:$0xff]
      %v1949 = vld [vmem:[%s300 + $0x73] sm:$0xff]
      %v1950 = vld [vmem:[%s300 + $0x7b] sm:$0xff]
      %v1951 = vld [vmem:[%s300 + $0x83] sm:$0xff]
      %v1952 = vld [vmem:[%s300 + $0x8b] sm:$0xff]
      %v1953 = vld [vmem:[%s300 + $0x93] sm:$0xff]
      %v1954 = vld [vmem:[%s300 + $0x9b] sm:$0xff]
      %v1955 = vld [vmem:[%s300 + $0xa3] sm:$0xff]
      %v1956 = vld [vmem:[%s300 + $0xab] sm:$0xff]
      %v1957 = vld [vmem:[%s300 + $0xb3] sm:$0xff]
      %v1958 = vld [vmem:[%s300 + $0xbb] sm:$0xff]
      %v1959 = vld [vmem:[%s300 + $0xc3] sm:$0xff]
      %v1960 = vld [vmem:[%s300 + $0xcb] sm:$0xff]
      %v1961 = vld [vmem:[%s300 + $0xd3] sm:$0xff]
      %v1962 = vld [vmem:[%s300 + $0xdb] sm:$0xff]
      %v1963 = vld [vmem:[%s300 + $0xe3] sm:$0xff]
      %v1964 = vld [vmem:[%s300 + $0xeb] sm:$0xff]
      %v1965 = vld [vmem:[%s300 + $0xf3] sm:$0xff]
      %v1966 = vld [vmem:[%s300 + $0xfb] sm:$0xff]
      %v1967 = vld [vmem:[%s300 + $0x103] sm:$0xff]
      %v1968 = vld [vmem:[%s300 + $0x10b] sm:$0xff]
      %v1969 = vld [vmem:[%s300 + $0x113] sm:$0xff]
      %v1970 = vld [vmem:[%s300 + $0x11b] sm:$0xff]
      %v1971 = vld [vmem:[%s300 + $0x123] sm:$0xff]
      %v1972 = vld [vmem:[%s300 + $0x12b] sm:$0xff]
      %v1973 = vpack.c.bf16 %v1938, %v1937
      %v1974 = vpack.c.bf16 %v1940, %v1939
      %v1975 = vpack.c.bf16 %v1942, %v1941
      %v1976 = vpack.c.bf16 %v1944, %v1943
      %v1977 = vpack.c.bf16 %v1946, %v1945
      %v1978 = vpack.c.bf16 %v1948, %v1947
      %v1979 = vpack.c.bf16 %v1950, %v1949
      %v1980 = vpack.c.bf16 %v1952, %v1951
      %v1981 = vpack.c.bf16 %v1954, %v1953
      %v1982 = vpack.c.bf16 %v1956, %v1955
      %v1983 = vpack.c.bf16 %v1958, %v1957
      %v1984 = vpack.c.bf16 %v1960, %v1959
      %v1985 = vpack.c.bf16 %v1962, %v1961
      %v1986 = vpack.c.bf16 %v1964, %v1963
      %v1987 = vpack.c.bf16 %v1966, %v1965
      %v1988 = vpack.c.bf16 %v1968, %v1967
      %v1989 = vpack.c.bf16 %v1970, %v1969
      %v1990 = vpack.c.bf16 %v1972, %v1971
      %v1991 = vld [vmem:[#allocation2] sm:$0xff]
      %v1992 = vld [vmem:[#allocation2 + $0x8] sm:$0xff]
      %v1993 = vld [vmem:[#allocation2 + $0x10] sm:$0xff]
      %v1994 = vld [vmem:[#allocation2 + $0x18] sm:$0xff]
      %v1995 = vld [vmem:[#allocation2 + $0x20] sm:$0xff]
      %v1996 = vld [vmem:[#allocation2 + $0x28] sm:$0xff]
      %v1997 = vld [vmem:[#allocation2 + $0x30] sm:$0xff]
      %v1998 = vld [vmem:[#allocation2 + $0x38] sm:$0xff]
      %v1999 = vld [vmem:[#allocation2 + $0x40] sm:$0xff]
      %v2000 = vld [vmem:[#allocation2 + $0x48] sm:$0xff]
      %v2001 = vld [vmem:[#allocation2 + $0x50] sm:$0xff]
      %v2002 = vld [vmem:[#allocation2 + $0x58] sm:$0xff]
      %v2003 = vld [vmem:[#allocation2 + $0x60] sm:$0xff]
      %v2004 = vld [vmem:[#allocation2 + $0x68] sm:$0xff]
      %v2005 = vld [vmem:[#allocation2 + $0x70] sm:$0xff]
      %v2006 = vld [vmem:[#allocation2 + $0x78] sm:$0xff]
      %v2007 = vld [vmem:[#allocation2 + $0x80] sm:$0xff]
      %v2008 = vld [vmem:[#allocation2 + $0x88] sm:$0xff]
      %v2009 = vld [vmem:[#allocation2 + $0x90] sm:$0xff]
      %v2010 = vld [vmem:[#allocation2 + $0x98] sm:$0xff]
      %v2011 = vld [vmem:[#allocation2 + $0xa0] sm:$0xff]
      %v2012 = vld [vmem:[#allocation2 + $0xa8] sm:$0xff]
      %v2013 = vld [vmem:[#allocation2 + $0xb0] sm:$0xff]
      %v2014 = vld [vmem:[#allocation2 + $0xb8] sm:$0xff]
      %v2015 = vld [vmem:[#allocation2 + $0xc0] sm:$0xff]
      %v2016 = vld [vmem:[#allocation2 + $0xc8] sm:$0xff]
      %v2017 = vld [vmem:[#allocation2 + $0xd0] sm:$0xff]
      %v2018 = vld [vmem:[#allocation2 + $0xd8] sm:$0xff]
      %v2019 = vld [vmem:[#allocation2 + $0xe0] sm:$0xff]
      %v2020 = vld [vmem:[#allocation2 + $0xe8] sm:$0xff]
      %v2021 = vld [vmem:[#allocation2 + $0xf0] sm:$0xff]
      %v2022 = vld [vmem:[#allocation2 + $0xf8] sm:$0xff]
      %v2023 = vld [vmem:[#allocation2 + $0x100] sm:$0xff]
      %v2024 = vld [vmem:[#allocation2 + $0x108] sm:$0xff]
      %v2025 = vld [vmem:[#allocation2 + $0x110] sm:$0xff]
      %v2026 = vld [vmem:[#allocation2 + $0x118] sm:$0xff]
      %s2027 = scalar_lea.vmem %s1, 8
      %v2028 = vld [vmem:[%s2027] sm:$0x3]
      %v2030 = vsel %vm435, %v1973, 0
      %v2033 = vsel %vm435, %v1974, 0
      %v2036 = vsel %vm435, %v1975, 0
      %v2039 = vsel %vm435, %v1976, 0
      %v2042 = vsel %vm435, %v1977, 0
      %v2045 = vsel %vm435, %v1978, 0
      %v2048 = vsel %vm435, %v1979, 0
      %v2051 = vsel %vm435, %v1980, 0
      %v2054 = vsel %vm435, %v1981, 0
      %v2057 = vsel %vm435, %v1982, 0
      %v2060 = vsel %vm435, %v1983, 0
      %v2063 = vsel %vm435, %v1984, 0
      %v2066 = vsel %vm435, %v1985, 0
      %v2069 = vsel %vm435, %v1986, 0
      %v2072 = vsel %vm435, %v1987, 0
      %v2075 = vsel %vm435, %v1988, 0
      %v2078 = vsel %vm435, %v1989, 0
      %v2081 = vsel %vm435, %v1990, 0
      %v2084 = vsel %vm490, %v2028, 0
      %2086 = vmatprep.subr.bf16.mxu0 0
      %2087 = vmatpush1.bf16.msra.mxu0 %v2084
      %2088 = vmatprep.subr.bf16.mxu0 0
      %2089 = vmatpush1.bf16.msra.mxu0 0
      %2090 = vmatprep.subr.bf16.mxu0 0
      %2091 = vmatpush1.bf16.msra.mxu0 0
      %2092 = vmatprep.subr.bf16.mxu0 0
      %2093 = vmatpush1.bf16.msra.mxu0 0
      %2094 = vmatprep.subr.bf16.mxu0 0
      %2095 = vmatpush1.bf16.msra.mxu0 0
      %2096 = vmatprep.subr.bf16.mxu0 0
      %2097 = vmatpush1.bf16.msra.mxu0 0
      %2098 = vmatprep.subr.bf16.mxu0 0
      %2099 = vmatpush1.bf16.msra.mxu0 0
      %2100 = vmatprep.subr.bf16.mxu0 0
      %2101 = vmatpush1.bf16.msra.mxu0 0
      %2102 = vmatprep.subr.bf16.mxu0 0
      %2103 = vmatpush1.bf16.msra.mxu0 0
      %2104 = vmatprep.subr.bf16.mxu0 0
      %2105 = vmatpush1.bf16.msra.mxu0 0
      %2106 = vmatprep.subr.bf16.mxu0 0
      %2107 = vmatpush1.bf16.msra.mxu0 0
      %2108 = vmatprep.subr.bf16.mxu0 0
      %2109 = vmatpush1.bf16.msra.mxu0 0
      %2110 = vmatprep.subr.bf16.mxu0 0
      %2111 = vmatpush1.bf16.msra.mxu0 0
      %2112 = vmatprep.subr.bf16.mxu0 0
      %2113 = vmatpush1.bf16.msra.mxu0 0
      %2114 = vmatprep.subr.bf16.mxu0 0
      %2115 = vmatpush1.bf16.msra.mxu0 0
      %2116 = vmatprep.subr.bf16.mxu0 0
      %2117 = vmatpush1.bf16.msra.mxu0 0
      %2118 = vmatprep.mubr.bf16.mxu0 0
      %2119 = vmatmul.mubr.bf16.gmra.mrb[0].mxu0 %v2030
      %v2120 = vpop.f32.mrb[0].mxu0
      %v2121 = vadd.f32 0.0, %v2120
      %v2122 = vpop.f32.mrb[0].mxu0
      %v2123 = vpop.f32.mrb[0].mxu0
      %v2124 = vadd.f32 0.0, %v2123
      %v2125 = vpop.f32.mrb[0].mxu0
      %2126 = vmatprep.mubr.bf16.mxu0 0
      %2127 = vmatmul.mubr.bf16.gmra.mrb[0].mxu0 %v2033
      %v2128 = vpop.f32.mrb[0].mxu0
      %v2129 = vadd.f32 0.0, %v2128
      %v2130 = vpop.f32.mrb[0].mxu0
      %v2131 = vpop.f32.mrb[0].mxu0
      %v2132 = vadd.f32 0.0, %v2131
      %v2133 = vpop.f32.mrb[0].mxu0
      %2134 = vmatprep.mubr.bf16.mxu0 0
      %2135 = vmatmul.mubr.bf16.gmra.mrb[0].mxu0 %v2036
      %v2136 = vpop.f32.mrb[0].mxu0
      %v2137 = vadd.f32 0.0, %v2136
      %v2138 = vpop.f32.mrb[0].mxu0
      %v2139 = vpop.f32.mrb[0].mxu0
      %v2140 = vadd.f32 0.0, %v2139
      %v2141 = vpop.f32.mrb[0].mxu0
      %2142 = vmatprep.mubr.bf16.mxu0 0
      %2143 = vmatmul.mubr.bf16.gmra.mrb[0].mxu0 %v2039
      %v2144 = vpop.f32.mrb[0].mxu0
      %v2145 = vadd.f32 0.0, %v2144
      %v2146 = vpop.f32.mrb[0].mxu0
      %v2147 = vpop.f32.mrb[0].mxu0
      %v2148 = vadd.f32 0.0, %v2147
      %v2149 = vpop.f32.mrb[0].mxu0
      %2150 = vmatprep.mubr.bf16.mxu0 0
      %2151 = vmatmul.mubr.bf16.gmra.mrb[0].mxu0 %v2042
      %v2152 = vpop.f32.mrb[0].mxu0
      %v2153 = vadd.f32 0.0, %v2152
      %v2154 = vpop.f32.mrb[0].mxu0
      %v2155 = vpop.f32.mrb[0].mxu0
      %v2156 = vadd.f32 0.0, %v2155
      %v2157 = vpop.f32.mrb[0].mxu0
      %2158 = vmatprep.mubr.bf16.mxu0 0
      %2159 = vmatmul.mubr.bf16.gmra.mrb[0].mxu0 %v2045
      %v2160 = vpop.f32.mrb[0].mxu0
      %v2161 = vadd.f32 0.0, %v2160
      %v2162 = vpop.f32.mrb[0].mxu0
      %v2163 = vpop.f32.mrb[0].mxu0
      %v2164 = vadd.f32 0.0, %v2163
      %v2165 = vpop.f32.mrb[0].mxu0
      %2166 = vmatprep.mubr.bf16.mxu0 0
      %2167 = vmatmul.mubr.bf16.gmra.mrb[0].mxu0 %v2048
      %v2168 = vpop.f32.mrb[0].mxu0
      %v2169 = vadd.f32 0.0, %v2168
      %v2170 = vpop.f32.mrb[0].mxu0
      %v2171 = vpop.f32.mrb[0].mxu0
      %v2172 = vadd.f32 0.0, %v2171
      %v2173 = vpop.f32.mrb[0].mxu0
      %2174 = vmatprep.mubr.bf16.mxu0 0
      %2175 = vmatmul.mubr.bf16.gmra.mrb[0].mxu0 %v2051
      %v2176 = vpop.f32.mrb[0].mxu0
      %v2177 = vadd.f32 0.0, %v2176
      %v2178 = vpop.f32.mrb[0].mxu0
      %v2179 = vpop.f32.mrb[0].mxu0
      %v2180 = vadd.f32 0.0, %v2179
      %v2181 = vpop.f32.mrb[0].mxu0
      %2182 = vmatprep.mubr.bf16.mxu0 0
      %2183 = vmatmul.mubr.bf16.gmra.mrb[0].mxu0 %v2054
      %v2184 = vpop.f32.mrb[0].mxu0
      %v2185 = vadd.f32 0.0, %v2184
      %v2186 = vpop.f32.mrb[0].mxu0
      %v2187 = vpop.f32.mrb[0].mxu0
      %v2188 = vadd.f32 0.0, %v2187
      %v2189 = vpop.f32.mrb[0].mxu0
      %2190 = vmatprep.mubr.bf16.mxu0 0
      %2191 = vmatmul.mubr.bf16.gmra.mrb[0].mxu0 %v2057
      %v2192 = vpop.f32.mrb[0].mxu0
      %v2193 = vadd.f32 0.0, %v2192
      %v2194 = vpop.f32.mrb[0].mxu0
      %v2195 = vpop.f32.mrb[0].mxu0
      %v2196 = vadd.f32 0.0, %v2195
      %v2197 = vpop.f32.mrb[0].mxu0
      %2198 = vmatprep.mubr.bf16.mxu0 0
      %2199 = vmatmul.mubr.bf16.gmra.mrb[0].mxu0 %v2060
      %v2200 = vpop.f32.mrb[0].mxu0
      %v2201 = vadd.f32 0.0, %v2200
      %v2202 = vpop.f32.mrb[0].mxu0
      %v2203 = vpop.f32.mrb[0].mxu0
      %v2204 = vadd.f32 0.0, %v2203
      %v2205 = vpop.f32.mrb[0].mxu0
      %2206 = vmatprep.mubr.bf16.mxu0 0
      %2207 = vmatmul.mubr.bf16.gmra.mrb[0].mxu0 %v2063
      %v2208 = vpop.f32.mrb[0].mxu0
      %v2209 = vadd.f32 0.0, %v2208
      %v2210 = vpop.f32.mrb[0].mxu0
      %v2211 = vpop.f32.mrb[0].mxu0
      %v2212 = vadd.f32 0.0, %v2211
      %v2213 = vpop.f32.mrb[0].mxu0
      %2214 = vmatprep.mubr.bf16.mxu0 0
      %2215 = vmatmul.mubr.bf16.gmra.mrb[0].mxu0 %v2066
      %v2216 = vpop.f32.mrb[0].mxu0
      %v2217 = vadd.f32 0.0, %v2216
      %v2218 = vpop.f32.mrb[0].mxu0
      %v2219 = vpop.f32.mrb[0].mxu0
      %v2220 = vadd.f32 0.0, %v2219
      %v2221 = vpop.f32.mrb[0].mxu0
      %2222 = vmatprep.mubr.bf16.mxu0 0
      %2223 = vmatmul.mubr.bf16.gmra.mrb[0].mxu0 %v2069
      %v2224 = vpop.f32.mrb[0].mxu0
      %v2225 = vadd.f32 0.0, %v2224
      %v2226 = vpop.f32.mrb[0].mxu0
      %v2227 = vpop.f32.mrb[0].mxu0
      %v2228 = vadd.f32 0.0, %v2227
      %v2229 = vpop.f32.mrb[0].mxu0
      %2230 = vmatprep.mubr.bf16.mxu0 0
      %2231 = vmatmul.mubr.bf16.gmra.mrb[0].mxu0 %v2072
      %v2232 = vpop.f32.mrb[0].mxu0
      %v2233 = vadd.f32 0.0, %v2232
      %v2234 = vpop.f32.mrb[0].mxu0
      %v2235 = vpop.f32.mrb[0].mxu0
      %v2236 = vadd.f32 0.0, %v2235
      %v2237 = vpop.f32.mrb[0].mxu0
      %2238 = vmatprep.mubr.bf16.mxu0 0
      %2239 = vmatmul.mubr.bf16.gmra.mrb[0].mxu0 %v2075
      %v2240 = vpop.f32.mrb[0].mxu0
      %v2241 = vadd.f32 0.0, %v2240
      %v2242 = vpop.f32.mrb[0].mxu0
      %v2243 = vpop.f32.mrb[0].mxu0
      %v2244 = vadd.f32 0.0, %v2243
      %v2245 = vpop.f32.mrb[0].mxu0
      %2246 = vmatprep.mubr.bf16.mxu0 0
      %2247 = vmatmul.mubr.bf16.gmra.mrb[0].mxu0 %v2078
      %v2248 = vpop.f32.mrb[0].mxu0
      %v2249 = vadd.f32 0.0, %v2248
      %v2250 = vpop.f32.mrb[0].mxu0
      %v2251 = vpop.f32.mrb[0].mxu0
      %v2252 = vadd.f32 0.0, %v2251
      %v2253 = vpop.f32.mrb[0].mxu0
      %2254 = vmatprep.mubr.bf16.mxu0 0
      %2255 = vmatmul.mubr.bf16.gmra.mrb[0].mxu0 %v2081
      %v2256 = vpop.f32.mrb[0].mxu0
      %v2257 = vadd.f32 0.0, %v2256
      %v2258 = vpop.f32.mrb[0].mxu0
      %v2259 = vpop.f32.mrb[0].mxu0
      %v2260 = vadd.f32 0.0, %v2259
      %v2261 = vpop.f32.mrb[0].mxu0
      %2262 = vdwg.mxu0
      %v2263 = vadd.f32 %v1991, %v2121
      %v2264 = vadd.f32 %v1992, %v2124
      %v2265 = vadd.f32 %v1993, %v2129
      %v2266 = vadd.f32 %v1994, %v2132
      %v2267 = vadd.f32 %v1995, %v2137
      %v2268 = vadd.f32 %v1996, %v2140
      %v2269 = vadd.f32 %v1997, %v2145
      %v2270 = vadd.f32 %v1998, %v2148
      %v2271 = vadd.f32 %v1999, %v2153
      %v2272 = vadd.f32 %v2000, %v2156
      %v2273 = vadd.f32 %v2001, %v2161
      %v2274 = vadd.f32 %v2002, %v2164
      %v2275 = vadd.f32 %v2003, %v2169
      %v2276 = vadd.f32 %v2004, %v2172
      %v2277 = vadd.f32 %v2005, %v2177
      %v2278 = vadd.f32 %v2006, %v2180
      %v2279 = vadd.f32 %v2007, %v2185
      %v2280 = vadd.f32 %v2008, %v2188
      %v2281 = vadd.f32 %v2009, %v2193
      %v2282 = vadd.f32 %v2010, %v2196
      %v2283 = vadd.f32 %v2011, %v2201
      %v2284 = vadd.f32 %v2012, %v2204
      %v2285 = vadd.f32 %v2013, %v2209
      %v2286 = vadd.f32 %v2014, %v2212
      %v2287 = vadd.f32 %v2015, %v2217
      %v2288 = vadd.f32 %v2016, %v2220
      %v2289 = vadd.f32 %v2017, %v2225
      %v2290 = vadd.f32 %v2018, %v2228
      %v2291 = vadd.f32 %v2019, %v2233
      %v2292 = vadd.f32 %v2020, %v2236
      %v2293 = vadd.f32 %v2021, %v2241
      %v2294 = vadd.f32 %v2022, %v2244
      %v2295 = vadd.f32 %v2023, %v2249
      %v2296 = vadd.f32 %v2024, %v2252
      %v2297 = vadd.f32 %v2025, %v2257
      %v2298 = vadd.f32 %v2026, %v2260
      %2299 = vst.msk [vmem:[#allocation2] sm:$0xff] %vm307, %v2263
      %2300 = vst.msk [vmem:[#allocation2 + $0x8] sm:$0xff] %vm307, %v2264
      %2301 = vst.msk [vmem:[#allocation2 + $0x10] sm:$0xff] %vm307, %v2265
      %2302 = vst.msk [vmem:[#allocation2 + $0x18] sm:$0xff] %vm307, %v2266
      %2303 = vst.msk [vmem:[#allocation2 + $0x20] sm:$0xff] %vm307, %v2267
      %2304 = vst.msk [vmem:[#allocation2 + $0x28] sm:$0xff] %vm307, %v2268
      %2305 = vst.msk [vmem:[#allocation2 + $0x30] sm:$0xff] %vm307, %v2269
      %2306 = vst.msk [vmem:[#allocation2 + $0x38] sm:$0xff] %vm307, %v2270
      %2307 = vst.msk [vmem:[#allocation2 + $0x40] sm:$0xff] %vm307, %v2271
      %2308 = vst.msk [vmem:[#allocation2 + $0x48] sm:$0xff] %vm307, %v2272
      %2309 = vst.msk [vmem:[#allocation2 + $0x50] sm:$0xff] %vm307, %v2273
      %2310 = vst.msk [vmem:[#allocation2 + $0x58] sm:$0xff] %vm307, %v2274
      %2311 = vst.msk [vmem:[#allocation2 + $0x60] sm:$0xff] %vm307, %v2275
      %2312 = vst.msk [vmem:[#allocation2 + $0x68] sm:$0xff] %vm307, %v2276
      %2313 = vst.msk [vmem:[#allocation2 + $0x70] sm:$0xff] %vm307, %v2277
      %2314 = vst.msk [vmem:[#allocation2 + $0x78] sm:$0xff] %vm307, %v2278
      %2315 = vst.msk [vmem:[#allocation2 + $0x80] sm:$0xff] %vm307, %v2279
      %2316 = vst.msk [vmem:[#allocation2 + $0x88] sm:$0xff] %vm307, %v2280
      %2317 = vst.msk [vmem:[#allocation2 + $0x90] sm:$0xff] %vm307, %v2281
      %2318 = vst.msk [vmem:[#allocation2 + $0x98] sm:$0xff] %vm307, %v2282
      %2319 = vst.msk [vmem:[#allocation2 + $0xa0] sm:$0xff] %vm307, %v2283
      %2320 = vst.msk [vmem:[#allocation2 + $0xa8] sm:$0xff] %vm307, %v2284
      %2321 = vst.msk [vmem:[#allocation2 + $0xb0] sm:$0xff] %vm307, %v2285
      %2322 = vst.msk [vmem:[#allocation2 + $0xb8] sm:$0xff] %vm307, %v2286
      %2323 = vst.msk [vmem:[#allocation2 + $0xc0] sm:$0xff] %vm307, %v2287
      %2324 = vst.msk [vmem:[#allocation2 + $0xc8] sm:$0xff] %vm307, %v2288
      %2325 = vst.msk [vmem:[#allocation2 + $0xd0] sm:$0xff] %vm307, %v2289
      %2326 = vst.msk [vmem:[#allocation2 + $0xd8] sm:$0xff] %vm307, %v2290
      %2327 = vst.msk [vmem:[#allocation2 + $0xe0] sm:$0xff] %vm307, %v2291
      %2328 = vst.msk [vmem:[#allocation2 + $0xe8] sm:$0xff] %vm307, %v2292
      %2329 = vst.msk [vmem:[#allocation2 + $0xf0] sm:$0xff] %vm307, %v2293
      %2330 = vst.msk [vmem:[#allocation2 + $0xf8] sm:$0xff] %vm307, %v2294
      %2331 = vst.msk [vmem:[#allocation2 + $0x100] sm:$0xff] %vm307, %v2295
      %2332 = vst.msk [vmem:[#allocation2 + $0x108] sm:$0xff] %vm307, %v2296
      %2333 = vst.msk [vmem:[#allocation2 + $0x110] sm:$0xff] %vm307, %v2297
      %2334 = vst.msk [vmem:[#allocation2 + $0x118] sm:$0xff] %vm307, %v2298
      %v2335 = vld [vmem:[%s300 + $0x14] sm:$0xff]
      %v2336 = vld [vmem:[%s300 + $0x1c] sm:$0xff]
      %v2337 = vld [vmem:[%s300 + $0x24] sm:$0xff]
      %v2338 = vld [vmem:[%s300 + $0x2c] sm:$0xff]
      %v2339 = vld [vmem:[%s300 + $0x34] sm:$0xff]
      %v2340 = vld [vmem:[%s300 + $0x3c] sm:$0xff]
      %v2341 = vld [vmem:[%s300 + $0x44] sm:$0xff]
      %v2342 = vld [vmem:[%s300 + $0x4c] sm:$0xff]
      %v2343 = vld [vmem:[%s300 + $0x54] sm:$0xff]
      %v2344 = vld [vmem:[%s300 + $0x5c] sm:$0xff]
      %v2345 = vld [vmem:[%s300 + $0x64] sm:$0xff]
      %v2346 = vld [vmem:[%s300 + $0x6c] sm:$0xff]
      %v2347 = vld [vmem:[%s300 + $0x74] sm:$0xff]
      %v2348 = vld [vmem:[%s300 + $0x7c] sm:$0xff]
      %v2349 = vld [vmem:[%s300 + $0x84] sm:$0xff]
      %v2350 = vld [vmem:[%s300 + $0x8c] sm:$0xff]
      %v2351 = vld [vmem:[%s300 + $0x94] sm:$0xff]
      %v2352 = vld [vmem:[%s300 + $0x9c] sm:$0xff]
      %v2353 = vld [vmem:[%s300 + $0xa4] sm:$0xff]
      %v2354 = vld [vmem:[%s300 + $0xac] sm:$0xff]
      %v2355 = vld [vmem:[%s300 + $0xb4] sm:$0xff]
      %v2356 = vld [vmem:[%s300 + $0xbc] sm:$0xff]
      %v2357 = vld [vmem:[%s300 + $0xc4] sm:$0xff]
      %v2358 = vld [vmem:[%s300 + $0xcc] sm:$0xff]
      %v2359 = vld [vmem:[%s300 + $0xd4] sm:$0xff]
      %v2360 = vld [vmem:[%s300 + $0xdc] sm:$0xff]
      %v2361 = vld [vmem:[%s300 + $0xe4] sm:$0xff]
      %v2362 = vld [vmem:[%s300 + $0xec] sm:$0xff]
      %v2363 = vld [vmem:[%s300 + $0xf4] sm:$0xff]
      %v2364 = vld [vmem:[%s300 + $0xfc] sm:$0xff]
      %v2365 = vld [vmem:[%s300 + $0x104] sm:$0xff]
      %v2366 = vld [vmem:[%s300 + $0x10c] sm:$0xff]
      %v2367 = vld [vmem:[%s300 + $0x114] sm:$0xff]
      %v2368 = vld [vmem:[%s300 + $0x11c] sm:$0xff]
      %v2369 = vld [vmem:[%s300 + $0x124] sm:$0xff]
      %v2370 = vld [vmem:[%s300 + $0x12c] sm:$0xff]
      %v2371 = vpack.c.bf16 %v2336, %v2335
      %v2372 = vpack.c.bf16 %v2338, %v2337
      %v2373 = vpack.c.bf16 %v2340, %v2339
      %v2374 = vpack.c.bf16 %v2342, %v2341
      %v2375 = vpack.c.bf16 %v2344, %v2343
      %v2376 = vpack.c.bf16 %v2346, %v2345
      %v2377 = vpack.c.bf16 %v2348, %v2347
      %v2378 = vpack.c.bf16 %v2350, %v2349
      %v2379 = vpack.c.bf16 %v2352, %v2351
      %v2380 = vpack.c.bf16 %v2354, %v2353
      %v2381 = vpack.c.bf16 %v2356, %v2355
      %v2382 = vpack.c.bf16 %v2358, %v2357
      %v2383 = vpack.c.bf16 %v2360, %v2359
      %v2384 = vpack.c.bf16 %v2362, %v2361
      %v2385 = vpack.c.bf16 %v2364, %v2363
      %v2386 = vpack.c.bf16 %v2366, %v2365
      %v2387 = vpack.c.bf16 %v2368, %v2367
      %v2388 = vpack.c.bf16 %v2370, %v2369
      %v2389 = vld [vmem:[#allocation2] sm:$0xff]
      %v2390 = vld [vmem:[#allocation2 + $0x8] sm:$0xff]
      %v2391 = vld [vmem:[#allocation2 + $0x10] sm:$0xff]
      %v2392 = vld [vmem:[#allocation2 + $0x18] sm:$0xff]
      %v2393 = vld [vmem:[#allocation2 + $0x20] sm:$0xff]
      %v2394 = vld [vmem:[#allocation2 + $0x28] sm:$0xff]
      %v2395 = vld [vmem:[#allocation2 + $0x30] sm:$0xff]
      %v2396 = vld [vmem:[#allocation2 + $0x38] sm:$0xff]
      %v2397 = vld [vmem:[#allocation2 + $0x40] sm:$0xff]
      %v2398 = vld [vmem:[#allocation2 + $0x48] sm:$0xff]
      %v2399 = vld [vmem:[#allocation2 + $0x50] sm:$0xff]
      %v2400 = vld [vmem:[#allocation2 + $0x58] sm:$0xff]
      %v2401 = vld [vmem:[#allocation2 + $0x60] sm:$0xff]
      %v2402 = vld [vmem:[#allocation2 + $0x68] sm:$0xff]
      %v2403 = vld [vmem:[#allocation2 + $0x70] sm:$0xff]
      %v2404 = vld [vmem:[#allocation2 + $0x78] sm:$0xff]
      %v2405 = vld [vmem:[#allocation2 + $0x80] sm:$0xff]
      %v2406 = vld [vmem:[#allocation2 + $0x88] sm:$0xff]
      %v2407 = vld [vmem:[#allocation2 + $0x90] sm:$0xff]
      %v2408 = vld [vmem:[#allocation2 + $0x98] sm:$0xff]
      %v2409 = vld [vmem:[#allocation2 + $0xa0] sm:$0xff]
      %v2410 = vld [vmem:[#allocation2 + $0xa8] sm:$0xff]
      %v2411 = vld [vmem:[#allocation2 + $0xb0] sm:$0xff]
      %v2412 = vld [vmem:[#allocation2 + $0xb8] sm:$0xff]
      %v2413 = vld [vmem:[#allocation2 + $0xc0] sm:$0xff]
      %v2414 = vld [vmem:[#allocation2 + $0xc8] sm:$0xff]
      %v2415 = vld [vmem:[#allocation2 + $0xd0] sm:$0xff]
      %v2416 = vld [vmem:[#allocation2 + $0xd8] sm:$0xff]
      %v2417 = vld [vmem:[#allocation2 + $0xe0] sm:$0xff]
      %v2418 = vld [vmem:[#allocation2 + $0xe8] sm:$0xff]
      %v2419 = vld [vmem:[#allocation2 + $0xf0] sm:$0xff]
      %v2420 = vld [vmem:[#allocation2 + $0xf8] sm:$0xff]
      %v2421 = vld [vmem:[#allocation2 + $0x100] sm:$0xff]
      %v2422 = vld [vmem:[#allocation2 + $0x108] sm:$0xff]
      %v2423 = vld [vmem:[#allocation2 + $0x110] sm:$0xff]
      %v2424 = vld [vmem:[#allocation2 + $0x118] sm:$0xff]
      %s2425 = scalar_lea.vmem %s1, 10
      %v2426 = vld [vmem:[%s2425] sm:$0x3]
      %v2428 = vsel %vm435, %v2371, 0
      %v2431 = vsel %vm435, %v2372, 0
      %v2434 = vsel %vm435, %v2373, 0
      %v2437 = vsel %vm435, %v2374, 0
      %v2440 = vsel %vm435, %v2375, 0
      %v2443 = vsel %vm435, %v2376, 0
      %v2446 = vsel %vm435, %v2377, 0
      %v2449 = vsel %vm435, %v2378, 0
      %v2452 = vsel %vm435, %v2379, 0
      %v2455 = vsel %vm435, %v2380, 0
      %v2458 = vsel %vm435, %v2381, 0
      %v2461 = vsel %vm435, %v2382, 0
      %v2464 = vsel %vm435, %v2383, 0
      %v2467 = vsel %vm435, %v2384, 0
      %v2470 = vsel %vm435, %v2385, 0
      %v2473 = vsel %vm435, %v2386, 0
      %v2476 = vsel %vm435, %v2387, 0
      %v2479 = vsel %vm435, %v2388, 0
      %v2482 = vsel %vm490, %v2426, 0
      %2484 = vmatprep.subr.bf16.mxu0 0
      %2485 = vmatpush1.bf16.msra.mxu0 %v2482
      %2486 = vmatprep.subr.bf16.mxu0 0
      %2487 = vmatpush1.bf16.msra.mxu0 0
      %2488 = vmatprep.subr.bf16.mxu0 0
      %2489 = vmatpush1.bf16.msra.mxu0 0
      %2490 = vmatprep.subr.bf16.mxu0 0
      %2491 = vmatpush1.bf16.msra.mxu0 0
      %2492 = vmatprep.subr.bf16.mxu0 0
      %2493 = vmatpush1.bf16.msra.mxu0 0
      %2494 = vmatprep.subr.bf16.mxu0 0
      %2495 = vmatpush1.bf16.msra.mxu0 0
      %2496 = vmatprep.subr.bf16.mxu0 0
      %2497 = vmatpush1.bf16.msra.mxu0 0
      %2498 = vmatprep.subr.bf16.mxu0 0
      %2499 = vmatpush1.bf16.msra.mxu0 0
      %2500 = vmatprep.subr.bf16.mxu0 0
      %2501 = vmatpush1.bf16.msra.mxu0 0
      %2502 = vmatprep.subr.bf16.mxu0 0
      %2503 = vmatpush1.bf16.msra.mxu0 0
      %2504 = vmatprep.subr.bf16.mxu0 0
      %2505 = vmatpush1.bf16.msra.mxu0 0
      %2506 = vmatprep.subr.bf16.mxu0 0
      %2507 = vmatpush1.bf16.msra.mxu0 0
      %2508 = vmatprep.subr.bf16.mxu0 0
      %2509 = vmatpush1.bf16.msra.mxu0 0
      %2510 = vmatprep.subr.bf16.mxu0 0
      %2511 = vmatpush1.bf16.msra.mxu0 0
      %2512 = vmatprep.subr.bf16.mxu0 0
      %2513 = vmatpush1.bf16.msra.mxu0 0
      %2514 = vmatprep.subr.bf16.mxu0 0
      %2515 = vmatpush1.bf16.msra.mxu0 0
      %2516 = vmatprep.mubr.bf16.mxu0 0
      %2517 = vmatmul.mubr.bf16.gmra.mrb[0].mxu0 %v2428
      %v2518 = vpop.f32.mrb[0].mxu0
      %v2519 = vadd.f32 0.0, %v2518
      %v2520 = vpop.f32.mrb[0].mxu0
      %v2521 = vpop.f32.mrb[0].mxu0
      %v2522 = vadd.f32 0.0, %v2521
      %v2523 = vpop.f32.mrb[0].mxu0
      %2524 = vmatprep.mubr.bf16.mxu0 0
      %2525 = vmatmul.mubr.bf16.gmra.mrb[0].mxu0 %v2431
      %v2526 = vpop.f32.mrb[0].mxu0
      %v2527 = vadd.f32 0.0, %v2526
      %v2528 = vpop.f32.mrb[0].mxu0
      %v2529 = vpop.f32.mrb[0].mxu0
      %v2530 = vadd.f32 0.0, %v2529
      %v2531 = vpop.f32.mrb[0].mxu0
      %2532 = vmatprep.mubr.bf16.mxu0 0
      %2533 = vmatmul.mubr.bf16.gmra.mrb[0].mxu0 %v2434
      %v2534 = vpop.f32.mrb[0].mxu0
      %v2535 = vadd.f32 0.0, %v2534
      %v2536 = vpop.f32.mrb[0].mxu0
      %v2537 = vpop.f32.mrb[0].mxu0
      %v2538 = vadd.f32 0.0, %v2537
      %v2539 = vpop.f32.mrb[0].mxu0
      %2540 = vmatprep.mubr.bf16.mxu0 0
      %2541 = vmatmul.mubr.bf16.gmra.mrb[0].mxu0 %v2437
      %v2542 = vpop.f32.mrb[0].mxu0
      %v2543 = vadd.f32 0.0, %v2542
      %v2544 = vpop.f32.mrb[0].mxu0
      %v2545 = vpop.f32.mrb[0].mxu0
      %v2546 = vadd.f32 0.0, %v2545
      %v2547 = vpop.f32.mrb[0].mxu0
      %2548 = vmatprep.mubr.bf16.mxu0 0
      %2549 = vmatmul.mubr.bf16.gmra.mrb[0].mxu0 %v2440
      %v2550 = vpop.f32.mrb[0].mxu0
      %v2551 = vadd.f32 0.0, %v2550
      %v2552 = vpop.f32.mrb[0].mxu0
      %v2553 = vpop.f32.mrb[0].mxu0
      %v2554 = vadd.f32 0.0, %v2553
      %v2555 = vpop.f32.mrb[0].mxu0
      %2556 = vmatprep.mubr.bf16.mxu0 0
      %2557 = vmatmul.mubr.bf16.gmra.mrb[0].mxu0 %v2443
      %v2558 = vpop.f32.mrb[0].mxu0
      %v2559 = vadd.f32 0.0, %v2558
      %v2560 = vpop.f32.mrb[0].mxu0
      %v2561 = vpop.f32.mrb[0].mxu0
      %v2562 = vadd.f32 0.0, %v2561
      %v2563 = vpop.f32.mrb[0].mxu0
      %2564 = vmatprep.mubr.bf16.mxu0 0
      %2565 = vmatmul.mubr.bf16.gmra.mrb[0].mxu0 %v2446
      %v2566 = vpop.f32.mrb[0].mxu0
      %v2567 = vadd.f32 0.0, %v2566
      %v2568 = vpop.f32.mrb[0].mxu0
      %v2569 = vpop.f32.mrb[0].mxu0
      %v2570 = vadd.f32 0.0, %v2569
      %v2571 = vpop.f32.mrb[0].mxu0
      %2572 = vmatprep.mubr.bf16.mxu0 0
      %2573 = vmatmul.mubr.bf16.gmra.mrb[0].mxu0 %v2449
      %v2574 = vpop.f32.mrb[0].mxu0
      %v2575 = vadd.f32 0.0, %v2574
      %v2576 = vpop.f32.mrb[0].mxu0
      %v2577 = vpop.f32.mrb[0].mxu0
      %v2578 = vadd.f32 0.0, %v2577
      %v2579 = vpop.f32.mrb[0].mxu0
      %2580 = vmatprep.mubr.bf16.mxu0 0
      %2581 = vmatmul.mubr.bf16.gmra.mrb[0].mxu0 %v2452
      %v2582 = vpop.f32.mrb[0].mxu0
      %v2583 = vadd.f32 0.0, %v2582
      %v2584 = vpop.f32.mrb[0].mxu0
      %v2585 = vpop.f32.mrb[0].mxu0
      %v2586 = vadd.f32 0.0, %v2585
      %v2587 = vpop.f32.mrb[0].mxu0
      %2588 = vmatprep.mubr.bf16.mxu0 0
      %2589 = vmatmul.mubr.bf16.gmra.mrb[0].mxu0 %v2455
      %v2590 = vpop.f32.mrb[0].mxu0
      %v2591 = vadd.f32 0.0, %v2590
      %v2592 = vpop.f32.mrb[0].mxu0
      %v2593 = vpop.f32.mrb[0].mxu0
      %v2594 = vadd.f32 0.0, %v2593
      %v2595 = vpop.f32.mrb[0].mxu0
      %2596 = vmatprep.mubr.bf16.mxu0 0
      %2597 = vmatmul.mubr.bf16.gmra.mrb[0].mxu0 %v2458
      %v2598 = vpop.f32.mrb[0].mxu0
      %v2599 = vadd.f32 0.0, %v2598
      %v2600 = vpop.f32.mrb[0].mxu0
      %v2601 = vpop.f32.mrb[0].mxu0
      %v2602 = vadd.f32 0.0, %v2601
      %v2603 = vpop.f32.mrb[0].mxu0
      %2604 = vmatprep.mubr.bf16.mxu0 0
      %2605 = vmatmul.mubr.bf16.gmra.mrb[0].mxu0 %v2461
      %v2606 = vpop.f32.mrb[0].mxu0
      %v2607 = vadd.f32 0.0, %v2606
      %v2608 = vpop.f32.mrb[0].mxu0
      %v2609 = vpop.f32.mrb[0].mxu0
      %v2610 = vadd.f32 0.0, %v2609
      %v2611 = vpop.f32.mrb[0].mxu0
      %2612 = vmatprep.mubr.bf16.mxu0 0
      %2613 = vmatmul.mubr.bf16.gmra.mrb[0].mxu0 %v2464
      %v2614 = vpop.f32.mrb[0].mxu0
      %v2615 = vadd.f32 0.0, %v2614
      %v2616 = vpop.f32.mrb[0].mxu0
      %v2617 = vpop.f32.mrb[0].mxu0
      %v2618 = vadd.f32 0.0, %v2617
      %v2619 = vpop.f32.mrb[0].mxu0
      %2620 = vmatprep.mubr.bf16.mxu0 0
      %2621 = vmatmul.mubr.bf16.gmra.mrb[0].mxu0 %v2467
      %v2622 = vpop.f32.mrb[0].mxu0
      %v2623 = vadd.f32 0.0, %v2622
      %v2624 = vpop.f32.mrb[0].mxu0
      %v2625 = vpop.f32.mrb[0].mxu0
      %v2626 = vadd.f32 0.0, %v2625
      %v2627 = vpop.f32.mrb[0].mxu0
      %2628 = vmatprep.mubr.bf16.mxu0 0
      %2629 = vmatmul.mubr.bf16.gmra.mrb[0].mxu0 %v2470
      %v2630 = vpop.f32.mrb[0].mxu0
      %v2631 = vadd.f32 0.0, %v2630
      %v2632 = vpop.f32.mrb[0].mxu0
      %v2633 = vpop.f32.mrb[0].mxu0
      %v2634 = vadd.f32 0.0, %v2633
      %v2635 = vpop.f32.mrb[0].mxu0
      %2636 = vmatprep.mubr.bf16.mxu0 0
      %2637 = vmatmul.mubr.bf16.gmra.mrb[0].mxu0 %v2473
      %v2638 = vpop.f32.mrb[0].mxu0
      %v2639 = vadd.f32 0.0, %v2638
      %v2640 = vpop.f32.mrb[0].mxu0
      %v2641 = vpop.f32.mrb[0].mxu0
      %v2642 = vadd.f32 0.0, %v2641
      %v2643 = vpop.f32.mrb[0].mxu0
      %2644 = vmatprep.mubr.bf16.mxu0 0
      %2645 = vmatmul.mubr.bf16.gmra.mrb[0].mxu0 %v2476
      %v2646 = vpop.f32.mrb[0].mxu0
      %v2647 = vadd.f32 0.0, %v2646
      %v2648 = vpop.f32.mrb[0].mxu0
      %v2649 = vpop.f32.mrb[0].mxu0
      %v2650 = vadd.f32 0.0, %v2649
      %v2651 = vpop.f32.mrb[0].mxu0
      %2652 = vmatprep.mubr.bf16.mxu0 0
      %2653 = vmatmul.mubr.bf16.gmra.mrb[0].mxu0 %v2479
      %v2654 = vpop.f32.mrb[0].mxu0
      %v2655 = vadd.f32 0.0, %v2654
      %v2656 = vpop.f32.mrb[0].mxu0
      %v2657 = vpop.f32.mrb[0].mxu0
      %v2658 = vadd.f32 0.0, %v2657
      %v2659 = vpop.f32.mrb[0].mxu0
      %2660 = vdwg.mxu0
      %v2661 = vadd.f32 %v2389, %v2519
      %v2662 = vadd.f32 %v2390, %v2522
      %v2663 = vadd.f32 %v2391, %v2527
      %v2664 = vadd.f32 %v2392, %v2530
      %v2665 = vadd.f32 %v2393, %v2535
      %v2666 = vadd.f32 %v2394, %v2538
      %v2667 = vadd.f32 %v2395, %v2543
      %v2668 = vadd.f32 %v2396, %v2546
      %v2669 = vadd.f32 %v2397, %v2551
      %v2670 = vadd.f32 %v2398, %v2554
      %v2671 = vadd.f32 %v2399, %v2559
      %v2672 = vadd.f32 %v2400, %v2562
      %v2673 = vadd.f32 %v2401, %v2567
      %v2674 = vadd.f32 %v2402, %v2570
      %v2675 = vadd.f32 %v2403, %v2575
      %v2676 = vadd.f32 %v2404, %v2578
      %v2677 = vadd.f32 %v2405, %v2583
      %v2678 = vadd.f32 %v2406, %v2586
      %v2679 = vadd.f32 %v2407, %v2591
      %v2680 = vadd.f32 %v2408, %v2594
      %v2681 = vadd.f32 %v2409, %v2599
      %v2682 = vadd.f32 %v2410, %v2602
      %v2683 = vadd.f32 %v2411, %v2607
      %v2684 = vadd.f32 %v2412, %v2610
      %v2685 = vadd.f32 %v2413, %v2615
      %v2686 = vadd.f32 %v2414, %v2618
      %v2687 = vadd.f32 %v2415, %v2623
      %v2688 = vadd.f32 %v2416, %v2626
      %v2689 = vadd.f32 %v2417, %v2631
      %v2690 = vadd.f32 %v2418, %v2634
      %v2691 = vadd.f32 %v2419, %v2639
      %v2692 = vadd.f32 %v2420, %v2642
      %v2693 = vadd.f32 %v2421, %v2647
      %v2694 = vadd.f32 %v2422, %v2650
      %v2695 = vadd.f32 %v2423, %v2655
      %v2696 = vadd.f32 %v2424, %v2658
      %2697 = vst.msk [vmem:[#allocation2] sm:$0xff] %vm307, %v2661
      %2698 = vst.msk [vmem:[#allocation2 + $0x8] sm:$0xff] %vm307, %v2662
      %2699 = vst.msk [vmem:[#allocation2 + $0x10] sm:$0xff] %vm307, %v2663
      %2700 = vst.msk [vmem:[#allocation2 + $0x18] sm:$0xff] %vm307, %v2664
      %2701 = vst.msk [vmem:[#allocation2 + $0x20] sm:$0xff] %vm307, %v2665
      %2702 = vst.msk [vmem:[#allocation2 + $0x28] sm:$0xff] %vm307, %v2666
      %2703 = vst.msk [vmem:[#allocation2 + $0x30] sm:$0xff] %vm307, %v2667
      %2704 = vst.msk [vmem:[#allocation2 + $0x38] sm:$0xff] %vm307, %v2668
      %2705 = vst.msk [vmem:[#allocation2 + $0x40] sm:$0xff] %vm307, %v2669
      %2706 = vst.msk [vmem:[#allocation2 + $0x48] sm:$0xff] %vm307, %v2670
      %2707 = vst.msk [vmem:[#allocation2 + $0x50] sm:$0xff] %vm307, %v2671
      %2708 = vst.msk [vmem:[#allocation2 + $0x58] sm:$0xff] %vm307, %v2672
      %2709 = vst.msk [vmem:[#allocation2 + $0x60] sm:$0xff] %vm307, %v2673
      %2710 = vst.msk [vmem:[#allocation2 + $0x68] sm:$0xff] %vm307, %v2674
      %2711 = vst.msk [vmem:[#allocation2 + $0x70] sm:$0xff] %vm307, %v2675
      %2712 = vst.msk [vmem:[#allocation2 + $0x78] sm:$0xff] %vm307, %v2676
      %2713 = vst.msk [vmem:[#allocation2 + $0x80] sm:$0xff] %vm307, %v2677
      %2714 = vst.msk [vmem:[#allocation2 + $0x88] sm:$0xff] %vm307, %v2678
      %2715 = vst.msk [vmem:[#allocation2 + $0x90] sm:$0xff] %vm307, %v2679
      %2716 = vst.msk [vmem:[#allocation2 + $0x98] sm:$0xff] %vm307, %v2680
      %2717 = vst.msk [vmem:[#allocation2 + $0xa0] sm:$0xff] %vm307, %v2681
      %2718 = vst.msk [vmem:[#allocation2 + $0xa8] sm:$0xff] %vm307, %v2682
      %2719 = vst.msk [vmem:[#allocation2 + $0xb0] sm:$0xff] %vm307, %v2683
      %2720 = vst.msk [vmem:[#allocation2 + $0xb8] sm:$0xff] %vm307, %v2684
      %2721 = vst.msk [vmem:[#allocation2 + $0xc0] sm:$0xff] %vm307, %v2685
      %2722 = vst.msk [vmem:[#allocation2 + $0xc8] sm:$0xff] %vm307, %v2686
      %2723 = vst.msk [vmem:[#allocation2 + $0xd0] sm:$0xff] %vm307, %v2687
      %2724 = vst.msk [vmem:[#allocation2 + $0xd8] sm:$0xff] %vm307, %v2688
      %2725 = vst.msk [vmem:[#allocation2 + $0xe0] sm:$0xff] %vm307, %v2689
      %2726 = vst.msk [vmem:[#allocation2 + $0xe8] sm:$0xff] %vm307, %v2690
      %2727 = vst.msk [vmem:[#allocation2 + $0xf0] sm:$0xff] %vm307, %v2691
      %2728 = vst.msk [vmem:[#allocation2 + $0xf8] sm:$0xff] %vm307, %v2692
      %2729 = vst.msk [vmem:[#allocation2 + $0x100] sm:$0xff] %vm307, %v2693
      %2730 = vst.msk [vmem:[#allocation2 + $0x108] sm:$0xff] %vm307, %v2694
      %2731 = vst.msk [vmem:[#allocation2 + $0x110] sm:$0xff] %vm307, %v2695
      %2732 = vst.msk [vmem:[#allocation2 + $0x118] sm:$0xff] %vm307, %v2696
      %v2733 = vld [vmem:[%s300 + $0x24] sm:$0xff]
      %v2734 = vld [vmem:[%s300 + $0x2c] sm:$0xff]
      %v2735 = vld [vmem:[%s300 + $0x34] sm:$0xff]
      %v2736 = vld [vmem:[%s300 + $0x3c] sm:$0xff]
      %v2737 = vld [vmem:[%s300 + $0x44] sm:$0xff]
      %v2738 = vld [vmem:[%s300 + $0x4c] sm:$0xff]
      %v2739 = vld [vmem:[%s300 + $0x54] sm:$0xff]
      %v2740 = vld [vmem:[%s300 + $0x5c] sm:$0xff]
      %v2741 = vld [vmem:[%s300 + $0x64] sm:$0xff]
      %v2742 = vld [vmem:[%s300 + $0x6c] sm:$0xff]
      %v2743 = vld [vmem:[%s300 + $0x74] sm:$0xff]
      %v2744 = vld [vmem:[%s300 + $0x7c] sm:$0xff]
      %v2745 = vld [vmem:[%s300 + $0x84] sm:$0xff]
      %v2746 = vld [vmem:[%s300 + $0x8c] sm:$0xff]
      %v2747 = vld [vmem:[%s300 + $0x94] sm:$0xff]
      %v2748 = vld [vmem:[%s300 + $0x9c] sm:$0xff]
      %v2749 = vld [vmem:[%s300 + $0xa4] sm:$0xff]
      %v2750 = vld [vmem:[%s300 + $0xac] sm:$0xff]
      %v2751 = vld [vmem:[%s300 + $0xb4] sm:$0xff]
      %v2752 = vld [vmem:[%s300 + $0xbc] sm:$0xff]
      %v2753 = vld [vmem:[%s300 + $0xc4] sm:$0xff]
      %v2754 = vld [vmem:[%s300 + $0xcc] sm:$0xff]
      %v2755 = vld [vmem:[%s300 + $0xd4] sm:$0xff]
      %v2756 = vld [vmem:[%s300 + $0xdc] sm:$0xff]
      %v2757 = vld [vmem:[%s300 + $0xe4] sm:$0xff]
      %v2758 = vld [vmem:[%s300 + $0xec] sm:$0xff]
      %v2759 = vld [vmem:[%s300 + $0xf4] sm:$0xff]
      %v2760 = vld [vmem:[%s300 + $0xfc] sm:$0xff]
      %v2761 = vld [vmem:[%s300 + $0x104] sm:$0xff]
      %v2762 = vld [vmem:[%s300 + $0x10c] sm:$0xff]
      %v2763 = vld [vmem:[%s300 + $0x114] sm:$0xff]
      %v2764 = vld [vmem:[%s300 + $0x11c] sm:$0xff]
      %v2765 = vld [vmem:[%s300 + $0x124] sm:$0xff]
      %v2766 = vld [vmem:[%s300 + $0x12c] sm:$0xff]
      %v2767 = vld [vmem:[%s300 + $0x134] sm:$0xff]
      %v2768 = vld [vmem:[%s300 + $0x13c] sm:$0xff]
      %v2769 = vpack.c.bf16 %v2734, %v2733
      %v2770 = vpack.c.bf16 %v2736, %v2735
      %v2771 = vpack.c.bf16 %v2738, %v2737
      %v2772 = vpack.c.bf16 %v2740, %v2739
      %v2773 = vpack.c.bf16 %v2742, %v2741
      %v2774 = vpack.c.bf16 %v2744, %v2743
      %v2775 = vpack.c.bf16 %v2746, %v2745
      %v2776 = vpack.c.bf16 %v2748, %v2747
      %v2777 = vpack.c.bf16 %v2750, %v2749
      %v2778 = vpack.c.bf16 %v2752, %v2751
      %v2779 = vpack.c.bf16 %v2754, %v2753
      %v2780 = vpack.c.bf16 %v2756, %v2755
      %v2781 = vpack.c.bf16 %v2758, %v2757
      %v2782 = vpack.c.bf16 %v2760, %v2759
      %v2783 = vpack.c.bf16 %v2762, %v2761
      %v2784 = vpack.c.bf16 %v2764, %v2763
      %v2785 = vpack.c.bf16 %v2766, %v2765
      %v2786 = vpack.c.bf16 %v2768, %v2767
      %v2787 = vld [vmem:[#allocation2] sm:$0xff]
      %v2788 = vld [vmem:[#allocation2 + $0x8] sm:$0xff]
      %v2789 = vld [vmem:[#allocation2 + $0x10] sm:$0xff]
      %v2790 = vld [vmem:[#allocation2 + $0x18] sm:$0xff]
      %v2791 = vld [vmem:[#allocation2 + $0x20] sm:$0xff]
      %v2792 = vld [vmem:[#allocation2 + $0x28] sm:$0xff]
      %v2793 = vld [vmem:[#allocation2 + $0x30] sm:$0xff]
      %v2794 = vld [vmem:[#allocation2 + $0x38] sm:$0xff]
      %v2795 = vld [vmem:[#allocation2 + $0x40] sm:$0xff]
      %v2796 = vld [vmem:[#allocation2 + $0x48] sm:$0xff]
      %v2797 = vld [vmem:[#allocation2 + $0x50] sm:$0xff]
      %v2798 = vld [vmem:[#allocation2 + $0x58] sm:$0xff]
      %v2799 = vld [vmem:[#allocation2 + $0x60] sm:$0xff]
      %v2800 = vld [vmem:[#allocation2 + $0x68] sm:$0xff]
      %v2801 = vld [vmem:[#allocation2 + $0x70] sm:$0xff]
      %v2802 = vld [vmem:[#allocation2 + $0x78] sm:$0xff]
      %v2803 = vld [vmem:[#allocation2 + $0x80] sm:$0xff]
      %v2804 = vld [vmem:[#allocation2 + $0x88] sm:$0xff]
      %v2805 = vld [vmem:[#allocation2 + $0x90] sm:$0xff]
      %v2806 = vld [vmem:[#allocation2 + $0x98] sm:$0xff]
      %v2807 = vld [vmem:[#allocation2 + $0xa0] sm:$0xff]
      %v2808 = vld [vmem:[#allocation2 + $0xa8] sm:$0xff]
      %v2809 = vld [vmem:[#allocation2 + $0xb0] sm:$0xff]
      %v2810 = vld [vmem:[#allocation2 + $0xb8] sm:$0xff]
      %v2811 = vld [vmem:[#allocation2 + $0xc0] sm:$0xff]
      %v2812 = vld [vmem:[#allocation2 + $0xc8] sm:$0xff]
      %v2813 = vld [vmem:[#allocation2 + $0xd0] sm:$0xff]
      %v2814 = vld [vmem:[#allocation2 + $0xd8] sm:$0xff]
      %v2815 = vld [vmem:[#allocation2 + $0xe0] sm:$0xff]
      %v2816 = vld [vmem:[#allocation2 + $0xe8] sm:$0xff]
      %v2817 = vld [vmem:[#allocation2 + $0xf0] sm:$0xff]
      %v2818 = vld [vmem:[#allocation2 + $0xf8] sm:$0xff]
      %v2819 = vld [vmem:[#allocation2 + $0x100] sm:$0xff]
      %v2820 = vld [vmem:[#allocation2 + $0x108] sm:$0xff]
      %v2821 = vld [vmem:[#allocation2 + $0x110] sm:$0xff]
      %v2822 = vld [vmem:[#allocation2 + $0x118] sm:$0xff]
      %s2823 = scalar_lea.vmem %s1, 12
      %v2824 = vld [vmem:[%s2823] sm:$0x3]
      %v2826 = vsel %vm435, %v2769, 0
      %v2829 = vsel %vm435, %v2770, 0
      %v2832 = vsel %vm435, %v2771, 0
      %v2835 = vsel %vm435, %v2772, 0
      %v2838 = vsel %vm435, %v2773, 0
      %v2841 = vsel %vm435, %v2774, 0
      %v2844 = vsel %vm435, %v2775, 0
      %v2847 = vsel %vm435, %v2776, 0
      %v2850 = vsel %vm435, %v2777, 0
      %v2853 = vsel %vm435, %v2778, 0
      %v2856 = vsel %vm435, %v2779, 0
      %v2859 = vsel %vm435, %v2780, 0
      %v2862 = vsel %vm435, %v2781, 0
      %v2865 = vsel %vm435, %v2782, 0
      %v2868 = vsel %vm435, %v2783, 0
      %v2871 = vsel %vm435, %v2784, 0
      %v2874 = vsel %vm435, %v2785, 0
      %v2877 = vsel %vm435, %v2786, 0
      %v2880 = vsel %vm490, %v2824, 0
      %2882 = vmatprep.subr.bf16.mxu0 0
      %2883 = vmatpush1.bf16.msra.mxu0 %v2880
      %2884 = vmatprep.subr.bf16.mxu0 0
      %2885 = vmatpush1.bf16.msra.mxu0 0
      %2886 = vmatprep.subr.bf16.mxu0 0
      %2887 = vmatpush1.bf16.msra.mxu0 0
      %2888 = vmatprep.subr.bf16.mxu0 0
      %2889 = vmatpush1.bf16.msra.mxu0 0
      %2890 = vmatprep.subr.bf16.mxu0 0
      %2891 = vmatpush1.bf16.msra.mxu0 0
      %2892 = vmatprep.subr.bf16.mxu0 0
      %2893 = vmatpush1.bf16.msra.mxu0 0
      %2894 = vmatprep.subr.bf16.mxu0 0
      %2895 = vmatpush1.bf16.msra.mxu0 0
      %2896 = vmatprep.subr.bf16.mxu0 0
      %2897 = vmatpush1.bf16.msra.mxu0 0
      %2898 = vmatprep.subr.bf16.mxu0 0
      %2899 = vmatpush1.bf16.msra.mxu0 0
      %2900 = vmatprep.subr.bf16.mxu0 0
      %2901 = vmatpush1.bf16.msra.mxu0 0
      %2902 = vmatprep.subr.bf16.mxu0 0
      %2903 = vmatpush1.bf16.msra.mxu0 0
      %2904 = vmatprep.subr.bf16.mxu0 0
      %2905 = vmatpush1.bf16.msra.mxu0 0
      %2906 = vmatprep.subr.bf16.mxu0 0
      %2907 = vmatpush1.bf16.msra.mxu0 0
      %2908 = vmatprep.subr.bf16.mxu0 0
      %2909 = vmatpush1.bf16.msra.mxu0 0
      %2910 = vmatprep.subr.bf16.mxu0 0
      %2911 = vmatpush1.bf16.msra.mxu0 0
      %2912 = vmatprep.subr.bf16.mxu0 0
      %2913 = vmatpush1.bf16.msra.mxu0 0
      %2914 = vmatprep.mubr.bf16.mxu0 0
      %2915 = vmatmul.mubr.bf16.gmra.mrb[0].mxu0 %v2826
      %v2916 = vpop.f32.mrb[0].mxu0
      %v2917 = vadd.f32 0.0, %v2916
      %v2918 = vpop.f32.mrb[0].mxu0
      %v2919 = vpop.f32.mrb[0].mxu0
      %v2920 = vadd.f32 0.0, %v2919
      %v2921 = vpop.f32.mrb[0].mxu0
      %2922 = vmatprep.mubr.bf16.mxu0 0
      %2923 = vmatmul.mubr.bf16.gmra.mrb[0].mxu0 %v2829
      %v2924 = vpop.f32.mrb[0].mxu0
      %v2925 = vadd.f32 0.0, %v2924
      %v2926 = vpop.f32.mrb[0].mxu0
      %v2927 = vpop.f32.mrb[0].mxu0
      %v2928 = vadd.f32 0.0, %v2927
      %v2929 = vpop.f32.mrb[0].mxu0
      %2930 = vmatprep.mubr.bf16.mxu0 0
      %2931 = vmatmul.mubr.bf16.gmra.mrb[0].mxu0 %v2832
      %v2932 = vpop.f32.mrb[0].mxu0
      %v2933 = vadd.f32 0.0, %v2932
      %v2934 = vpop.f32.mrb[0].mxu0
      %v2935 = vpop.f32.mrb[0].mxu0
      %v2936 = vadd.f32 0.0, %v2935
      %v2937 = vpop.f32.mrb[0].mxu0
      %2938 = vmatprep.mubr.bf16.mxu0 0
      %2939 = vmatmul.mubr.bf16.gmra.mrb[0].mxu0 %v2835
      %v2940 = vpop.f32.mrb[0].mxu0
      %v2941 = vadd.f32 0.0, %v2940
      %v2942 = vpop.f32.mrb[0].mxu0
      %v2943 = vpop.f32.mrb[0].mxu0
      %v2944 = vadd.f32 0.0, %v2943
      %v2945 = vpop.f32.mrb[0].mxu0
      %2946 = vmatprep.mubr.bf16.mxu0 0
      %2947 = vmatmul.mubr.bf16.gmra.mrb[0].mxu0 %v2838
      %v2948 = vpop.f32.mrb[0].mxu0
      %v2949 = vadd.f32 0.0, %v2948
      %v2950 = vpop.f32.mrb[0].mxu0
      %v2951 = vpop.f32.mrb[0].mxu0
      %v2952 = vadd.f32 0.0, %v2951
      %v2953 = vpop.f32.mrb[0].mxu0
      %2954 = vmatprep.mubr.bf16.mxu0 0
      %2955 = vmatmul.mubr.bf16.gmra.mrb[0].mxu0 %v2841
      %v2956 = vpop.f32.mrb[0].mxu0
      %v2957 = vadd.f32 0.0, %v2956
      %v2958 = vpop.f32.mrb[0].mxu0
      %v2959 = vpop.f32.mrb[0].mxu0
      %v2960 = vadd.f32 0.0, %v2959
      %v2961 = vpop.f32.mrb[0].mxu0
      %2962 = vmatprep.mubr.bf16.mxu0 0
      %2963 = vmatmul.mubr.bf16.gmra.mrb[0].mxu0 %v2844
      %v2964 = vpop.f32.mrb[0].mxu0
      %v2965 = vadd.f32 0.0, %v2964
      %v2966 = vpop.f32.mrb[0].mxu0
      %v2967 = vpop.f32.mrb[0].mxu0
      %v2968 = vadd.f32 0.0, %v2967
      %v2969 = vpop.f32.mrb[0].mxu0
      %2970 = vmatprep.mubr.bf16.mxu0 0
      %2971 = vmatmul.mubr.bf16.gmra.mrb[0].mxu0 %v2847
      %v2972 = vpop.f32.mrb[0].mxu0
      %v2973 = vadd.f32 0.0, %v2972
      %v2974 = vpop.f32.mrb[0].mxu0
      %v2975 = vpop.f32.mrb[0].mxu0
      %v2976 = vadd.f32 0.0, %v2975
      %v2977 = vpop.f32.mrb[0].mxu0
      %2978 = vmatprep.mubr.bf16.mxu0 0
      %2979 = vmatmul.mubr.bf16.gmra.mrb[0].mxu0 %v2850
      %v2980 = vpop.f32.mrb[0].mxu0
      %v2981 = vadd.f32 0.0, %v2980
      %v2982 = vpop.f32.mrb[0].mxu0
      %v2983 = vpop.f32.mrb[0].mxu0
      %v2984 = vadd.f32 0.0, %v2983
      %v2985 = vpop.f32.mrb[0].mxu0
      %2986 = vmatprep.mubr.bf16.mxu0 0
      %2987 = vmatmul.mubr.bf16.gmra.mrb[0].mxu0 %v2853
      %v2988 = vpop.f32.mrb[0].mxu0
      %v2989 = vadd.f32 0.0, %v2988
      %v2990 = vpop.f32.mrb[0].mxu0
      %v2991 = vpop.f32.mrb[0].mxu0
      %v2992 = vadd.f32 0.0, %v2991
      %v2993 = vpop.f32.mrb[0].mxu0
      %2994 = vmatprep.mubr.bf16.mxu0 0
      %2995 = vmatmul.mubr.bf16.gmra.mrb[0].mxu0 %v2856
      %v2996 = vpop.f32.mrb[0].mxu0
      %v2997 = vadd.f32 0.0, %v2996
      %v2998 = vpop.f32.mrb[0].mxu0
      %v2999 = vpop.f32.mrb[0].mxu0
      %v3000 = vadd.f32 0.0, %v2999
      %v3001 = vpop.f32.mrb[0].mxu0
      %3002 = vmatprep.mubr.bf16.mxu0 0
      %3003 = vmatmul.mubr.bf16.gmra.mrb[0].mxu0 %v2859
      %v3004 = vpop.f32.mrb[0].mxu0
      %v3005 = vadd.f32 0.0, %v3004
      %v3006 = vpop.f32.mrb[0].mxu0
      %v3007 = vpop.f32.mrb[0].mxu0
      %v3008 = vadd.f32 0.0, %v3007
      %v3009 = vpop.f32.mrb[0].mxu0
      %3010 = vmatprep.mubr.bf16.mxu0 0
      %3011 = vmatmul.mubr.bf16.gmra.mrb[0].mxu0 %v2862
      %v3012 = vpop.f32.mrb[0].mxu0
      %v3013 = vadd.f32 0.0, %v3012
      %v3014 = vpop.f32.mrb[0].mxu0
      %v3015 = vpop.f32.mrb[0].mxu0
      %v3016 = vadd.f32 0.0, %v3015
      %v3017 = vpop.f32.mrb[0].mxu0
      %3018 = vmatprep.mubr.bf16.mxu0 0
      %3019 = vmatmul.mubr.bf16.gmra.mrb[0].mxu0 %v2865
      %v3020 = vpop.f32.mrb[0].mxu0
      %v3021 = vadd.f32 0.0, %v3020
      %v3022 = vpop.f32.mrb[0].mxu0
      %v3023 = vpop.f32.mrb[0].mxu0
      %v3024 = vadd.f32 0.0, %v3023
      %v3025 = vpop.f32.mrb[0].mxu0
      %3026 = vmatprep.mubr.bf16.mxu0 0
      %3027 = vmatmul.mubr.bf16.gmra.mrb[0].mxu0 %v2868
      %v3028 = vpop.f32.mrb[0].mxu0
      %v3029 = vadd.f32 0.0, %v3028
      %v3030 = vpop.f32.mrb[0].mxu0
      %v3031 = vpop.f32.mrb[0].mxu0
      %v3032 = vadd.f32 0.0, %v3031
      %v3033 = vpop.f32.mrb[0].mxu0
      %3034 = vmatprep.mubr.bf16.mxu0 0
      %3035 = vmatmul.mubr.bf16.gmra.mrb[0].mxu0 %v2871
      %v3036 = vpop.f32.mrb[0].mxu0
      %v3037 = vadd.f32 0.0, %v3036
      %v3038 = vpop.f32.mrb[0].mxu0
      %v3039 = vpop.f32.mrb[0].mxu0
      %v3040 = vadd.f32 0.0, %v3039
      %v3041 = vpop.f32.mrb[0].mxu0
      %3042 = vmatprep.mubr.bf16.mxu0 0
      %3043 = vmatmul.mubr.bf16.gmra.mrb[0].mxu0 %v2874
      %v3044 = vpop.f32.mrb[0].mxu0
      %v3045 = vadd.f32 0.0, %v3044
      %v3046 = vpop.f32.mrb[0].mxu0
      %v3047 = vpop.f32.mrb[0].mxu0
      %v3048 = vadd.f32 0.0, %v3047
      %v3049 = vpop.f32.mrb[0].mxu0
      %3050 = vmatprep.mubr.bf16.mxu0 0
      %3051 = vmatmul.mubr.bf16.gmra.mrb[0].mxu0 %v2877
      %v3052 = vpop.f32.mrb[0].mxu0
      %v3053 = vadd.f32 0.0, %v3052
      %v3054 = vpop.f32.mrb[0].mxu0
      %v3055 = vpop.f32.mrb[0].mxu0
      %v3056 = vadd.f32 0.0, %v3055
      %v3057 = vpop.f32.mrb[0].mxu0
      %3058 = vdwg.mxu0
      %v3059 = vadd.f32 %v2787, %v2917
      %v3060 = vadd.f32 %v2788, %v2920
      %v3061 = vadd.f32 %v2789, %v2925
      %v3062 = vadd.f32 %v2790, %v2928
      %v3063 = vadd.f32 %v2791, %v2933
      %v3064 = vadd.f32 %v2792, %v2936
      %v3065 = vadd.f32 %v2793, %v2941
      %v3066 = vadd.f32 %v2794, %v2944
      %v3067 = vadd.f32 %v2795, %v2949
      %v3068 = vadd.f32 %v2796, %v2952
      %v3069 = vadd.f32 %v2797, %v2957
      %v3070 = vadd.f32 %v2798, %v2960
      %v3071 = vadd.f32 %v2799, %v2965
      %v3072 = vadd.f32 %v2800, %v2968
      %v3073 = vadd.f32 %v2801, %v2973
      %v3074 = vadd.f32 %v2802, %v2976
      %v3075 = vadd.f32 %v2803, %v2981
      %v3076 = vadd.f32 %v2804, %v2984
      %v3077 = vadd.f32 %v2805, %v2989
      %v3078 = vadd.f32 %v2806, %v2992
      %v3079 = vadd.f32 %v2807, %v2997
      %v3080 = vadd.f32 %v2808, %v3000
      %v3081 = vadd.f32 %v2809, %v3005
      %v3082 = vadd.f32 %v2810, %v3008
      %v3083 = vadd.f32 %v2811, %v3013
      %v3084 = vadd.f32 %v2812, %v3016
      %v3085 = vadd.f32 %v2813, %v3021
      %v3086 = vadd.f32 %v2814, %v3024
      %v3087 = vadd.f32 %v2815, %v3029
      %v3088 = vadd.f32 %v2816, %v3032
      %v3089 = vadd.f32 %v2817, %v3037
      %v3090 = vadd.f32 %v2818, %v3040
      %v3091 = vadd.f32 %v2819, %v3045
      %v3092 = vadd.f32 %v2820, %v3048
      %v3093 = vadd.f32 %v2821, %v3053
      %v3094 = vadd.f32 %v2822, %v3056
      %3095 = vst.msk [vmem:[#allocation2] sm:$0xff] %vm307, %v3059
      %3096 = vst.msk [vmem:[#allocation2 + $0x8] sm:$0xff] %vm307, %v3060
      %3097 = vst.msk [vmem:[#allocation2 + $0x10] sm:$0xff] %vm307, %v3061
      %3098 = vst.msk [vmem:[#allocation2 + $0x18] sm:$0xff] %vm307, %v3062
      %3099 = vst.msk [vmem:[#allocation2 + $0x20] sm:$0xff] %vm307, %v3063
      %3100 = vst.msk [vmem:[#allocation2 + $0x28] sm:$0xff] %vm307, %v3064
      %3101 = vst.msk [vmem:[#allocation2 + $0x30] sm:$0xff] %vm307, %v3065
      %3102 = vst.msk [vmem:[#allocation2 + $0x38] sm:$0xff] %vm307, %v3066
      %3103 = vst.msk [vmem:[#allocation2 + $0x40] sm:$0xff] %vm307, %v3067
      %3104 = vst.msk [vmem:[#allocation2 + $0x48] sm:$0xff] %vm307, %v3068
      %3105 = vst.msk [vmem:[#allocation2 + $0x50] sm:$0xff] %vm307, %v3069
      %3106 = vst.msk [vmem:[#allocation2 + $0x58] sm:$0xff] %vm307, %v3070
      %3107 = vst.msk [vmem:[#allocation2 + $0x60] sm:$0xff] %vm307, %v3071
      %3108 = vst.msk [vmem:[#allocation2 + $0x68] sm:$0xff] %vm307, %v3072
      %3109 = vst.msk [vmem:[#allocation2 + $0x70] sm:$0xff] %vm307, %v3073
      %3110 = vst.msk [vmem:[#allocation2 + $0x78] sm:$0xff] %vm307, %v3074
      %3111 = vst.msk [vmem:[#allocation2 + $0x80] sm:$0xff] %vm307, %v3075
      %3112 = vst.msk [vmem:[#allocation2 + $0x88] sm:$0xff] %vm307, %v3076
      %3113 = vst.msk [vmem:[#allocation2 + $0x90] sm:$0xff] %vm307, %v3077
      %3114 = vst.msk [vmem:[#allocation2 + $0x98] sm:$0xff] %vm307, %v3078
      %3115 = vst.msk [vmem:[#allocation2 + $0xa0] sm:$0xff] %vm307, %v3079
      %3116 = vst.msk [vmem:[#allocation2 + $0xa8] sm:$0xff] %vm307, %v3080
      %3117 = vst.msk [vmem:[#allocation2 + $0xb0] sm:$0xff] %vm307, %v3081
      %3118 = vst.msk [vmem:[#allocation2 + $0xb8] sm:$0xff] %vm307, %v3082
      %3119 = vst.msk [vmem:[#allocation2 + $0xc0] sm:$0xff] %vm307, %v3083
      %3120 = vst.msk [vmem:[#allocation2 + $0xc8] sm:$0xff] %vm307, %v3084
      %3121 = vst.msk [vmem:[#allocation2 + $0xd0] sm:$0xff] %vm307, %v3085
      %3122 = vst.msk [vmem:[#allocation2 + $0xd8] sm:$0xff] %vm307, %v3086
      %3123 = vst.msk [vmem:[#allocation2 + $0xe0] sm:$0xff] %vm307, %v3087
      %3124 = vst.msk [vmem:[#allocation2 + $0xe8] sm:$0xff] %vm307, %v3088
      %3125 = vst.msk [vmem:[#allocation2 + $0xf0] sm:$0xff] %vm307, %v3089
      %3126 = vst.msk [vmem:[#allocation2 + $0xf8] sm:$0xff] %vm307, %v3090
      %3127 = vst.msk [vmem:[#allocation2 + $0x100] sm:$0xff] %vm307, %v3091
      %3128 = vst.msk [vmem:[#allocation2 + $0x108] sm:$0xff] %vm307, %v3092
      %3129 = vst.msk [vmem:[#allocation2 + $0x110] sm:$0xff] %vm307, %v3093
      %3130 = vst.msk [vmem:[#allocation2 + $0x118] sm:$0xff] %vm307, %v3094
      %v3131 = vld [vmem:[%s300 + $0x25] sm:$0xff]
      %v3132 = vld [vmem:[%s300 + $0x2d] sm:$0xff]
      %v3133 = vld [vmem:[%s300 + $0x35] sm:$0xff]
      %v3134 = vld [vmem:[%s300 + $0x3d] sm:$0xff]
      %v3135 = vld [vmem:[%s300 + $0x45] sm:$0xff]
      %v3136 = vld [vmem:[%s300 + $0x4d] sm:$0xff]
      %v3137 = vld [vmem:[%s300 + $0x55] sm:$0xff]
      %v3138 = vld [vmem:[%s300 + $0x5d] sm:$0xff]
      %v3139 = vld [vmem:[%s300 + $0x65] sm:$0xff]
      %v3140 = vld [vmem:[%s300 + $0x6d] sm:$0xff]
      %v3141 = vld [vmem:[%s300 + $0x75] sm:$0xff]
      %v3142 = vld [vmem:[%s300 + $0x7d] sm:$0xff]
      %v3143 = vld [vmem:[%s300 + $0x85] sm:$0xff]
      %v3144 = vld [vmem:[%s300 + $0x8d] sm:$0xff]
      %v3145 = vld [vmem:[%s300 + $0x95] sm:$0xff]
      %v3146 = vld [vmem:[%s300 + $0x9d] sm:$0xff]
      %v3147 = vld [vmem:[%s300 + $0xa5] sm:$0xff]
      %v3148 = vld [vmem:[%s300 + $0xad] sm:$0xff]
      %v3149 = vld [vmem:[%s300 + $0xb5] sm:$0xff]
      %v3150 = vld [vmem:[%s300 + $0xbd] sm:$0xff]
      %v3151 = vld [vmem:[%s300 + $0xc5] sm:$0xff]
      %v3152 = vld [vmem:[%s300 + $0xcd] sm:$0xff]
      %v3153 = vld [vmem:[%s300 + $0xd5] sm:$0xff]
      %v3154 = vld [vmem:[%s300 + $0xdd] sm:$0xff]
      %v3155 = vld [vmem:[%s300 + $0xe5] sm:$0xff]
      %v3156 = vld [vmem:[%s300 + $0xed] sm:$0xff]
      %v3157 = vld [vmem:[%s300 + $0xf5] sm:$0xff]
      %v3158 = vld [vmem:[%s300 + $0xfd] sm:$0xff]
      %v3159 = vld [vmem:[%s300 + $0x105] sm:$0xff]
      %v3160 = vld [vmem:[%s300 + $0x10d] sm:$0xff]
      %v3161 = vld [vmem:[%s300 + $0x115] sm:$0xff]
      %v3162 = vld [vmem:[%s300 + $0x11d] sm:$0xff]
      %v3163 = vld [vmem:[%s300 + $0x125] sm:$0xff]
      %v3164 = vld [vmem:[%s300 + $0x12d] sm:$0xff]
      %v3165 = vld [vmem:[%s300 + $0x135] sm:$0xff]
      %v3166 = vld [vmem:[%s300 + $0x13d] sm:$0xff]
      %v3167 = vpack.c.bf16 %v3132, %v3131
      %v3168 = vpack.c.bf16 %v3134, %v3133
      %v3169 = vpack.c.bf16 %v3136, %v3135
      %v3170 = vpack.c.bf16 %v3138, %v3137
      %v3171 = vpack.c.bf16 %v3140, %v3139
      %v3172 = vpack.c.bf16 %v3142, %v3141
      %v3173 = vpack.c.bf16 %v3144, %v3143
      %v3174 = vpack.c.bf16 %v3146, %v3145
      %v3175 = vpack.c.bf16 %v3148, %v3147
      %v3176 = vpack.c.bf16 %v3150, %v3149
      %v3177 = vpack.c.bf16 %v3152, %v3151
      %v3178 = vpack.c.bf16 %v3154, %v3153
      %v3179 = vpack.c.bf16 %v3156, %v3155
      %v3180 = vpack.c.bf16 %v3158, %v3157
      %v3181 = vpack.c.bf16 %v3160, %v3159
      %v3182 = vpack.c.bf16 %v3162, %v3161
      %v3183 = vpack.c.bf16 %v3164, %v3163
      %v3184 = vpack.c.bf16 %v3166, %v3165
      %v3185 = vld [vmem:[#allocation2] sm:$0xff]
      %v3186 = vld [vmem:[#allocation2 + $0x8] sm:$0xff]
      %v3187 = vld [vmem:[#allocation2 + $0x10] sm:$0xff]
      %v3188 = vld [vmem:[#allocation2 + $0x18] sm:$0xff]
      %v3189 = vld [vmem:[#allocation2 + $0x20] sm:$0xff]
      %v3190 = vld [vmem:[#allocation2 + $0x28] sm:$0xff]
      %v3191 = vld [vmem:[#allocation2 + $0x30] sm:$0xff]
      %v3192 = vld [vmem:[#allocation2 + $0x38] sm:$0xff]
      %v3193 = vld [vmem:[#allocation2 + $0x40] sm:$0xff]
      %v3194 = vld [vmem:[#allocation2 + $0x48] sm:$0xff]
      %v3195 = vld [vmem:[#allocation2 + $0x50] sm:$0xff]
      %v3196 = vld [vmem:[#allocation2 + $0x58] sm:$0xff]
      %v3197 = vld [vmem:[#allocation2 + $0x60] sm:$0xff]
      %v3198 = vld [vmem:[#allocation2 + $0x68] sm:$0xff]
      %v3199 = vld [vmem:[#allocation2 + $0x70] sm:$0xff]
      %v3200 = vld [vmem:[#allocation2 + $0x78] sm:$0xff]
      %v3201 = vld [vmem:[#allocation2 + $0x80] sm:$0xff]
      %v3202 = vld [vmem:[#allocation2 + $0x88] sm:$0xff]
      %v3203 = vld [vmem:[#allocation2 + $0x90] sm:$0xff]
      %v3204 = vld [vmem:[#allocation2 + $0x98] sm:$0xff]
      %v3205 = vld [vmem:[#allocation2 + $0xa0] sm:$0xff]
      %v3206 = vld [vmem:[#allocation2 + $0xa8] sm:$0xff]
      %v3207 = vld [vmem:[#allocation2 + $0xb0] sm:$0xff]
      %v3208 = vld [vmem:[#allocation2 + $0xb8] sm:$0xff]
      %v3209 = vld [vmem:[#allocation2 + $0xc0] sm:$0xff]
      %v3210 = vld [vmem:[#allocation2 + $0xc8] sm:$0xff]
      %v3211 = vld [vmem:[#allocation2 + $0xd0] sm:$0xff]
      %v3212 = vld [vmem:[#allocation2 + $0xd8] sm:$0xff]
      %v3213 = vld [vmem:[#allocation2 + $0xe0] sm:$0xff]
      %v3214 = vld [vmem:[#allocation2 + $0xe8] sm:$0xff]
      %v3215 = vld [vmem:[#allocation2 + $0xf0] sm:$0xff]
      %v3216 = vld [vmem:[#allocation2 + $0xf8] sm:$0xff]
      %v3217 = vld [vmem:[#allocation2 + $0x100] sm:$0xff]
      %v3218 = vld [vmem:[#allocation2 + $0x108] sm:$0xff]
      %v3219 = vld [vmem:[#allocation2 + $0x110] sm:$0xff]
      %v3220 = vld [vmem:[#allocation2 + $0x118] sm:$0xff]
      %s3221 = scalar_lea.vmem %s1, 14
      %v3222 = vld [vmem:[%s3221] sm:$0x3]
      %v3224 = vsel %vm435, %v3167, 0
      %v3227 = vsel %vm435, %v3168, 0
      %v3230 = vsel %vm435, %v3169, 0
      %v3233 = vsel %vm435, %v3170, 0
      %v3236 = vsel %vm435, %v3171, 0
      %v3239 = vsel %vm435, %v3172, 0
      %v3242 = vsel %vm435, %v3173, 0
      %v3245 = vsel %vm435, %v3174, 0
      %v3248 = vsel %vm435, %v3175, 0
      %v3251 = vsel %vm435, %v3176, 0
      %v3254 = vsel %vm435, %v3177, 0
      %v3257 = vsel %vm435, %v3178, 0
      %v3260 = vsel %vm435, %v3179, 0
      %v3263 = vsel %vm435, %v3180, 0
      %v3266 = vsel %vm435, %v3181, 0
      %v3269 = vsel %vm435, %v3182, 0
      %v3272 = vsel %vm435, %v3183, 0
      %v3275 = vsel %vm435, %v3184, 0
      %v3278 = vsel %vm490, %v3222, 0
      %3280 = vmatprep.subr.bf16.mxu0 0
      %3281 = vmatpush1.bf16.msra.mxu0 %v3278
      %3282 = vmatprep.subr.bf16.mxu0 0
      %3283 = vmatpush1.bf16.msra.mxu0 0
      %3284 = vmatprep.subr.bf16.mxu0 0
      %3285 = vmatpush1.bf16.msra.mxu0 0
      %3286 = vmatprep.subr.bf16.mxu0 0
      %3287 = vmatpush1.bf16.msra.mxu0 0
      %3288 = vmatprep.subr.bf16.mxu0 0
      %3289 = vmatpush1.bf16.msra.mxu0 0
      %3290 = vmatprep.subr.bf16.mxu0 0
      %3291 = vmatpush1.bf16.msra.mxu0 0
      %3292 = vmatprep.subr.bf16.mxu0 0
      %3293 = vmatpush1.bf16.msra.mxu0 0
      %3294 = vmatprep.subr.bf16.mxu0 0
      %3295 = vmatpush1.bf16.msra.mxu0 0
      %3296 = vmatprep.subr.bf16.mxu0 0
      %3297 = vmatpush1.bf16.msra.mxu0 0
      %3298 = vmatprep.subr.bf16.mxu0 0
      %3299 = vmatpush1.bf16.msra.mxu0 0
      %3300 = vmatprep.subr.bf16.mxu0 0
      %3301 = vmatpush1.bf16.msra.mxu0 0
      %3302 = vmatprep.subr.bf16.mxu0 0
      %3303 = vmatpush1.bf16.msra.mxu0 0
      %3304 = vmatprep.subr.bf16.mxu0 0
      %3305 = vmatpush1.bf16.msra.mxu0 0
      %3306 = vmatprep.subr.bf16.mxu0 0
      %3307 = vmatpush1.bf16.msra.mxu0 0
      %3308 = vmatprep.subr.bf16.mxu0 0
      %3309 = vmatpush1.bf16.msra.mxu0 0
      %3310 = vmatprep.subr.bf16.mxu0 0
      %3311 = vmatpush1.bf16.msra.mxu0 0
      %3312 = vmatprep.mubr.bf16.mxu0 0
      %3313 = vmatmul.mubr.bf16.gmra.mrb[0].mxu0 %v3224
      %v3314 = vpop.f32.mrb[0].mxu0
      %v3315 = vadd.f32 0.0, %v3314
      %v3316 = vpop.f32.mrb[0].mxu0
      %v3317 = vpop.f32.mrb[0].mxu0
      %v3318 = vadd.f32 0.0, %v3317
      %v3319 = vpop.f32.mrb[0].mxu0
      %3320 = vmatprep.mubr.bf16.mxu0 0
      %3321 = vmatmul.mubr.bf16.gmra.mrb[0].mxu0 %v3227
      %v3322 = vpop.f32.mrb[0].mxu0
      %v3323 = vadd.f32 0.0, %v3322
      %v3324 = vpop.f32.mrb[0].mxu0
      %v3325 = vpop.f32.mrb[0].mxu0
      %v3326 = vadd.f32 0.0, %v3325
      %v3327 = vpop.f32.mrb[0].mxu0
      %3328 = vmatprep.mubr.bf16.mxu0 0
      %3329 = vmatmul.mubr.bf16.gmra.mrb[0].mxu0 %v3230
      %v3330 = vpop.f32.mrb[0].mxu0
      %v3331 = vadd.f32 0.0, %v3330
      %v3332 = vpop.f32.mrb[0].mxu0
      %v3333 = vpop.f32.mrb[0].mxu0
      %v3334 = vadd.f32 0.0, %v3333
      %v3335 = vpop.f32.mrb[0].mxu0
      %3336 = vmatprep.mubr.bf16.mxu0 0
      %3337 = vmatmul.mubr.bf16.gmra.mrb[0].mxu0 %v3233
      %v3338 = vpop.f32.mrb[0].mxu0
      %v3339 = vadd.f32 0.0, %v3338
      %v3340 = vpop.f32.mrb[0].mxu0
      %v3341 = vpop.f32.mrb[0].mxu0
      %v3342 = vadd.f32 0.0, %v3341
      %v3343 = vpop.f32.mrb[0].mxu0
      %3344 = vmatprep.mubr.bf16.mxu0 0
      %3345 = vmatmul.mubr.bf16.gmra.mrb[0].mxu0 %v3236
      %v3346 = vpop.f32.mrb[0].mxu0
      %v3347 = vadd.f32 0.0, %v3346
      %v3348 = vpop.f32.mrb[0].mxu0
      %v3349 = vpop.f32.mrb[0].mxu0
      %v3350 = vadd.f32 0.0, %v3349
      %v3351 = vpop.f32.mrb[0].mxu0
      %3352 = vmatprep.mubr.bf16.mxu0 0
      %3353 = vmatmul.mubr.bf16.gmra.mrb[0].mxu0 %v3239
      %v3354 = vpop.f32.mrb[0].mxu0
      %v3355 = vadd.f32 0.0, %v3354
      %v3356 = vpop.f32.mrb[0].mxu0
      %v3357 = vpop.f32.mrb[0].mxu0
      %v3358 = vadd.f32 0.0, %v3357
      %v3359 = vpop.f32.mrb[0].mxu0
      %3360 = vmatprep.mubr.bf16.mxu0 0
      %3361 = vmatmul.mubr.bf16.gmra.mrb[0].mxu0 %v3242
      %v3362 = vpop.f32.mrb[0].mxu0
      %v3363 = vadd.f32 0.0, %v3362
      %v3364 = vpop.f32.mrb[0].mxu0
      %v3365 = vpop.f32.mrb[0].mxu0
      %v3366 = vadd.f32 0.0, %v3365
      %v3367 = vpop.f32.mrb[0].mxu0
      %3368 = vmatprep.mubr.bf16.mxu0 0
      %3369 = vmatmul.mubr.bf16.gmra.mrb[0].mxu0 %v3245
      %v3370 = vpop.f32.mrb[0].mxu0
      %v3371 = vadd.f32 0.0, %v3370
      %v3372 = vpop.f32.mrb[0].mxu0
      %v3373 = vpop.f32.mrb[0].mxu0
      %v3374 = vadd.f32 0.0, %v3373
      %v3375 = vpop.f32.mrb[0].mxu0
      %3376 = vmatprep.mubr.bf16.mxu0 0
      %3377 = vmatmul.mubr.bf16.gmra.mrb[0].mxu0 %v3248
      %v3378 = vpop.f32.mrb[0].mxu0
      %v3379 = vadd.f32 0.0, %v3378
      %v3380 = vpop.f32.mrb[0].mxu0
      %v3381 = vpop.f32.mrb[0].mxu0
      %v3382 = vadd.f32 0.0, %v3381
      %v3383 = vpop.f32.mrb[0].mxu0
      %3384 = vmatprep.mubr.bf16.mxu0 0
      %3385 = vmatmul.mubr.bf16.gmra.mrb[0].mxu0 %v3251
      %v3386 = vpop.f32.mrb[0].mxu0
      %v3387 = vadd.f32 0.0, %v3386
      %v3388 = vpop.f32.mrb[0].mxu0
      %v3389 = vpop.f32.mrb[0].mxu0
      %v3390 = vadd.f32 0.0, %v3389
      %v3391 = vpop.f32.mrb[0].mxu0
      %3392 = vmatprep.mubr.bf16.mxu0 0
      %3393 = vmatmul.mubr.bf16.gmra.mrb[0].mxu0 %v3254
      %v3394 = vpop.f32.mrb[0].mxu0
      %v3395 = vadd.f32 0.0, %v3394
      %v3396 = vpop.f32.mrb[0].mxu0
      %v3397 = vpop.f32.mrb[0].mxu0
      %v3398 = vadd.f32 0.0, %v3397
      %v3399 = vpop.f32.mrb[0].mxu0
      %3400 = vmatprep.mubr.bf16.mxu0 0
      %3401 = vmatmul.mubr.bf16.gmra.mrb[0].mxu0 %v3257
      %v3402 = vpop.f32.mrb[0].mxu0
      %v3403 = vadd.f32 0.0, %v3402
      %v3404 = vpop.f32.mrb[0].mxu0
      %v3405 = vpop.f32.mrb[0].mxu0
      %v3406 = vadd.f32 0.0, %v3405
      %v3407 = vpop.f32.mrb[0].mxu0
      %3408 = vmatprep.mubr.bf16.mxu0 0
      %3409 = vmatmul.mubr.bf16.gmra.mrb[0].mxu0 %v3260
      %v3410 = vpop.f32.mrb[0].mxu0
      %v3411 = vadd.f32 0.0, %v3410
      %v3412 = vpop.f32.mrb[0].mxu0
      %v3413 = vpop.f32.mrb[0].mxu0
      %v3414 = vadd.f32 0.0, %v3413
      %v3415 = vpop.f32.mrb[0].mxu0
      %3416 = vmatprep.mubr.bf16.mxu0 0
      %3417 = vmatmul.mubr.bf16.gmra.mrb[0].mxu0 %v3263
      %v3418 = vpop.f32.mrb[0].mxu0
      %v3419 = vadd.f32 0.0, %v3418
      %v3420 = vpop.f32.mrb[0].mxu0
      %v3421 = vpop.f32.mrb[0].mxu0
      %v3422 = vadd.f32 0.0, %v3421
      %v3423 = vpop.f32.mrb[0].mxu0
      %3424 = vmatprep.mubr.bf16.mxu0 0
      %3425 = vmatmul.mubr.bf16.gmra.mrb[0].mxu0 %v3266
      %v3426 = vpop.f32.mrb[0].mxu0
      %v3427 = vadd.f32 0.0, %v3426
      %v3428 = vpop.f32.mrb[0].mxu0
      %v3429 = vpop.f32.mrb[0].mxu0
      %v3430 = vadd.f32 0.0, %v3429
      %v3431 = vpop.f32.mrb[0].mxu0
      %3432 = vmatprep.mubr.bf16.mxu0 0
      %3433 = vmatmul.mubr.bf16.gmra.mrb[0].mxu0 %v3269
      %v3434 = vpop.f32.mrb[0].mxu0
      %v3435 = vadd.f32 0.0, %v3434
      %v3436 = vpop.f32.mrb[0].mxu0
      %v3437 = vpop.f32.mrb[0].mxu0
      %v3438 = vadd.f32 0.0, %v3437
      %v3439 = vpop.f32.mrb[0].mxu0
      %3440 = vmatprep.mubr.bf16.mxu0 0
      %3441 = vmatmul.mubr.bf16.gmra.mrb[0].mxu0 %v3272
      %v3442 = vpop.f32.mrb[0].mxu0
      %v3443 = vadd.f32 0.0, %v3442
      %v3444 = vpop.f32.mrb[0].mxu0
      %v3445 = vpop.f32.mrb[0].mxu0
      %v3446 = vadd.f32 0.0, %v3445
      %v3447 = vpop.f32.mrb[0].mxu0
      %3448 = vmatprep.mubr.bf16.mxu0 0
      %3449 = vmatmul.mubr.bf16.gmra.mrb[0].mxu0 %v3275
      %v3450 = vpop.f32.mrb[0].mxu0
      %v3451 = vadd.f32 0.0, %v3450
      %v3452 = vpop.f32.mrb[0].mxu0
      %v3453 = vpop.f32.mrb[0].mxu0
      %v3454 = vadd.f32 0.0, %v3453
      %v3455 = vpop.f32.mrb[0].mxu0
      %3456 = vdwg.mxu0
      %v3457 = vadd.f32 %v3185, %v3315
      %v3458 = vadd.f32 %v3186, %v3318
      %v3459 = vadd.f32 %v3187, %v3323
      %v3460 = vadd.f32 %v3188, %v3326
      %v3461 = vadd.f32 %v3189, %v3331
      %v3462 = vadd.f32 %v3190, %v3334
      %v3463 = vadd.f32 %v3191, %v3339
      %v3464 = vadd.f32 %v3192, %v3342
      %v3465 = vadd.f32 %v3193, %v3347
      %v3466 = vadd.f32 %v3194, %v3350
      %v3467 = vadd.f32 %v3195, %v3355
      %v3468 = vadd.f32 %v3196, %v3358
      %v3469 = vadd.f32 %v3197, %v3363
      %v3470 = vadd.f32 %v3198, %v3366
      %v3471 = vadd.f32 %v3199, %v3371
      %v3472 = vadd.f32 %v3200, %v3374
      %v3473 = vadd.f32 %v3201, %v3379
      %v3474 = vadd.f32 %v3202, %v3382
      %v3475 = vadd.f32 %v3203, %v3387
      %v3476 = vadd.f32 %v3204, %v3390
      %v3477 = vadd.f32 %v3205, %v3395
      %v3478 = vadd.f32 %v3206, %v3398
      %v3479 = vadd.f32 %v3207, %v3403
      %v3480 = vadd.f32 %v3208, %v3406
      %v3481 = vadd.f32 %v3209, %v3411
      %v3482 = vadd.f32 %v3210, %v3414
      %v3483 = vadd.f32 %v3211, %v3419
      %v3484 = vadd.f32 %v3212, %v3422
      %v3485 = vadd.f32 %v3213, %v3427
      %v3486 = vadd.f32 %v3214, %v3430
      %v3487 = vadd.f32 %v3215, %v3435
      %v3488 = vadd.f32 %v3216, %v3438
      %v3489 = vadd.f32 %v3217, %v3443
      %v3490 = vadd.f32 %v3218, %v3446
      %v3491 = vadd.f32 %v3219, %v3451
      %v3492 = vadd.f32 %v3220, %v3454
      %3493 = vst.msk [vmem:[#allocation2] sm:$0xff] %vm307, %v3457
      %3494 = vst.msk [vmem:[#allocation2 + $0x8] sm:$0xff] %vm307, %v3458
      %3495 = vst.msk [vmem:[#allocation2 + $0x10] sm:$0xff] %vm307, %v3459
      %3496 = vst.msk [vmem:[#allocation2 + $0x18] sm:$0xff] %vm307, %v3460
      %3497 = vst.msk [vmem:[#allocation2 + $0x20] sm:$0xff] %vm307, %v3461
      %3498 = vst.msk [vmem:[#allocation2 + $0x28] sm:$0xff] %vm307, %v3462
      %3499 = vst.msk [vmem:[#allocation2 + $0x30] sm:$0xff] %vm307, %v3463
      %3500 = vst.msk [vmem:[#allocation2 + $0x38] sm:$0xff] %vm307, %v3464
      %3501 = vst.msk [vmem:[#allocation2 + $0x40] sm:$0xff] %vm307, %v3465
      %3502 = vst.msk [vmem:[#allocation2 + $0x48] sm:$0xff] %vm307, %v3466
      %3503 = vst.msk [vmem:[#allocation2 + $0x50] sm:$0xff] %vm307, %v3467
      %3504 = vst.msk [vmem:[#allocation2 + $0x58] sm:$0xff] %vm307, %v3468
      %3505 = vst.msk [vmem:[#allocation2 + $0x60] sm:$0xff] %vm307, %v3469
      %3506 = vst.msk [vmem:[#allocation2 + $0x68] sm:$0xff] %vm307, %v3470
      %3507 = vst.msk [vmem:[#allocation2 + $0x70] sm:$0xff] %vm307, %v3471
      %3508 = vst.msk [vmem:[#allocation2 + $0x78] sm:$0xff] %vm307, %v3472
      %3509 = vst.msk [vmem:[#allocation2 + $0x80] sm:$0xff] %vm307, %v3473
      %3510 = vst.msk [vmem:[#allocation2 + $0x88] sm:$0xff] %vm307, %v3474
      %3511 = vst.msk [vmem:[#allocation2 + $0x90] sm:$0xff] %vm307, %v3475
      %3512 = vst.msk [vmem:[#allocation2 + $0x98] sm:$0xff] %vm307, %v3476
      %3513 = vst.msk [vmem:[#allocation2 + $0xa0] sm:$0xff] %vm307, %v3477
      %3514 = vst.msk [vmem:[#allocation2 + $0xa8] sm:$0xff] %vm307, %v3478
      %3515 = vst.msk [vmem:[#allocation2 + $0xb0] sm:$0xff] %vm307, %v3479
      %3516 = vst.msk [vmem:[#allocation2 + $0xb8] sm:$0xff] %vm307, %v3480
      %3517 = vst.msk [vmem:[#allocation2 + $0xc0] sm:$0xff] %vm307, %v3481
      %3518 = vst.msk [vmem:[#allocation2 + $0xc8] sm:$0xff] %vm307, %v3482
      %3519 = vst.msk [vmem:[#allocation2 + $0xd0] sm:$0xff] %vm307, %v3483
      %3520 = vst.msk [vmem:[#allocation2 + $0xd8] sm:$0xff] %vm307, %v3484
      %3521 = vst.msk [vmem:[#allocation2 + $0xe0] sm:$0xff] %vm307, %v3485
      %3522 = vst.msk [vmem:[#allocation2 + $0xe8] sm:$0xff] %vm307, %v3486
      %3523 = vst.msk [vmem:[#allocation2 + $0xf0] sm:$0xff] %vm307, %v3487
      %3524 = vst.msk [vmem:[#allocation2 + $0xf8] sm:$0xff] %vm307, %v3488
      %3525 = vst.msk [vmem:[#allocation2 + $0x100] sm:$0xff] %vm307, %v3489
      %3526 = vst.msk [vmem:[#allocation2 + $0x108] sm:$0xff] %vm307, %v3490
      %3527 = vst.msk [vmem:[#allocation2 + $0x110] sm:$0xff] %vm307, %v3491
      %3528 = vst.msk [vmem:[#allocation2 + $0x118] sm:$0xff] %vm307, %v3492
      %v3529 = vld [vmem:[%s300 + $0x26] sm:$0xff]
      %v3530 = vld [vmem:[%s300 + $0x2e] sm:$0xff]
      %v3531 = vld [vmem:[%s300 + $0x36] sm:$0xff]
      %v3532 = vld [vmem:[%s300 + $0x3e] sm:$0xff]
      %v3533 = vld [vmem:[%s300 + $0x46] sm:$0xff]
      %v3534 = vld [vmem:[%s300 + $0x4e] sm:$0xff]
      %v3535 = vld [vmem:[%s300 + $0x56] sm:$0xff]
      %v3536 = vld [vmem:[%s300 + $0x5e] sm:$0xff]
      %v3537 = vld [vmem:[%s300 + $0x66] sm:$0xff]
      %v3538 = vld [vmem:[%s300 + $0x6e] sm:$0xff]
      %v3539 = vld [vmem:[%s300 + $0x76] sm:$0xff]
      %v3540 = vld [vmem:[%s300 + $0x7e] sm:$0xff]
      %v3541 = vld [vmem:[%s300 + $0x86] sm:$0xff]
      %v3542 = vld [vmem:[%s300 + $0x8e] sm:$0xff]
      %v3543 = vld [vmem:[%s300 + $0x96] sm:$0xff]
      %v3544 = vld [vmem:[%s300 + $0x9e] sm:$0xff]
      %v3545 = vld [vmem:[%s300 + $0xa6] sm:$0xff]
      %v3546 = vld [vmem:[%s300 + $0xae] sm:$0xff]
      %v3547 = vld [vmem:[%s300 + $0xb6] sm:$0xff]
      %v3548 = vld [vmem:[%s300 + $0xbe] sm:$0xff]
      %v3549 = vld [vmem:[%s300 + $0xc6] sm:$0xff]
      %v3550 = vld [vmem:[%s300 + $0xce] sm:$0xff]
      %v3551 = vld [vmem:[%s300 + $0xd6] sm:$0xff]
      %v3552 = vld [vmem:[%s300 + $0xde] sm:$0xff]
      %v3553 = vld [vmem:[%s300 + $0xe6] sm:$0xff]
      %v3554 = vld [vmem:[%s300 + $0xee] sm:$0xff]
      %v3555 = vld [vmem:[%s300 + $0xf6] sm:$0xff]
      %v3556 = vld [vmem:[%s300 + $0xfe] sm:$0xff]
      %v3557 = vld [vmem:[%s300 + $0x106] sm:$0xff]
      %v3558 = vld [vmem:[%s300 + $0x10e] sm:$0xff]
      %v3559 = vld [vmem:[%s300 + $0x116] sm:$0xff]
      %v3560 = vld [vmem:[%s300 + $0x11e] sm:$0xff]
      %v3561 = vld [vmem:[%s300 + $0x126] sm:$0xff]
      %v3562 = vld [vmem:[%s300 + $0x12e] sm:$0xff]
      %v3563 = vld [vmem:[%s300 + $0x136] sm:$0xff]
      %v3564 = vld [vmem:[%s300 + $0x13e] sm:$0xff]
      %v3565 = vpack.c.bf16 %v3530, %v3529
      %v3566 = vpack.c.bf16 %v3532, %v3531
      %v3567 = vpack.c.bf16 %v3534, %v3533
      %v3568 = vpack.c.bf16 %v3536, %v3535
      %v3569 = vpack.c.bf16 %v3538, %v3537
      %v3570 = vpack.c.bf16 %v3540, %v3539
      %v3571 = vpack.c.bf16 %v3542, %v3541
      %v3572 = vpack.c.bf16 %v3544, %v3543
      %v3573 = vpack.c.bf16 %v3546, %v3545
      %v3574 = vpack.c.bf16 %v3548, %v3547
      %v3575 = vpack.c.bf16 %v3550, %v3549
      %v3576 = vpack.c.bf16 %v3552, %v3551
      %v3577 = vpack.c.bf16 %v3554, %v3553
      %v3578 = vpack.c.bf16 %v3556, %v3555
      %v3579 = vpack.c.bf16 %v3558, %v3557
      %v3580 = vpack.c.bf16 %v3560, %v3559
      %v3581 = vpack.c.bf16 %v3562, %v3561
      %v3582 = vpack.c.bf16 %v3564, %v3563
      %v3583 = vld [vmem:[#allocation2] sm:$0xff]
      %v3584 = vld [vmem:[#allocation2 + $0x8] sm:$0xff]
      %v3585 = vld [vmem:[#allocation2 + $0x10] sm:$0xff]
      %v3586 = vld [vmem:[#allocation2 + $0x18] sm:$0xff]
      %v3587 = vld [vmem:[#allocation2 + $0x20] sm:$0xff]
      %v3588 = vld [vmem:[#allocation2 + $0x28] sm:$0xff]
      %v3589 = vld [vmem:[#allocation2 + $0x30] sm:$0xff]
      %v3590 = vld [vmem:[#allocation2 + $0x38] sm:$0xff]
      %v3591 = vld [vmem:[#allocation2 + $0x40] sm:$0xff]
      %v3592 = vld [vmem:[#allocation2 + $0x48] sm:$0xff]
      %v3593 = vld [vmem:[#allocation2 + $0x50] sm:$0xff]
      %v3594 = vld [vmem:[#allocation2 + $0x58] sm:$0xff]
      %v3595 = vld [vmem:[#allocation2 + $0x60] sm:$0xff]
      %v3596 = vld [vmem:[#allocation2 + $0x68] sm:$0xff]
      %v3597 = vld [vmem:[#allocation2 + $0x70] sm:$0xff]
      %v3598 = vld [vmem:[#allocation2 + $0x78] sm:$0xff]
      %v3599 = vld [vmem:[#allocation2 + $0x80] sm:$0xff]
      %v3600 = vld [vmem:[#allocation2 + $0x88] sm:$0xff]
      %v3601 = vld [vmem:[#allocation2 + $0x90] sm:$0xff]
      %v3602 = vld [vmem:[#allocation2 + $0x98] sm:$0xff]
      %v3603 = vld [vmem:[#allocation2 + $0xa0] sm:$0xff]
      %v3604 = vld [vmem:[#allocation2 + $0xa8] sm:$0xff]
      %v3605 = vld [vmem:[#allocation2 + $0xb0] sm:$0xff]
      %v3606 = vld [vmem:[#allocation2 + $0xb8] sm:$0xff]
      %v3607 = vld [vmem:[#allocation2 + $0xc0] sm:$0xff]
      %v3608 = vld [vmem:[#allocation2 + $0xc8] sm:$0xff]
      %v3609 = vld [vmem:[#allocation2 + $0xd0] sm:$0xff]
      %v3610 = vld [vmem:[#allocation2 + $0xd8] sm:$0xff]
      %v3611 = vld [vmem:[#allocation2 + $0xe0] sm:$0xff]
      %v3612 = vld [vmem:[#allocation2 + $0xe8] sm:$0xff]
      %v3613 = vld [vmem:[#allocation2 + $0xf0] sm:$0xff]
      %v3614 = vld [vmem:[#allocation2 + $0xf8] sm:$0xff]
      %v3615 = vld [vmem:[#allocation2 + $0x100] sm:$0xff]
      %v3616 = vld [vmem:[#allocation2 + $0x108] sm:$0xff]
      %v3617 = vld [vmem:[#allocation2 + $0x110] sm:$0xff]
      %v3618 = vld [vmem:[#allocation2 + $0x118] sm:$0xff]
      %s3619 = scalar_lea.vmem %s1, 16
      %v3620 = vld [vmem:[%s3619] sm:$0x3]
      %v3622 = vsel %vm435, %v3565, 0
      %v3625 = vsel %vm435, %v3566, 0
      %v3628 = vsel %vm435, %v3567, 0
      %v3631 = vsel %vm435, %v3568, 0
      %v3634 = vsel %vm435, %v3569, 0
      %v3637 = vsel %vm435, %v3570, 0
      %v3640 = vsel %vm435, %v3571, 0
      %v3643 = vsel %vm435, %v3572, 0
      %v3646 = vsel %vm435, %v3573, 0
      %v3649 = vsel %vm435, %v3574, 0
      %v3652 = vsel %vm435, %v3575, 0
      %v3655 = vsel %vm435, %v3576, 0
      %v3658 = vsel %vm435, %v3577, 0
      %v3661 = vsel %vm435, %v3578, 0
      %v3664 = vsel %vm435, %v3579, 0
      %v3667 = vsel %vm435, %v3580, 0
      %v3670 = vsel %vm435, %v3581, 0
      %v3673 = vsel %vm435, %v3582, 0
      %v3676 = vsel %vm490, %v3620, 0
      %3678 = vmatprep.subr.bf16.mxu0 0
      %3679 = vmatpush1.bf16.msra.mxu0 %v3676
      %3680 = vmatprep.subr.bf16.mxu0 0
      %3681 = vmatpush1.bf16.msra.mxu0 0
      %3682 = vmatprep.subr.bf16.mxu0 0
      %3683 = vmatpush1.bf16.msra.mxu0 0
      %3684 = vmatprep.subr.bf16.mxu0 0
      %3685 = vmatpush1.bf16.msra.mxu0 0
      %3686 = vmatprep.subr.bf16.mxu0 0
      %3687 = vmatpush1.bf16.msra.mxu0 0
      %3688 = vmatprep.subr.bf16.mxu0 0
      %3689 = vmatpush1.bf16.msra.mxu0 0
      %3690 = vmatprep.subr.bf16.mxu0 0
      %3691 = vmatpush1.bf16.msra.mxu0 0
      %3692 = vmatprep.subr.bf16.mxu0 0
      %3693 = vmatpush1.bf16.msra.mxu0 0
      %3694 = vmatprep.subr.bf16.mxu0 0
      %3695 = vmatpush1.bf16.msra.mxu0 0
      %3696 = vmatprep.subr.bf16.mxu0 0
      %3697 = vmatpush1.bf16.msra.mxu0 0
      %3698 = vmatprep.subr.bf16.mxu0 0
      %3699 = vmatpush1.bf16.msra.mxu0 0
      %3700 = vmatprep.subr.bf16.mxu0 0
      %3701 = vmatpush1.bf16.msra.mxu0 0
      %3702 = vmatprep.subr.bf16.mxu0 0
      %3703 = vmatpush1.bf16.msra.mxu0 0
      %3704 = vmatprep.subr.bf16.mxu0 0
      %3705 = vmatpush1.bf16.msra.mxu0 0
      %3706 = vmatprep.subr.bf16.mxu0 0
      %3707 = vmatpush1.bf16.msra.mxu0 0
      %3708 = vmatprep.subr.bf16.mxu0 0
      %3709 = vmatpush1.bf16.msra.mxu0 0
      %3710 = vmatprep.mubr.bf16.mxu0 0
      %3711 = vmatmul.mubr.bf16.gmra.mrb[0].mxu0 %v3622
      %v3712 = vpop.f32.mrb[0].mxu0
      %v3713 = vadd.f32 0.0, %v3712
      %v3714 = vpop.f32.mrb[0].mxu0
      %v3715 = vpop.f32.mrb[0].mxu0
      %v3716 = vadd.f32 0.0, %v3715
      %v3717 = vpop.f32.mrb[0].mxu0
      %3718 = vmatprep.mubr.bf16.mxu0 0
      %3719 = vmatmul.mubr.bf16.gmra.mrb[0].mxu0 %v3625
      %v3720 = vpop.f32.mrb[0].mxu0
      %v3721 = vadd.f32 0.0, %v3720
      %v3722 = vpop.f32.mrb[0].mxu0
      %v3723 = vpop.f32.mrb[0].mxu0
      %v3724 = vadd.f32 0.0, %v3723
      %v3725 = vpop.f32.mrb[0].mxu0
      %3726 = vmatprep.mubr.bf16.mxu0 0
      %3727 = vmatmul.mubr.bf16.gmra.mrb[0].mxu0 %v3628
      %v3728 = vpop.f32.mrb[0].mxu0
      %v3729 = vadd.f32 0.0, %v3728
      %v3730 = vpop.f32.mrb[0].mxu0
      %v3731 = vpop.f32.mrb[0].mxu0
      %v3732 = vadd.f32 0.0, %v3731
      %v3733 = vpop.f32.mrb[0].mxu0
      %3734 = vmatprep.mubr.bf16.mxu0 0
      %3735 = vmatmul.mubr.bf16.gmra.mrb[0].mxu0 %v3631
      %v3736 = vpop.f32.mrb[0].mxu0
      %v3737 = vadd.f32 0.0, %v3736
      %v3738 = vpop.f32.mrb[0].mxu0
      %v3739 = vpop.f32.mrb[0].mxu0
      %v3740 = vadd.f32 0.0, %v3739
      %v3741 = vpop.f32.mrb[0].mxu0
      %3742 = vmatprep.mubr.bf16.mxu0 0
      %3743 = vmatmul.mubr.bf16.gmra.mrb[0].mxu0 %v3634
      %v3744 = vpop.f32.mrb[0].mxu0
      %v3745 = vadd.f32 0.0, %v3744
      %v3746 = vpop.f32.mrb[0].mxu0
      %v3747 = vpop.f32.mrb[0].mxu0
      %v3748 = vadd.f32 0.0, %v3747
      %v3749 = vpop.f32.mrb[0].mxu0
      %3750 = vmatprep.mubr.bf16.mxu0 0
      %3751 = vmatmul.mubr.bf16.gmra.mrb[0].mxu0 %v3637
      %v3752 = vpop.f32.mrb[0].mxu0
      %v3753 = vadd.f32 0.0, %v3752
      %v3754 = vpop.f32.mrb[0].mxu0
      %v3755 = vpop.f32.mrb[0].mxu0
      %v3756 = vadd.f32 0.0, %v3755
      %v3757 = vpop.f32.mrb[0].mxu0
      %3758 = vmatprep.mubr.bf16.mxu0 0
      %3759 = vmatmul.mubr.bf16.gmra.mrb[0].mxu0 %v3640
      %v3760 = vpop.f32.mrb[0].mxu0
      %v3761 = vadd.f32 0.0, %v3760
      %v3762 = vpop.f32.mrb[0].mxu0
      %v3763 = vpop.f32.mrb[0].mxu0
      %v3764 = vadd.f32 0.0, %v3763
      %v3765 = vpop.f32.mrb[0].mxu0
      %3766 = vmatprep.mubr.bf16.mxu0 0
      %3767 = vmatmul.mubr.bf16.gmra.mrb[0].mxu0 %v3643
      %v3768 = vpop.f32.mrb[0].mxu0
      %v3769 = vadd.f32 0.0, %v3768
      %v3770 = vpop.f32.mrb[0].mxu0
      %v3771 = vpop.f32.mrb[0].mxu0
      %v3772 = vadd.f32 0.0, %v3771
      %v3773 = vpop.f32.mrb[0].mxu0
      %3774 = vmatprep.mubr.bf16.mxu0 0
      %3775 = vmatmul.mubr.bf16.gmra.mrb[0].mxu0 %v3646
      %v3776 = vpop.f32.mrb[0].mxu0
      %v3777 = vadd.f32 0.0, %v3776
      %v3778 = vpop.f32.mrb[0].mxu0
      %v3779 = vpop.f32.mrb[0].mxu0
      %v3780 = vadd.f32 0.0, %v3779
      %v3781 = vpop.f32.mrb[0].mxu0
      %3782 = vmatprep.mubr.bf16.mxu0 0
      %3783 = vmatmul.mubr.bf16.gmra.mrb[0].mxu0 %v3649
      %v3784 = vpop.f32.mrb[0].mxu0
      %v3785 = vadd.f32 0.0, %v3784
      %v3786 = vpop.f32.mrb[0].mxu0
      %v3787 = vpop.f32.mrb[0].mxu0
      %v3788 = vadd.f32 0.0, %v3787
      %v3789 = vpop.f32.mrb[0].mxu0
      %3790 = vmatprep.mubr.bf16.mxu0 0
      %3791 = vmatmul.mubr.bf16.gmra.mrb[0].mxu0 %v3652
      %v3792 = vpop.f32.mrb[0].mxu0
      %v3793 = vadd.f32 0.0, %v3792
      %v3794 = vpop.f32.mrb[0].mxu0
      %v3795 = vpop.f32.mrb[0].mxu0
      %v3796 = vadd.f32 0.0, %v3795
      %v3797 = vpop.f32.mrb[0].mxu0
      %3798 = vmatprep.mubr.bf16.mxu0 0
      %3799 = vmatmul.mubr.bf16.gmra.mrb[0].mxu0 %v3655
      %v3800 = vpop.f32.mrb[0].mxu0
      %v3801 = vadd.f32 0.0, %v3800
      %v3802 = vpop.f32.mrb[0].mxu0
      %v3803 = vpop.f32.mrb[0].mxu0
      %v3804 = vadd.f32 0.0, %v3803
      %v3805 = vpop.f32.mrb[0].mxu0
      %3806 = vmatprep.mubr.bf16.mxu0 0
      %3807 = vmatmul.mubr.bf16.gmra.mrb[0].mxu0 %v3658
      %v3808 = vpop.f32.mrb[0].mxu0
      %v3809 = vadd.f32 0.0, %v3808
      %v3810 = vpop.f32.mrb[0].mxu0
      %v3811 = vpop.f32.mrb[0].mxu0
      %v3812 = vadd.f32 0.0, %v3811
      %v3813 = vpop.f32.mrb[0].mxu0
      %3814 = vmatprep.mubr.bf16.mxu0 0
      %3815 = vmatmul.mubr.bf16.gmra.mrb[0].mxu0 %v3661
      %v3816 = vpop.f32.mrb[0].mxu0
      %v3817 = vadd.f32 0.0, %v3816
      %v3818 = vpop.f32.mrb[0].mxu0
      %v3819 = vpop.f32.mrb[0].mxu0
      %v3820 = vadd.f32 0.0, %v3819
      %v3821 = vpop.f32.mrb[0].mxu0
      %3822 = vmatprep.mubr.bf16.mxu0 0
      %3823 = vmatmul.mubr.bf16.gmra.mrb[0].mxu0 %v3664
      %v3824 = vpop.f32.mrb[0].mxu0
      %v3825 = vadd.f32 0.0, %v3824
      %v3826 = vpop.f32.mrb[0].mxu0
      %v3827 = vpop.f32.mrb[0].mxu0
      %v3828 = vadd.f32 0.0, %v3827
      %v3829 = vpop.f32.mrb[0].mxu0
      %3830 = vmatprep.mubr.bf16.mxu0 0
      %3831 = vmatmul.mubr.bf16.gmra.mrb[0].mxu0 %v3667
      %v3832 = vpop.f32.mrb[0].mxu0
      %v3833 = vadd.f32 0.0, %v3832
      %v3834 = vpop.f32.mrb[0].mxu0
      %v3835 = vpop.f32.mrb[0].mxu0
      %v3836 = vadd.f32 0.0, %v3835
      %v3837 = vpop.f32.mrb[0].mxu0
      %3838 = vmatprep.mubr.bf16.mxu0 0
      %3839 = vmatmul.mubr.bf16.gmra.mrb[0].mxu0 %v3670
      %v3840 = vpop.f32.mrb[0].mxu0
      %v3841 = vadd.f32 0.0, %v3840
      %v3842 = vpop.f32.mrb[0].mxu0
      %v3843 = vpop.f32.mrb[0].mxu0
      %v3844 = vadd.f32 0.0, %v3843
      %v3845 = vpop.f32.mrb[0].mxu0
      %3846 = vmatprep.mubr.bf16.mxu0 0
      %3847 = vmatmul.mubr.bf16.gmra.mrb[0].mxu0 %v3673
      %v3848 = vpop.f32.mrb[0].mxu0
      %v3849 = vadd.f32 0.0, %v3848
      %v3850 = vpop.f32.mrb[0].mxu0
      %v3851 = vpop.f32.mrb[0].mxu0
      %v3852 = vadd.f32 0.0, %v3851
      %v3853 = vpop.f32.mrb[0].mxu0
      %3854 = vdwg.mxu0
      %v3855 = vadd.f32 %v3583, %v3713
      %v3856 = vadd.f32 %v3584, %v3716
      %v3857 = vadd.f32 %v3585, %v3721
      %v3858 = vadd.f32 %v3586, %v3724
      %v3859 = vadd.f32 %v3587, %v3729
      %v3860 = vadd.f32 %v3588, %v3732
      %v3861 = vadd.f32 %v3589, %v3737
      %v3862 = vadd.f32 %v3590, %v3740
      %v3863 = vadd.f32 %v3591, %v3745
      %v3864 = vadd.f32 %v3592, %v3748
      %v3865 = vadd.f32 %v3593, %v3753
      %v3866 = vadd.f32 %v3594, %v3756
      %v3867 = vadd.f32 %v3595, %v3761
      %v3868 = vadd.f32 %v3596, %v3764
      %v3869 = vadd.f32 %v3597, %v3769
      %v3870 = vadd.f32 %v3598, %v3772
      %v3871 = vadd.f32 %v3599, %v3777
      %v3872 = vadd.f32 %v3600, %v3780
      %v3873 = vadd.f32 %v3601, %v3785
      %v3874 = vadd.f32 %v3602, %v3788
      %v3875 = vadd.f32 %v3603, %v3793
      %v3876 = vadd.f32 %v3604, %v3796
      %v3877 = vadd.f32 %v3605, %v3801
      %v3878 = vadd.f32 %v3606, %v3804
      %v3879 = vadd.f32 %v3607, %v3809
      %v3880 = vadd.f32 %v3608, %v3812
      %v3881 = vadd.f32 %v3609, %v3817
      %v3882 = vadd.f32 %v3610, %v3820
      %v3883 = vadd.f32 %v3611, %v3825
      %v3884 = vadd.f32 %v3612, %v3828
      %v3885 = vadd.f32 %v3613, %v3833
      %v3886 = vadd.f32 %v3614, %v3836
      %v3887 = vadd.f32 %v3615, %v3841
      %v3888 = vadd.f32 %v3616, %v3844
      %v3889 = vadd.f32 %v3617, %v3849
      %v3890 = vadd.f32 %v3618, %v3852
      %3891 = vst.msk [vmem:[#allocation2] sm:$0xff] %vm307, %v3855
      %3892 = vst.msk [vmem:[#allocation2 + $0x8] sm:$0xff] %vm307, %v3856
      %3893 = vst.msk [vmem:[#allocation2 + $0x10] sm:$0xff] %vm307, %v3857
      %3894 = vst.msk [vmem:[#allocation2 + $0x18] sm:$0xff] %vm307, %v3858
      %3895 = vst.msk [vmem:[#allocation2 + $0x20] sm:$0xff] %vm307, %v3859
      %3896 = vst.msk [vmem:[#allocation2 + $0x28] sm:$0xff] %vm307, %v3860
      %3897 = vst.msk [vmem:[#allocation2 + $0x30] sm:$0xff] %vm307, %v3861
      %3898 = vst.msk [vmem:[#allocation2 + $0x38] sm:$0xff] %vm307, %v3862
      %3899 = vst.msk [vmem:[#allocation2 + $0x40] sm:$0xff] %vm307, %v3863
      %3900 = vst.msk [vmem:[#allocation2 + $0x48] sm:$0xff] %vm307, %v3864
      %3901 = vst.msk [vmem:[#allocation2 + $0x50] sm:$0xff] %vm307, %v3865
      %3902 = vst.msk [vmem:[#allocation2 + $0x58] sm:$0xff] %vm307, %v3866
      %3903 = vst.msk [vmem:[#allocation2 + $0x60] sm:$0xff] %vm307, %v3867
      %3904 = vst.msk [vmem:[#allocation2 + $0x68] sm:$0xff] %vm307, %v3868
      %3905 = vst.msk [vmem:[#allocation2 + $0x70] sm:$0xff] %vm307, %v3869
      %3906 = vst.msk [vmem:[#allocation2 + $0x78] sm:$0xff] %vm307, %v3870
      %3907 = vst.msk [vmem:[#allocation2 + $0x80] sm:$0xff] %vm307, %v3871
      %3908 = vst.msk [vmem:[#allocation2 + $0x88] sm:$0xff] %vm307, %v3872
      %3909 = vst.msk [vmem:[#allocation2 + $0x90] sm:$0xff] %vm307, %v3873
      %3910 = vst.msk [vmem:[#allocation2 + $0x98] sm:$0xff] %vm307, %v3874
      %3911 = vst.msk [vmem:[#allocation2 + $0xa0] sm:$0xff] %vm307, %v3875
      %3912 = vst.msk [vmem:[#allocation2 + $0xa8] sm:$0xff] %vm307, %v3876
      %3913 = vst.msk [vmem:[#allocation2 + $0xb0] sm:$0xff] %vm307, %v3877
      %3914 = vst.msk [vmem:[#allocation2 + $0xb8] sm:$0xff] %vm307, %v3878
      %3915 = vst.msk [vmem:[#allocation2 + $0xc0] sm:$0xff] %vm307, %v3879
      %3916 = vst.msk [vmem:[#allocation2 + $0xc8] sm:$0xff] %vm307, %v3880
      %3917 = vst.msk [vmem:[#allocation2 + $0xd0] sm:$0xff] %vm307, %v3881
      %3918 = vst.msk [vmem:[#allocation2 + $0xd8] sm:$0xff] %vm307, %v3882
      %3919 = vst.msk [vmem:[#allocation2 + $0xe0] sm:$0xff] %vm307, %v3883
      %3920 = vst.msk [vmem:[#allocation2 + $0xe8] sm:$0xff] %vm307, %v3884
      %3921 = vst.msk [vmem:[#allocation2 + $0xf0] sm:$0xff] %vm307, %v3885
      %3922 = vst.msk [vmem:[#allocation2 + $0xf8] sm:$0xff] %vm307, %v3886
      %3923 = vst.msk [vmem:[#allocation2 + $0x100] sm:$0xff] %vm307, %v3887
      %3924 = vst.msk [vmem:[#allocation2 + $0x108] sm:$0xff] %vm307, %v3888
      %3925 = vst.msk [vmem:[#allocation2 + $0x110] sm:$0xff] %vm307, %v3889
      %3926 = vst.msk [vmem:[#allocation2 + $0x118] sm:$0xff] %vm307, %v3890
      %v3927 = vld [vmem:[#allocation2] sm:$0xff]
      %v3928 = vld [vmem:[#allocation2 + $0x8] sm:$0xff]
      %v3929 = vld [vmem:[#allocation2 + $0x10] sm:$0xff]
      %v3930 = vld [vmem:[#allocation2 + $0x18] sm:$0xff]
      %v3931 = vld [vmem:[#allocation2 + $0x20] sm:$0xff]
      %v3932 = vld [vmem:[#allocation2 + $0x28] sm:$0xff]
      %v3933 = vld [vmem:[#allocation2 + $0x30] sm:$0xff]
      %v3934 = vld [vmem:[#allocation2 + $0x38] sm:$0xff]
      %v3935 = vld [vmem:[#allocation2 + $0x40] sm:$0xff]
      %v3936 = vld [vmem:[#allocation2 + $0x48] sm:$0xff]
      %v3937 = vld [vmem:[#allocation2 + $0x50] sm:$0xff]
      %v3938 = vld [vmem:[#allocation2 + $0x58] sm:$0xff]
      %v3939 = vld [vmem:[#allocation2 + $0x60] sm:$0xff]
      %v3940 = vld [vmem:[#allocation2 + $0x68] sm:$0xff]
      %v3941 = vld [vmem:[#allocation2 + $0x70] sm:$0xff]
      %v3942 = vld [vmem:[#allocation2 + $0x78] sm:$0xff]
      %v3943 = vld [vmem:[#allocation2 + $0x80] sm:$0xff]
      %v3944 = vld [vmem:[#allocation2 + $0x88] sm:$0xff]
      %v3945 = vld [vmem:[#allocation2 + $0x90] sm:$0xff]
      %v3946 = vld [vmem:[#allocation2 + $0x98] sm:$0xff]
      %v3947 = vld [vmem:[#allocation2 + $0xa0] sm:$0xff]
      %v3948 = vld [vmem:[#allocation2 + $0xa8] sm:$0xff]
      %v3949 = vld [vmem:[#allocation2 + $0xb0] sm:$0xff]
      %v3950 = vld [vmem:[#allocation2 + $0xb8] sm:$0xff]
      %v3951 = vld [vmem:[#allocation2 + $0xc0] sm:$0xff]
      %v3952 = vld [vmem:[#allocation2 + $0xc8] sm:$0xff]
      %v3953 = vld [vmem:[#allocation2 + $0xd0] sm:$0xff]
      %v3954 = vld [vmem:[#allocation2 + $0xd8] sm:$0xff]
      %v3955 = vld [vmem:[#allocation2 + $0xe0] sm:$0xff]
      %v3956 = vld [vmem:[#allocation2 + $0xe8] sm:$0xff]
      %v3957 = vld [vmem:[#allocation2 + $0xf0] sm:$0xff]
      %v3958 = vld [vmem:[#allocation2 + $0xf8] sm:$0xff]
      %v3959 = vld [vmem:[#allocation2 + $0x100] sm:$0xff]
      %v3960 = vld [vmem:[#allocation2 + $0x108] sm:$0xff]
      %v3961 = vld [vmem:[#allocation2 + $0x110] sm:$0xff]
      %v3962 = vld [vmem:[#allocation2 + $0x118] sm:$0xff]
      %v3963 = vmul.f32 %v3927, %v3927
      %v3964 = vmul.f32 %v3928, %v3928
      %v3965 = vmul.f32 %v3929, %v3929
      %v3966 = vmul.f32 %v3930, %v3930
      %v3967 = vmul.f32 %v3931, %v3931
      %v3968 = vmul.f32 %v3932, %v3932
      %v3969 = vmul.f32 %v3933, %v3933
      %v3970 = vmul.f32 %v3934, %v3934
      %v3971 = vmul.f32 %v3935, %v3935
      %v3972 = vmul.f32 %v3936, %v3936
      %v3973 = vmul.f32 %v3937, %v3937
      %v3974 = vmul.f32 %v3938, %v3938
      %v3975 = vmul.f32 %v3939, %v3939
      %v3976 = vmul.f32 %v3940, %v3940
      %v3977 = vmul.f32 %v3941, %v3941
      %v3978 = vmul.f32 %v3942, %v3942
      %v3979 = vmul.f32 %v3943, %v3943
      %v3980 = vmul.f32 %v3944, %v3944
      %v3981 = vmul.f32 %v3945, %v3945
      %v3982 = vmul.f32 %v3946, %v3946
      %v3983 = vmul.f32 %v3947, %v3947
      %v3984 = vmul.f32 %v3948, %v3948
      %v3985 = vmul.f32 %v3949, %v3949
      %v3986 = vmul.f32 %v3950, %v3950
      %v3987 = vmul.f32 %v3951, %v3951
      %v3988 = vmul.f32 %v3952, %v3952
      %v3989 = vmul.f32 %v3953, %v3953
      %v3990 = vmul.f32 %v3954, %v3954
      %v3991 = vmul.f32 %v3955, %v3955
      %v3992 = vmul.f32 %v3956, %v3956
      %v3993 = vmul.f32 %v3957, %v3957
      %v3994 = vmul.f32 %v3958, %v3958
      %v3995 = vmul.f32 %v3959, %v3959
      %v3996 = vmul.f32 %v3960, %v3960
      %v3997 = vmul.f32 %v3961, %v3961
      %v3998 = vmul.f32 %v3962, %v3962
      %v3999 = vsel %vm307, %v3963, 0.0
      %4000 = vadd.xlane.f32.xlu0 %v3999
      %v4001 = vpop.xlane.xlu0 %4000
      %v4002 = vsel %vm307, %v3964, 0.0
      %4003 = vadd.xlane.f32.xlu0 %v4002
      %v4004 = vpop.xlane.xlu0 %4003
      %v4005 = vsel %vm307, %v3965, 0.0
      %4006 = vadd.xlane.f32.xlu0 %v4005
      %v4007 = vpop.xlane.xlu0 %4006
      %v4008 = vsel %vm307, %v3966, 0.0
      %4009 = vadd.xlane.f32.xlu0 %v4008
      %v4010 = vpop.xlane.xlu0 %4009
      %v4011 = vsel %vm307, %v3967, 0.0
      %4012 = vadd.xlane.f32.xlu0 %v4011
      %v4013 = vpop.xlane.xlu0 %4012
      %v4014 = vsel %vm307, %v3968, 0.0
      %4015 = vadd.xlane.f32.xlu0 %v4014
      %v4016 = vpop.xlane.xlu0 %4015
      %v4017 = vsel %vm307, %v3969, 0.0
      %4018 = vadd.xlane.f32.xlu0 %v4017
      %v4019 = vpop.xlane.xlu0 %4018
      %v4020 = vsel %vm307, %v3970, 0.0
      %4021 = vadd.xlane.f32.xlu0 %v4020
      %v4022 = vpop.xlane.xlu0 %4021
      %v4023 = vsel %vm307, %v3971, 0.0
      %4024 = vadd.xlane.f32.xlu0 %v4023
      %v4025 = vpop.xlane.xlu0 %4024
      %v4026 = vsel %vm307, %v3972, 0.0
      %4027 = vadd.xlane.f32.xlu0 %v4026
      %v4028 = vpop.xlane.xlu0 %4027
      %v4029 = vsel %vm307, %v3973, 0.0
      %4030 = vadd.xlane.f32.xlu0 %v4029
      %v4031 = vpop.xlane.xlu0 %4030
      %v4032 = vsel %vm307, %v3974, 0.0
      %4033 = vadd.xlane.f32.xlu0 %v4032
      %v4034 = vpop.xlane.xlu0 %4033
      %v4035 = vsel %vm307, %v3975, 0.0
      %4036 = vadd.xlane.f32.xlu0 %v4035
      %v4037 = vpop.xlane.xlu0 %4036
      %v4038 = vsel %vm307, %v3976, 0.0
      %4039 = vadd.xlane.f32.xlu0 %v4038
      %v4040 = vpop.xlane.xlu0 %4039
      %v4041 = vsel %vm307, %v3977, 0.0
      %4042 = vadd.xlane.f32.xlu0 %v4041
      %v4043 = vpop.xlane.xlu0 %4042
      %v4044 = vsel %vm307, %v3978, 0.0
      %4045 = vadd.xlane.f32.xlu0 %v4044
      %v4046 = vpop.xlane.xlu0 %4045
      %v4047 = vsel %vm307, %v3979, 0.0
      %4048 = vadd.xlane.f32.xlu0 %v4047
      %v4049 = vpop.xlane.xlu0 %4048
      %v4050 = vsel %vm307, %v3980, 0.0
      %4051 = vadd.xlane.f32.xlu0 %v4050
      %v4052 = vpop.xlane.xlu0 %4051
      %v4053 = vsel %vm307, %v3981, 0.0
      %4054 = vadd.xlane.f32.xlu0 %v4053
      %v4055 = vpop.xlane.xlu0 %4054
      %v4056 = vsel %vm307, %v3982, 0.0
      %4057 = vadd.xlane.f32.xlu0 %v4056
      %v4058 = vpop.xlane.xlu0 %4057
      %v4059 = vsel %vm307, %v3983, 0.0
      %4060 = vadd.xlane.f32.xlu0 %v4059
      %v4061 = vpop.xlane.xlu0 %4060
      %v4062 = vsel %vm307, %v3984, 0.0
      %4063 = vadd.xlane.f32.xlu0 %v4062
      %v4064 = vpop.xlane.xlu0 %4063
      %v4065 = vsel %vm307, %v3985, 0.0
      %4066 = vadd.xlane.f32.xlu0 %v4065
      %v4067 = vpop.xlane.xlu0 %4066
      %v4068 = vsel %vm307, %v3986, 0.0
      %4069 = vadd.xlane.f32.xlu0 %v4068
      %v4070 = vpop.xlane.xlu0 %4069
      %v4071 = vsel %vm307, %v3987, 0.0
      %4072 = vadd.xlane.f32.xlu0 %v4071
      %v4073 = vpop.xlane.xlu0 %4072
      %v4074 = vsel %vm307, %v3988, 0.0
      %4075 = vadd.xlane.f32.xlu0 %v4074
      %v4076 = vpop.xlane.xlu0 %4075
      %v4077 = vsel %vm307, %v3989, 0.0
      %4078 = vadd.xlane.f32.xlu0 %v4077
      %v4079 = vpop.xlane.xlu0 %4078
      %v4080 = vsel %vm307, %v3990, 0.0
      %4081 = vadd.xlane.f32.xlu0 %v4080
      %v4082 = vpop.xlane.xlu0 %4081
      %v4083 = vsel %vm307, %v3991, 0.0
      %4084 = vadd.xlane.f32.xlu0 %v4083
      %v4085 = vpop.xlane.xlu0 %4084
      %v4086 = vsel %vm307, %v3992, 0.0
      %4087 = vadd.xlane.f32.xlu0 %v4086
      %v4088 = vpop.xlane.xlu0 %4087
      %v4089 = vsel %vm307, %v3993, 0.0
      %4090 = vadd.xlane.f32.xlu0 %v4089
      %v4091 = vpop.xlane.xlu0 %4090
      %v4092 = vsel %vm307, %v3994, 0.0
      %4093 = vadd.xlane.f32.xlu0 %v4092
      %v4094 = vpop.xlane.xlu0 %4093
      %v4095 = vsel %vm307, %v3995, 0.0
      %4096 = vadd.xlane.f32.xlu0 %v4095
      %v4097 = vpop.xlane.xlu0 %4096
      %v4098 = vsel %vm307, %v3996, 0.0
      %4099 = vadd.xlane.f32.xlu0 %v4098
      %v4100 = vpop.xlane.xlu0 %4099
      %v4101 = vsel %vm307, %v3997, 0.0
      %4102 = vadd.xlane.f32.xlu0 %v4101
      %v4103 = vpop.xlane.xlu0 %4102
      %v4104 = vsel %vm307, %v3998, 0.0
      %4105 = vadd.xlane.f32.xlu0 %v4104
      %v4106 = vpop.xlane.xlu0 %4105
      %v4107 = vrcp.pop 8.0
      %v4108 = vmul.f32 %v4001, %v4107
      %v4109 = vmul.f32 %v4004, %v4107
      %v4110 = vmul.f32 %v4007, %v4107
      %v4111 = vmul.f32 %v4010, %v4107
      %v4112 = vmul.f32 %v4013, %v4107
      %v4113 = vmul.f32 %v4016, %v4107
      %v4114 = vmul.f32 %v4019, %v4107
      %v4115 = vmul.f32 %v4022, %v4107
      %v4116 = vmul.f32 %v4025, %v4107
      %v4117 = vmul.f32 %v4028, %v4107
      %v4118 = vmul.f32 %v4031, %v4107
      %v4119 = vmul.f32 %v4034, %v4107
      %v4120 = vmul.f32 %v4037, %v4107
      %v4121 = vmul.f32 %v4040, %v4107
      %v4122 = vmul.f32 %v4043, %v4107
      %v4123 = vmul.f32 %v4046, %v4107
      %v4124 = vmul.f32 %v4049, %v4107
      %v4125 = vmul.f32 %v4052, %v4107
      %v4126 = vmul.f32 %v4055, %v4107
      %v4127 = vmul.f32 %v4058, %v4107
      %v4128 = vmul.f32 %v4061, %v4107
      %v4129 = vmul.f32 %v4064, %v4107
      %v4130 = vmul.f32 %v4067, %v4107
      %v4131 = vmul.f32 %v4070, %v4107
      %v4132 = vmul.f32 %v4073, %v4107
      %v4133 = vmul.f32 %v4076, %v4107
      %v4134 = vmul.f32 %v4079, %v4107
      %v4135 = vmul.f32 %v4082, %v4107
      %v4136 = vmul.f32 %v4085, %v4107
      %v4137 = vmul.f32 %v4088, %v4107
      %v4138 = vmul.f32 %v4091, %v4107
      %v4139 = vmul.f32 %v4094, %v4107
      %v4140 = vmul.f32 %v4097, %v4107
      %v4141 = vmul.f32 %v4100, %v4107
      %v4142 = vmul.f32 %v4103, %v4107
      %v4143 = vmul.f32 %v4106, %v4107
      %v4144 = vadd.f32 %v4108, 1e-05
      %v4145 = vadd.f32 %v4109, 1e-05
      %v4146 = vadd.f32 %v4110, 1e-05
      %v4147 = vadd.f32 %v4111, 1e-05
      %v4148 = vadd.f32 %v4112, 1e-05
      %v4149 = vadd.f32 %v4113, 1e-05
      %v4150 = vadd.f32 %v4114, 1e-05
      %v4151 = vadd.f32 %v4115, 1e-05
      %v4152 = vadd.f32 %v4116, 1e-05
      %v4153 = vadd.f32 %v4117, 1e-05
      %v4154 = vadd.f32 %v4118, 1e-05
      %v4155 = vadd.f32 %v4119, 1e-05
      %v4156 = vadd.f32 %v4120, 1e-05
      %v4157 = vadd.f32 %v4121, 1e-05
      %v4158 = vadd.f32 %v4122, 1e-05
      %v4159 = vadd.f32 %v4123, 1e-05
      %v4160 = vadd.f32 %v4124, 1e-05
      %v4161 = vadd.f32 %v4125, 1e-05
      %v4162 = vadd.f32 %v4126, 1e-05
      %v4163 = vadd.f32 %v4127, 1e-05
      %v4164 = vadd.f32 %v4128, 1e-05
      %v4165 = vadd.f32 %v4129, 1e-05
      %v4166 = vadd.f32 %v4130, 1e-05
      %v4167 = vadd.f32 %v4131, 1e-05
      %v4168 = vadd.f32 %v4132, 1e-05
      %v4169 = vadd.f32 %v4133, 1e-05
      %v4170 = vadd.f32 %v4134, 1e-05
      %v4171 = vadd.f32 %v4135, 1e-05
      %v4172 = vadd.f32 %v4136, 1e-05
      %v4173 = vadd.f32 %v4137, 1e-05
      %v4174 = vadd.f32 %v4138, 1e-05
      %v4175 = vadd.f32 %v4139, 1e-05
      %v4176 = vadd.f32 %v4140, 1e-05
      %v4177 = vadd.f32 %v4141, 1e-05
      %v4178 = vadd.f32 %v4142, 1e-05
      %v4179 = vadd.f32 %v4143, 1e-05
      %v4180 = vrsqrt.pop %v4144
      %v4181 = vrsqrt.pop %v4145
      %v4182 = vrsqrt.pop %v4146
      %v4183 = vrsqrt.pop %v4147
      %v4184 = vrsqrt.pop %v4148
      %v4185 = vrsqrt.pop %v4149
      %v4186 = vrsqrt.pop %v4150
      %v4187 = vrsqrt.pop %v4151
      %v4188 = vrsqrt.pop %v4152
      %v4189 = vrsqrt.pop %v4153
      %v4190 = vrsqrt.pop %v4154
      %v4191 = vrsqrt.pop %v4155
      %v4192 = vrsqrt.pop %v4156
      %v4193 = vrsqrt.pop %v4157
      %v4194 = vrsqrt.pop %v4158
      %v4195 = vrsqrt.pop %v4159
      %v4196 = vrsqrt.pop %v4160
      %v4197 = vrsqrt.pop %v4161
      %v4198 = vrsqrt.pop %v4162
      %v4199 = vrsqrt.pop %v4163
      %v4200 = vrsqrt.pop %v4164
      %v4201 = vrsqrt.pop %v4165
      %v4202 = vrsqrt.pop %v4166
      %v4203 = vrsqrt.pop %v4167
      %v4204 = vrsqrt.pop %v4168
      %v4205 = vrsqrt.pop %v4169
      %v4206 = vrsqrt.pop %v4170
      %v4207 = vrsqrt.pop %v4171
      %v4208 = vrsqrt.pop %v4172
      %v4209 = vrsqrt.pop %v4173
      %v4210 = vrsqrt.pop %v4174
      %v4211 = vrsqrt.pop %v4175
      %v4212 = vrsqrt.pop %v4176
      %v4213 = vrsqrt.pop %v4177
      %v4214 = vrsqrt.pop %v4178
      %v4215 = vrsqrt.pop %v4179
      %v4216 = vmul.f32 %v3927, %v4180
      %v4217 = vmul.f32 %v3928, %v4181
      %v4218 = vmul.f32 %v3929, %v4182
      %v4219 = vmul.f32 %v3930, %v4183
      %v4220 = vmul.f32 %v3931, %v4184
      %v4221 = vmul.f32 %v3932, %v4185
      %v4222 = vmul.f32 %v3933, %v4186
      %v4223 = vmul.f32 %v3934, %v4187
      %v4224 = vmul.f32 %v3935, %v4188
      %v4225 = vmul.f32 %v3936, %v4189
      %v4226 = vmul.f32 %v3937, %v4190
      %v4227 = vmul.f32 %v3938, %v4191
      %v4228 = vmul.f32 %v3939, %v4192
      %v4229 = vmul.f32 %v3940, %v4193
      %v4230 = vmul.f32 %v3941, %v4194
      %v4231 = vmul.f32 %v3942, %v4195
      %v4232 = vmul.f32 %v3943, %v4196
      %v4233 = vmul.f32 %v3944, %v4197
      %v4234 = vmul.f32 %v3945, %v4198
      %v4235 = vmul.f32 %v3946, %v4199
      %v4236 = vmul.f32 %v3947, %v4200
      %v4237 = vmul.f32 %v3948, %v4201
      %v4238 = vmul.f32 %v3949, %v4202
      %v4239 = vmul.f32 %v3950, %v4203
      %v4240 = vmul.f32 %v3951, %v4204
      %v4241 = vmul.f32 %v3952, %v4205
      %v4242 = vmul.f32 %v3953, %v4206
      %v4243 = vmul.f32 %v3954, %v4207
      %v4244 = vmul.f32 %v3955, %v4208
      %v4245 = vmul.f32 %v3956, %v4209
      %v4246 = vmul.f32 %v3957, %v4210
      %v4247 = vmul.f32 %v3958, %v4211
      %v4248 = vmul.f32 %v3959, %v4212
      %v4249 = vmul.f32 %v3960, %v4213
      %v4250 = vmul.f32 %v3961, %v4214
      %v4251 = vmul.f32 %v3962, %v4215
      %v4252 = vld [vmem:[%s3] sm:$0x1]
      %v4254 = vlaneseq
      %v4255 = vshrl.u32 %v4254, 7
      %v4256 = vsub.s32 0, %v4255
      %v4257 = vrot.slane %v4252, %v4256
      %v4259 = vmul.f32 %v4216, %v4257
      %v4260 = vmul.f32 %v4217, %v4257
      %v4261 = vmul.f32 %v4218, %v4257
      %v4262 = vmul.f32 %v4219, %v4257
      %v4263 = vmul.f32 %v4220, %v4257
      %v4264 = vmul.f32 %v4221, %v4257
      %v4265 = vmul.f32 %v4222, %v4257
      %v4266 = vmul.f32 %v4223, %v4257
      %v4267 = vmul.f32 %v4224, %v4257
      %v4268 = vmul.f32 %v4225, %v4257
      %v4269 = vmul.f32 %v4226, %v4257
      %v4270 = vmul.f32 %v4227, %v4257
      %v4271 = vmul.f32 %v4228, %v4257
      %v4272 = vmul.f32 %v4229, %v4257
      %v4273 = vmul.f32 %v4230, %v4257
      %v4274 = vmul.f32 %v4231, %v4257
      %v4275 = vmul.f32 %v4232, %v4257
      %v4276 = vmul.f32 %v4233, %v4257
      %v4277 = vmul.f32 %v4234, %v4257
      %v4278 = vmul.f32 %v4235, %v4257
      %v4279 = vmul.f32 %v4236, %v4257
      %v4280 = vmul.f32 %v4237, %v4257
      %v4281 = vmul.f32 %v4238, %v4257
      %v4282 = vmul.f32 %v4239, %v4257
      %v4283 = vmul.f32 %v4240, %v4257
      %v4284 = vmul.f32 %v4241, %v4257
      %v4285 = vmul.f32 %v4242, %v4257
      %v4286 = vmul.f32 %v4243, %v4257
      %v4287 = vmul.f32 %v4244, %v4257
      %v4288 = vmul.f32 %v4245, %v4257
      %v4289 = vmul.f32 %v4246, %v4257
      %v4290 = vmul.f32 %v4247, %v4257
      %v4291 = vmul.f32 %v4248, %v4257
      %v4292 = vmul.f32 %v4249, %v4257
      %v4293 = vmul.f32 %v4250, %v4257
      %v4294 = vmul.f32 %v4251, %v4257
      %v4295 = vld [vmem:[%s4] sm:$0x1]
      %v4297 = vlaneseq
      %v4298 = vshrl.u32 %v4297, 7
      %v4299 = vsub.s32 0, %v4298
      %v4300 = vrot.slane %v4295, %v4299
      %v4302 = vadd.f32 %v4259, %v4300
      %v4303 = vadd.f32 %v4260, %v4300
      %v4304 = vadd.f32 %v4261, %v4300
      %v4305 = vadd.f32 %v4262, %v4300
      %v4306 = vadd.f32 %v4263, %v4300
      %v4307 = vadd.f32 %v4264, %v4300
      %v4308 = vadd.f32 %v4265, %v4300
      %v4309 = vadd.f32 %v4266, %v4300
      %v4310 = vadd.f32 %v4267, %v4300
      %v4311 = vadd.f32 %v4268, %v4300
      %v4312 = vadd.f32 %v4269, %v4300
      %v4313 = vadd.f32 %v4270, %v4300
      %v4314 = vadd.f32 %v4271, %v4300
      %v4315 = vadd.f32 %v4272, %v4300
      %v4316 = vadd.f32 %v4273, %v4300
      %v4317 = vadd.f32 %v4274, %v4300
      %v4318 = vadd.f32 %v4275, %v4300
      %v4319 = vadd.f32 %v4276, %v4300
      %v4320 = vadd.f32 %v4277, %v4300
      %v4321 = vadd.f32 %v4278, %v4300
      %v4322 = vadd.f32 %v4279, %v4300
      %v4323 = vadd.f32 %v4280, %v4300
      %v4324 = vadd.f32 %v4281, %v4300
      %v4325 = vadd.f32 %v4282, %v4300
      %v4326 = vadd.f32 %v4283, %v4300
      %v4327 = vadd.f32 %v4284, %v4300
      %v4328 = vadd.f32 %v4285, %v4300
      %v4329 = vadd.f32 %v4286, %v4300
      %v4330 = vadd.f32 %v4287, %v4300
      %v4331 = vadd.f32 %v4288, %v4300
      %v4332 = vadd.f32 %v4289, %v4300
      %v4333 = vadd.f32 %v4290, %v4300
      %v4334 = vadd.f32 %v4291, %v4300
      %v4335 = vadd.f32 %v4292, %v4300
      %v4336 = vadd.f32 %v4293, %v4300
      %v4337 = vadd.f32 %v4294, %v4300
      %v4338 = vmax.f32 %v4302, 0.0
      %v4339 = vmax.f32 %v4303, 0.0
      %v4340 = vmax.f32 %v4304, 0.0
      %v4341 = vmax.f32 %v4305, 0.0
      %v4342 = vmax.f32 %v4306, 0.0
      %v4343 = vmax.f32 %v4307, 0.0
      %v4344 = vmax.f32 %v4308, 0.0
      %v4345 = vmax.f32 %v4309, 0.0
      %v4346 = vmax.f32 %v4310, 0.0
      %v4347 = vmax.f32 %v4311, 0.0
      %v4348 = vmax.f32 %v4312, 0.0
      %v4349 = vmax.f32 %v4313, 0.0
      %v4350 = vmax.f32 %v4314, 0.0
      %v4351 = vmax.f32 %v4315, 0.0
      %v4352 = vmax.f32 %v4316, 0.0
      %v4353 = vmax.f32 %v4317, 0.0
      %v4354 = vmax.f32 %v4318, 0.0
      %v4355 = vmax.f32 %v4319, 0.0
      %v4356 = vmax.f32 %v4320, 0.0
      %v4357 = vmax.f32 %v4321, 0.0
      %v4358 = vmax.f32 %v4322, 0.0
      %v4359 = vmax.f32 %v4323, 0.0
      %v4360 = vmax.f32 %v4324, 0.0
      %v4361 = vmax.f32 %v4325, 0.0
      %v4362 = vmax.f32 %v4326, 0.0
      %v4363 = vmax.f32 %v4327, 0.0
      %v4364 = vmax.f32 %v4328, 0.0
      %v4365 = vmax.f32 %v4329, 0.0
      %v4366 = vmax.f32 %v4330, 0.0
      %v4367 = vmax.f32 %v4331, 0.0
      %v4368 = vmax.f32 %v4332, 0.0
      %v4369 = vmax.f32 %v4333, 0.0
      %v4370 = vmax.f32 %v4334, 0.0
      %v4371 = vmax.f32 %v4335, 0.0
      %v4372 = vmax.f32 %v4336, 0.0
      %v4373 = vmax.f32 %v4337, 0.0
      %v4374 = vld [vmem:[%s7] sm:$0xff]
      %v4375 = vld [vmem:[%s7 + $0x8] sm:$0xff]
      %v4376 = vld [vmem:[%s7 + $0x10] sm:$0xff]
      %v4377 = vld [vmem:[%s7 + $0x18] sm:$0xff]
      %v4378 = vld [vmem:[%s7 + $0x20] sm:$0xff]
      %v4379 = vld [vmem:[%s7 + $0x28] sm:$0xff]
      %v4380 = vld [vmem:[%s7 + $0x30] sm:$0xff]
      %v4381 = vld [vmem:[%s7 + $0x38] sm:$0xff]
      %v4382 = vld [vmem:[%s7 + $0x40] sm:$0xff]
      %v4383 = vld [vmem:[%s7 + $0x48] sm:$0xff]
      %v4384 = vld [vmem:[%s7 + $0x50] sm:$0xff]
      %v4385 = vld [vmem:[%s7 + $0x58] sm:$0xff]
      %v4386 = vld [vmem:[%s7 + $0x60] sm:$0xff]
      %v4387 = vld [vmem:[%s7 + $0x68] sm:$0xff]
      %v4388 = vld [vmem:[%s7 + $0x70] sm:$0xff]
      %v4389 = vld [vmem:[%s7 + $0x78] sm:$0xff]
      %v4390 = vld [vmem:[%s7 + $0x80] sm:$0xff]
      %v4391 = vld [vmem:[%s7 + $0x88] sm:$0xff]
      %v4392 = vld [vmem:[%s7 + $0x90] sm:$0xff]
      %v4393 = vld [vmem:[%s7 + $0x98] sm:$0xff]
      %v4394 = vld [vmem:[%s7 + $0xa0] sm:$0xff]
      %v4395 = vld [vmem:[%s7 + $0xa8] sm:$0xff]
      %v4396 = vld [vmem:[%s7 + $0xb0] sm:$0xff]
      %v4397 = vld [vmem:[%s7 + $0xb8] sm:$0xff]
      %v4398 = vld [vmem:[%s7 + $0xc0] sm:$0xff]
      %v4399 = vld [vmem:[%s7 + $0xc8] sm:$0xff]
      %v4400 = vld [vmem:[%s7 + $0xd0] sm:$0xff]
      %v4401 = vld [vmem:[%s7 + $0xd8] sm:$0xff]
      %v4402 = vld [vmem:[%s7 + $0xe0] sm:$0xff]
      %v4403 = vld [vmem:[%s7 + $0xe8] sm:$0xff]
      %v4404 = vld [vmem:[%s7 + $0xf0] sm:$0xff]
      %v4405 = vld [vmem:[%s7 + $0xf8] sm:$0xff]
      %v4406 = vld [vmem:[%s7 + $0x100] sm:$0xff]
      %v4407 = vld [vmem:[%s7 + $0x108] sm:$0xff]
      %v4408 = vld [vmem:[%s7 + $0x110] sm:$0xff]
      %v4409 = vld [vmem:[%s7 + $0x118] sm:$0xff]
      %4411 = vset.pattern.permute.xlu0 0
      %4412 = vperm.xlu0 %4411, %v4374
      %v4413 = vpop.permute.xlu0 %4412
      %4416 = vset.pattern.permute.xlu0 0
      %4417 = vperm.xlu0 %4416, %v4375
      %v4418 = vpop.permute.xlu0 %4417
      %4421 = vset.pattern.permute.xlu0 0
      %4422 = vperm.xlu0 %4421, %v4376
      %v4423 = vpop.permute.xlu0 %4422
      %4426 = vset.pattern.permute.xlu0 0
      %4427 = vperm.xlu0 %4426, %v4377
      %v4428 = vpop.permute.xlu0 %4427
      %4431 = vset.pattern.permute.xlu0 0
      %4432 = vperm.xlu0 %4431, %v4378
      %v4433 = vpop.permute.xlu0 %4432
      %4436 = vset.pattern.permute.xlu0 0
      %4437 = vperm.xlu0 %4436, %v4379
      %v4438 = vpop.permute.xlu0 %4437
      %4441 = vset.pattern.permute.xlu0 0
      %4442 = vperm.xlu0 %4441, %v4380
      %v4443 = vpop.permute.xlu0 %4442
      %4446 = vset.pattern.permute.xlu0 0
      %4447 = vperm.xlu0 %4446, %v4381
      %v4448 = vpop.permute.xlu0 %4447
      %4451 = vset.pattern.permute.xlu0 0
      %4452 = vperm.xlu0 %4451, %v4382
      %v4453 = vpop.permute.xlu0 %4452
      %4456 = vset.pattern.permute.xlu0 0
      %4457 = vperm.xlu0 %4456, %v4383
      %v4458 = vpop.permute.xlu0 %4457
      %4461 = vset.pattern.permute.xlu0 0
      %4462 = vperm.xlu0 %4461, %v4384
      %v4463 = vpop.permute.xlu0 %4462
      %4466 = vset.pattern.permute.xlu0 0
      %4467 = vperm.xlu0 %4466, %v4385
      %v4468 = vpop.permute.xlu0 %4467
      %4471 = vset.pattern.permute.xlu0 0
      %4472 = vperm.xlu0 %4471, %v4386
      %v4473 = vpop.permute.xlu0 %4472
      %4476 = vset.pattern.permute.xlu0 0
      %4477 = vperm.xlu0 %4476, %v4387
      %v4478 = vpop.permute.xlu0 %4477
      %4481 = vset.pattern.permute.xlu0 0
      %4482 = vperm.xlu0 %4481, %v4388
      %v4483 = vpop.permute.xlu0 %4482
      %4486 = vset.pattern.permute.xlu0 0
      %4487 = vperm.xlu0 %4486, %v4389
      %v4488 = vpop.permute.xlu0 %4487
      %4491 = vset.pattern.permute.xlu0 0
      %4492 = vperm.xlu0 %4491, %v4390
      %v4493 = vpop.permute.xlu0 %4492
      %4496 = vset.pattern.permute.xlu0 0
      %4497 = vperm.xlu0 %4496, %v4391
      %v4498 = vpop.permute.xlu0 %4497
      %4501 = vset.pattern.permute.xlu0 0
      %4502 = vperm.xlu0 %4501, %v4392
      %v4503 = vpop.permute.xlu0 %4502
      %4506 = vset.pattern.permute.xlu0 0
      %4507 = vperm.xlu0 %4506, %v4393
      %v4508 = vpop.permute.xlu0 %4507
      %4511 = vset.pattern.permute.xlu0 0
      %4512 = vperm.xlu0 %4511, %v4394
      %v4513 = vpop.permute.xlu0 %4512
      %4516 = vset.pattern.permute.xlu0 0
      %4517 = vperm.xlu0 %4516, %v4395
      %v4518 = vpop.permute.xlu0 %4517
      %4521 = vset.pattern.permute.xlu0 0
      %4522 = vperm.xlu0 %4521, %v4396
      %v4523 = vpop.permute.xlu0 %4522
      %4526 = vset.pattern.permute.xlu0 0
      %4527 = vperm.xlu0 %4526, %v4397
      %v4528 = vpop.permute.xlu0 %4527
      %4531 = vset.pattern.permute.xlu0 0
      %4532 = vperm.xlu0 %4531, %v4398
      %v4533 = vpop.permute.xlu0 %4532
      %4536 = vset.pattern.permute.xlu0 0
      %4537 = vperm.xlu0 %4536, %v4399
      %v4538 = vpop.permute.xlu0 %4537
      %4541 = vset.pattern.permute.xlu0 0
      %4542 = vperm.xlu0 %4541, %v4400
      %v4543 = vpop.permute.xlu0 %4542
      %4546 = vset.pattern.permute.xlu0 0
      %4547 = vperm.xlu0 %4546, %v4401
      %v4548 = vpop.permute.xlu0 %4547
      %4551 = vset.pattern.permute.xlu0 0
      %4552 = vperm.xlu0 %4551, %v4402
      %v4553 = vpop.permute.xlu0 %4552
      %4556 = vset.pattern.permute.xlu0 0
      %4557 = vperm.xlu0 %4556, %v4403
      %v4558 = vpop.permute.xlu0 %4557
      %4561 = vset.pattern.permute.xlu0 0
      %4562 = vperm.xlu0 %4561, %v4404
      %v4563 = vpop.permute.xlu0 %4562
      %4566 = vset.pattern.permute.xlu0 0
      %4567 = vperm.xlu0 %4566, %v4405
      %v4568 = vpop.permute.xlu0 %4567
      %4571 = vset.pattern.permute.xlu0 0
      %4572 = vperm.xlu0 %4571, %v4406
      %v4573 = vpop.permute.xlu0 %4572
      %4576 = vset.pattern.permute.xlu0 0
      %4577 = vperm.xlu0 %4576, %v4407
      %v4578 = vpop.permute.xlu0 %4577
      %4581 = vset.pattern.permute.xlu0 0
      %4582 = vperm.xlu0 %4581, %v4408
      %v4583 = vpop.permute.xlu0 %4582
      %4586 = vset.pattern.permute.xlu0 0
      %4587 = vperm.xlu0 %4586, %v4409
      %v4588 = vpop.permute.xlu0 %4587
      %v4590 = vmul.f32 %v4338, %v4413
      %v4591 = vmul.f32 %v4339, %v4418
      %v4592 = vmul.f32 %v4340, %v4423
      %v4593 = vmul.f32 %v4341, %v4428
      %v4594 = vmul.f32 %v4342, %v4433
      %v4595 = vmul.f32 %v4343, %v4438
      %v4596 = vmul.f32 %v4344, %v4443
      %v4597 = vmul.f32 %v4345, %v4448
      %v4598 = vmul.f32 %v4346, %v4453
      %v4599 = vmul.f32 %v4347, %v4458
      %v4600 = vmul.f32 %v4348, %v4463
      %v4601 = vmul.f32 %v4349, %v4468
      %v4602 = vmul.f32 %v4350, %v4473
      %v4603 = vmul.f32 %v4351, %v4478
      %v4604 = vmul.f32 %v4352, %v4483
      %v4605 = vmul.f32 %v4353, %v4488
      %v4606 = vmul.f32 %v4354, %v4493
      %v4607 = vmul.f32 %v4355, %v4498
      %v4608 = vmul.f32 %v4356, %v4503
      %v4609 = vmul.f32 %v4357, %v4508
      %v4610 = vmul.f32 %v4358, %v4513
      %v4611 = vmul.f32 %v4359, %v4518
      %v4612 = vmul.f32 %v4360, %v4523
      %v4613 = vmul.f32 %v4361, %v4528
      %v4614 = vmul.f32 %v4362, %v4533
      %v4615 = vmul.f32 %v4363, %v4538
      %v4616 = vmul.f32 %v4364, %v4543
      %v4617 = vmul.f32 %v4365, %v4548
      %v4618 = vmul.f32 %v4366, %v4553
      %v4619 = vmul.f32 %v4367, %v4558
      %v4620 = vmul.f32 %v4368, %v4563
      %v4621 = vmul.f32 %v4369, %v4568
      %v4622 = vmul.f32 %v4370, %v4573
      %v4623 = vmul.f32 %v4371, %v4578
      %v4624 = vmul.f32 %v4372, %v4583
      %v4625 = vmul.f32 %v4373, %v4588
      %4626 = vst.msk [vmem:[#allocation3] sm:$0xff] %vm307, 0.0
      %4627 = vst.msk [vmem:[#allocation3 + $0x8] sm:$0xff] %vm307, 0.0
      %4628 = vst.msk [vmem:[#allocation3 + $0x10] sm:$0xff] %vm307, 0.0
      %4629 = vst.msk [vmem:[#allocation3 + $0x18] sm:$0xff] %vm307, 0.0
      %4630 = vst.msk [vmem:[#allocation3 + $0x20] sm:$0xff] %vm307, 0.0
      %4631 = vst.msk [vmem:[#allocation3 + $0x28] sm:$0xff] %vm307, 0.0
      %4632 = vst.msk [vmem:[#allocation3 + $0x30] sm:$0xff] %vm307, 0.0
      %4633 = vst.msk [vmem:[#allocation3 + $0x38] sm:$0xff] %vm307, 0.0
      %4634 = vst.msk [vmem:[#allocation3 + $0x40] sm:$0xff] %vm307, 0.0
      %4635 = vst.msk [vmem:[#allocation3 + $0x48] sm:$0xff] %vm307, 0.0
      %4636 = vst.msk [vmem:[#allocation3 + $0x50] sm:$0xff] %vm307, 0.0
      %4637 = vst.msk [vmem:[#allocation3 + $0x58] sm:$0xff] %vm307, 0.0
      %4638 = vst.msk [vmem:[#allocation3 + $0x60] sm:$0xff] %vm307, 0.0
      %4639 = vst.msk [vmem:[#allocation3 + $0x68] sm:$0xff] %vm307, 0.0
      %4640 = vst.msk [vmem:[#allocation3 + $0x70] sm:$0xff] %vm307, 0.0
      %4641 = vst.msk [vmem:[#allocation3 + $0x78] sm:$0xff] %vm307, 0.0
      %4642 = vst.msk [vmem:[#allocation3 + $0x80] sm:$0xff] %vm307, 0.0
      %4643 = vst.msk [vmem:[#allocation3 + $0x88] sm:$0xff] %vm307, 0.0
      %4644 = vst.msk [vmem:[#allocation3 + $0x90] sm:$0xff] %vm307, 0.0
      %4645 = vst.msk [vmem:[#allocation3 + $0x98] sm:$0xff] %vm307, 0.0
      %4646 = vst.msk [vmem:[#allocation3 + $0xa0] sm:$0xff] %vm307, 0.0
      %4647 = vst.msk [vmem:[#allocation3 + $0xa8] sm:$0xff] %vm307, 0.0
      %4648 = vst.msk [vmem:[#allocation3 + $0xb0] sm:$0xff] %vm307, 0.0
      %4649 = vst.msk [vmem:[#allocation3 + $0xb8] sm:$0xff] %vm307, 0.0
      %4650 = vst.msk [vmem:[#allocation3 + $0xc0] sm:$0xff] %vm307, 0.0
      %4651 = vst.msk [vmem:[#allocation3 + $0xc8] sm:$0xff] %vm307, 0.0
      %4652 = vst.msk [vmem:[#allocation3 + $0xd0] sm:$0xff] %vm307, 0.0
      %4653 = vst.msk [vmem:[#allocation3 + $0xd8] sm:$0xff] %vm307, 0.0
      %4654 = vst.msk [vmem:[#allocation3 + $0xe0] sm:$0xff] %vm307, 0.0
      %4655 = vst.msk [vmem:[#allocation3 + $0xe8] sm:$0xff] %vm307, 0.0
      %4656 = vst.msk [vmem:[#allocation3 + $0xf0] sm:$0xff] %vm307, 0.0
      %4657 = vst.msk [vmem:[#allocation3 + $0xf8] sm:$0xff] %vm307, 0.0
      %4658 = vst.msk [vmem:[#allocation3 + $0x100] sm:$0xff] %vm307, 0.0
      %4659 = vst.msk [vmem:[#allocation3 + $0x108] sm:$0xff] %vm307, 0.0
      %4660 = vst.msk [vmem:[#allocation3 + $0x110] sm:$0xff] %vm307, 0.0
      %4661 = vst.msk [vmem:[#allocation3 + $0x118] sm:$0xff] %vm307, 0.0
      %4662 = vst.msk [vmem:[#allocation3 + $0x120] sm:$0xff] %vm307, 0.0
      %4663 = vst.msk [vmem:[#allocation3 + $0x128] sm:$0xff] %vm307, 0.0
      %4664 = vst.msk [vmem:[#allocation3 + $0x130] sm:$0xff] %vm307, 0.0
      %4665 = vst.msk [vmem:[#allocation3 + $0x138] sm:$0xff] %vm307, 0.0
      %4666 = vst.msk [vmem:[#allocation3 + $0x140] sm:$0xff] %vm307, 0.0
      %4667 = vst.msk [vmem:[#allocation3 + $0x148] sm:$0xff] %vm307, 0.0
      %4668 = vst.msk [vmem:[#allocation3 + $0x150] sm:$0xff] %vm307, 0.0
      %vm4669 = vcmask 59392
      %4670 = vst.msk [vmem:[#allocation3 + $0x158] sm:$0x7] %vm4669, 0.0
      %4671 = vst.msk [vmem:[#allocation3 + $0x18] sm:$0xff] %vm307, %v4590
      %4672 = vst.msk [vmem:[#allocation3 + $0x20] sm:$0xff] %vm307, %v4591
      %4673 = vst.msk [vmem:[#allocation3 + $0x28] sm:$0xff] %vm307, %v4592
      %4674 = vst.msk [vmem:[#allocation3 + $0x30] sm:$0xff] %vm307, %v4593
      %4675 = vst.msk [vmem:[#allocation3 + $0x38] sm:$0xff] %vm307, %v4594
      %4676 = vst.msk [vmem:[#allocation3 + $0x40] sm:$0xff] %vm307, %v4595
      %4677 = vst.msk [vmem:[#allocation3 + $0x48] sm:$0xff] %vm307, %v4596
      %4678 = vst.msk [vmem:[#allocation3 + $0x50] sm:$0xff] %vm307, %v4597
      %4679 = vst.msk [vmem:[#allocation3 + $0x58] sm:$0xff] %vm307, %v4598
      %4680 = vst.msk [vmem:[#allocation3 + $0x60] sm:$0xff] %vm307, %v4599
      %4681 = vst.msk [vmem:[#allocation3 + $0x68] sm:$0xff] %vm307, %v4600
      %4682 = vst.msk [vmem:[#allocation3 + $0x70] sm:$0xff] %vm307, %v4601
      %4683 = vst.msk [vmem:[#allocation3 + $0x78] sm:$0xff] %vm307, %v4602
      %4684 = vst.msk [vmem:[#allocation3 + $0x80] sm:$0xff] %vm307, %v4603
      %4685 = vst.msk [vmem:[#allocation3 + $0x88] sm:$0xff] %vm307, %v4604
      %4686 = vst.msk [vmem:[#allocation3 + $0x90] sm:$0xff] %vm307, %v4605
      %4687 = vst.msk [vmem:[#allocation3 + $0x98] sm:$0xff] %vm307, %v4606
      %4688 = vst.msk [vmem:[#allocation3 + $0xa0] sm:$0xff] %vm307, %v4607
      %4689 = vst.msk [vmem:[#allocation3 + $0xa8] sm:$0xff] %vm307, %v4608
      %4690 = vst.msk [vmem:[#allocation3 + $0xb0] sm:$0xff] %vm307, %v4609
      %4691 = vst.msk [vmem:[#allocation3 + $0xb8] sm:$0xff] %vm307, %v4610
      %4692 = vst.msk [vmem:[#allocation3 + $0xc0] sm:$0xff] %vm307, %v4611
      %4693 = vst.msk [vmem:[#allocation3 + $0xc8] sm:$0xff] %vm307, %v4612
      %4694 = vst.msk [vmem:[#allocation3 + $0xd0] sm:$0xff] %vm307, %v4613
      %4695 = vst.msk [vmem:[#allocation3 + $0xd8] sm:$0xff] %vm307, %v4614
      %4696 = vst.msk [vmem:[#allocation3 + $0xe0] sm:$0xff] %vm307, %v4615
      %4697 = vst.msk [vmem:[#allocation3 + $0xe8] sm:$0xff] %vm307, %v4616
      %4698 = vst.msk [vmem:[#allocation3 + $0xf0] sm:$0xff] %vm307, %v4617
      %4699 = vst.msk [vmem:[#allocation3 + $0xf8] sm:$0xff] %vm307, %v4618
      %4700 = vst.msk [vmem:[#allocation3 + $0x100] sm:$0xff] %vm307, %v4619
      %4701 = vst.msk [vmem:[#allocation3 + $0x108] sm:$0xff] %vm307, %v4620
      %4702 = vst.msk [vmem:[#allocation3 + $0x110] sm:$0xff] %vm307, %v4621
      %4703 = vst.msk [vmem:[#allocation3 + $0x118] sm:$0xff] %vm307, %v4622
      %4704 = vst.msk [vmem:[#allocation3 + $0x120] sm:$0xff] %vm307, %v4623
      %4705 = vst.msk [vmem:[#allocation3 + $0x128] sm:$0xff] %vm307, %v4624
      %4706 = vst.msk [vmem:[#allocation3 + $0x130] sm:$0xff] %vm307, %v4625
      %4707 = vst.msk [vmem:[#allocation4] sm:$0xff] %vm435, 0.0
      %4708 = vst.msk [vmem:[#allocation4 + $0x8] sm:$0xff] %vm435, 0.0
      %4709 = vst.msk [vmem:[#allocation4 + $0x10] sm:$0xff] %vm435, 0.0
      %4710 = vst.msk [vmem:[#allocation4 + $0x18] sm:$0xff] %vm435, 0.0
      %4711 = vst.msk [vmem:[#allocation4 + $0x20] sm:$0xff] %vm435, 0.0
      %4712 = vst.msk [vmem:[#allocation4 + $0x28] sm:$0xff] %vm435, 0.0
      %4713 = vst.msk [vmem:[#allocation4 + $0x30] sm:$0xff] %vm435, 0.0
      %4714 = vst.msk [vmem:[#allocation4 + $0x38] sm:$0xff] %vm435, 0.0
      %4715 = vst.msk [vmem:[#allocation4 + $0x40] sm:$0xff] %vm435, 0.0
      %4716 = vst.msk [vmem:[#allocation4 + $0x48] sm:$0xff] %vm435, 0.0
      %4717 = vst.msk [vmem:[#allocation4 + $0x50] sm:$0xff] %vm435, 0.0
      %4718 = vst.msk [vmem:[#allocation4 + $0x58] sm:$0xff] %vm435, 0.0
      %4719 = vst.msk [vmem:[#allocation4 + $0x60] sm:$0xff] %vm435, 0.0
      %4720 = vst.msk [vmem:[#allocation4 + $0x68] sm:$0xff] %vm435, 0.0
      %4721 = vst.msk [vmem:[#allocation4 + $0x70] sm:$0xff] %vm435, 0.0
      %4722 = vst.msk [vmem:[#allocation4 + $0x78] sm:$0xff] %vm435, 0.0
      %4723 = vst.msk [vmem:[#allocation4 + $0x80] sm:$0xff] %vm435, 0.0
      %4724 = vst.msk [vmem:[#allocation4 + $0x88] sm:$0xff] %vm435, 0.0
      %4725 = vst.msk [vmem:[#allocation4 + $0x90] sm:$0xff] %vm435, 0.0
      %4726 = vst.msk [vmem:[#allocation4 + $0x98] sm:$0xff] %vm435, 0.0
      %4727 = vst.msk [vmem:[#allocation4 + $0xa0] sm:$0xff] %vm435, 0.0
      %4728 = vst.msk [vmem:[#allocation4 + $0xa8] sm:$0xff] %vm435, 0.0
      %4729 = vst.msk [vmem:[#allocation4 + $0xb0] sm:$0xff] %vm435, 0.0
      %4730 = vst.msk [vmem:[#allocation4 + $0xb8] sm:$0xff] %vm435, 0.0
      %4731 = vst.msk [vmem:[#allocation4 + $0xc0] sm:$0xff] %vm435, 0.0
      %4732 = vst.msk [vmem:[#allocation4 + $0xc8] sm:$0xff] %vm435, 0.0
      %4733 = vst.msk [vmem:[#allocation4 + $0xd0] sm:$0xff] %vm435, 0.0
      %4734 = vst.msk [vmem:[#allocation4 + $0xd8] sm:$0xff] %vm435, 0.0
      %4735 = vst.msk [vmem:[#allocation4 + $0xe0] sm:$0xff] %vm435, 0.0
      %4736 = vst.msk [vmem:[#allocation4 + $0xe8] sm:$0xff] %vm435, 0.0
      %4737 = vst.msk [vmem:[#allocation4 + $0xf0] sm:$0xff] %vm435, 0.0
      %4738 = vst.msk [vmem:[#allocation4 + $0xf8] sm:$0xff] %vm435, 0.0
      %4739 = vst.msk [vmem:[#allocation4 + $0x100] sm:$0xff] %vm435, 0.0
      %4740 = vst.msk [vmem:[#allocation4 + $0x108] sm:$0xff] %vm435, 0.0
      %4741 = vst.msk [vmem:[#allocation4 + $0x110] sm:$0xff] %vm435, 0.0
      %4742 = vst.msk [vmem:[#allocation4 + $0x118] sm:$0xff] %vm435, 0.0
      %v4743 = vld [vmem:[#allocation3 + $0x5] sm:$0xff]
      %v4744 = vld [vmem:[#allocation3 + $0xd] sm:$0xff]
      %v4745 = vld [vmem:[#allocation3 + $0x15] sm:$0xff]
      %v4746 = vld [vmem:[#allocation3 + $0x1d] sm:$0xff]
      %v4747 = vld [vmem:[#allocation3 + $0x25] sm:$0xff]
      %v4748 = vld [vmem:[#allocation3 + $0x2d] sm:$0xff]
      %v4749 = vld [vmem:[#allocation3 + $0x35] sm:$0xff]
      %v4750 = vld [vmem:[#allocation3 + $0x3d] sm:$0xff]
      %v4751 = vld [vmem:[#allocation3 + $0x45] sm:$0xff]
      %v4752 = vld [vmem:[#allocation3 + $0x4d] sm:$0xff]
      %v4753 = vld [vmem:[#allocation3 + $0x55] sm:$0xff]
      %v4754 = vld [vmem:[#allocation3 + $0x5d] sm:$0xff]
      %v4755 = vld [vmem:[#allocation3 + $0x65] sm:$0xff]
      %v4756 = vld [vmem:[#allocation3 + $0x6d] sm:$0xff]
      %v4757 = vld [vmem:[#allocation3 + $0x75] sm:$0xff]
      %v4758 = vld [vmem:[#allocation3 + $0x7d] sm:$0xff]
      %v4759 = vld [vmem:[#allocation3 + $0x85] sm:$0xff]
      %v4760 = vld [vmem:[#allocation3 + $0x8d] sm:$0xff]
      %v4761 = vld [vmem:[#allocation3 + $0x95] sm:$0xff]
      %v4762 = vld [vmem:[#allocation3 + $0x9d] sm:$0xff]
      %v4763 = vld [vmem:[#allocation3 + $0xa5] sm:$0xff]
      %v4764 = vld [vmem:[#allocation3 + $0xad] sm:$0xff]
      %v4765 = vld [vmem:[#allocation3 + $0xb5] sm:$0xff]
      %v4766 = vld [vmem:[#allocation3 + $0xbd] sm:$0xff]
      %v4767 = vld [vmem:[#allocation3 + $0xc5] sm:$0xff]
      %v4768 = vld [vmem:[#allocation3 + $0xcd] sm:$0xff]
      %v4769 = vld [vmem:[#allocation3 + $0xd5] sm:$0xff]
      %v4770 = vld [vmem:[#allocation3 + $0xdd] sm:$0xff]
      %v4771 = vld [vmem:[#allocation3 + $0xe5] sm:$0xff]
      %v4772 = vld [vmem:[#allocation3 + $0xed] sm:$0xff]
      %v4773 = vld [vmem:[#allocation3 + $0xf5] sm:$0xff]
      %v4774 = vld [vmem:[#allocation3 + $0xfd] sm:$0xff]
      %v4775 = vld [vmem:[#allocation3 + $0x105] sm:$0xff]
      %v4776 = vld [vmem:[#allocation3 + $0x10d] sm:$0xff]
      %v4777 = vld [vmem:[#allocation3 + $0x115] sm:$0xff]
      %v4778 = vld [vmem:[#allocation3 + $0x11d] sm:$0xff]
      %v4779 = vpack.c.bf16 %v4744, %v4743
      %v4780 = vpack.c.bf16 %v4746, %v4745
      %v4781 = vpack.c.bf16 %v4748, %v4747
      %v4782 = vpack.c.bf16 %v4750, %v4749
      %v4783 = vpack.c.bf16 %v4752, %v4751
      %v4784 = vpack.c.bf16 %v4754, %v4753
      %v4785 = vpack.c.bf16 %v4756, %v4755
      %v4786 = vpack.c.bf16 %v4758, %v4757
      %v4787 = vpack.c.bf16 %v4760, %v4759
      %v4788 = vpack.c.bf16 %v4762, %v4761
      %v4789 = vpack.c.bf16 %v4764, %v4763
      %v4790 = vpack.c.bf16 %v4766, %v4765
      %v4791 = vpack.c.bf16 %v4768, %v4767
      %v4792 = vpack.c.bf16 %v4770, %v4769
      %v4793 = vpack.c.bf16 %v4772, %v4771
      %v4794 = vpack.c.bf16 %v4774, %v4773
      %v4795 = vpack.c.bf16 %v4776, %v4775
      %v4796 = vpack.c.bf16 %v4778, %v4777
      %v4797 = vld [vmem:[#allocation4] sm:$0xff]
      %v4798 = vld [vmem:[#allocation4 + $0x8] sm:$0xff]
      %v4799 = vld [vmem:[#allocation4 + $0x10] sm:$0xff]
      %v4800 = vld [vmem:[#allocation4 + $0x18] sm:$0xff]
      %v4801 = vld [vmem:[#allocation4 + $0x20] sm:$0xff]
      %v4802 = vld [vmem:[#allocation4 + $0x28] sm:$0xff]
      %v4803 = vld [vmem:[#allocation4 + $0x30] sm:$0xff]
      %v4804 = vld [vmem:[#allocation4 + $0x38] sm:$0xff]
      %v4805 = vld [vmem:[#allocation4 + $0x40] sm:$0xff]
      %v4806 = vld [vmem:[#allocation4 + $0x48] sm:$0xff]
      %v4807 = vld [vmem:[#allocation4 + $0x50] sm:$0xff]
      %v4808 = vld [vmem:[#allocation4 + $0x58] sm:$0xff]
      %v4809 = vld [vmem:[#allocation4 + $0x60] sm:$0xff]
      %v4810 = vld [vmem:[#allocation4 + $0x68] sm:$0xff]
      %v4811 = vld [vmem:[#allocation4 + $0x70] sm:$0xff]
      %v4812 = vld [vmem:[#allocation4 + $0x78] sm:$0xff]
      %v4813 = vld [vmem:[#allocation4 + $0x80] sm:$0xff]
      %v4814 = vld [vmem:[#allocation4 + $0x88] sm:$0xff]
      %v4815 = vld [vmem:[#allocation4 + $0x90] sm:$0xff]
      %v4816 = vld [vmem:[#allocation4 + $0x98] sm:$0xff]
      %v4817 = vld [vmem:[#allocation4 + $0xa0] sm:$0xff]
      %v4818 = vld [vmem:[#allocation4 + $0xa8] sm:$0xff]
      %v4819 = vld [vmem:[#allocation4 + $0xb0] sm:$0xff]
      %v4820 = vld [vmem:[#allocation4 + $0xb8] sm:$0xff]
      %v4821 = vld [vmem:[#allocation4 + $0xc0] sm:$0xff]
      %v4822 = vld [vmem:[#allocation4 + $0xc8] sm:$0xff]
      %v4823 = vld [vmem:[#allocation4 + $0xd0] sm:$0xff]
      %v4824 = vld [vmem:[#allocation4 + $0xd8] sm:$0xff]
      %v4825 = vld [vmem:[#allocation4 + $0xe0] sm:$0xff]
      %v4826 = vld [vmem:[#allocation4 + $0xe8] sm:$0xff]
      %v4827 = vld [vmem:[#allocation4 + $0xf0] sm:$0xff]
      %v4828 = vld [vmem:[#allocation4 + $0xf8] sm:$0xff]
      %v4829 = vld [vmem:[#allocation4 + $0x100] sm:$0xff]
      %v4830 = vld [vmem:[#allocation4 + $0x108] sm:$0xff]
      %v4831 = vld [vmem:[#allocation4 + $0x110] sm:$0xff]
      %v4832 = vld [vmem:[#allocation4 + $0x118] sm:$0xff]
      %v4833 = vld [vmem:[%s2] sm:$0xf]
      %v4835 = vsel %vm307, %v4779, 0
      %v4838 = vsel %vm307, %v4780, 0
      %v4841 = vsel %vm307, %v4781, 0
      %v4844 = vsel %vm307, %v4782, 0
      %v4847 = vsel %vm307, %v4783, 0
      %v4850 = vsel %vm307, %v4784, 0
      %v4853 = vsel %vm307, %v4785, 0
      %v4856 = vsel %vm307, %v4786, 0
      %v4859 = vsel %vm307, %v4787, 0
      %v4862 = vsel %vm307, %v4788, 0
      %v4865 = vsel %vm307, %v4789, 0
      %v4868 = vsel %vm307, %v4790, 0
      %v4871 = vsel %vm307, %v4791, 0
      %v4874 = vsel %vm307, %v4792, 0
      %v4877 = vsel %vm307, %v4793, 0
      %v4880 = vsel %vm307, %v4794, 0
      %v4883 = vsel %vm307, %v4795, 0
      %v4886 = vsel %vm307, %v4796, 0
      %vm4888 = vcmask 1043456
      %v4890 = vsel %vm4888, %v4833, 0
      %4892 = vmatprep.subr.bf16.mxu0 0
      %4893 = vmatpush1.bf16.msra.mxu0 %v4890
      %4894 = vmatprep.subr.bf16.mxu0 0
      %4895 = vmatpush1.bf16.msra.mxu0 0
      %4896 = vmatprep.subr.bf16.mxu0 0
      %4897 = vmatpush1.bf16.msra.mxu0 0
      %4898 = vmatprep.subr.bf16.mxu0 0
      %4899 = vmatpush1.bf16.msra.mxu0 0
      %4900 = vmatprep.subr.bf16.mxu0 0
      %4901 = vmatpush1.bf16.msra.mxu0 0
      %4902 = vmatprep.subr.bf16.mxu0 0
      %4903 = vmatpush1.bf16.msra.mxu0 0
      %4904 = vmatprep.subr.bf16.mxu0 0
      %4905 = vmatpush1.bf16.msra.mxu0 0
      %4906 = vmatprep.subr.bf16.mxu0 0
      %4907 = vmatpush1.bf16.msra.mxu0 0
      %4908 = vmatprep.subr.bf16.mxu0 0
      %4909 = vmatpush1.bf16.msra.mxu0 0
      %4910 = vmatprep.subr.bf16.mxu0 0
      %4911 = vmatpush1.bf16.msra.mxu0 0
      %4912 = vmatprep.subr.bf16.mxu0 0
      %4913 = vmatpush1.bf16.msra.mxu0 0
      %4914 = vmatprep.subr.bf16.mxu0 0
      %4915 = vmatpush1.bf16.msra.mxu0 0
      %4916 = vmatprep.subr.bf16.mxu0 0
      %4917 = vmatpush1.bf16.msra.mxu0 0
      %4918 = vmatprep.subr.bf16.mxu0 0
      %4919 = vmatpush1.bf16.msra.mxu0 0
      %4920 = vmatprep.subr.bf16.mxu0 0
      %4921 = vmatpush1.bf16.msra.mxu0 0
      %4922 = vmatprep.subr.bf16.mxu0 0
      %4923 = vmatpush1.bf16.msra.mxu0 0
      %4924 = vmatprep.mubr.bf16.mxu0 0
      %4925 = vmatmul.mubr.bf16.gmra.mrb[0].mxu0 %v4835
      %v4926 = vpop.f32.mrb[0].mxu0
      %v4927 = vadd.f32 0.0, %v4926
      %v4928 = vpop.f32.mrb[0].mxu0
      %v4929 = vpop.f32.mrb[0].mxu0
      %v4930 = vadd.f32 0.0, %v4929
      %v4931 = vpop.f32.mrb[0].mxu0
      %4932 = vmatprep.mubr.bf16.mxu0 0
      %4933 = vmatmul.mubr.bf16.gmra.mrb[0].mxu0 %v4838
      %v4934 = vpop.f32.mrb[0].mxu0
      %v4935 = vadd.f32 0.0, %v4934
      %v4936 = vpop.f32.mrb[0].mxu0
      %v4937 = vpop.f32.mrb[0].mxu0
      %v4938 = vadd.f32 0.0, %v4937
      %v4939 = vpop.f32.mrb[0].mxu0
      %4940 = vmatprep.mubr.bf16.mxu0 0
      %4941 = vmatmul.mubr.bf16.gmra.mrb[0].mxu0 %v4841
      %v4942 = vpop.f32.mrb[0].mxu0
      %v4943 = vadd.f32 0.0, %v4942
      %v4944 = vpop.f32.mrb[0].mxu0
      %v4945 = vpop.f32.mrb[0].mxu0
      %v4946 = vadd.f32 0.0, %v4945
      %v4947 = vpop.f32.mrb[0].mxu0
      %4948 = vmatprep.mubr.bf16.mxu0 0
      %4949 = vmatmul.mubr.bf16.gmra.mrb[0].mxu0 %v4844
      %v4950 = vpop.f32.mrb[0].mxu0
      %v4951 = vadd.f32 0.0, %v4950
      %v4952 = vpop.f32.mrb[0].mxu0
      %v4953 = vpop.f32.mrb[0].mxu0
      %v4954 = vadd.f32 0.0, %v4953
      %v4955 = vpop.f32.mrb[0].mxu0
      %4956 = vmatprep.mubr.bf16.mxu0 0
      %4957 = vmatmul.mubr.bf16.gmra.mrb[0].mxu0 %v4847
      %v4958 = vpop.f32.mrb[0].mxu0
      %v4959 = vadd.f32 0.0, %v4958
      %v4960 = vpop.f32.mrb[0].mxu0
      %v4961 = vpop.f32.mrb[0].mxu0
      %v4962 = vadd.f32 0.0, %v4961
      %v4963 = vpop.f32.mrb[0].mxu0
      %4964 = vmatprep.mubr.bf16.mxu0 0
      %4965 = vmatmul.mubr.bf16.gmra.mrb[0].mxu0 %v4850
      %v4966 = vpop.f32.mrb[0].mxu0
      %v4967 = vadd.f32 0.0, %v4966
      %v4968 = vpop.f32.mrb[0].mxu0
      %v4969 = vpop.f32.mrb[0].mxu0
      %v4970 = vadd.f32 0.0, %v4969
      %v4971 = vpop.f32.mrb[0].mxu0
      %4972 = vmatprep.mubr.bf16.mxu0 0
      %4973 = vmatmul.mubr.bf16.gmra.mrb[0].mxu0 %v4853
      %v4974 = vpop.f32.mrb[0].mxu0
      %v4975 = vadd.f32 0.0, %v4974
      %v4976 = vpop.f32.mrb[0].mxu0
      %v4977 = vpop.f32.mrb[0].mxu0
      %v4978 = vadd.f32 0.0, %v4977
      %v4979 = vpop.f32.mrb[0].mxu0
      %4980 = vmatprep.mubr.bf16.mxu0 0
      %4981 = vmatmul.mubr.bf16.gmra.mrb[0].mxu0 %v4856
      %v4982 = vpop.f32.mrb[0].mxu0
      %v4983 = vadd.f32 0.0, %v4982
      %v4984 = vpop.f32.mrb[0].mxu0
      %v4985 = vpop.f32.mrb[0].mxu0
      %v4986 = vadd.f32 0.0, %v4985
      %v4987 = vpop.f32.mrb[0].mxu0
      %4988 = vmatprep.mubr.bf16.mxu0 0
      %4989 = vmatmul.mubr.bf16.gmra.mrb[0].mxu0 %v4859
      %v4990 = vpop.f32.mrb[0].mxu0
      %v4991 = vadd.f32 0.0, %v4990
      %v4992 = vpop.f32.mrb[0].mxu0
      %v4993 = vpop.f32.mrb[0].mxu0
      %v4994 = vadd.f32 0.0, %v4993
      %v4995 = vpop.f32.mrb[0].mxu0
      %4996 = vmatprep.mubr.bf16.mxu0 0
      %4997 = vmatmul.mubr.bf16.gmra.mrb[0].mxu0 %v4862
      %v4998 = vpop.f32.mrb[0].mxu0
      %v4999 = vadd.f32 0.0, %v4998
      %v5000 = vpop.f32.mrb[0].mxu0
      %v5001 = vpop.f32.mrb[0].mxu0
      %v5002 = vadd.f32 0.0, %v5001
      %v5003 = vpop.f32.mrb[0].mxu0
      %5004 = vmatprep.mubr.bf16.mxu0 0
      %5005 = vmatmul.mubr.bf16.gmra.mrb[0].mxu0 %v4865
      %v5006 = vpop.f32.mrb[0].mxu0
      %v5007 = vadd.f32 0.0, %v5006
      %v5008 = vpop.f32.mrb[0].mxu0
      %v5009 = vpop.f32.mrb[0].mxu0
      %v5010 = vadd.f32 0.0, %v5009
      %v5011 = vpop.f32.mrb[0].mxu0
      %5012 = vmatprep.mubr.bf16.mxu0 0
      %5013 = vmatmul.mubr.bf16.gmra.mrb[0].mxu0 %v4868
      %v5014 = vpop.f32.mrb[0].mxu0
      %v5015 = vadd.f32 0.0, %v5014
      %v5016 = vpop.f32.mrb[0].mxu0
      %v5017 = vpop.f32.mrb[0].mxu0
      %v5018 = vadd.f32 0.0, %v5017
      %v5019 = vpop.f32.mrb[0].mxu0
      %5020 = vmatprep.mubr.bf16.mxu0 0
      %5021 = vmatmul.mubr.bf16.gmra.mrb[0].mxu0 %v4871
      %v5022 = vpop.f32.mrb[0].mxu0
      %v5023 = vadd.f32 0.0, %v5022
      %v5024 = vpop.f32.mrb[0].mxu0
      %v5025 = vpop.f32.mrb[0].mxu0
      %v5026 = vadd.f32 0.0, %v5025
      %v5027 = vpop.f32.mrb[0].mxu0
      %5028 = vmatprep.mubr.bf16.mxu0 0
      %5029 = vmatmul.mubr.bf16.gmra.mrb[0].mxu0 %v4874
      %v5030 = vpop.f32.mrb[0].mxu0
      %v5031 = vadd.f32 0.0, %v5030
      %v5032 = vpop.f32.mrb[0].mxu0
      %v5033 = vpop.f32.mrb[0].mxu0
      %v5034 = vadd.f32 0.0, %v5033
      %v5035 = vpop.f32.mrb[0].mxu0
      %5036 = vmatprep.mubr.bf16.mxu0 0
      %5037 = vmatmul.mubr.bf16.gmra.mrb[0].mxu0 %v4877
      %v5038 = vpop.f32.mrb[0].mxu0
      %v5039 = vadd.f32 0.0, %v5038
      %v5040 = vpop.f32.mrb[0].mxu0
      %v5041 = vpop.f32.mrb[0].mxu0
      %v5042 = vadd.f32 0.0, %v5041
      %v5043 = vpop.f32.mrb[0].mxu0
      %5044 = vmatprep.mubr.bf16.mxu0 0
      %5045 = vmatmul.mubr.bf16.gmra.mrb[0].mxu0 %v4880
      %v5046 = vpop.f32.mrb[0].mxu0
      %v5047 = vadd.f32 0.0, %v5046
      %v5048 = vpop.f32.mrb[0].mxu0
      %v5049 = vpop.f32.mrb[0].mxu0
      %v5050 = vadd.f32 0.0, %v5049
      %v5051 = vpop.f32.mrb[0].mxu0
      %5052 = vmatprep.mubr.bf16.mxu0 0
      %5053 = vmatmul.mubr.bf16.gmra.mrb[0].mxu0 %v4883
      %v5054 = vpop.f32.mrb[0].mxu0
      %v5055 = vadd.f32 0.0, %v5054
      %v5056 = vpop.f32.mrb[0].mxu0
      %v5057 = vpop.f32.mrb[0].mxu0
      %v5058 = vadd.f32 0.0, %v5057
      %v5059 = vpop.f32.mrb[0].mxu0
      %5060 = vmatprep.mubr.bf16.mxu0 0
      %5061 = vmatmul.mubr.bf16.gmra.mrb[0].mxu0 %v4886
      %v5062 = vpop.f32.mrb[0].mxu0
      %v5063 = vadd.f32 0.0, %v5062
      %v5064 = vpop.f32.mrb[0].mxu0
      %v5065 = vpop.f32.mrb[0].mxu0
      %v5066 = vadd.f32 0.0, %v5065
      %v5067 = vpop.f32.mrb[0].mxu0
      %5068 = vdwg.mxu0
      %v5069 = vadd.f32 %v4797, %v4927
      %v5070 = vadd.f32 %v4798, %v4930
      %v5071 = vadd.f32 %v4799, %v4935
      %v5072 = vadd.f32 %v4800, %v4938
      %v5073 = vadd.f32 %v4801, %v4943
      %v5074 = vadd.f32 %v4802, %v4946
      %v5075 = vadd.f32 %v4803, %v4951
      %v5076 = vadd.f32 %v4804, %v4954
      %v5077 = vadd.f32 %v4805, %v4959
      %v5078 = vadd.f32 %v4806, %v4962
      %v5079 = vadd.f32 %v4807, %v4967
      %v5080 = vadd.f32 %v4808, %v4970
      %v5081 = vadd.f32 %v4809, %v4975
      %v5082 = vadd.f32 %v4810, %v4978
      %v5083 = vadd.f32 %v4811, %v4983
      %v5084 = vadd.f32 %v4812, %v4986
      %v5085 = vadd.f32 %v4813, %v4991
      %v5086 = vadd.f32 %v4814, %v4994
      %v5087 = vadd.f32 %v4815, %v4999
      %v5088 = vadd.f32 %v4816, %v5002
      %v5089 = vadd.f32 %v4817, %v5007
      %v5090 = vadd.f32 %v4818, %v5010
      %v5091 = vadd.f32 %v4819, %v5015
      %v5092 = vadd.f32 %v4820, %v5018
      %v5093 = vadd.f32 %v4821, %v5023
      %v5094 = vadd.f32 %v4822, %v5026
      %v5095 = vadd.f32 %v4823, %v5031
      %v5096 = vadd.f32 %v4824, %v5034
      %v5097 = vadd.f32 %v4825, %v5039
      %v5098 = vadd.f32 %v4826, %v5042
      %v5099 = vadd.f32 %v4827, %v5047
      %v5100 = vadd.f32 %v4828, %v5050
      %v5101 = vadd.f32 %v4829, %v5055
      %v5102 = vadd.f32 %v4830, %v5058
      %v5103 = vadd.f32 %v4831, %v5063
      %v5104 = vadd.f32 %v4832, %v5066
      %5105 = vst.msk [vmem:[#allocation4] sm:$0xff] %vm435, %v5069
      %5106 = vst.msk [vmem:[#allocation4 + $0x8] sm:$0xff] %vm435, %v5070
      %5107 = vst.msk [vmem:[#allocation4 + $0x10] sm:$0xff] %vm435, %v5071
      %5108 = vst.msk [vmem:[#allocation4 + $0x18] sm:$0xff] %vm435, %v5072
      %5109 = vst.msk [vmem:[#allocation4 + $0x20] sm:$0xff] %vm435, %v5073
      %5110 = vst.msk [vmem:[#allocation4 + $0x28] sm:$0xff] %vm435, %v5074
      %5111 = vst.msk [vmem:[#allocation4 + $0x30] sm:$0xff] %vm435, %v5075
      %5112 = vst.msk [vmem:[#allocation4 + $0x38] sm:$0xff] %vm435, %v5076
      %5113 = vst.msk [vmem:[#allocation4 + $0x40] sm:$0xff] %vm435, %v5077
      %5114 = vst.msk [vmem:[#allocation4 + $0x48] sm:$0xff] %vm435, %v5078
      %5115 = vst.msk [vmem:[#allocation4 + $0x50] sm:$0xff] %vm435, %v5079
      %5116 = vst.msk [vmem:[#allocation4 + $0x58] sm:$0xff] %vm435, %v5080
      %5117 = vst.msk [vmem:[#allocation4 + $0x60] sm:$0xff] %vm435, %v5081
      %5118 = vst.msk [vmem:[#allocation4 + $0x68] sm:$0xff] %vm435, %v5082
      %5119 = vst.msk [vmem:[#allocation4 + $0x70] sm:$0xff] %vm435, %v5083
      %5120 = vst.msk [vmem:[#allocation4 + $0x78] sm:$0xff] %vm435, %v5084
      %5121 = vst.msk [vmem:[#allocation4 + $0x80] sm:$0xff] %vm435, %v5085
      %5122 = vst.msk [vmem:[#allocation4 + $0x88] sm:$0xff] %vm435, %v5086
      %5123 = vst.msk [vmem:[#allocation4 + $0x90] sm:$0xff] %vm435, %v5087
      %5124 = vst.msk [vmem:[#allocation4 + $0x98] sm:$0xff] %vm435, %v5088
      %5125 = vst.msk [vmem:[#allocation4 + $0xa0] sm:$0xff] %vm435, %v5089
      %5126 = vst.msk [vmem:[#allocation4 + $0xa8] sm:$0xff] %vm435, %v5090
      %5127 = vst.msk [vmem:[#allocation4 + $0xb0] sm:$0xff] %vm435, %v5091
      %5128 = vst.msk [vmem:[#allocation4 + $0xb8] sm:$0xff] %vm435, %v5092
      %5129 = vst.msk [vmem:[#allocation4 + $0xc0] sm:$0xff] %vm435, %v5093
      %5130 = vst.msk [vmem:[#allocation4 + $0xc8] sm:$0xff] %vm435, %v5094
      %5131 = vst.msk [vmem:[#allocation4 + $0xd0] sm:$0xff] %vm435, %v5095
      %5132 = vst.msk [vmem:[#allocation4 + $0xd8] sm:$0xff] %vm435, %v5096
      %5133 = vst.msk [vmem:[#allocation4 + $0xe0] sm:$0xff] %vm435, %v5097
      %5134 = vst.msk [vmem:[#allocation4 + $0xe8] sm:$0xff] %vm435, %v5098
      %5135 = vst.msk [vmem:[#allocation4 + $0xf0] sm:$0xff] %vm435, %v5099
      %5136 = vst.msk [vmem:[#allocation4 + $0xf8] sm:$0xff] %vm435, %v5100
      %5137 = vst.msk [vmem:[#allocation4 + $0x100] sm:$0xff] %vm435, %v5101
      %5138 = vst.msk [vmem:[#allocation4 + $0x108] sm:$0xff] %vm435, %v5102
      %5139 = vst.msk [vmem:[#allocation4 + $0x110] sm:$0xff] %vm435, %v5103
      %5140 = vst.msk [vmem:[#allocation4 + $0x118] sm:$0xff] %vm435, %v5104
      %v5141 = vld [vmem:[#allocation3 + $0x6] sm:$0xff]
      %v5142 = vld [vmem:[#allocation3 + $0xe] sm:$0xff]
      %v5143 = vld [vmem:[#allocation3 + $0x16] sm:$0xff]
      %v5144 = vld [vmem:[#allocation3 + $0x1e] sm:$0xff]
      %v5145 = vld [vmem:[#allocation3 + $0x26] sm:$0xff]
      %v5146 = vld [vmem:[#allocation3 + $0x2e] sm:$0xff]
      %v5147 = vld [vmem:[#allocation3 + $0x36] sm:$0xff]
      %v5148 = vld [vmem:[#allocation3 + $0x3e] sm:$0xff]
      %v5149 = vld [vmem:[#allocation3 + $0x46] sm:$0xff]
      %v5150 = vld [vmem:[#allocation3 + $0x4e] sm:$0xff]
      %v5151 = vld [vmem:[#allocation3 + $0x56] sm:$0xff]
      %v5152 = vld [vmem:[#allocation3 + $0x5e] sm:$0xff]
      %v5153 = vld [vmem:[#allocation3 + $0x66] sm:$0xff]
      %v5154 = vld [vmem:[#allocation3 + $0x6e] sm:$0xff]
      %v5155 = vld [vmem:[#allocation3 + $0x76] sm:$0xff]
      %v5156 = vld [vmem:[#allocation3 + $0x7e] sm:$0xff]
      %v5157 = vld [vmem:[#allocation3 + $0x86] sm:$0xff]
      %v5158 = vld [vmem:[#allocation3 + $0x8e] sm:$0xff]
      %v5159 = vld [vmem:[#allocation3 + $0x96] sm:$0xff]
      %v5160 = vld [vmem:[#allocation3 + $0x9e] sm:$0xff]
      %v5161 = vld [vmem:[#allocation3 + $0xa6] sm:$0xff]
      %v5162 = vld [vmem:[#allocation3 + $0xae] sm:$0xff]
      %v5163 = vld [vmem:[#allocation3 + $0xb6] sm:$0xff]
      %v5164 = vld [vmem:[#allocation3 + $0xbe] sm:$0xff]
      %v5165 = vld [vmem:[#allocation3 + $0xc6] sm:$0xff]
      %v5166 = vld [vmem:[#allocation3 + $0xce] sm:$0xff]
      %v5167 = vld [vmem:[#allocation3 + $0xd6] sm:$0xff]
      %v5168 = vld [vmem:[#allocation3 + $0xde] sm:$0xff]
      %v5169 = vld [vmem:[#allocation3 + $0xe6] sm:$0xff]
      %v5170 = vld [vmem:[#allocation3 + $0xee] sm:$0xff]
      %v5171 = vld [vmem:[#allocation3 + $0xf6] sm:$0xff]
      %v5172 = vld [vmem:[#allocation3 + $0xfe] sm:$0xff]
      %v5173 = vld [vmem:[#allocation3 + $0x106] sm:$0xff]
      %v5174 = vld [vmem:[#allocation3 + $0x10e] sm:$0xff]
      %v5175 = vld [vmem:[#allocation3 + $0x116] sm:$0xff]
      %v5176 = vld [vmem:[#allocation3 + $0x11e] sm:$0xff]
      %v5177 = vpack.c.bf16 %v5142, %v5141
      %v5178 = vpack.c.bf16 %v5144, %v5143
      %v5179 = vpack.c.bf16 %v5146, %v5145
      %v5180 = vpack.c.bf16 %v5148, %v5147
      %v5181 = vpack.c.bf16 %v5150, %v5149
      %v5182 = vpack.c.bf16 %v5152, %v5151
      %v5183 = vpack.c.bf16 %v5154, %v5153
      %v5184 = vpack.c.bf16 %v5156, %v5155
      %v5185 = vpack.c.bf16 %v5158, %v5157
      %v5186 = vpack.c.bf16 %v5160, %v5159
      %v5187 = vpack.c.bf16 %v5162, %v5161
      %v5188 = vpack.c.bf16 %v5164, %v5163
      %v5189 = vpack.c.bf16 %v5166, %v5165
      %v5190 = vpack.c.bf16 %v5168, %v5167
      %v5191 = vpack.c.bf16 %v5170, %v5169
      %v5192 = vpack.c.bf16 %v5172, %v5171
      %v5193 = vpack.c.bf16 %v5174, %v5173
      %v5194 = vpack.c.bf16 %v5176, %v5175
      %v5195 = vld [vmem:[#allocation4] sm:$0xff]
      %v5196 = vld [vmem:[#allocation4 + $0x8] sm:$0xff]
      %v5197 = vld [vmem:[#allocation4 + $0x10] sm:$0xff]
      %v5198 = vld [vmem:[#allocation4 + $0x18] sm:$0xff]
      %v5199 = vld [vmem:[#allocation4 + $0x20] sm:$0xff]
      %v5200 = vld [vmem:[#allocation4 + $0x28] sm:$0xff]
      %v5201 = vld [vmem:[#allocation4 + $0x30] sm:$0xff]
      %v5202 = vld [vmem:[#allocation4 + $0x38] sm:$0xff]
      %v5203 = vld [vmem:[#allocation4 + $0x40] sm:$0xff]
      %v5204 = vld [vmem:[#allocation4 + $0x48] sm:$0xff]
      %v5205 = vld [vmem:[#allocation4 + $0x50] sm:$0xff]
      %v5206 = vld [vmem:[#allocation4 + $0x58] sm:$0xff]
      %v5207 = vld [vmem:[#allocation4 + $0x60] sm:$0xff]
      %v5208 = vld [vmem:[#allocation4 + $0x68] sm:$0xff]
      %v5209 = vld [vmem:[#allocation4 + $0x70] sm:$0xff]
      %v5210 = vld [vmem:[#allocation4 + $0x78] sm:$0xff]
      %v5211 = vld [vmem:[#allocation4 + $0x80] sm:$0xff]
      %v5212 = vld [vmem:[#allocation4 + $0x88] sm:$0xff]
      %v5213 = vld [vmem:[#allocation4 + $0x90] sm:$0xff]
      %v5214 = vld [vmem:[#allocation4 + $0x98] sm:$0xff]
      %v5215 = vld [vmem:[#allocation4 + $0xa0] sm:$0xff]
      %v5216 = vld [vmem:[#allocation4 + $0xa8] sm:$0xff]
      %v5217 = vld [vmem:[#allocation4 + $0xb0] sm:$0xff]
      %v5218 = vld [vmem:[#allocation4 + $0xb8] sm:$0xff]
      %v5219 = vld [vmem:[#allocation4 + $0xc0] sm:$0xff]
      %v5220 = vld [vmem:[#allocation4 + $0xc8] sm:$0xff]
      %v5221 = vld [vmem:[#allocation4 + $0xd0] sm:$0xff]
      %v5222 = vld [vmem:[#allocation4 + $0xd8] sm:$0xff]
      %v5223 = vld [vmem:[#allocation4 + $0xe0] sm:$0xff]
      %v5224 = vld [vmem:[#allocation4 + $0xe8] sm:$0xff]
      %v5225 = vld [vmem:[#allocation4 + $0xf0] sm:$0xff]
      %v5226 = vld [vmem:[#allocation4 + $0xf8] sm:$0xff]
      %v5227 = vld [vmem:[#allocation4 + $0x100] sm:$0xff]
      %v5228 = vld [vmem:[#allocation4 + $0x108] sm:$0xff]
      %v5229 = vld [vmem:[#allocation4 + $0x110] sm:$0xff]
      %v5230 = vld [vmem:[#allocation4 + $0x118] sm:$0xff]
      %s5231 = scalar_lea.vmem %s2, 4
      %v5232 = vld [vmem:[%s5231] sm:$0xf]
      %v5234 = vsel %vm307, %v5177, 0
      %v5237 = vsel %vm307, %v5178, 0
      %v5240 = vsel %vm307, %v5179, 0
      %v5243 = vsel %vm307, %v5180, 0
      %v5246 = vsel %vm307, %v5181, 0
      %v5249 = vsel %vm307, %v5182, 0
      %v5252 = vsel %vm307, %v5183, 0
      %v5255 = vsel %vm307, %v5184, 0
      %v5258 = vsel %vm307, %v5185, 0
      %v5261 = vsel %vm307, %v5186, 0
      %v5264 = vsel %vm307, %v5187, 0
      %v5267 = vsel %vm307, %v5188, 0
      %v5270 = vsel %vm307, %v5189, 0
      %v5273 = vsel %vm307, %v5190, 0
      %v5276 = vsel %vm307, %v5191, 0
      %v5279 = vsel %vm307, %v5192, 0
      %v5282 = vsel %vm307, %v5193, 0
      %v5285 = vsel %vm307, %v5194, 0
      %v5288 = vsel %vm4888, %v5232, 0
      %5290 = vmatprep.subr.bf16.mxu0 0
      %5291 = vmatpush1.bf16.msra.mxu0 %v5288
      %5292 = vmatprep.subr.bf16.mxu0 0
      %5293 = vmatpush1.bf16.msra.mxu0 0
      %5294 = vmatprep.subr.bf16.mxu0 0
      %5295 = vmatpush1.bf16.msra.mxu0 0
      %5296 = vmatprep.subr.bf16.mxu0 0
      %5297 = vmatpush1.bf16.msra.mxu0 0
      %5298 = vmatprep.subr.bf16.mxu0 0
      %5299 = vmatpush1.bf16.msra.mxu0 0
      %5300 = vmatprep.subr.bf16.mxu0 0
      %5301 = vmatpush1.bf16.msra.mxu0 0
      %5302 = vmatprep.subr.bf16.mxu0 0
      %5303 = vmatpush1.bf16.msra.mxu0 0
      %5304 = vmatprep.subr.bf16.mxu0 0
      %5305 = vmatpush1.bf16.msra.mxu0 0
      %5306 = vmatprep.subr.bf16.mxu0 0
      %5307 = vmatpush1.bf16.msra.mxu0 0
      %5308 = vmatprep.subr.bf16.mxu0 0
      %5309 = vmatpush1.bf16.msra.mxu0 0
      %5310 = vmatprep.subr.bf16.mxu0 0
      %5311 = vmatpush1.bf16.msra.mxu0 0
      %5312 = vmatprep.subr.bf16.mxu0 0
      %5313 = vmatpush1.bf16.msra.mxu0 0
      %5314 = vmatprep.subr.bf16.mxu0 0
      %5315 = vmatpush1.bf16.msra.mxu0 0
      %5316 = vmatprep.subr.bf16.mxu0 0
      %5317 = vmatpush1.bf16.msra.mxu0 0
      %5318 = vmatprep.subr.bf16.mxu0 0
      %5319 = vmatpush1.bf16.msra.mxu0 0
      %5320 = vmatprep.subr.bf16.mxu0 0
      %5321 = vmatpush1.bf16.msra.mxu0 0
      %5322 = vmatprep.mubr.bf16.mxu0 0
      %5323 = vmatmul.mubr.bf16.gmra.mrb[0].mxu0 %v5234
      %v5324 = vpop.f32.mrb[0].mxu0
      %v5325 = vadd.f32 0.0, %v5324
      %v5326 = vpop.f32.mrb[0].mxu0
      %v5327 = vpop.f32.mrb[0].mxu0
      %v5328 = vadd.f32 0.0, %v5327
      %v5329 = vpop.f32.mrb[0].mxu0
      %5330 = vmatprep.mubr.bf16.mxu0 0
      %5331 = vmatmul.mubr.bf16.gmra.mrb[0].mxu0 %v5237
      %v5332 = vpop.f32.mrb[0].mxu0
      %v5333 = vadd.f32 0.0, %v5332
      %v5334 = vpop.f32.mrb[0].mxu0
      %v5335 = vpop.f32.mrb[0].mxu0
      %v5336 = vadd.f32 0.0, %v5335
      %v5337 = vpop.f32.mrb[0].mxu0
      %5338 = vmatprep.mubr.bf16.mxu0 0
      %5339 = vmatmul.mubr.bf16.gmra.mrb[0].mxu0 %v5240
      %v5340 = vpop.f32.mrb[0].mxu0
      %v5341 = vadd.f32 0.0, %v5340
      %v5342 = vpop.f32.mrb[0].mxu0
      %v5343 = vpop.f32.mrb[0].mxu0
      %v5344 = vadd.f32 0.0, %v5343
      %v5345 = vpop.f32.mrb[0].mxu0
      %5346 = vmatprep.mubr.bf16.mxu0 0
      %5347 = vmatmul.mubr.bf16.gmra.mrb[0].mxu0 %v5243
      %v5348 = vpop.f32.mrb[0].mxu0
      %v5349 = vadd.f32 0.0, %v5348
      %v5350 = vpop.f32.mrb[0].mxu0
      %v5351 = vpop.f32.mrb[0].mxu0
      %v5352 = vadd.f32 0.0, %v5351
      %v5353 = vpop.f32.mrb[0].mxu0
      %5354 = vmatprep.mubr.bf16.mxu0 0
      %5355 = vmatmul.mubr.bf16.gmra.mrb[0].mxu0 %v5246
      %v5356 = vpop.f32.mrb[0].mxu0
      %v5357 = vadd.f32 0.0, %v5356
      %v5358 = vpop.f32.mrb[0].mxu0
      %v5359 = vpop.f32.mrb[0].mxu0
      %v5360 = vadd.f32 0.0, %v5359
      %v5361 = vpop.f32.mrb[0].mxu0
      %5362 = vmatprep.mubr.bf16.mxu0 0
      %5363 = vmatmul.mubr.bf16.gmra.mrb[0].mxu0 %v5249
      %v5364 = vpop.f32.mrb[0].mxu0
      %v5365 = vadd.f32 0.0, %v5364
      %v5366 = vpop.f32.mrb[0].mxu0
      %v5367 = vpop.f32.mrb[0].mxu0
      %v5368 = vadd.f32 0.0, %v5367
      %v5369 = vpop.f32.mrb[0].mxu0
      %5370 = vmatprep.mubr.bf16.mxu0 0
      %5371 = vmatmul.mubr.bf16.gmra.mrb[0].mxu0 %v5252
      %v5372 = vpop.f32.mrb[0].mxu0
      %v5373 = vadd.f32 0.0, %v5372
      %v5374 = vpop.f32.mrb[0].mxu0
      %v5375 = vpop.f32.mrb[0].mxu0
      %v5376 = vadd.f32 0.0, %v5375
      %v5377 = vpop.f32.mrb[0].mxu0
      %5378 = vmatprep.mubr.bf16.mxu0 0
      %5379 = vmatmul.mubr.bf16.gmra.mrb[0].mxu0 %v5255
      %v5380 = vpop.f32.mrb[0].mxu0
      %v5381 = vadd.f32 0.0, %v5380
      %v5382 = vpop.f32.mrb[0].mxu0
      %v5383 = vpop.f32.mrb[0].mxu0
      %v5384 = vadd.f32 0.0, %v5383
      %v5385 = vpop.f32.mrb[0].mxu0
      %5386 = vmatprep.mubr.bf16.mxu0 0
      %5387 = vmatmul.mubr.bf16.gmra.mrb[0].mxu0 %v5258
      %v5388 = vpop.f32.mrb[0].mxu0
      %v5389 = vadd.f32 0.0, %v5388
      %v5390 = vpop.f32.mrb[0].mxu0
      %v5391 = vpop.f32.mrb[0].mxu0
      %v5392 = vadd.f32 0.0, %v5391
      %v5393 = vpop.f32.mrb[0].mxu0
      %5394 = vmatprep.mubr.bf16.mxu0 0
      %5395 = vmatmul.mubr.bf16.gmra.mrb[0].mxu0 %v5261
      %v5396 = vpop.f32.mrb[0].mxu0
      %v5397 = vadd.f32 0.0, %v5396
      %v5398 = vpop.f32.mrb[0].mxu0
      %v5399 = vpop.f32.mrb[0].mxu0
      %v5400 = vadd.f32 0.0, %v5399
      %v5401 = vpop.f32.mrb[0].mxu0
      %5402 = vmatprep.mubr.bf16.mxu0 0
      %5403 = vmatmul.mubr.bf16.gmra.mrb[0].mxu0 %v5264
      %v5404 = vpop.f32.mrb[0].mxu0
      %v5405 = vadd.f32 0.0, %v5404
      %v5406 = vpop.f32.mrb[0].mxu0
      %v5407 = vpop.f32.mrb[0].mxu0
      %v5408 = vadd.f32 0.0, %v5407
      %v5409 = vpop.f32.mrb[0].mxu0
      %5410 = vmatprep.mubr.bf16.mxu0 0
      %5411 = vmatmul.mubr.bf16.gmra.mrb[0].mxu0 %v5267
      %v5412 = vpop.f32.mrb[0].mxu0
      %v5413 = vadd.f32 0.0, %v5412
      %v5414 = vpop.f32.mrb[0].mxu0
      %v5415 = vpop.f32.mrb[0].mxu0
      %v5416 = vadd.f32 0.0, %v5415
      %v5417 = vpop.f32.mrb[0].mxu0
      %5418 = vmatprep.mubr.bf16.mxu0 0
      %5419 = vmatmul.mubr.bf16.gmra.mrb[0].mxu0 %v5270
      %v5420 = vpop.f32.mrb[0].mxu0
      %v5421 = vadd.f32 0.0, %v5420
      %v5422 = vpop.f32.mrb[0].mxu0
      %v5423 = vpop.f32.mrb[0].mxu0
      %v5424 = vadd.f32 0.0, %v5423
      %v5425 = vpop.f32.mrb[0].mxu0
      %5426 = vmatprep.mubr.bf16.mxu0 0
      %5427 = vmatmul.mubr.bf16.gmra.mrb[0].mxu0 %v5273
      %v5428 = vpop.f32.mrb[0].mxu0
      %v5429 = vadd.f32 0.0, %v5428
      %v5430 = vpop.f32.mrb[0].mxu0
      %v5431 = vpop.f32.mrb[0].mxu0
      %v5432 = vadd.f32 0.0, %v5431
      %v5433 = vpop.f32.mrb[0].mxu0
      %5434 = vmatprep.mubr.bf16.mxu0 0
      %5435 = vmatmul.mubr.bf16.gmra.mrb[0].mxu0 %v5276
      %v5436 = vpop.f32.mrb[0].mxu0
      %v5437 = vadd.f32 0.0, %v5436
      %v5438 = vpop.f32.mrb[0].mxu0
      %v5439 = vpop.f32.mrb[0].mxu0
      %v5440 = vadd.f32 0.0, %v5439
      %v5441 = vpop.f32.mrb[0].mxu0
      %5442 = vmatprep.mubr.bf16.mxu0 0
      %5443 = vmatmul.mubr.bf16.gmra.mrb[0].mxu0 %v5279
      %v5444 = vpop.f32.mrb[0].mxu0
      %v5445 = vadd.f32 0.0, %v5444
      %v5446 = vpop.f32.mrb[0].mxu0
      %v5447 = vpop.f32.mrb[0].mxu0
      %v5448 = vadd.f32 0.0, %v5447
      %v5449 = vpop.f32.mrb[0].mxu0
      %5450 = vmatprep.mubr.bf16.mxu0 0
      %5451 = vmatmul.mubr.bf16.gmra.mrb[0].mxu0 %v5282
      %v5452 = vpop.f32.mrb[0].mxu0
      %v5453 = vadd.f32 0.0, %v5452
      %v5454 = vpop.f32.mrb[0].mxu0
      %v5455 = vpop.f32.mrb[0].mxu0
      %v5456 = vadd.f32 0.0, %v5455
      %v5457 = vpop.f32.mrb[0].mxu0
      %5458 = vmatprep.mubr.bf16.mxu0 0
      %5459 = vmatmul.mubr.bf16.gmra.mrb[0].mxu0 %v5285
      %v5460 = vpop.f32.mrb[0].mxu0
      %v5461 = vadd.f32 0.0, %v5460
      %v5462 = vpop.f32.mrb[0].mxu0
      %v5463 = vpop.f32.mrb[0].mxu0
      %v5464 = vadd.f32 0.0, %v5463
      %v5465 = vpop.f32.mrb[0].mxu0
      %5466 = vdwg.mxu0
      %v5467 = vadd.f32 %v5195, %v5325
      %v5468 = vadd.f32 %v5196, %v5328
      %v5469 = vadd.f32 %v5197, %v5333
      %v5470 = vadd.f32 %v5198, %v5336
      %v5471 = vadd.f32 %v5199, %v5341
      %v5472 = vadd.f32 %v5200, %v5344
      %v5473 = vadd.f32 %v5201, %v5349
      %v5474 = vadd.f32 %v5202, %v5352
      %v5475 = vadd.f32 %v5203, %v5357
      %v5476 = vadd.f32 %v5204, %v5360
      %v5477 = vadd.f32 %v5205, %v5365
      %v5478 = vadd.f32 %v5206, %v5368
      %v5479 = vadd.f32 %v5207, %v5373
      %v5480 = vadd.f32 %v5208, %v5376
      %v5481 = vadd.f32 %v5209, %v5381
      %v5482 = vadd.f32 %v5210, %v5384
      %v5483 = vadd.f32 %v5211, %v5389
      %v5484 = vadd.f32 %v5212, %v5392
      %v5485 = vadd.f32 %v5213, %v5397
      %v5486 = vadd.f32 %v5214, %v5400
      %v5487 = vadd.f32 %v5215, %v5405
      %v5488 = vadd.f32 %v5216, %v5408
      %v5489 = vadd.f32 %v5217, %v5413
      %v5490 = vadd.f32 %v5218, %v5416
      %v5491 = vadd.f32 %v5219, %v5421
      %v5492 = vadd.f32 %v5220, %v5424
      %v5493 = vadd.f32 %v5221, %v5429
      %v5494 = vadd.f32 %v5222, %v5432
      %v5495 = vadd.f32 %v5223, %v5437
      %v5496 = vadd.f32 %v5224, %v5440
      %v5497 = vadd.f32 %v5225, %v5445
      %v5498 = vadd.f32 %v5226, %v5448
      %v5499 = vadd.f32 %v5227, %v5453
      %v5500 = vadd.f32 %v5228, %v5456
      %v5501 = vadd.f32 %v5229, %v5461
      %v5502 = vadd.f32 %v5230, %v5464
      %5503 = vst.msk [vmem:[#allocation4] sm:$0xff] %vm435, %v5467
      %5504 = vst.msk [vmem:[#allocation4 + $0x8] sm:$0xff] %vm435, %v5468
      %5505 = vst.msk [vmem:[#allocation4 + $0x10] sm:$0xff] %vm435, %v5469
      %5506 = vst.msk [vmem:[#allocation4 + $0x18] sm:$0xff] %vm435, %v5470
      %5507 = vst.msk [vmem:[#allocation4 + $0x20] sm:$0xff] %vm435, %v5471
      %5508 = vst.msk [vmem:[#allocation4 + $0x28] sm:$0xff] %vm435, %v5472
      %5509 = vst.msk [vmem:[#allocation4 + $0x30] sm:$0xff] %vm435, %v5473
      %5510 = vst.msk [vmem:[#allocation4 + $0x38] sm:$0xff] %vm435, %v5474
      %5511 = vst.msk [vmem:[#allocation4 + $0x40] sm:$0xff] %vm435, %v5475
      %5512 = vst.msk [vmem:[#allocation4 + $0x48] sm:$0xff] %vm435, %v5476
      %5513 = vst.msk [vmem:[#allocation4 + $0x50] sm:$0xff] %vm435, %v5477
      %5514 = vst.msk [vmem:[#allocation4 + $0x58] sm:$0xff] %vm435, %v5478
      %5515 = vst.msk [vmem:[#allocation4 + $0x60] sm:$0xff] %vm435, %v5479
      %5516 = vst.msk [vmem:[#allocation4 + $0x68] sm:$0xff] %vm435, %v5480
      %5517 = vst.msk [vmem:[#allocation4 + $0x70] sm:$0xff] %vm435, %v5481
      %5518 = vst.msk [vmem:[#allocation4 + $0x78] sm:$0xff] %vm435, %v5482
      %5519 = vst.msk [vmem:[#allocation4 + $0x80] sm:$0xff] %vm435, %v5483
      %5520 = vst.msk [vmem:[#allocation4 + $0x88] sm:$0xff] %vm435, %v5484
      %5521 = vst.msk [vmem:[#allocation4 + $0x90] sm:$0xff] %vm435, %v5485
      %5522 = vst.msk [vmem:[#allocation4 + $0x98] sm:$0xff] %vm435, %v5486
      %5523 = vst.msk [vmem:[#allocation4 + $0xa0] sm:$0xff] %vm435, %v5487
      %5524 = vst.msk [vmem:[#allocation4 + $0xa8] sm:$0xff] %vm435, %v5488
      %5525 = vst.msk [vmem:[#allocation4 + $0xb0] sm:$0xff] %vm435, %v5489
      %5526 = vst.msk [vmem:[#allocation4 + $0xb8] sm:$0xff] %vm435, %v5490
      %5527 = vst.msk [vmem:[#allocation4 + $0xc0] sm:$0xff] %vm435, %v5491
      %5528 = vst.msk [vmem:[#allocation4 + $0xc8] sm:$0xff] %vm435, %v5492
      %5529 = vst.msk [vmem:[#allocation4 + $0xd0] sm:$0xff] %vm435, %v5493
      %5530 = vst.msk [vmem:[#allocation4 + $0xd8] sm:$0xff] %vm435, %v5494
      %5531 = vst.msk [vmem:[#allocation4 + $0xe0] sm:$0xff] %vm435, %v5495
      %5532 = vst.msk [vmem:[#allocation4 + $0xe8] sm:$0xff] %vm435, %v5496
      %5533 = vst.msk [vmem:[#allocation4 + $0xf0] sm:$0xff] %vm435, %v5497
      %5534 = vst.msk [vmem:[#allocation4 + $0xf8] sm:$0xff] %vm435, %v5498
      %5535 = vst.msk [vmem:[#allocation4 + $0x100] sm:$0xff] %vm435, %v5499
      %5536 = vst.msk [vmem:[#allocation4 + $0x108] sm:$0xff] %vm435, %v5500
      %5537 = vst.msk [vmem:[#allocation4 + $0x110] sm:$0xff] %vm435, %v5501
      %5538 = vst.msk [vmem:[#allocation4 + $0x118] sm:$0xff] %vm435, %v5502
      %v5539 = vld [vmem:[#allocation3 + $0x7] sm:$0xff]
      %v5540 = vld [vmem:[#allocation3 + $0xf] sm:$0xff]
      %v5541 = vld [vmem:[#allocation3 + $0x17] sm:$0xff]
      %v5542 = vld [vmem:[#allocation3 + $0x1f] sm:$0xff]
      %v5543 = vld [vmem:[#allocation3 + $0x27] sm:$0xff]
      %v5544 = vld [vmem:[#allocation3 + $0x2f] sm:$0xff]
      %v5545 = vld [vmem:[#allocation3 + $0x37] sm:$0xff]
      %v5546 = vld [vmem:[#allocation3 + $0x3f] sm:$0xff]
      %v5547 = vld [vmem:[#allocation3 + $0x47] sm:$0xff]
      %v5548 = vld [vmem:[#allocation3 + $0x4f] sm:$0xff]
      %v5549 = vld [vmem:[#allocation3 + $0x57] sm:$0xff]
      %v5550 = vld [vmem:[#allocation3 + $0x5f] sm:$0xff]
      %v5551 = vld [vmem:[#allocation3 + $0x67] sm:$0xff]
      %v5552 = vld [vmem:[#allocation3 + $0x6f] sm:$0xff]
      %v5553 = vld [vmem:[#allocation3 + $0x77] sm:$0xff]
      %v5554 = vld [vmem:[#allocation3 + $0x7f] sm:$0xff]
      %v5555 = vld [vmem:[#allocation3 + $0x87] sm:$0xff]
      %v5556 = vld [vmem:[#allocation3 + $0x8f] sm:$0xff]
      %v5557 = vld [vmem:[#allocation3 + $0x97] sm:$0xff]
      %v5558 = vld [vmem:[#allocation3 + $0x9f] sm:$0xff]
      %v5559 = vld [vmem:[#allocation3 + $0xa7] sm:$0xff]
      %v5560 = vld [vmem:[#allocation3 + $0xaf] sm:$0xff]
      %v5561 = vld [vmem:[#allocation3 + $0xb7] sm:$0xff]
      %v5562 = vld [vmem:[#allocation3 + $0xbf] sm:$0xff]
      %v5563 = vld [vmem:[#allocation3 + $0xc7] sm:$0xff]
      %v5564 = vld [vmem:[#allocation3 + $0xcf] sm:$0xff]
      %v5565 = vld [vmem:[#allocation3 + $0xd7] sm:$0xff]
      %v5566 = vld [vmem:[#allocation3 + $0xdf] sm:$0xff]
      %v5567 = vld [vmem:[#allocation3 + $0xe7] sm:$0xff]
      %v5568 = vld [vmem:[#allocation3 + $0xef] sm:$0xff]
      %v5569 = vld [vmem:[#allocation3 + $0xf7] sm:$0xff]
      %v5570 = vld [vmem:[#allocation3 + $0xff] sm:$0xff]
      %v5571 = vld [vmem:[#allocation3 + $0x107] sm:$0xff]
      %v5572 = vld [vmem:[#allocation3 + $0x10f] sm:$0xff]
      %v5573 = vld [vmem:[#allocation3 + $0x117] sm:$0xff]
      %v5574 = vld [vmem:[#allocation3 + $0x11f] sm:$0xff]
      %v5575 = vpack.c.bf16 %v5540, %v5539
      %v5576 = vpack.c.bf16 %v5542, %v5541
      %v5577 = vpack.c.bf16 %v5544, %v5543
      %v5578 = vpack.c.bf16 %v5546, %v5545
      %v5579 = vpack.c.bf16 %v5548, %v5547
      %v5580 = vpack.c.bf16 %v5550, %v5549
      %v5581 = vpack.c.bf16 %v5552, %v5551
      %v5582 = vpack.c.bf16 %v5554, %v5553
      %v5583 = vpack.c.bf16 %v5556, %v5555
      %v5584 = vpack.c.bf16 %v5558, %v5557
      %v5585 = vpack.c.bf16 %v5560, %v5559
      %v5586 = vpack.c.bf16 %v5562, %v5561
      %v5587 = vpack.c.bf16 %v5564, %v5563
      %v5588 = vpack.c.bf16 %v5566, %v5565
      %v5589 = vpack.c.bf16 %v5568, %v5567
      %v5590 = vpack.c.bf16 %v5570, %v5569
      %v5591 = vpack.c.bf16 %v5572, %v5571
      %v5592 = vpack.c.bf16 %v5574, %v5573
      %v5593 = vld [vmem:[#allocation4] sm:$0xff]
      %v5594 = vld [vmem:[#allocation4 + $0x8] sm:$0xff]
      %v5595 = vld [vmem:[#allocation4 + $0x10] sm:$0xff]
      %v5596 = vld [vmem:[#allocation4 + $0x18] sm:$0xff]
      %v5597 = vld [vmem:[#allocation4 + $0x20] sm:$0xff]
      %v5598 = vld [vmem:[#allocation4 + $0x28] sm:$0xff]
      %v5599 = vld [vmem:[#allocation4 + $0x30] sm:$0xff]
      %v5600 = vld [vmem:[#allocation4 + $0x38] sm:$0xff]
      %v5601 = vld [vmem:[#allocation4 + $0x40] sm:$0xff]
      %v5602 = vld [vmem:[#allocation4 + $0x48] sm:$0xff]
      %v5603 = vld [vmem:[#allocation4 + $0x50] sm:$0xff]
      %v5604 = vld [vmem:[#allocation4 + $0x58] sm:$0xff]
      %v5605 = vld [vmem:[#allocation4 + $0x60] sm:$0xff]
      %v5606 = vld [vmem:[#allocation4 + $0x68] sm:$0xff]
      %v5607 = vld [vmem:[#allocation4 + $0x70] sm:$0xff]
      %v5608 = vld [vmem:[#allocation4 + $0x78] sm:$0xff]
      %v5609 = vld [vmem:[#allocation4 + $0x80] sm:$0xff]
      %v5610 = vld [vmem:[#allocation4 + $0x88] sm:$0xff]
      %v5611 = vld [vmem:[#allocation4 + $0x90] sm:$0xff]
      %v5612 = vld [vmem:[#allocation4 + $0x98] sm:$0xff]
      %v5613 = vld [vmem:[#allocation4 + $0xa0] sm:$0xff]
      %v5614 = vld [vmem:[#allocation4 + $0xa8] sm:$0xff]
      %v5615 = vld [vmem:[#allocation4 + $0xb0] sm:$0xff]
      %v5616 = vld [vmem:[#allocation4 + $0xb8] sm:$0xff]
      %v5617 = vld [vmem:[#allocation4 + $0xc0] sm:$0xff]
      %v5618 = vld [vmem:[#allocation4 + $0xc8] sm:$0xff]
      %v5619 = vld [vmem:[#allocation4 + $0xd0] sm:$0xff]
      %v5620 = vld [vmem:[#allocation4 + $0xd8] sm:$0xff]
      %v5621 = vld [vmem:[#allocation4 + $0xe0] sm:$0xff]
      %v5622 = vld [vmem:[#allocation4 + $0xe8] sm:$0xff]
      %v5623 = vld [vmem:[#allocation4 + $0xf0] sm:$0xff]
      %v5624 = vld [vmem:[#allocation4 + $0xf8] sm:$0xff]
      %v5625 = vld [vmem:[#allocation4 + $0x100] sm:$0xff]
      %v5626 = vld [vmem:[#allocation4 + $0x108] sm:$0xff]
      %v5627 = vld [vmem:[#allocation4 + $0x110] sm:$0xff]
      %v5628 = vld [vmem:[#allocation4 + $0x118] sm:$0xff]
      %s5629 = scalar_lea.vmem %s2, 8
      %v5630 = vld [vmem:[%s5629] sm:$0xf]
      %v5632 = vsel %vm307, %v5575, 0
      %v5635 = vsel %vm307, %v5576, 0
      %v5638 = vsel %vm307, %v5577, 0
      %v5641 = vsel %vm307, %v5578, 0
      %v5644 = vsel %vm307, %v5579, 0
      %v5647 = vsel %vm307, %v5580, 0
      %v5650 = vsel %vm307, %v5581, 0
      %v5653 = vsel %vm307, %v5582, 0
      %v5656 = vsel %vm307, %v5583, 0
      %v5659 = vsel %vm307, %v5584, 0
      %v5662 = vsel %vm307, %v5585, 0
      %v5665 = vsel %vm307, %v5586, 0
      %v5668 = vsel %vm307, %v5587, 0
      %v5671 = vsel %vm307, %v5588, 0
      %v5674 = vsel %vm307, %v5589, 0
      %v5677 = vsel %vm307, %v5590, 0
      %v5680 = vsel %vm307, %v5591, 0
      %v5683 = vsel %vm307, %v5592, 0
      %v5686 = vsel %vm4888, %v5630, 0
      %5688 = vmatprep.subr.bf16.mxu0 0
      %5689 = vmatpush1.bf16.msra.mxu0 %v5686
      %5690 = vmatprep.subr.bf16.mxu0 0
      %5691 = vmatpush1.bf16.msra.mxu0 0
      %5692 = vmatprep.subr.bf16.mxu0 0
      %5693 = vmatpush1.bf16.msra.mxu0 0
      %5694 = vmatprep.subr.bf16.mxu0 0
      %5695 = vmatpush1.bf16.msra.mxu0 0
      %5696 = vmatprep.subr.bf16.mxu0 0
      %5697 = vmatpush1.bf16.msra.mxu0 0
      %5698 = vmatprep.subr.bf16.mxu0 0
      %5699 = vmatpush1.bf16.msra.mxu0 0
      %5700 = vmatprep.subr.bf16.mxu0 0
      %5701 = vmatpush1.bf16.msra.mxu0 0
      %5702 = vmatprep.subr.bf16.mxu0 0
      %5703 = vmatpush1.bf16.msra.mxu0 0
      %5704 = vmatprep.subr.bf16.mxu0 0
      %5705 = vmatpush1.bf16.msra.mxu0 0
      %5706 = vmatprep.subr.bf16.mxu0 0
      %5707 = vmatpush1.bf16.msra.mxu0 0
      %5708 = vmatprep.subr.bf16.mxu0 0
      %5709 = vmatpush1.bf16.msra.mxu0 0
      %5710 = vmatprep.subr.bf16.mxu0 0
      %5711 = vmatpush1.bf16.msra.mxu0 0
      %5712 = vmatprep.subr.bf16.mxu0 0
      %5713 = vmatpush1.bf16.msra.mxu0 0
      %5714 = vmatprep.subr.bf16.mxu0 0
      %5715 = vmatpush1.bf16.msra.mxu0 0
      %5716 = vmatprep.subr.bf16.mxu0 0
      %5717 = vmatpush1.bf16.msra.mxu0 0
      %5718 = vmatprep.subr.bf16.mxu0 0
      %5719 = vmatpush1.bf16.msra.mxu0 0
      %5720 = vmatprep.mubr.bf16.mxu0 0
      %5721 = vmatmul.mubr.bf16.gmra.mrb[0].mxu0 %v5632
      %v5722 = vpop.f32.mrb[0].mxu0
      %v5723 = vadd.f32 0.0, %v5722
      %v5724 = vpop.f32.mrb[0].mxu0
      %v5725 = vpop.f32.mrb[0].mxu0
      %v5726 = vadd.f32 0.0, %v5725
      %v5727 = vpop.f32.mrb[0].mxu0
      %5728 = vmatprep.mubr.bf16.mxu0 0
      %5729 = vmatmul.mubr.bf16.gmra.mrb[0].mxu0 %v5635
      %v5730 = vpop.f32.mrb[0].mxu0
      %v5731 = vadd.f32 0.0, %v5730
      %v5732 = vpop.f32.mrb[0].mxu0
      %v5733 = vpop.f32.mrb[0].mxu0
      %v5734 = vadd.f32 0.0, %v5733
      %v5735 = vpop.f32.mrb[0].mxu0
      %5736 = vmatprep.mubr.bf16.mxu0 0
      %5737 = vmatmul.mubr.bf16.gmra.mrb[0].mxu0 %v5638
      %v5738 = vpop.f32.mrb[0].mxu0
      %v5739 = vadd.f32 0.0, %v5738
      %v5740 = vpop.f32.mrb[0].mxu0
      %v5741 = vpop.f32.mrb[0].mxu0
      %v5742 = vadd.f32 0.0, %v5741
      %v5743 = vpop.f32.mrb[0].mxu0
      %5744 = vmatprep.mubr.bf16.mxu0 0
      %5745 = vmatmul.mubr.bf16.gmra.mrb[0].mxu0 %v5641
      %v5746 = vpop.f32.mrb[0].mxu0
      %v5747 = vadd.f32 0.0, %v5746
      %v5748 = vpop.f32.mrb[0].mxu0
      %v5749 = vpop.f32.mrb[0].mxu0
      %v5750 = vadd.f32 0.0, %v5749
      %v5751 = vpop.f32.mrb[0].mxu0
      %5752 = vmatprep.mubr.bf16.mxu0 0
      %5753 = vmatmul.mubr.bf16.gmra.mrb[0].mxu0 %v5644
      %v5754 = vpop.f32.mrb[0].mxu0
      %v5755 = vadd.f32 0.0, %v5754
      %v5756 = vpop.f32.mrb[0].mxu0
      %v5757 = vpop.f32.mrb[0].mxu0
      %v5758 = vadd.f32 0.0, %v5757
      %v5759 = vpop.f32.mrb[0].mxu0
      %5760 = vmatprep.mubr.bf16.mxu0 0
      %5761 = vmatmul.mubr.bf16.gmra.mrb[0].mxu0 %v5647
      %v5762 = vpop.f32.mrb[0].mxu0
      %v5763 = vadd.f32 0.0, %v5762
      %v5764 = vpop.f32.mrb[0].mxu0
      %v5765 = vpop.f32.mrb[0].mxu0
      %v5766 = vadd.f32 0.0, %v5765
      %v5767 = vpop.f32.mrb[0].mxu0
      %5768 = vmatprep.mubr.bf16.mxu0 0
      %5769 = vmatmul.mubr.bf16.gmra.mrb[0].mxu0 %v5650
      %v5770 = vpop.f32.mrb[0].mxu0
      %v5771 = vadd.f32 0.0, %v5770
      %v5772 = vpop.f32.mrb[0].mxu0
      %v5773 = vpop.f32.mrb[0].mxu0
      %v5774 = vadd.f32 0.0, %v5773
      %v5775 = vpop.f32.mrb[0].mxu0
      %5776 = vmatprep.mubr.bf16.mxu0 0
      %5777 = vmatmul.mubr.bf16.gmra.mrb[0].mxu0 %v5653
      %v5778 = vpop.f32.mrb[0].mxu0
      %v5779 = vadd.f32 0.0, %v5778
      %v5780 = vpop.f32.mrb[0].mxu0
      %v5781 = vpop.f32.mrb[0].mxu0
      %v5782 = vadd.f32 0.0, %v5781
      %v5783 = vpop.f32.mrb[0].mxu0
      %5784 = vmatprep.mubr.bf16.mxu0 0
      %5785 = vmatmul.mubr.bf16.gmra.mrb[0].mxu0 %v5656
      %v5786 = vpop.f32.mrb[0].mxu0
      %v5787 = vadd.f32 0.0, %v5786
      %v5788 = vpop.f32.mrb[0].mxu0
      %v5789 = vpop.f32.mrb[0].mxu0
      %v5790 = vadd.f32 0.0, %v5789
      %v5791 = vpop.f32.mrb[0].mxu0
      %5792 = vmatprep.mubr.bf16.mxu0 0
      %5793 = vmatmul.mubr.bf16.gmra.mrb[0].mxu0 %v5659
      %v5794 = vpop.f32.mrb[0].mxu0
      %v5795 = vadd.f32 0.0, %v5794
      %v5796 = vpop.f32.mrb[0].mxu0
      %v5797 = vpop.f32.mrb[0].mxu0
      %v5798 = vadd.f32 0.0, %v5797
      %v5799 = vpop.f32.mrb[0].mxu0
      %5800 = vmatprep.mubr.bf16.mxu0 0
      %5801 = vmatmul.mubr.bf16.gmra.mrb[0].mxu0 %v5662
      %v5802 = vpop.f32.mrb[0].mxu0
      %v5803 = vadd.f32 0.0, %v5802
      %v5804 = vpop.f32.mrb[0].mxu0
      %v5805 = vpop.f32.mrb[0].mxu0
      %v5806 = vadd.f32 0.0, %v5805
      %v5807 = vpop.f32.mrb[0].mxu0
      %5808 = vmatprep.mubr.bf16.mxu0 0
      %5809 = vmatmul.mubr.bf16.gmra.mrb[0].mxu0 %v5665
      %v5810 = vpop.f32.mrb[0].mxu0
      %v5811 = vadd.f32 0.0, %v5810
      %v5812 = vpop.f32.mrb[0].mxu0
      %v5813 = vpop.f32.mrb[0].mxu0
      %v5814 = vadd.f32 0.0, %v5813
      %v5815 = vpop.f32.mrb[0].mxu0
      %5816 = vmatprep.mubr.bf16.mxu0 0
      %5817 = vmatmul.mubr.bf16.gmra.mrb[0].mxu0 %v5668
      %v5818 = vpop.f32.mrb[0].mxu0
      %v5819 = vadd.f32 0.0, %v5818
      %v5820 = vpop.f32.mrb[0].mxu0
      %v5821 = vpop.f32.mrb[0].mxu0
      %v5822 = vadd.f32 0.0, %v5821
      %v5823 = vpop.f32.mrb[0].mxu0
      %5824 = vmatprep.mubr.bf16.mxu0 0
      %5825 = vmatmul.mubr.bf16.gmra.mrb[0].mxu0 %v5671
      %v5826 = vpop.f32.mrb[0].mxu0
      %v5827 = vadd.f32 0.0, %v5826
      %v5828 = vpop.f32.mrb[0].mxu0
      %v5829 = vpop.f32.mrb[0].mxu0
      %v5830 = vadd.f32 0.0, %v5829
      %v5831 = vpop.f32.mrb[0].mxu0
      %5832 = vmatprep.mubr.bf16.mxu0 0
      %5833 = vmatmul.mubr.bf16.gmra.mrb[0].mxu0 %v5674
      %v5834 = vpop.f32.mrb[0].mxu0
      %v5835 = vadd.f32 0.0, %v5834
      %v5836 = vpop.f32.mrb[0].mxu0
      %v5837 = vpop.f32.mrb[0].mxu0
      %v5838 = vadd.f32 0.0, %v5837
      %v5839 = vpop.f32.mrb[0].mxu0
      %5840 = vmatprep.mubr.bf16.mxu0 0
      %5841 = vmatmul.mubr.bf16.gmra.mrb[0].mxu0 %v5677
      %v5842 = vpop.f32.mrb[0].mxu0
      %v5843 = vadd.f32 0.0, %v5842
      %v5844 = vpop.f32.mrb[0].mxu0
      %v5845 = vpop.f32.mrb[0].mxu0
      %v5846 = vadd.f32 0.0, %v5845
      %v5847 = vpop.f32.mrb[0].mxu0
      %5848 = vmatprep.mubr.bf16.mxu0 0
      %5849 = vmatmul.mubr.bf16.gmra.mrb[0].mxu0 %v5680
      %v5850 = vpop.f32.mrb[0].mxu0
      %v5851 = vadd.f32 0.0, %v5850
      %v5852 = vpop.f32.mrb[0].mxu0
      %v5853 = vpop.f32.mrb[0].mxu0
      %v5854 = vadd.f32 0.0, %v5853
      %v5855 = vpop.f32.mrb[0].mxu0
      %5856 = vmatprep.mubr.bf16.mxu0 0
      %5857 = vmatmul.mubr.bf16.gmra.mrb[0].mxu0 %v5683
      %v5858 = vpop.f32.mrb[0].mxu0
      %v5859 = vadd.f32 0.0, %v5858
      %v5860 = vpop.f32.mrb[0].mxu0
      %v5861 = vpop.f32.mrb[0].mxu0
      %v5862 = vadd.f32 0.0, %v5861
      %v5863 = vpop.f32.mrb[0].mxu0
      %5864 = vdwg.mxu0
      %v5865 = vadd.f32 %v5593, %v5723
      %v5866 = vadd.f32 %v5594, %v5726
      %v5867 = vadd.f32 %v5595, %v5731
      %v5868 = vadd.f32 %v5596, %v5734
      %v5869 = vadd.f32 %v5597, %v5739
      %v5870 = vadd.f32 %v5598, %v5742
      %v5871 = vadd.f32 %v5599, %v5747
      %v5872 = vadd.f32 %v5600, %v5750
      %v5873 = vadd.f32 %v5601, %v5755
      %v5874 = vadd.f32 %v5602, %v5758
      %v5875 = vadd.f32 %v5603, %v5763
      %v5876 = vadd.f32 %v5604, %v5766
      %v5877 = vadd.f32 %v5605, %v5771
      %v5878 = vadd.f32 %v5606, %v5774
      %v5879 = vadd.f32 %v5607, %v5779
      %v5880 = vadd.f32 %v5608, %v5782
      %v5881 = vadd.f32 %v5609, %v5787
      %v5882 = vadd.f32 %v5610, %v5790
      %v5883 = vadd.f32 %v5611, %v5795
      %v5884 = vadd.f32 %v5612, %v5798
      %v5885 = vadd.f32 %v5613, %v5803
      %v5886 = vadd.f32 %v5614, %v5806
      %v5887 = vadd.f32 %v5615, %v5811
      %v5888 = vadd.f32 %v5616, %v5814
      %v5889 = vadd.f32 %v5617, %v5819
      %v5890 = vadd.f32 %v5618, %v5822
      %v5891 = vadd.f32 %v5619, %v5827
      %v5892 = vadd.f32 %v5620, %v5830
      %v5893 = vadd.f32 %v5621, %v5835
      %v5894 = vadd.f32 %v5622, %v5838
      %v5895 = vadd.f32 %v5623, %v5843
      %v5896 = vadd.f32 %v5624, %v5846
      %v5897 = vadd.f32 %v5625, %v5851
      %v5898 = vadd.f32 %v5626, %v5854
      %v5899 = vadd.f32 %v5627, %v5859
      %v5900 = vadd.f32 %v5628, %v5862
      %5901 = vst.msk [vmem:[#allocation4] sm:$0xff] %vm435, %v5865
      %5902 = vst.msk [vmem:[#allocation4 + $0x8] sm:$0xff] %vm435, %v5866
      %5903 = vst.msk [vmem:[#allocation4 + $0x10] sm:$0xff] %vm435, %v5867
      %5904 = vst.msk [vmem:[#allocation4 + $0x18] sm:$0xff] %vm435, %v5868
      %5905 = vst.msk [vmem:[#allocation4 + $0x20] sm:$0xff] %vm435, %v5869
      %5906 = vst.msk [vmem:[#allocation4 + $0x28] sm:$0xff] %vm435, %v5870
      %5907 = vst.msk [vmem:[#allocation4 + $0x30] sm:$0xff] %vm435, %v5871
      %5908 = vst.msk [vmem:[#allocation4 + $0x38] sm:$0xff] %vm435, %v5872
      %5909 = vst.msk [vmem:[#allocation4 + $0x40] sm:$0xff] %vm435, %v5873
      %5910 = vst.msk [vmem:[#allocation4 + $0x48] sm:$0xff] %vm435, %v5874
      %5911 = vst.msk [vmem:[#allocation4 + $0x50] sm:$0xff] %vm435, %v5875
      %5912 = vst.msk [vmem:[#allocation4 + $0x58] sm:$0xff] %vm435, %v5876
      %5913 = vst.msk [vmem:[#allocation4 + $0x60] sm:$0xff] %vm435, %v5877
      %5914 = vst.msk [vmem:[#allocation4 + $0x68] sm:$0xff] %vm435, %v5878
      %5915 = vst.msk [vmem:[#allocation4 + $0x70] sm:$0xff] %vm435, %v5879
      %5916 = vst.msk [vmem:[#allocation4 + $0x78] sm:$0xff] %vm435, %v5880
      %5917 = vst.msk [vmem:[#allocation4 + $0x80] sm:$0xff] %vm435, %v5881
      %5918 = vst.msk [vmem:[#allocation4 + $0x88] sm:$0xff] %vm435, %v5882
      %5919 = vst.msk [vmem:[#allocation4 + $0x90] sm:$0xff] %vm435, %v5883
      %5920 = vst.msk [vmem:[#allocation4 + $0x98] sm:$0xff] %vm435, %v5884
      %5921 = vst.msk [vmem:[#allocation4 + $0xa0] sm:$0xff] %vm435, %v5885
      %5922 = vst.msk [vmem:[#allocation4 + $0xa8] sm:$0xff] %vm435, %v5886
      %5923 = vst.msk [vmem:[#allocation4 + $0xb0] sm:$0xff] %vm435, %v5887
      %5924 = vst.msk [vmem:[#allocation4 + $0xb8] sm:$0xff] %vm435, %v5888
      %5925 = vst.msk [vmem:[#allocation4 + $0xc0] sm:$0xff] %vm435, %v5889
      %5926 = vst.msk [vmem:[#allocation4 + $0xc8] sm:$0xff] %vm435, %v5890
      %5927 = vst.msk [vmem:[#allocation4 + $0xd0] sm:$0xff] %vm435, %v5891
      %5928 = vst.msk [vmem:[#allocation4 + $0xd8] sm:$0xff] %vm435, %v5892
      %5929 = vst.msk [vmem:[#allocation4 + $0xe0] sm:$0xff] %vm435, %v5893
      %5930 = vst.msk [vmem:[#allocation4 + $0xe8] sm:$0xff] %vm435, %v5894
      %5931 = vst.msk [vmem:[#allocation4 + $0xf0] sm:$0xff] %vm435, %v5895
      %5932 = vst.msk [vmem:[#allocation4 + $0xf8] sm:$0xff] %vm435, %v5896
      %5933 = vst.msk [vmem:[#allocation4 + $0x100] sm:$0xff] %vm435, %v5897
      %5934 = vst.msk [vmem:[#allocation4 + $0x108] sm:$0xff] %vm435, %v5898
      %5935 = vst.msk [vmem:[#allocation4 + $0x110] sm:$0xff] %vm435, %v5899
      %5936 = vst.msk [vmem:[#allocation4 + $0x118] sm:$0xff] %vm435, %v5900
      %v5937 = vld [vmem:[#allocation3 + $0x17] sm:$0xff]
      %v5938 = vld [vmem:[#allocation3 + $0x1f] sm:$0xff]
      %v5939 = vld [vmem:[#allocation3 + $0x27] sm:$0xff]
      %v5940 = vld [vmem:[#allocation3 + $0x2f] sm:$0xff]
      %v5941 = vld [vmem:[#allocation3 + $0x37] sm:$0xff]
      %v5942 = vld [vmem:[#allocation3 + $0x3f] sm:$0xff]
      %v5943 = vld [vmem:[#allocation3 + $0x47] sm:$0xff]
      %v5944 = vld [vmem:[#allocation3 + $0x4f] sm:$0xff]
      %v5945 = vld [vmem:[#allocation3 + $0x57] sm:$0xff]
      %v5946 = vld [vmem:[#allocation3 + $0x5f] sm:$0xff]
      %v5947 = vld [vmem:[#allocation3 + $0x67] sm:$0xff]
      %v5948 = vld [vmem:[#allocation3 + $0x6f] sm:$0xff]
      %v5949 = vld [vmem:[#allocation3 + $0x77] sm:$0xff]
      %v5950 = vld [vmem:[#allocation3 + $0x7f] sm:$0xff]
      %v5951 = vld [vmem:[#allocation3 + $0x87] sm:$0xff]
      %v5952 = vld [vmem:[#allocation3 + $0x8f] sm:$0xff]
      %v5953 = vld [vmem:[#allocation3 + $0x97] sm:$0xff]
      %v5954 = vld [vmem:[#allocation3 + $0x9f] sm:$0xff]
      %v5955 = vld [vmem:[#allocation3 + $0xa7] sm:$0xff]
      %v5956 = vld [vmem:[#allocation3 + $0xaf] sm:$0xff]
      %v5957 = vld [vmem:[#allocation3 + $0xb7] sm:$0xff]
      %v5958 = vld [vmem:[#allocation3 + $0xbf] sm:$0xff]
      %v5959 = vld [vmem:[#allocation3 + $0xc7] sm:$0xff]
      %v5960 = vld [vmem:[#allocation3 + $0xcf] sm:$0xff]
      %v5961 = vld [vmem:[#allocation3 + $0xd7] sm:$0xff]
      %v5962 = vld [vmem:[#allocation3 + $0xdf] sm:$0xff]
      %v5963 = vld [vmem:[#allocation3 + $0xe7] sm:$0xff]
      %v5964 = vld [vmem:[#allocation3 + $0xef] sm:$0xff]
      %v5965 = vld [vmem:[#allocation3 + $0xf7] sm:$0xff]
      %v5966 = vld [vmem:[#allocation3 + $0xff] sm:$0xff]
      %v5967 = vld [vmem:[#allocation3 + $0x107] sm:$0xff]
      %v5968 = vld [vmem:[#allocation3 + $0x10f] sm:$0xff]
      %v5969 = vld [vmem:[#allocation3 + $0x117] sm:$0xff]
      %v5970 = vld [vmem:[#allocation3 + $0x11f] sm:$0xff]
      %v5971 = vld [vmem:[#allocation3 + $0x127] sm:$0xff]
      %v5972 = vld [vmem:[#allocation3 + $0x12f] sm:$0xff]
      %v5973 = vpack.c.bf16 %v5938, %v5937
      %v5974 = vpack.c.bf16 %v5940, %v5939
      %v5975 = vpack.c.bf16 %v5942, %v5941
      %v5976 = vpack.c.bf16 %v5944, %v5943
      %v5977 = vpack.c.bf16 %v5946, %v5945
      %v5978 = vpack.c.bf16 %v5948, %v5947
      %v5979 = vpack.c.bf16 %v5950, %v5949
      %v5980 = vpack.c.bf16 %v5952, %v5951
      %v5981 = vpack.c.bf16 %v5954, %v5953
      %v5982 = vpack.c.bf16 %v5956, %v5955
      %v5983 = vpack.c.bf16 %v5958, %v5957
      %v5984 = vpack.c.bf16 %v5960, %v5959
      %v5985 = vpack.c.bf16 %v5962, %v5961
      %v5986 = vpack.c.bf16 %v5964, %v5963
      %v5987 = vpack.c.bf16 %v5966, %v5965
      %v5988 = vpack.c.bf16 %v5968, %v5967
      %v5989 = vpack.c.bf16 %v5970, %v5969
      %v5990 = vpack.c.bf16 %v5972, %v5971
      %v5991 = vld [vmem:[#allocation4] sm:$0xff]
      %v5992 = vld [vmem:[#allocation4 + $0x8] sm:$0xff]
      %v5993 = vld [vmem:[#allocation4 + $0x10] sm:$0xff]
      %v5994 = vld [vmem:[#allocation4 + $0x18] sm:$0xff]
      %v5995 = vld [vmem:[#allocation4 + $0x20] sm:$0xff]
      %v5996 = vld [vmem:[#allocation4 + $0x28] sm:$0xff]
      %v5997 = vld [vmem:[#allocation4 + $0x30] sm:$0xff]
      %v5998 = vld [vmem:[#allocation4 + $0x38] sm:$0xff]
      %v5999 = vld [vmem:[#allocation4 + $0x40] sm:$0xff]
      %v6000 = vld [vmem:[#allocation4 + $0x48] sm:$0xff]
      %v6001 = vld [vmem:[#allocation4 + $0x50] sm:$0xff]
      %v6002 = vld [vmem:[#allocation4 + $0x58] sm:$0xff]
      %v6003 = vld [vmem:[#allocation4 + $0x60] sm:$0xff]
      %v6004 = vld [vmem:[#allocation4 + $0x68] sm:$0xff]
      %v6005 = vld [vmem:[#allocation4 + $0x70] sm:$0xff]
      %v6006 = vld [vmem:[#allocation4 + $0x78] sm:$0xff]
      %v6007 = vld [vmem:[#allocation4 + $0x80] sm:$0xff]
      %v6008 = vld [vmem:[#allocation4 + $0x88] sm:$0xff]
      %v6009 = vld [vmem:[#allocation4 + $0x90] sm:$0xff]
      %v6010 = vld [vmem:[#allocation4 + $0x98] sm:$0xff]
      %v6011 = vld [vmem:[#allocation4 + $0xa0] sm:$0xff]
      %v6012 = vld [vmem:[#allocation4 + $0xa8] sm:$0xff]
      %v6013 = vld [vmem:[#allocation4 + $0xb0] sm:$0xff]
      %v6014 = vld [vmem:[#allocation4 + $0xb8] sm:$0xff]
      %v6015 = vld [vmem:[#allocation4 + $0xc0] sm:$0xff]
      %v6016 = vld [vmem:[#allocation4 + $0xc8] sm:$0xff]
      %v6017 = vld [vmem:[#allocation4 + $0xd0] sm:$0xff]
      %v6018 = vld [vmem:[#allocation4 + $0xd8] sm:$0xff]
      %v6019 = vld [vmem:[#allocation4 + $0xe0] sm:$0xff]
      %v6020 = vld [vmem:[#allocation4 + $0xe8] sm:$0xff]
      %v6021 = vld [vmem:[#allocation4 + $0xf0] sm:$0xff]
      %v6022 = vld [vmem:[#allocation4 + $0xf8] sm:$0xff]
      %v6023 = vld [vmem:[#allocation4 + $0x100] sm:$0xff]
      %v6024 = vld [vmem:[#allocation4 + $0x108] sm:$0xff]
      %v6025 = vld [vmem:[#allocation4 + $0x110] sm:$0xff]
      %v6026 = vld [vmem:[#allocation4 + $0x118] sm:$0xff]
      %s6027 = scalar_lea.vmem %s2, 12
      %v6028 = vld [vmem:[%s6027] sm:$0xf]
      %v6030 = vsel %vm307, %v5973, 0
      %v6033 = vsel %vm307, %v5974, 0
      %v6036 = vsel %vm307, %v5975, 0
      %v6039 = vsel %vm307, %v5976, 0
      %v6042 = vsel %vm307, %v5977, 0
      %v6045 = vsel %vm307, %v5978, 0
      %v6048 = vsel %vm307, %v5979, 0
      %v6051 = vsel %vm307, %v5980, 0
      %v6054 = vsel %vm307, %v5981, 0
      %v6057 = vsel %vm307, %v5982, 0
      %v6060 = vsel %vm307, %v5983, 0
      %v6063 = vsel %vm307, %v5984, 0
      %v6066 = vsel %vm307, %v5985, 0
      %v6069 = vsel %vm307, %v5986, 0
      %v6072 = vsel %vm307, %v5987, 0
      %v6075 = vsel %vm307, %v5988, 0
      %v6078 = vsel %vm307, %v5989, 0
      %v6081 = vsel %vm307, %v5990, 0
      %v6084 = vsel %vm4888, %v6028, 0
      %6086 = vmatprep.subr.bf16.mxu0 0
      %6087 = vmatpush1.bf16.msra.mxu0 %v6084
      %6088 = vmatprep.subr.bf16.mxu0 0
      %6089 = vmatpush1.bf16.msra.mxu0 0
      %6090 = vmatprep.subr.bf16.mxu0 0
      %6091 = vmatpush1.bf16.msra.mxu0 0
      %6092 = vmatprep.subr.bf16.mxu0 0
      %6093 = vmatpush1.bf16.msra.mxu0 0
      %6094 = vmatprep.subr.bf16.mxu0 0
      %6095 = vmatpush1.bf16.msra.mxu0 0
      %6096 = vmatprep.subr.bf16.mxu0 0
      %6097 = vmatpush1.bf16.msra.mxu0 0
      %6098 = vmatprep.subr.bf16.mxu0 0
      %6099 = vmatpush1.bf16.msra.mxu0 0
      %6100 = vmatprep.subr.bf16.mxu0 0
      %6101 = vmatpush1.bf16.msra.mxu0 0
      %6102 = vmatprep.subr.bf16.mxu0 0
      %6103 = vmatpush1.bf16.msra.mxu0 0
      %6104 = vmatprep.subr.bf16.mxu0 0
      %6105 = vmatpush1.bf16.msra.mxu0 0
      %6106 = vmatprep.subr.bf16.mxu0 0
      %6107 = vmatpush1.bf16.msra.mxu0 0
      %6108 = vmatprep.subr.bf16.mxu0 0
      %6109 = vmatpush1.bf16.msra.mxu0 0
      %6110 = vmatprep.subr.bf16.mxu0 0
      %6111 = vmatpush1.bf16.msra.mxu0 0
      %6112 = vmatprep.subr.bf16.mxu0 0
      %6113 = vmatpush1.bf16.msra.mxu0 0
      %6114 = vmatprep.subr.bf16.mxu0 0
      %6115 = vmatpush1.bf16.msra.mxu0 0
      %6116 = vmatprep.subr.bf16.mxu0 0
      %6117 = vmatpush1.bf16.msra.mxu0 0
      %6118 = vmatprep.mubr.bf16.mxu0 0
      %6119 = vmatmul.mubr.bf16.gmra.mrb[0].mxu0 %v6030
      %v6120 = vpop.f32.mrb[0].mxu0
      %v6121 = vadd.f32 0.0, %v6120
      %v6122 = vpop.f32.mrb[0].mxu0
      %v6123 = vpop.f32.mrb[0].mxu0
      %v6124 = vadd.f32 0.0, %v6123
      %v6125 = vpop.f32.mrb[0].mxu0
      %6126 = vmatprep.mubr.bf16.mxu0 0
      %6127 = vmatmul.mubr.bf16.gmra.mrb[0].mxu0 %v6033
      %v6128 = vpop.f32.mrb[0].mxu0
      %v6129 = vadd.f32 0.0, %v6128
      %v6130 = vpop.f32.mrb[0].mxu0
      %v6131 = vpop.f32.mrb[0].mxu0
      %v6132 = vadd.f32 0.0, %v6131
      %v6133 = vpop.f32.mrb[0].mxu0
      %6134 = vmatprep.mubr.bf16.mxu0 0
      %6135 = vmatmul.mubr.bf16.gmra.mrb[0].mxu0 %v6036
      %v6136 = vpop.f32.mrb[0].mxu0
      %v6137 = vadd.f32 0.0, %v6136
      %v6138 = vpop.f32.mrb[0].mxu0
      %v6139 = vpop.f32.mrb[0].mxu0
      %v6140 = vadd.f32 0.0, %v6139
      %v6141 = vpop.f32.mrb[0].mxu0
      %6142 = vmatprep.mubr.bf16.mxu0 0
      %6143 = vmatmul.mubr.bf16.gmra.mrb[0].mxu0 %v6039
      %v6144 = vpop.f32.mrb[0].mxu0
      %v6145 = vadd.f32 0.0, %v6144
      %v6146 = vpop.f32.mrb[0].mxu0
      %v6147 = vpop.f32.mrb[0].mxu0
      %v6148 = vadd.f32 0.0, %v6147
      %v6149 = vpop.f32.mrb[0].mxu0
      %6150 = vmatprep.mubr.bf16.mxu0 0
      %6151 = vmatmul.mubr.bf16.gmra.mrb[0].mxu0 %v6042
      %v6152 = vpop.f32.mrb[0].mxu0
      %v6153 = vadd.f32 0.0, %v6152
      %v6154 = vpop.f32.mrb[0].mxu0
      %v6155 = vpop.f32.mrb[0].mxu0
      %v6156 = vadd.f32 0.0, %v6155
      %v6157 = vpop.f32.mrb[0].mxu0
      %6158 = vmatprep.mubr.bf16.mxu0 0
      %6159 = vmatmul.mubr.bf16.gmra.mrb[0].mxu0 %v6045
      %v6160 = vpop.f32.mrb[0].mxu0
      %v6161 = vadd.f32 0.0, %v6160
      %v6162 = vpop.f32.mrb[0].mxu0
      %v6163 = vpop.f32.mrb[0].mxu0
      %v6164 = vadd.f32 0.0, %v6163
      %v6165 = vpop.f32.mrb[0].mxu0
      %6166 = vmatprep.mubr.bf16.mxu0 0
      %6167 = vmatmul.mubr.bf16.gmra.mrb[0].mxu0 %v6048
      %v6168 = vpop.f32.mrb[0].mxu0
      %v6169 = vadd.f32 0.0, %v6168
      %v6170 = vpop.f32.mrb[0].mxu0
      %v6171 = vpop.f32.mrb[0].mxu0
      %v6172 = vadd.f32 0.0, %v6171
      %v6173 = vpop.f32.mrb[0].mxu0
      %6174 = vmatprep.mubr.bf16.mxu0 0
      %6175 = vmatmul.mubr.bf16.gmra.mrb[0].mxu0 %v6051
      %v6176 = vpop.f32.mrb[0].mxu0
      %v6177 = vadd.f32 0.0, %v6176
      %v6178 = vpop.f32.mrb[0].mxu0
      %v6179 = vpop.f32.mrb[0].mxu0
      %v6180 = vadd.f32 0.0, %v6179
      %v6181 = vpop.f32.mrb[0].mxu0
      %6182 = vmatprep.mubr.bf16.mxu0 0
      %6183 = vmatmul.mubr.bf16.gmra.mrb[0].mxu0 %v6054
      %v6184 = vpop.f32.mrb[0].mxu0
      %v6185 = vadd.f32 0.0, %v6184
      %v6186 = vpop.f32.mrb[0].mxu0
      %v6187 = vpop.f32.mrb[0].mxu0
      %v6188 = vadd.f32 0.0, %v6187
      %v6189 = vpop.f32.mrb[0].mxu0
      %6190 = vmatprep.mubr.bf16.mxu0 0
      %6191 = vmatmul.mubr.bf16.gmra.mrb[0].mxu0 %v6057
      %v6192 = vpop.f32.mrb[0].mxu0
      %v6193 = vadd.f32 0.0, %v6192
      %v6194 = vpop.f32.mrb[0].mxu0
      %v6195 = vpop.f32.mrb[0].mxu0
      %v6196 = vadd.f32 0.0, %v6195
      %v6197 = vpop.f32.mrb[0].mxu0
      %6198 = vmatprep.mubr.bf16.mxu0 0
      %6199 = vmatmul.mubr.bf16.gmra.mrb[0].mxu0 %v6060
      %v6200 = vpop.f32.mrb[0].mxu0
      %v6201 = vadd.f32 0.0, %v6200
      %v6202 = vpop.f32.mrb[0].mxu0
      %v6203 = vpop.f32.mrb[0].mxu0
      %v6204 = vadd.f32 0.0, %v6203
      %v6205 = vpop.f32.mrb[0].mxu0
      %6206 = vmatprep.mubr.bf16.mxu0 0
      %6207 = vmatmul.mubr.bf16.gmra.mrb[0].mxu0 %v6063
      %v6208 = vpop.f32.mrb[0].mxu0
      %v6209 = vadd.f32 0.0, %v6208
      %v6210 = vpop.f32.mrb[0].mxu0
      %v6211 = vpop.f32.mrb[0].mxu0
      %v6212 = vadd.f32 0.0, %v6211
      %v6213 = vpop.f32.mrb[0].mxu0
      %6214 = vmatprep.mubr.bf16.mxu0 0
      %6215 = vmatmul.mubr.bf16.gmra.mrb[0].mxu0 %v6066
      %v6216 = vpop.f32.mrb[0].mxu0
      %v6217 = vadd.f32 0.0, %v6216
      %v6218 = vpop.f32.mrb[0].mxu0
      %v6219 = vpop.f32.mrb[0].mxu0
      %v6220 = vadd.f32 0.0, %v6219
      %v6221 = vpop.f32.mrb[0].mxu0
      %6222 = vmatprep.mubr.bf16.mxu0 0
      %6223 = vmatmul.mubr.bf16.gmra.mrb[0].mxu0 %v6069
      %v6224 = vpop.f32.mrb[0].mxu0
      %v6225 = vadd.f32 0.0, %v6224
      %v6226 = vpop.f32.mrb[0].mxu0
      %v6227 = vpop.f32.mrb[0].mxu0
      %v6228 = vadd.f32 0.0, %v6227
      %v6229 = vpop.f32.mrb[0].mxu0
      %6230 = vmatprep.mubr.bf16.mxu0 0
      %6231 = vmatmul.mubr.bf16.gmra.mrb[0].mxu0 %v6072
      %v6232 = vpop.f32.mrb[0].mxu0
      %v6233 = vadd.f32 0.0, %v6232
      %v6234 = vpop.f32.mrb[0].mxu0
      %v6235 = vpop.f32.mrb[0].mxu0
      %v6236 = vadd.f32 0.0, %v6235
      %v6237 = vpop.f32.mrb[0].mxu0
      %6238 = vmatprep.mubr.bf16.mxu0 0
      %6239 = vmatmul.mubr.bf16.gmra.mrb[0].mxu0 %v6075
      %v6240 = vpop.f32.mrb[0].mxu0
      %v6241 = vadd.f32 0.0, %v6240
      %v6242 = vpop.f32.mrb[0].mxu0
      %v6243 = vpop.f32.mrb[0].mxu0
      %v6244 = vadd.f32 0.0, %v6243
      %v6245 = vpop.f32.mrb[0].mxu0
      %6246 = vmatprep.mubr.bf16.mxu0 0
      %6247 = vmatmul.mubr.bf16.gmra.mrb[0].mxu0 %v6078
      %v6248 = vpop.f32.mrb[0].mxu0
      %v6249 = vadd.f32 0.0, %v6248
      %v6250 = vpop.f32.mrb[0].mxu0
      %v6251 = vpop.f32.mrb[0].mxu0
      %v6252 = vadd.f32 0.0, %v6251
      %v6253 = vpop.f32.mrb[0].mxu0
      %6254 = vmatprep.mubr.bf16.mxu0 0
      %6255 = vmatmul.mubr.bf16.gmra.mrb[0].mxu0 %v6081
      %v6256 = vpop.f32.mrb[0].mxu0
      %v6257 = vadd.f32 0.0, %v6256
      %v6258 = vpop.f32.mrb[0].mxu0
      %v6259 = vpop.f32.mrb[0].mxu0
      %v6260 = vadd.f32 0.0, %v6259
      %v6261 = vpop.f32.mrb[0].mxu0
      %6262 = vdwg.mxu0
      %v6263 = vadd.f32 %v5991, %v6121
      %v6264 = vadd.f32 %v5992, %v6124
      %v6265 = vadd.f32 %v5993, %v6129
      %v6266 = vadd.f32 %v5994, %v6132
      %v6267 = vadd.f32 %v5995, %v6137
      %v6268 = vadd.f32 %v5996, %v6140
      %v6269 = vadd.f32 %v5997, %v6145
      %v6270 = vadd.f32 %v5998, %v6148
      %v6271 = vadd.f32 %v5999, %v6153
      %v6272 = vadd.f32 %v6000, %v6156
      %v6273 = vadd.f32 %v6001, %v6161
      %v6274 = vadd.f32 %v6002, %v6164
      %v6275 = vadd.f32 %v6003, %v6169
      %v6276 = vadd.f32 %v6004, %v6172
      %v6277 = vadd.f32 %v6005, %v6177
      %v6278 = vadd.f32 %v6006, %v6180
      %v6279 = vadd.f32 %v6007, %v6185
      %v6280 = vadd.f32 %v6008, %v6188
      %v6281 = vadd.f32 %v6009, %v6193
      %v6282 = vadd.f32 %v6010, %v6196
      %v6283 = vadd.f32 %v6011, %v6201
      %v6284 = vadd.f32 %v6012, %v6204
      %v6285 = vadd.f32 %v6013, %v6209
      %v6286 = vadd.f32 %v6014, %v6212
      %v6287 = vadd.f32 %v6015, %v6217
      %v6288 = vadd.f32 %v6016, %v6220
      %v6289 = vadd.f32 %v6017, %v6225
      %v6290 = vadd.f32 %v6018, %v6228
      %v6291 = vadd.f32 %v6019, %v6233
      %v6292 = vadd.f32 %v6020, %v6236
      %v6293 = vadd.f32 %v6021, %v6241
      %v6294 = vadd.f32 %v6022, %v6244
      %v6295 = vadd.f32 %v6023, %v6249
      %v6296 = vadd.f32 %v6024, %v6252
      %v6297 = vadd.f32 %v6025, %v6257
      %v6298 = vadd.f32 %v6026, %v6260
      %6299 = vst.msk [vmem:[#allocation4] sm:$0xff] %vm435, %v6263
      %6300 = vst.msk [vmem:[#allocation4 + $0x8] sm:$0xff] %vm435, %v6264
      %6301 = vst.msk [vmem:[#allocation4 + $0x10] sm:$0xff] %vm435, %v6265
      %6302 = vst.msk [vmem:[#allocation4 + $0x18] sm:$0xff] %vm435, %v6266
      %6303 = vst.msk [vmem:[#allocation4 + $0x20] sm:$0xff] %vm435, %v6267
      %6304 = vst.msk [vmem:[#allocation4 + $0x28] sm:$0xff] %vm435, %v6268
      %6305 = vst.msk [vmem:[#allocation4 + $0x30] sm:$0xff] %vm435, %v6269
      %6306 = vst.msk [vmem:[#allocation4 + $0x38] sm:$0xff] %vm435, %v6270
      %6307 = vst.msk [vmem:[#allocation4 + $0x40] sm:$0xff] %vm435, %v6271
      %6308 = vst.msk [vmem:[#allocation4 + $0x48] sm:$0xff] %vm435, %v6272
      %6309 = vst.msk [vmem:[#allocation4 + $0x50] sm:$0xff] %vm435, %v6273
      %6310 = vst.msk [vmem:[#allocation4 + $0x58] sm:$0xff] %vm435, %v6274
      %6311 = vst.msk [vmem:[#allocation4 + $0x60] sm:$0xff] %vm435, %v6275
      %6312 = vst.msk [vmem:[#allocation4 + $0x68] sm:$0xff] %vm435, %v6276
      %6313 = vst.msk [vmem:[#allocation4 + $0x70] sm:$0xff] %vm435, %v6277
      %6314 = vst.msk [vmem:[#allocation4 + $0x78] sm:$0xff] %vm435, %v6278
      %6315 = vst.msk [vmem:[#allocation4 + $0x80] sm:$0xff] %vm435, %v6279
      %6316 = vst.msk [vmem:[#allocation4 + $0x88] sm:$0xff] %vm435, %v6280
      %6317 = vst.msk [vmem:[#allocation4 + $0x90] sm:$0xff] %vm435, %v6281
      %6318 = vst.msk [vmem:[#allocation4 + $0x98] sm:$0xff] %vm435, %v6282
      %6319 = vst.msk [vmem:[#allocation4 + $0xa0] sm:$0xff] %vm435, %v6283
      %6320 = vst.msk [vmem:[#allocation4 + $0xa8] sm:$0xff] %vm435, %v6284
      %6321 = vst.msk [vmem:[#allocation4 + $0xb0] sm:$0xff] %vm435, %v6285
      %6322 = vst.msk [vmem:[#allocation4 + $0xb8] sm:$0xff] %vm435, %v6286
      %6323 = vst.msk [vmem:[#allocation4 + $0xc0] sm:$0xff] %vm435, %v6287
      %6324 = vst.msk [vmem:[#allocation4 + $0xc8] sm:$0xff] %vm435, %v6288
      %6325 = vst.msk [vmem:[#allocation4 + $0xd0] sm:$0xff] %vm435, %v6289
      %6326 = vst.msk [vmem:[#allocation4 + $0xd8] sm:$0xff] %vm435, %v6290
      %6327 = vst.msk [vmem:[#allocation4 + $0xe0] sm:$0xff] %vm435, %v6291
      %6328 = vst.msk [vmem:[#allocation4 + $0xe8] sm:$0xff] %vm435, %v6292
      %6329 = vst.msk [vmem:[#allocation4 + $0xf0] sm:$0xff] %vm435, %v6293
      %6330 = vst.msk [vmem:[#allocation4 + $0xf8] sm:$0xff] %vm435, %v6294
      %6331 = vst.msk [vmem:[#allocation4 + $0x100] sm:$0xff] %vm435, %v6295
      %6332 = vst.msk [vmem:[#allocation4 + $0x108] sm:$0xff] %vm435, %v6296
      %6333 = vst.msk [vmem:[#allocation4 + $0x110] sm:$0xff] %vm435, %v6297
      %6334 = vst.msk [vmem:[#allocation4 + $0x118] sm:$0xff] %vm435, %v6298
      %v6335 = vld [vmem:[#allocation3 + $0x18] sm:$0xff]
      %v6336 = vld [vmem:[#allocation3 + $0x20] sm:$0xff]
      %v6337 = vld [vmem:[#allocation3 + $0x28] sm:$0xff]
      %v6338 = vld [vmem:[#allocation3 + $0x30] sm:$0xff]
      %v6339 = vld [vmem:[#allocation3 + $0x38] sm:$0xff]
      %v6340 = vld [vmem:[#allocation3 + $0x40] sm:$0xff]
      %v6341 = vld [vmem:[#allocation3 + $0x48] sm:$0xff]
      %v6342 = vld [vmem:[#allocation3 + $0x50] sm:$0xff]
      %v6343 = vld [vmem:[#allocation3 + $0x58] sm:$0xff]
      %v6344 = vld [vmem:[#allocation3 + $0x60] sm:$0xff]
      %v6345 = vld [vmem:[#allocation3 + $0x68] sm:$0xff]
      %v6346 = vld [vmem:[#allocation3 + $0x70] sm:$0xff]
      %v6347 = vld [vmem:[#allocation3 + $0x78] sm:$0xff]
      %v6348 = vld [vmem:[#allocation3 + $0x80] sm:$0xff]
      %v6349 = vld [vmem:[#allocation3 + $0x88] sm:$0xff]
      %v6350 = vld [vmem:[#allocation3 + $0x90] sm:$0xff]
      %v6351 = vld [vmem:[#allocation3 + $0x98] sm:$0xff]
      %v6352 = vld [vmem:[#allocation3 + $0xa0] sm:$0xff]
      %v6353 = vld [vmem:[#allocation3 + $0xa8] sm:$0xff]
      %v6354 = vld [vmem:[#allocation3 + $0xb0] sm:$0xff]
      %v6355 = vld [vmem:[#allocation3 + $0xb8] sm:$0xff]
      %v6356 = vld [vmem:[#allocation3 + $0xc0] sm:$0xff]
      %v6357 = vld [vmem:[#allocation3 + $0xc8] sm:$0xff]
      %v6358 = vld [vmem:[#allocation3 + $0xd0] sm:$0xff]
      %v6359 = vld [vmem:[#allocation3 + $0xd8] sm:$0xff]
      %v6360 = vld [vmem:[#allocation3 + $0xe0] sm:$0xff]
      %v6361 = vld [vmem:[#allocation3 + $0xe8] sm:$0xff]
      %v6362 = vld [vmem:[#allocation3 + $0xf0] sm:$0xff]
      %v6363 = vld [vmem:[#allocation3 + $0xf8] sm:$0xff]
      %v6364 = vld [vmem:[#allocation3 + $0x100] sm:$0xff]
      %v6365 = vld [vmem:[#allocation3 + $0x108] sm:$0xff]
      %v6366 = vld [vmem:[#allocation3 + $0x110] sm:$0xff]
      %v6367 = vld [vmem:[#allocation3 + $0x118] sm:$0xff]
      %v6368 = vld [vmem:[#allocation3 + $0x120] sm:$0xff]
      %v6369 = vld [vmem:[#allocation3 + $0x128] sm:$0xff]
      %v6370 = vld [vmem:[#allocation3 + $0x130] sm:$0xff]
      %v6371 = vpack.c.bf16 %v6336, %v6335
      %v6372 = vpack.c.bf16 %v6338, %v6337
      %v6373 = vpack.c.bf16 %v6340, %v6339
      %v6374 = vpack.c.bf16 %v6342, %v6341
      %v6375 = vpack.c.bf16 %v6344, %v6343
      %v6376 = vpack.c.bf16 %v6346, %v6345
      %v6377 = vpack.c.bf16 %v6348, %v6347
      %v6378 = vpack.c.bf16 %v6350, %v6349
      %v6379 = vpack.c.bf16 %v6352, %v6351
      %v6380 = vpack.c.bf16 %v6354, %v6353
      %v6381 = vpack.c.bf16 %v6356, %v6355
      %v6382 = vpack.c.bf16 %v6358, %v6357
      %v6383 = vpack.c.bf16 %v6360, %v6359
      %v6384 = vpack.c.bf16 %v6362, %v6361
      %v6385 = vpack.c.bf16 %v6364, %v6363
      %v6386 = vpack.c.bf16 %v6366, %v6365
      %v6387 = vpack.c.bf16 %v6368, %v6367
      %v6388 = vpack.c.bf16 %v6370, %v6369
      %v6389 = vld [vmem:[#allocation4] sm:$0xff]
      %v6390 = vld [vmem:[#allocation4 + $0x8] sm:$0xff]
      %v6391 = vld [vmem:[#allocation4 + $0x10] sm:$0xff]
      %v6392 = vld [vmem:[#allocation4 + $0x18] sm:$0xff]
      %v6393 = vld [vmem:[#allocation4 + $0x20] sm:$0xff]
      %v6394 = vld [vmem:[#allocation4 + $0x28] sm:$0xff]
      %v6395 = vld [vmem:[#allocation4 + $0x30] sm:$0xff]
      %v6396 = vld [vmem:[#allocation4 + $0x38] sm:$0xff]
      %v6397 = vld [vmem:[#allocation4 + $0x40] sm:$0xff]
      %v6398 = vld [vmem:[#allocation4 + $0x48] sm:$0xff]
      %v6399 = vld [vmem:[#allocation4 + $0x50] sm:$0xff]
      %v6400 = vld [vmem:[#allocation4 + $0x58] sm:$0xff]
      %v6401 = vld [vmem:[#allocation4 + $0x60] sm:$0xff]
      %v6402 = vld [vmem:[#allocation4 + $0x68] sm:$0xff]
      %v6403 = vld [vmem:[#allocation4 + $0x70] sm:$0xff]
      %v6404 = vld [vmem:[#allocation4 + $0x78] sm:$0xff]
      %v6405 = vld [vmem:[#allocation4 + $0x80] sm:$0xff]
      %v6406 = vld [vmem:[#allocation4 + $0x88] sm:$0xff]
      %v6407 = vld [vmem:[#allocation4 + $0x90] sm:$0xff]
      %v6408 = vld [vmem:[#allocation4 + $0x98] sm:$0xff]
      %v6409 = vld [vmem:[#allocation4 + $0xa0] sm:$0xff]
      %v6410 = vld [vmem:[#allocation4 + $0xa8] sm:$0xff]
      %v6411 = vld [vmem:[#allocation4 + $0xb0] sm:$0xff]
      %v6412 = vld [vmem:[#allocation4 + $0xb8] sm:$0xff]
      %v6413 = vld [vmem:[#allocation4 + $0xc0] sm:$0xff]
      %v6414 = vld [vmem:[#allocation4 + $0xc8] sm:$0xff]
      %v6415 = vld [vmem:[#allocation4 + $0xd0] sm:$0xff]
      %v6416 = vld [vmem:[#allocation4 + $0xd8] sm:$0xff]
      %v6417 = vld [vmem:[#allocation4 + $0xe0] sm:$0xff]
      %v6418 = vld [vmem:[#allocation4 + $0xe8] sm:$0xff]
      %v6419 = vld [vmem:[#allocation4 + $0xf0] sm:$0xff]
      %v6420 = vld [vmem:[#allocation4 + $0xf8] sm:$0xff]
      %v6421 = vld [vmem:[#allocation4 + $0x100] sm:$0xff]
      %v6422 = vld [vmem:[#allocation4 + $0x108] sm:$0xff]
      %v6423 = vld [vmem:[#allocation4 + $0x110] sm:$0xff]
      %v6424 = vld [vmem:[#allocation4 + $0x118] sm:$0xff]
      %s6425 = scalar_lea.vmem %s2, 16
      %v6426 = vld [vmem:[%s6425] sm:$0xf]
      %v6428 = vsel %vm307, %v6371, 0
      %v6431 = vsel %vm307, %v6372, 0
      %v6434 = vsel %vm307, %v6373, 0
      %v6437 = vsel %vm307, %v6374, 0
      %v6440 = vsel %vm307, %v6375, 0
      %v6443 = vsel %vm307, %v6376, 0
      %v6446 = vsel %vm307, %v6377, 0
      %v6449 = vsel %vm307, %v6378, 0
      %v6452 = vsel %vm307, %v6379, 0
      %v6455 = vsel %vm307, %v6380, 0
      %v6458 = vsel %vm307, %v6381, 0
      %v6461 = vsel %vm307, %v6382, 0
      %v6464 = vsel %vm307, %v6383, 0
      %v6467 = vsel %vm307, %v6384, 0
      %v6470 = vsel %vm307, %v6385, 0
      %v6473 = vsel %vm307, %v6386, 0
      %v6476 = vsel %vm307, %v6387, 0
      %v6479 = vsel %vm307, %v6388, 0
      %v6482 = vsel %vm4888, %v6426, 0
      %6484 = vmatprep.subr.bf16.mxu0 0
      %6485 = vmatpush1.bf16.msra.mxu0 %v6482
      %6486 = vmatprep.subr.bf16.mxu0 0
      %6487 = vmatpush1.bf16.msra.mxu0 0
      %6488 = vmatprep.subr.bf16.mxu0 0
      %6489 = vmatpush1.bf16.msra.mxu0 0
      %6490 = vmatprep.subr.bf16.mxu0 0
      %6491 = vmatpush1.bf16.msra.mxu0 0
      %6492 = vmatprep.subr.bf16.mxu0 0
      %6493 = vmatpush1.bf16.msra.mxu0 0
      %6494 = vmatprep.subr.bf16.mxu0 0
      %6495 = vmatpush1.bf16.msra.mxu0 0
      %6496 = vmatprep.subr.bf16.mxu0 0
      %6497 = vmatpush1.bf16.msra.mxu0 0
      %6498 = vmatprep.subr.bf16.mxu0 0
      %6499 = vmatpush1.bf16.msra.mxu0 0
      %6500 = vmatprep.subr.bf16.mxu0 0
      %6501 = vmatpush1.bf16.msra.mxu0 0
      %6502 = vmatprep.subr.bf16.mxu0 0
      %6503 = vmatpush1.bf16.msra.mxu0 0
      %6504 = vmatprep.subr.bf16.mxu0 0
      %6505 = vmatpush1.bf16.msra.mxu0 0
      %6506 = vmatprep.subr.bf16.mxu0 0
      %6507 = vmatpush1.bf16.msra.mxu0 0
      %6508 = vmatprep.subr.bf16.mxu0 0
      %6509 = vmatpush1.bf16.msra.mxu0 0
      %6510 = vmatprep.subr.bf16.mxu0 0
      %6511 = vmatpush1.bf16.msra.mxu0 0
      %6512 = vmatprep.subr.bf16.mxu0 0
      %6513 = vmatpush1.bf16.msra.mxu0 0
      %6514 = vmatprep.subr.bf16.mxu0 0
      %6515 = vmatpush1.bf16.msra.mxu0 0
      %6516 = vmatprep.mubr.bf16.mxu0 0
      %6517 = vmatmul.mubr.bf16.gmra.mrb[0].mxu0 %v6428
      %v6518 = vpop.f32.mrb[0].mxu0
      %v6519 = vadd.f32 0.0, %v6518
      %v6520 = vpop.f32.mrb[0].mxu0
      %v6521 = vpop.f32.mrb[0].mxu0
      %v6522 = vadd.f32 0.0, %v6521
      %v6523 = vpop.f32.mrb[0].mxu0
      %6524 = vmatprep.mubr.bf16.mxu0 0
      %6525 = vmatmul.mubr.bf16.gmra.mrb[0].mxu0 %v6431
      %v6526 = vpop.f32.mrb[0].mxu0
      %v6527 = vadd.f32 0.0, %v6526
      %v6528 = vpop.f32.mrb[0].mxu0
      %v6529 = vpop.f32.mrb[0].mxu0
      %v6530 = vadd.f32 0.0, %v6529
      %v6531 = vpop.f32.mrb[0].mxu0
      %6532 = vmatprep.mubr.bf16.mxu0 0
      %6533 = vmatmul.mubr.bf16.gmra.mrb[0].mxu0 %v6434
      %v6534 = vpop.f32.mrb[0].mxu0
      %v6535 = vadd.f32 0.0, %v6534
      %v6536 = vpop.f32.mrb[0].mxu0
      %v6537 = vpop.f32.mrb[0].mxu0
      %v6538 = vadd.f32 0.0, %v6537
      %v6539 = vpop.f32.mrb[0].mxu0
      %6540 = vmatprep.mubr.bf16.mxu0 0
      %6541 = vmatmul.mubr.bf16.gmra.mrb[0].mxu0 %v6437
      %v6542 = vpop.f32.mrb[0].mxu0
      %v6543 = vadd.f32 0.0, %v6542
      %v6544 = vpop.f32.mrb[0].mxu0
      %v6545 = vpop.f32.mrb[0].mxu0
      %v6546 = vadd.f32 0.0, %v6545
      %v6547 = vpop.f32.mrb[0].mxu0
      %6548 = vmatprep.mubr.bf16.mxu0 0
      %6549 = vmatmul.mubr.bf16.gmra.mrb[0].mxu0 %v6440
      %v6550 = vpop.f32.mrb[0].mxu0
      %v6551 = vadd.f32 0.0, %v6550
      %v6552 = vpop.f32.mrb[0].mxu0
      %v6553 = vpop.f32.mrb[0].mxu0
      %v6554 = vadd.f32 0.0, %v6553
      %v6555 = vpop.f32.mrb[0].mxu0
      %6556 = vmatprep.mubr.bf16.mxu0 0
      %6557 = vmatmul.mubr.bf16.gmra.mrb[0].mxu0 %v6443
      %v6558 = vpop.f32.mrb[0].mxu0
      %v6559 = vadd.f32 0.0, %v6558
      %v6560 = vpop.f32.mrb[0].mxu0
      %v6561 = vpop.f32.mrb[0].mxu0
      %v6562 = vadd.f32 0.0, %v6561
      %v6563 = vpop.f32.mrb[0].mxu0
      %6564 = vmatprep.mubr.bf16.mxu0 0
      %6565 = vmatmul.mubr.bf16.gmra.mrb[0].mxu0 %v6446
      %v6566 = vpop.f32.mrb[0].mxu0
      %v6567 = vadd.f32 0.0, %v6566
      %v6568 = vpop.f32.mrb[0].mxu0
      %v6569 = vpop.f32.mrb[0].mxu0
      %v6570 = vadd.f32 0.0, %v6569
      %v6571 = vpop.f32.mrb[0].mxu0
      %6572 = vmatprep.mubr.bf16.mxu0 0
      %6573 = vmatmul.mubr.bf16.gmra.mrb[0].mxu0 %v6449
      %v6574 = vpop.f32.mrb[0].mxu0
      %v6575 = vadd.f32 0.0, %v6574
      %v6576 = vpop.f32.mrb[0].mxu0
      %v6577 = vpop.f32.mrb[0].mxu0
      %v6578 = vadd.f32 0.0, %v6577
      %v6579 = vpop.f32.mrb[0].mxu0
      %6580 = vmatprep.mubr.bf16.mxu0 0
      %6581 = vmatmul.mubr.bf16.gmra.mrb[0].mxu0 %v6452
      %v6582 = vpop.f32.mrb[0].mxu0
      %v6583 = vadd.f32 0.0, %v6582
      %v6584 = vpop.f32.mrb[0].mxu0
      %v6585 = vpop.f32.mrb[0].mxu0
      %v6586 = vadd.f32 0.0, %v6585
      %v6587 = vpop.f32.mrb[0].mxu0
      %6588 = vmatprep.mubr.bf16.mxu0 0
      %6589 = vmatmul.mubr.bf16.gmra.mrb[0].mxu0 %v6455
      %v6590 = vpop.f32.mrb[0].mxu0
      %v6591 = vadd.f32 0.0, %v6590
      %v6592 = vpop.f32.mrb[0].mxu0
      %v6593 = vpop.f32.mrb[0].mxu0
      %v6594 = vadd.f32 0.0, %v6593
      %v6595 = vpop.f32.mrb[0].mxu0
      %6596 = vmatprep.mubr.bf16.mxu0 0
      %6597 = vmatmul.mubr.bf16.gmra.mrb[0].mxu0 %v6458
      %v6598 = vpop.f32.mrb[0].mxu0
      %v6599 = vadd.f32 0.0, %v6598
      %v6600 = vpop.f32.mrb[0].mxu0
      %v6601 = vpop.f32.mrb[0].mxu0
      %v6602 = vadd.f32 0.0, %v6601
      %v6603 = vpop.f32.mrb[0].mxu0
      %6604 = vmatprep.mubr.bf16.mxu0 0
      %6605 = vmatmul.mubr.bf16.gmra.mrb[0].mxu0 %v6461
      %v6606 = vpop.f32.mrb[0].mxu0
      %v6607 = vadd.f32 0.0, %v6606
      %v6608 = vpop.f32.mrb[0].mxu0
      %v6609 = vpop.f32.mrb[0].mxu0
      %v6610 = vadd.f32 0.0, %v6609
      %v6611 = vpop.f32.mrb[0].mxu0
      %6612 = vmatprep.mubr.bf16.mxu0 0
      %6613 = vmatmul.mubr.bf16.gmra.mrb[0].mxu0 %v6464
      %v6614 = vpop.f32.mrb[0].mxu0
      %v6615 = vadd.f32 0.0, %v6614
      %v6616 = vpop.f32.mrb[0].mxu0
      %v6617 = vpop.f32.mrb[0].mxu0
      %v6618 = vadd.f32 0.0, %v6617
      %v6619 = vpop.f32.mrb[0].mxu0
      %6620 = vmatprep.mubr.bf16.mxu0 0
      %6621 = vmatmul.mubr.bf16.gmra.mrb[0].mxu0 %v6467
      %v6622 = vpop.f32.mrb[0].mxu0
      %v6623 = vadd.f32 0.0, %v6622
      %v6624 = vpop.f32.mrb[0].mxu0
      %v6625 = vpop.f32.mrb[0].mxu0
      %v6626 = vadd.f32 0.0, %v6625
      %v6627 = vpop.f32.mrb[0].mxu0
      %6628 = vmatprep.mubr.bf16.mxu0 0
      %6629 = vmatmul.mubr.bf16.gmra.mrb[0].mxu0 %v6470
      %v6630 = vpop.f32.mrb[0].mxu0
      %v6631 = vadd.f32 0.0, %v6630
      %v6632 = vpop.f32.mrb[0].mxu0
      %v6633 = vpop.f32.mrb[0].mxu0
      %v6634 = vadd.f32 0.0, %v6633
      %v6635 = vpop.f32.mrb[0].mxu0
      %6636 = vmatprep.mubr.bf16.mxu0 0
      %6637 = vmatmul.mubr.bf16.gmra.mrb[0].mxu0 %v6473
      %v6638 = vpop.f32.mrb[0].mxu0
      %v6639 = vadd.f32 0.0, %v6638
      %v6640 = vpop.f32.mrb[0].mxu0
      %v6641 = vpop.f32.mrb[0].mxu0
      %v6642 = vadd.f32 0.0, %v6641
      %v6643 = vpop.f32.mrb[0].mxu0
      %6644 = vmatprep.mubr.bf16.mxu0 0
      %6645 = vmatmul.mubr.bf16.gmra.mrb[0].mxu0 %v6476
      %v6646 = vpop.f32.mrb[0].mxu0
      %v6647 = vadd.f32 0.0, %v6646
      %v6648 = vpop.f32.mrb[0].mxu0
      %v6649 = vpop.f32.mrb[0].mxu0
      %v6650 = vadd.f32 0.0, %v6649
      %v6651 = vpop.f32.mrb[0].mxu0
      %6652 = vmatprep.mubr.bf16.mxu0 0
      %6653 = vmatmul.mubr.bf16.gmra.mrb[0].mxu0 %v6479
      %v6654 = vpop.f32.mrb[0].mxu0
      %v6655 = vadd.f32 0.0, %v6654
      %v6656 = vpop.f32.mrb[0].mxu0
      %v6657 = vpop.f32.mrb[0].mxu0
      %v6658 = vadd.f32 0.0, %v6657
      %v6659 = vpop.f32.mrb[0].mxu0
      %6660 = vdwg.mxu0
      %v6661 = vadd.f32 %v6389, %v6519
      %v6662 = vadd.f32 %v6390, %v6522
      %v6663 = vadd.f32 %v6391, %v6527
      %v6664 = vadd.f32 %v6392, %v6530
      %v6665 = vadd.f32 %v6393, %v6535
      %v6666 = vadd.f32 %v6394, %v6538
      %v6667 = vadd.f32 %v6395, %v6543
      %v6668 = vadd.f32 %v6396, %v6546
      %v6669 = vadd.f32 %v6397, %v6551
      %v6670 = vadd.f32 %v6398, %v6554
      %v6671 = vadd.f32 %v6399, %v6559
      %v6672 = vadd.f32 %v6400, %v6562
      %v6673 = vadd.f32 %v6401, %v6567
      %v6674 = vadd.f32 %v6402, %v6570
      %v6675 = vadd.f32 %v6403, %v6575
      %v6676 = vadd.f32 %v6404, %v6578
      %v6677 = vadd.f32 %v6405, %v6583
      %v6678 = vadd.f32 %v6406, %v6586
      %v6679 = vadd.f32 %v6407, %v6591
      %v6680 = vadd.f32 %v6408, %v6594
      %v6681 = vadd.f32 %v6409, %v6599
      %v6682 = vadd.f32 %v6410, %v6602
      %v6683 = vadd.f32 %v6411, %v6607
      %v6684 = vadd.f32 %v6412, %v6610
      %v6685 = vadd.f32 %v6413, %v6615
      %v6686 = vadd.f32 %v6414, %v6618
      %v6687 = vadd.f32 %v6415, %v6623
      %v6688 = vadd.f32 %v6416, %v6626
      %v6689 = vadd.f32 %v6417, %v6631
      %v6690 = vadd.f32 %v6418, %v6634
      %v6691 = vadd.f32 %v6419, %v6639
      %v6692 = vadd.f32 %v6420, %v6642
      %v6693 = vadd.f32 %v6421, %v6647
      %v6694 = vadd.f32 %v6422, %v6650
      %v6695 = vadd.f32 %v6423, %v6655
      %v6696 = vadd.f32 %v6424, %v6658
      %6697 = vst.msk [vmem:[#allocation4] sm:$0xff] %vm435, %v6661
      %6698 = vst.msk [vmem:[#allocation4 + $0x8] sm:$0xff] %vm435, %v6662
      %6699 = vst.msk [vmem:[#allocation4 + $0x10] sm:$0xff] %vm435, %v6663
      %6700 = vst.msk [vmem:[#allocation4 + $0x18] sm:$0xff] %vm435, %v6664
      %6701 = vst.msk [vmem:[#allocation4 + $0x20] sm:$0xff] %vm435, %v6665
      %6702 = vst.msk [vmem:[#allocation4 + $0x28] sm:$0xff] %vm435, %v6666
      %6703 = vst.msk [vmem:[#allocation4 + $0x30] sm:$0xff] %vm435, %v6667
      %6704 = vst.msk [vmem:[#allocation4 + $0x38] sm:$0xff] %vm435, %v6668
      %6705 = vst.msk [vmem:[#allocation4 + $0x40] sm:$0xff] %vm435, %v6669
      %6706 = vst.msk [vmem:[#allocation4 + $0x48] sm:$0xff] %vm435, %v6670
      %6707 = vst.msk [vmem:[#allocation4 + $0x50] sm:$0xff] %vm435, %v6671
      %6708 = vst.msk [vmem:[#allocation4 + $0x58] sm:$0xff] %vm435, %v6672
      %6709 = vst.msk [vmem:[#allocation4 + $0x60] sm:$0xff] %vm435, %v6673
      %6710 = vst.msk [vmem:[#allocation4 + $0x68] sm:$0xff] %vm435, %v6674
      %6711 = vst.msk [vmem:[#allocation4 + $0x70] sm:$0xff] %vm435, %v6675
      %6712 = vst.msk [vmem:[#allocation4 + $0x78] sm:$0xff] %vm435, %v6676
      %6713 = vst.msk [vmem:[#allocation4 + $0x80] sm:$0xff] %vm435, %v6677
      %6714 = vst.msk [vmem:[#allocation4 + $0x88] sm:$0xff] %vm435, %v6678
      %6715 = vst.msk [vmem:[#allocation4 + $0x90] sm:$0xff] %vm435, %v6679
      %6716 = vst.msk [vmem:[#allocation4 + $0x98] sm:$0xff] %vm435, %v6680
      %6717 = vst.msk [vmem:[#allocation4 + $0xa0] sm:$0xff] %vm435, %v6681
      %6718 = vst.msk [vmem:[#allocation4 + $0xa8] sm:$0xff] %vm435, %v6682
      %6719 = vst.msk [vmem:[#allocation4 + $0xb0] sm:$0xff] %vm435, %v6683
      %6720 = vst.msk [vmem:[#allocation4 + $0xb8] sm:$0xff] %vm435, %v6684
      %6721 = vst.msk [vmem:[#allocation4 + $0xc0] sm:$0xff] %vm435, %v6685
      %6722 = vst.msk [vmem:[#allocation4 + $0xc8] sm:$0xff] %vm435, %v6686
      %6723 = vst.msk [vmem:[#allocation4 + $0xd0] sm:$0xff] %vm435, %v6687
      %6724 = vst.msk [vmem:[#allocation4 + $0xd8] sm:$0xff] %vm435, %v6688
      %6725 = vst.msk [vmem:[#allocation4 + $0xe0] sm:$0xff] %vm435, %v6689
      %6726 = vst.msk [vmem:[#allocation4 + $0xe8] sm:$0xff] %vm435, %v6690
      %6727 = vst.msk [vmem:[#allocation4 + $0xf0] sm:$0xff] %vm435, %v6691
      %6728 = vst.msk [vmem:[#allocation4 + $0xf8] sm:$0xff] %vm435, %v6692
      %6729 = vst.msk [vmem:[#allocation4 + $0x100] sm:$0xff] %vm435, %v6693
      %6730 = vst.msk [vmem:[#allocation4 + $0x108] sm:$0xff] %vm435, %v6694
      %6731 = vst.msk [vmem:[#allocation4 + $0x110] sm:$0xff] %vm435, %v6695
      %6732 = vst.msk [vmem:[#allocation4 + $0x118] sm:$0xff] %vm435, %v6696
      %v6733 = vld [vmem:[#allocation3 + $0x19] sm:$0xff]
      %v6734 = vld [vmem:[#allocation3 + $0x21] sm:$0xff]
      %v6735 = vld [vmem:[#allocation3 + $0x29] sm:$0xff]
      %v6736 = vld [vmem:[#allocation3 + $0x31] sm:$0xff]
      %v6737 = vld [vmem:[#allocation3 + $0x39] sm:$0xff]
      %v6738 = vld [vmem:[#allocation3 + $0x41] sm:$0xff]
      %v6739 = vld [vmem:[#allocation3 + $0x49] sm:$0xff]
      %v6740 = vld [vmem:[#allocation3 + $0x51] sm:$0xff]
      %v6741 = vld [vmem:[#allocation3 + $0x59] sm:$0xff]
      %v6742 = vld [vmem:[#allocation3 + $0x61] sm:$0xff]
      %v6743 = vld [vmem:[#allocation3 + $0x69] sm:$0xff]
      %v6744 = vld [vmem:[#allocation3 + $0x71] sm:$0xff]
      %v6745 = vld [vmem:[#allocation3 + $0x79] sm:$0xff]
      %v6746 = vld [vmem:[#allocation3 + $0x81] sm:$0xff]
      %v6747 = vld [vmem:[#allocation3 + $0x89] sm:$0xff]
      %v6748 = vld [vmem:[#allocation3 + $0x91] sm:$0xff]
      %v6749 = vld [vmem:[#allocation3 + $0x99] sm:$0xff]
      %v6750 = vld [vmem:[#allocation3 + $0xa1] sm:$0xff]
      %v6751 = vld [vmem:[#allocation3 + $0xa9] sm:$0xff]
      %v6752 = vld [vmem:[#allocation3 + $0xb1] sm:$0xff]
      %v6753 = vld [vmem:[#allocation3 + $0xb9] sm:$0xff]
      %v6754 = vld [vmem:[#allocation3 + $0xc1] sm:$0xff]
      %v6755 = vld [vmem:[#allocation3 + $0xc9] sm:$0xff]
      %v6756 = vld [vmem:[#allocation3 + $0xd1] sm:$0xff]
      %v6757 = vld [vmem:[#allocation3 + $0xd9] sm:$0xff]
      %v6758 = vld [vmem:[#allocation3 + $0xe1] sm:$0xff]
      %v6759 = vld [vmem:[#allocation3 + $0xe9] sm:$0xff]
      %v6760 = vld [vmem:[#allocation3 + $0xf1] sm:$0xff]
      %v6761 = vld [vmem:[#allocation3 + $0xf9] sm:$0xff]
      %v6762 = vld [vmem:[#allocation3 + $0x101] sm:$0xff]
      %v6763 = vld [vmem:[#allocation3 + $0x109] sm:$0xff]
      %v6764 = vld [vmem:[#allocation3 + $0x111] sm:$0xff]
      %v6765 = vld [vmem:[#allocation3 + $0x119] sm:$0xff]
      %v6766 = vld [vmem:[#allocation3 + $0x121] sm:$0xff]
      %v6767 = vld [vmem:[#allocation3 + $0x129] sm:$0xff]
      %v6768 = vld [vmem:[#allocation3 + $0x131] sm:$0xff]
      %v6769 = vpack.c.bf16 %v6734, %v6733
      %v6770 = vpack.c.bf16 %v6736, %v6735
      %v6771 = vpack.c.bf16 %v6738, %v6737
      %v6772 = vpack.c.bf16 %v6740, %v6739
      %v6773 = vpack.c.bf16 %v6742, %v6741
      %v6774 = vpack.c.bf16 %v6744, %v6743
      %v6775 = vpack.c.bf16 %v6746, %v6745
      %v6776 = vpack.c.bf16 %v6748, %v6747
      %v6777 = vpack.c.bf16 %v6750, %v6749
      %v6778 = vpack.c.bf16 %v6752, %v6751
      %v6779 = vpack.c.bf16 %v6754, %v6753
      %v6780 = vpack.c.bf16 %v6756, %v6755
      %v6781 = vpack.c.bf16 %v6758, %v6757
      %v6782 = vpack.c.bf16 %v6760, %v6759
      %v6783 = vpack.c.bf16 %v6762, %v6761
      %v6784 = vpack.c.bf16 %v6764, %v6763
      %v6785 = vpack.c.bf16 %v6766, %v6765
      %v6786 = vpack.c.bf16 %v6768, %v6767
      %v6787 = vld [vmem:[#allocation4] sm:$0xff]
      %v6788 = vld [vmem:[#allocation4 + $0x8] sm:$0xff]
      %v6789 = vld [vmem:[#allocation4 + $0x10] sm:$0xff]
      %v6790 = vld [vmem:[#allocation4 + $0x18] sm:$0xff]
      %v6791 = vld [vmem:[#allocation4 + $0x20] sm:$0xff]
      %v6792 = vld [vmem:[#allocation4 + $0x28] sm:$0xff]
      %v6793 = vld [vmem:[#allocation4 + $0x30] sm:$0xff]
      %v6794 = vld [vmem:[#allocation4 + $0x38] sm:$0xff]
      %v6795 = vld [vmem:[#allocation4 + $0x40] sm:$0xff]
      %v6796 = vld [vmem:[#allocation4 + $0x48] sm:$0xff]
      %v6797 = vld [vmem:[#allocation4 + $0x50] sm:$0xff]
      %v6798 = vld [vmem:[#allocation4 + $0x58] sm:$0xff]
      %v6799 = vld [vmem:[#allocation4 + $0x60] sm:$0xff]
      %v6800 = vld [vmem:[#allocation4 + $0x68] sm:$0xff]
      %v6801 = vld [vmem:[#allocation4 + $0x70] sm:$0xff]
      %v6802 = vld [vmem:[#allocation4 + $0x78] sm:$0xff]
      %v6803 = vld [vmem:[#allocation4 + $0x80] sm:$0xff]
      %v6804 = vld [vmem:[#allocation4 + $0x88] sm:$0xff]
      %v6805 = vld [vmem:[#allocation4 + $0x90] sm:$0xff]
      %v6806 = vld [vmem:[#allocation4 + $0x98] sm:$0xff]
      %v6807 = vld [vmem:[#allocation4 + $0xa0] sm:$0xff]
      %v6808 = vld [vmem:[#allocation4 + $0xa8] sm:$0xff]
      %v6809 = vld [vmem:[#allocation4 + $0xb0] sm:$0xff]
      %v6810 = vld [vmem:[#allocation4 + $0xb8] sm:$0xff]
      %v6811 = vld [vmem:[#allocation4 + $0xc0] sm:$0xff]
      %v6812 = vld [vmem:[#allocation4 + $0xc8] sm:$0xff]
      %v6813 = vld [vmem:[#allocation4 + $0xd0] sm:$0xff]
      %v6814 = vld [vmem:[#allocation4 + $0xd8] sm:$0xff]
      %v6815 = vld [vmem:[#allocation4 + $0xe0] sm:$0xff]
      %v6816 = vld [vmem:[#allocation4 + $0xe8] sm:$0xff]
      %v6817 = vld [vmem:[#allocation4 + $0xf0] sm:$0xff]
      %v6818 = vld [vmem:[#allocation4 + $0xf8] sm:$0xff]
      %v6819 = vld [vmem:[#allocation4 + $0x100] sm:$0xff]
      %v6820 = vld [vmem:[#allocation4 + $0x108] sm:$0xff]
      %v6821 = vld [vmem:[#allocation4 + $0x110] sm:$0xff]
      %v6822 = vld [vmem:[#allocation4 + $0x118] sm:$0xff]
      %s6823 = scalar_lea.vmem %s2, 20
      %v6824 = vld [vmem:[%s6823] sm:$0xf]
      %v6826 = vsel %vm307, %v6769, 0
      %v6829 = vsel %vm307, %v6770, 0
      %v6832 = vsel %vm307, %v6771, 0
      %v6835 = vsel %vm307, %v6772, 0
      %v6838 = vsel %vm307, %v6773, 0
      %v6841 = vsel %vm307, %v6774, 0
      %v6844 = vsel %vm307, %v6775, 0
      %v6847 = vsel %vm307, %v6776, 0
      %v6850 = vsel %vm307, %v6777, 0
      %v6853 = vsel %vm307, %v6778, 0
      %v6856 = vsel %vm307, %v6779, 0
      %v6859 = vsel %vm307, %v6780, 0
      %v6862 = vsel %vm307, %v6781, 0
      %v6865 = vsel %vm307, %v6782, 0
      %v6868 = vsel %vm307, %v6783, 0
      %v6871 = vsel %vm307, %v6784, 0
      %v6874 = vsel %vm307, %v6785, 0
      %v6877 = vsel %vm307, %v6786, 0
      %v6880 = vsel %vm4888, %v6824, 0
      %6882 = vmatprep.subr.bf16.mxu0 0
      %6883 = vmatpush1.bf16.msra.mxu0 %v6880
      %6884 = vmatprep.subr.bf16.mxu0 0
      %6885 = vmatpush1.bf16.msra.mxu0 0
      %6886 = vmatprep.subr.bf16.mxu0 0
      %6887 = vmatpush1.bf16.msra.mxu0 0
      %6888 = vmatprep.subr.bf16.mxu0 0
      %6889 = vmatpush1.bf16.msra.mxu0 0
      %6890 = vmatprep.subr.bf16.mxu0 0
      %6891 = vmatpush1.bf16.msra.mxu0 0
      %6892 = vmatprep.subr.bf16.mxu0 0
      %6893 = vmatpush1.bf16.msra.mxu0 0
      %6894 = vmatprep.subr.bf16.mxu0 0
      %6895 = vmatpush1.bf16.msra.mxu0 0
      %6896 = vmatprep.subr.bf16.mxu0 0
      %6897 = vmatpush1.bf16.msra.mxu0 0
      %6898 = vmatprep.subr.bf16.mxu0 0
      %6899 = vmatpush1.bf16.msra.mxu0 0
      %6900 = vmatprep.subr.bf16.mxu0 0
      %6901 = vmatpush1.bf16.msra.mxu0 0
      %6902 = vmatprep.subr.bf16.mxu0 0
      %6903 = vmatpush1.bf16.msra.mxu0 0
      %6904 = vmatprep.subr.bf16.mxu0 0
      %6905 = vmatpush1.bf16.msra.mxu0 0
      %6906 = vmatprep.subr.bf16.mxu0 0
      %6907 = vmatpush1.bf16.msra.mxu0 0
      %6908 = vmatprep.subr.bf16.mxu0 0
      %6909 = vmatpush1.bf16.msra.mxu0 0
      %6910 = vmatprep.subr.bf16.mxu0 0
      %6911 = vmatpush1.bf16.msra.mxu0 0
      %6912 = vmatprep.subr.bf16.mxu0 0
      %6913 = vmatpush1.bf16.msra.mxu0 0
      %6914 = vmatprep.mubr.bf16.mxu0 0
      %6915 = vmatmul.mubr.bf16.gmra.mrb[0].mxu0 %v6826
      %v6916 = vpop.f32.mrb[0].mxu0
      %v6917 = vadd.f32 0.0, %v6916
      %v6918 = vpop.f32.mrb[0].mxu0
      %v6919 = vpop.f32.mrb[0].mxu0
      %v6920 = vadd.f32 0.0, %v6919
      %v6921 = vpop.f32.mrb[0].mxu0
      %6922 = vmatprep.mubr.bf16.mxu0 0
      %6923 = vmatmul.mubr.bf16.gmra.mrb[0].mxu0 %v6829
      %v6924 = vpop.f32.mrb[0].mxu0
      %v6925 = vadd.f32 0.0, %v6924
      %v6926 = vpop.f32.mrb[0].mxu0
      %v6927 = vpop.f32.mrb[0].mxu0
      %v6928 = vadd.f32 0.0, %v6927
      %v6929 = vpop.f32.mrb[0].mxu0
      %6930 = vmatprep.mubr.bf16.mxu0 0
      %6931 = vmatmul.mubr.bf16.gmra.mrb[0].mxu0 %v6832
      %v6932 = vpop.f32.mrb[0].mxu0
      %v6933 = vadd.f32 0.0, %v6932
      %v6934 = vpop.f32.mrb[0].mxu0
      %v6935 = vpop.f32.mrb[0].mxu0
      %v6936 = vadd.f32 0.0, %v6935
      %v6937 = vpop.f32.mrb[0].mxu0
      %6938 = vmatprep.mubr.bf16.mxu0 0
      %6939 = vmatmul.mubr.bf16.gmra.mrb[0].mxu0 %v6835
      %v6940 = vpop.f32.mrb[0].mxu0
      %v6941 = vadd.f32 0.0, %v6940
      %v6942 = vpop.f32.mrb[0].mxu0
      %v6943 = vpop.f32.mrb[0].mxu0
      %v6944 = vadd.f32 0.0, %v6943
      %v6945 = vpop.f32.mrb[0].mxu0
      %6946 = vmatprep.mubr.bf16.mxu0 0
      %6947 = vmatmul.mubr.bf16.gmra.mrb[0].mxu0 %v6838
      %v6948 = vpop.f32.mrb[0].mxu0
      %v6949 = vadd.f32 0.0, %v6948
      %v6950 = vpop.f32.mrb[0].mxu0
      %v6951 = vpop.f32.mrb[0].mxu0
      %v6952 = vadd.f32 0.0, %v6951
      %v6953 = vpop.f32.mrb[0].mxu0
      %6954 = vmatprep.mubr.bf16.mxu0 0
      %6955 = vmatmul.mubr.bf16.gmra.mrb[0].mxu0 %v6841
      %v6956 = vpop.f32.mrb[0].mxu0
      %v6957 = vadd.f32 0.0, %v6956
      %v6958 = vpop.f32.mrb[0].mxu0
      %v6959 = vpop.f32.mrb[0].mxu0
      %v6960 = vadd.f32 0.0, %v6959
      %v6961 = vpop.f32.mrb[0].mxu0
      %6962 = vmatprep.mubr.bf16.mxu0 0
      %6963 = vmatmul.mubr.bf16.gmra.mrb[0].mxu0 %v6844
      %v6964 = vpop.f32.mrb[0].mxu0
      %v6965 = vadd.f32 0.0, %v6964
      %v6966 = vpop.f32.mrb[0].mxu0
      %v6967 = vpop.f32.mrb[0].mxu0
      %v6968 = vadd.f32 0.0, %v6967
      %v6969 = vpop.f32.mrb[0].mxu0
      %6970 = vmatprep.mubr.bf16.mxu0 0
      %6971 = vmatmul.mubr.bf16.gmra.mrb[0].mxu0 %v6847
      %v6972 = vpop.f32.mrb[0].mxu0
      %v6973 = vadd.f32 0.0, %v6972
      %v6974 = vpop.f32.mrb[0].mxu0
      %v6975 = vpop.f32.mrb[0].mxu0
      %v6976 = vadd.f32 0.0, %v6975
      %v6977 = vpop.f32.mrb[0].mxu0
      %6978 = vmatprep.mubr.bf16.mxu0 0
      %6979 = vmatmul.mubr.bf16.gmra.mrb[0].mxu0 %v6850
      %v6980 = vpop.f32.mrb[0].mxu0
      %v6981 = vadd.f32 0.0, %v6980
      %v6982 = vpop.f32.mrb[0].mxu0
      %v6983 = vpop.f32.mrb[0].mxu0
      %v6984 = vadd.f32 0.0, %v6983
      %v6985 = vpop.f32.mrb[0].mxu0
      %6986 = vmatprep.mubr.bf16.mxu0 0
      %6987 = vmatmul.mubr.bf16.gmra.mrb[0].mxu0 %v6853
      %v6988 = vpop.f32.mrb[0].mxu0
      %v6989 = vadd.f32 0.0, %v6988
      %v6990 = vpop.f32.mrb[0].mxu0
      %v6991 = vpop.f32.mrb[0].mxu0
      %v6992 = vadd.f32 0.0, %v6991
      %v6993 = vpop.f32.mrb[0].mxu0
      %6994 = vmatprep.mubr.bf16.mxu0 0
      %6995 = vmatmul.mubr.bf16.gmra.mrb[0].mxu0 %v6856
      %v6996 = vpop.f32.mrb[0].mxu0
      %v6997 = vadd.f32 0.0, %v6996
      %v6998 = vpop.f32.mrb[0].mxu0
      %v6999 = vpop.f32.mrb[0].mxu0
      %v7000 = vadd.f32 0.0, %v6999
      %v7001 = vpop.f32.mrb[0].mxu0
      %7002 = vmatprep.mubr.bf16.mxu0 0
      %7003 = vmatmul.mubr.bf16.gmra.mrb[0].mxu0 %v6859
      %v7004 = vpop.f32.mrb[0].mxu0
      %v7005 = vadd.f32 0.0, %v7004
      %v7006 = vpop.f32.mrb[0].mxu0
      %v7007 = vpop.f32.mrb[0].mxu0
      %v7008 = vadd.f32 0.0, %v7007
      %v7009 = vpop.f32.mrb[0].mxu0
      %7010 = vmatprep.mubr.bf16.mxu0 0
      %7011 = vmatmul.mubr.bf16.gmra.mrb[0].mxu0 %v6862
      %v7012 = vpop.f32.mrb[0].mxu0
      %v7013 = vadd.f32 0.0, %v7012
      %v7014 = vpop.f32.mrb[0].mxu0
      %v7015 = vpop.f32.mrb[0].mxu0
      %v7016 = vadd.f32 0.0, %v7015
      %v7017 = vpop.f32.mrb[0].mxu0
      %7018 = vmatprep.mubr.bf16.mxu0 0
      %7019 = vmatmul.mubr.bf16.gmra.mrb[0].mxu0 %v6865
      %v7020 = vpop.f32.mrb[0].mxu0
      %v7021 = vadd.f32 0.0, %v7020
      %v7022 = vpop.f32.mrb[0].mxu0
      %v7023 = vpop.f32.mrb[0].mxu0
      %v7024 = vadd.f32 0.0, %v7023
      %v7025 = vpop.f32.mrb[0].mxu0
      %7026 = vmatprep.mubr.bf16.mxu0 0
      %7027 = vmatmul.mubr.bf16.gmra.mrb[0].mxu0 %v6868
      %v7028 = vpop.f32.mrb[0].mxu0
      %v7029 = vadd.f32 0.0, %v7028
      %v7030 = vpop.f32.mrb[0].mxu0
      %v7031 = vpop.f32.mrb[0].mxu0
      %v7032 = vadd.f32 0.0, %v7031
      %v7033 = vpop.f32.mrb[0].mxu0
      %7034 = vmatprep.mubr.bf16.mxu0 0
      %7035 = vmatmul.mubr.bf16.gmra.mrb[0].mxu0 %v6871
      %v7036 = vpop.f32.mrb[0].mxu0
      %v7037 = vadd.f32 0.0, %v7036
      %v7038 = vpop.f32.mrb[0].mxu0
      %v7039 = vpop.f32.mrb[0].mxu0
      %v7040 = vadd.f32 0.0, %v7039
      %v7041 = vpop.f32.mrb[0].mxu0
      %7042 = vmatprep.mubr.bf16.mxu0 0
      %7043 = vmatmul.mubr.bf16.gmra.mrb[0].mxu0 %v6874
      %v7044 = vpop.f32.mrb[0].mxu0
      %v7045 = vadd.f32 0.0, %v7044
      %v7046 = vpop.f32.mrb[0].mxu0
      %v7047 = vpop.f32.mrb[0].mxu0
      %v7048 = vadd.f32 0.0, %v7047
      %v7049 = vpop.f32.mrb[0].mxu0
      %7050 = vmatprep.mubr.bf16.mxu0 0
      %7051 = vmatmul.mubr.bf16.gmra.mrb[0].mxu0 %v6877
      %v7052 = vpop.f32.mrb[0].mxu0
      %v7053 = vadd.f32 0.0, %v7052
      %v7054 = vpop.f32.mrb[0].mxu0
      %v7055 = vpop.f32.mrb[0].mxu0
      %v7056 = vadd.f32 0.0, %v7055
      %v7057 = vpop.f32.mrb[0].mxu0
      %7058 = vdwg.mxu0
      %v7059 = vadd.f32 %v6787, %v6917
      %v7060 = vadd.f32 %v6788, %v6920
      %v7061 = vadd.f32 %v6789, %v6925
      %v7062 = vadd.f32 %v6790, %v6928
      %v7063 = vadd.f32 %v6791, %v6933
      %v7064 = vadd.f32 %v6792, %v6936
      %v7065 = vadd.f32 %v6793, %v6941
      %v7066 = vadd.f32 %v6794, %v6944
      %v7067 = vadd.f32 %v6795, %v6949
      %v7068 = vadd.f32 %v6796, %v6952
      %v7069 = vadd.f32 %v6797, %v6957
      %v7070 = vadd.f32 %v6798, %v6960
      %v7071 = vadd.f32 %v6799, %v6965
      %v7072 = vadd.f32 %v6800, %v6968
      %v7073 = vadd.f32 %v6801, %v6973
      %v7074 = vadd.f32 %v6802, %v6976
      %v7075 = vadd.f32 %v6803, %v6981
      %v7076 = vadd.f32 %v6804, %v6984
      %v7077 = vadd.f32 %v6805, %v6989
      %v7078 = vadd.f32 %v6806, %v6992
      %v7079 = vadd.f32 %v6807, %v6997
      %v7080 = vadd.f32 %v6808, %v7000
      %v7081 = vadd.f32 %v6809, %v7005
      %v7082 = vadd.f32 %v6810, %v7008
      %v7083 = vadd.f32 %v6811, %v7013
      %v7084 = vadd.f32 %v6812, %v7016
      %v7085 = vadd.f32 %v6813, %v7021
      %v7086 = vadd.f32 %v6814, %v7024
      %v7087 = vadd.f32 %v6815, %v7029
      %v7088 = vadd.f32 %v6816, %v7032
      %v7089 = vadd.f32 %v6817, %v7037
      %v7090 = vadd.f32 %v6818, %v7040
      %v7091 = vadd.f32 %v6819, %v7045
      %v7092 = vadd.f32 %v6820, %v7048
      %v7093 = vadd.f32 %v6821, %v7053
      %v7094 = vadd.f32 %v6822, %v7056
      %7095 = vst.msk [vmem:[#allocation4] sm:$0xff] %vm435, %v7059
      %7096 = vst.msk [vmem:[#allocation4 + $0x8] sm:$0xff] %vm435, %v7060
      %7097 = vst.msk [vmem:[#allocation4 + $0x10] sm:$0xff] %vm435, %v7061
      %7098 = vst.msk [vmem:[#allocation4 + $0x18] sm:$0xff] %vm435, %v7062
      %7099 = vst.msk [vmem:[#allocation4 + $0x20] sm:$0xff] %vm435, %v7063
      %7100 = vst.msk [vmem:[#allocation4 + $0x28] sm:$0xff] %vm435, %v7064
      %7101 = vst.msk [vmem:[#allocation4 + $0x30] sm:$0xff] %vm435, %v7065
      %7102 = vst.msk [vmem:[#allocation4 + $0x38] sm:$0xff] %vm435, %v7066
      %7103 = vst.msk [vmem:[#allocation4 + $0x40] sm:$0xff] %vm435, %v7067
      %7104 = vst.msk [vmem:[#allocation4 + $0x48] sm:$0xff] %vm435, %v7068
      %7105 = vst.msk [vmem:[#allocation4 + $0x50] sm:$0xff] %vm435, %v7069
      %7106 = vst.msk [vmem:[#allocation4 + $0x58] sm:$0xff] %vm435, %v7070
      %7107 = vst.msk [vmem:[#allocation4 + $0x60] sm:$0xff] %vm435, %v7071
      %7108 = vst.msk [vmem:[#allocation4 + $0x68] sm:$0xff] %vm435, %v7072
      %7109 = vst.msk [vmem:[#allocation4 + $0x70] sm:$0xff] %vm435, %v7073
      %7110 = vst.msk [vmem:[#allocation4 + $0x78] sm:$0xff] %vm435, %v7074
      %7111 = vst.msk [vmem:[#allocation4 + $0x80] sm:$0xff] %vm435, %v7075
      %7112 = vst.msk [vmem:[#allocation4 + $0x88] sm:$0xff] %vm435, %v7076
      %7113 = vst.msk [vmem:[#allocation4 + $0x90] sm:$0xff] %vm435, %v7077
      %7114 = vst.msk [vmem:[#allocation4 + $0x98] sm:$0xff] %vm435, %v7078
      %7115 = vst.msk [vmem:[#allocation4 + $0xa0] sm:$0xff] %vm435, %v7079
      %7116 = vst.msk [vmem:[#allocation4 + $0xa8] sm:$0xff] %vm435, %v7080
      %7117 = vst.msk [vmem:[#allocation4 + $0xb0] sm:$0xff] %vm435, %v7081
      %7118 = vst.msk [vmem:[#allocation4 + $0xb8] sm:$0xff] %vm435, %v7082
      %7119 = vst.msk [vmem:[#allocation4 + $0xc0] sm:$0xff] %vm435, %v7083
      %7120 = vst.msk [vmem:[#allocation4 + $0xc8] sm:$0xff] %vm435, %v7084
      %7121 = vst.msk [vmem:[#allocation4 + $0xd0] sm:$0xff] %vm435, %v7085
      %7122 = vst.msk [vmem:[#allocation4 + $0xd8] sm:$0xff] %vm435, %v7086
      %7123 = vst.msk [vmem:[#allocation4 + $0xe0] sm:$0xff] %vm435, %v7087
      %7124 = vst.msk [vmem:[#allocation4 + $0xe8] sm:$0xff] %vm435, %v7088
      %7125 = vst.msk [vmem:[#allocation4 + $0xf0] sm:$0xff] %vm435, %v7089
      %7126 = vst.msk [vmem:[#allocation4 + $0xf8] sm:$0xff] %vm435, %v7090
      %7127 = vst.msk [vmem:[#allocation4 + $0x100] sm:$0xff] %vm435, %v7091
      %7128 = vst.msk [vmem:[#allocation4 + $0x108] sm:$0xff] %vm435, %v7092
      %7129 = vst.msk [vmem:[#allocation4 + $0x110] sm:$0xff] %vm435, %v7093
      %7130 = vst.msk [vmem:[#allocation4 + $0x118] sm:$0xff] %vm435, %v7094
      %v7131 = vld [vmem:[#allocation3 + $0x29] sm:$0xff]
      %v7132 = vld [vmem:[#allocation3 + $0x31] sm:$0xff]
      %v7133 = vld [vmem:[#allocation3 + $0x39] sm:$0xff]
      %v7134 = vld [vmem:[#allocation3 + $0x41] sm:$0xff]
      %v7135 = vld [vmem:[#allocation3 + $0x49] sm:$0xff]
      %v7136 = vld [vmem:[#allocation3 + $0x51] sm:$0xff]
      %v7137 = vld [vmem:[#allocation3 + $0x59] sm:$0xff]
      %v7138 = vld [vmem:[#allocation3 + $0x61] sm:$0xff]
      %v7139 = vld [vmem:[#allocation3 + $0x69] sm:$0xff]
      %v7140 = vld [vmem:[#allocation3 + $0x71] sm:$0xff]
      %v7141 = vld [vmem:[#allocation3 + $0x79] sm:$0xff]
      %v7142 = vld [vmem:[#allocation3 + $0x81] sm:$0xff]
      %v7143 = vld [vmem:[#allocation3 + $0x89] sm:$0xff]
      %v7144 = vld [vmem:[#allocation3 + $0x91] sm:$0xff]
      %v7145 = vld [vmem:[#allocation3 + $0x99] sm:$0xff]
      %v7146 = vld [vmem:[#allocation3 + $0xa1] sm:$0xff]
      %v7147 = vld [vmem:[#allocation3 + $0xa9] sm:$0xff]
      %v7148 = vld [vmem:[#allocation3 + $0xb1] sm:$0xff]
      %v7149 = vld [vmem:[#allocation3 + $0xb9] sm:$0xff]
      %v7150 = vld [vmem:[#allocation3 + $0xc1] sm:$0xff]
      %v7151 = vld [vmem:[#allocation3 + $0xc9] sm:$0xff]
      %v7152 = vld [vmem:[#allocation3 + $0xd1] sm:$0xff]
      %v7153 = vld [vmem:[#allocation3 + $0xd9] sm:$0xff]
      %v7154 = vld [vmem:[#allocation3 + $0xe1] sm:$0xff]
      %v7155 = vld [vmem:[#allocation3 + $0xe9] sm:$0xff]
      %v7156 = vld [vmem:[#allocation3 + $0xf1] sm:$0xff]
      %v7157 = vld [vmem:[#allocation3 + $0xf9] sm:$0xff]
      %v7158 = vld [vmem:[#allocation3 + $0x101] sm:$0xff]
      %v7159 = vld [vmem:[#allocation3 + $0x109] sm:$0xff]
      %v7160 = vld [vmem:[#allocation3 + $0x111] sm:$0xff]
      %v7161 = vld [vmem:[#allocation3 + $0x119] sm:$0xff]
      %v7162 = vld [vmem:[#allocation3 + $0x121] sm:$0xff]
      %v7163 = vld [vmem:[#allocation3 + $0x129] sm:$0xff]
      %v7164 = vld [vmem:[#allocation3 + $0x131] sm:$0xff]
      %v7165 = vld [vmem:[#allocation3 + $0x139] sm:$0xff]
      %v7166 = vld [vmem:[#allocation3 + $0x141] sm:$0xff]
      %v7167 = vpack.c.bf16 %v7132, %v7131
      %v7168 = vpack.c.bf16 %v7134, %v7133
      %v7169 = vpack.c.bf16 %v7136, %v7135
      %v7170 = vpack.c.bf16 %v7138, %v7137
      %v7171 = vpack.c.bf16 %v7140, %v7139
      %v7172 = vpack.c.bf16 %v7142, %v7141
      %v7173 = vpack.c.bf16 %v7144, %v7143
      %v7174 = vpack.c.bf16 %v7146, %v7145
      %v7175 = vpack.c.bf16 %v7148, %v7147
      %v7176 = vpack.c.bf16 %v7150, %v7149
      %v7177 = vpack.c.bf16 %v7152, %v7151
      %v7178 = vpack.c.bf16 %v7154, %v7153
      %v7179 = vpack.c.bf16 %v7156, %v7155
      %v7180 = vpack.c.bf16 %v7158, %v7157
      %v7181 = vpack.c.bf16 %v7160, %v7159
      %v7182 = vpack.c.bf16 %v7162, %v7161
      %v7183 = vpack.c.bf16 %v7164, %v7163
      %v7184 = vpack.c.bf16 %v7166, %v7165
      %v7185 = vld [vmem:[#allocation4] sm:$0xff]
      %v7186 = vld [vmem:[#allocation4 + $0x8] sm:$0xff]
      %v7187 = vld [vmem:[#allocation4 + $0x10] sm:$0xff]
      %v7188 = vld [vmem:[#allocation4 + $0x18] sm:$0xff]
      %v7189 = vld [vmem:[#allocation4 + $0x20] sm:$0xff]
      %v7190 = vld [vmem:[#allocation4 + $0x28] sm:$0xff]
      %v7191 = vld [vmem:[#allocation4 + $0x30] sm:$0xff]
      %v7192 = vld [vmem:[#allocation4 + $0x38] sm:$0xff]
      %v7193 = vld [vmem:[#allocation4 + $0x40] sm:$0xff]
      %v7194 = vld [vmem:[#allocation4 + $0x48] sm:$0xff]
      %v7195 = vld [vmem:[#allocation4 + $0x50] sm:$0xff]
      %v7196 = vld [vmem:[#allocation4 + $0x58] sm:$0xff]
      %v7197 = vld [vmem:[#allocation4 + $0x60] sm:$0xff]
      %v7198 = vld [vmem:[#allocation4 + $0x68] sm:$0xff]
      %v7199 = vld [vmem:[#allocation4 + $0x70] sm:$0xff]
      %v7200 = vld [vmem:[#allocation4 + $0x78] sm:$0xff]
      %v7201 = vld [vmem:[#allocation4 + $0x80] sm:$0xff]
      %v7202 = vld [vmem:[#allocation4 + $0x88] sm:$0xff]
      %v7203 = vld [vmem:[#allocation4 + $0x90] sm:$0xff]
      %v7204 = vld [vmem:[#allocation4 + $0x98] sm:$0xff]
      %v7205 = vld [vmem:[#allocation4 + $0xa0] sm:$0xff]
      %v7206 = vld [vmem:[#allocation4 + $0xa8] sm:$0xff]
      %v7207 = vld [vmem:[#allocation4 + $0xb0] sm:$0xff]
      %v7208 = vld [vmem:[#allocation4 + $0xb8] sm:$0xff]
      %v7209 = vld [vmem:[#allocation4 + $0xc0] sm:$0xff]
      %v7210 = vld [vmem:[#allocation4 + $0xc8] sm:$0xff]
      %v7211 = vld [vmem:[#allocation4 + $0xd0] sm:$0xff]
      %v7212 = vld [vmem:[#allocation4 + $0xd8] sm:$0xff]
      %v7213 = vld [vmem:[#allocation4 + $0xe0] sm:$0xff]
      %v7214 = vld [vmem:[#allocation4 + $0xe8] sm:$0xff]
      %v7215 = vld [vmem:[#allocation4 + $0xf0] sm:$0xff]
      %v7216 = vld [vmem:[#allocation4 + $0xf8] sm:$0xff]
      %v7217 = vld [vmem:[#allocation4 + $0x100] sm:$0xff]
      %v7218 = vld [vmem:[#allocation4 + $0x108] sm:$0xff]
      %v7219 = vld [vmem:[#allocation4 + $0x110] sm:$0xff]
      %v7220 = vld [vmem:[#allocation4 + $0x118] sm:$0xff]
      %s7221 = scalar_lea.vmem %s2, 24
      %v7222 = vld [vmem:[%s7221] sm:$0xf]
      %v7224 = vsel %vm307, %v7167, 0
      %v7227 = vsel %vm307, %v7168, 0
      %v7230 = vsel %vm307, %v7169, 0
      %v7233 = vsel %vm307, %v7170, 0
      %v7236 = vsel %vm307, %v7171, 0
      %v7239 = vsel %vm307, %v7172, 0
      %v7242 = vsel %vm307, %v7173, 0
      %v7245 = vsel %vm307, %v7174, 0
      %v7248 = vsel %vm307, %v7175, 0
      %v7251 = vsel %vm307, %v7176, 0
      %v7254 = vsel %vm307, %v7177, 0
      %v7257 = vsel %vm307, %v7178, 0
      %v7260 = vsel %vm307, %v7179, 0
      %v7263 = vsel %vm307, %v7180, 0
      %v7266 = vsel %vm307, %v7181, 0
      %v7269 = vsel %vm307, %v7182, 0
      %v7272 = vsel %vm307, %v7183, 0
      %v7275 = vsel %vm307, %v7184, 0
      %v7278 = vsel %vm4888, %v7222, 0
      %7280 = vmatprep.subr.bf16.mxu0 0
      %7281 = vmatpush1.bf16.msra.mxu0 %v7278
      %7282 = vmatprep.subr.bf16.mxu0 0
      %7283 = vmatpush1.bf16.msra.mxu0 0
      %7284 = vmatprep.subr.bf16.mxu0 0
      %7285 = vmatpush1.bf16.msra.mxu0 0
      %7286 = vmatprep.subr.bf16.mxu0 0
      %7287 = vmatpush1.bf16.msra.mxu0 0
      %7288 = vmatprep.subr.bf16.mxu0 0
      %7289 = vmatpush1.bf16.msra.mxu0 0
      %7290 = vmatprep.subr.bf16.mxu0 0
      %7291 = vmatpush1.bf16.msra.mxu0 0
      %7292 = vmatprep.subr.bf16.mxu0 0
      %7293 = vmatpush1.bf16.msra.mxu0 0
      %7294 = vmatprep.subr.bf16.mxu0 0
      %7295 = vmatpush1.bf16.msra.mxu0 0
      %7296 = vmatprep.subr.bf16.mxu0 0
      %7297 = vmatpush1.bf16.msra.mxu0 0
      %7298 = vmatprep.subr.bf16.mxu0 0
      %7299 = vmatpush1.bf16.msra.mxu0 0
      %7300 = vmatprep.subr.bf16.mxu0 0
      %7301 = vmatpush1.bf16.msra.mxu0 0
      %7302 = vmatprep.subr.bf16.mxu0 0
      %7303 = vmatpush1.bf16.msra.mxu0 0
      %7304 = vmatprep.subr.bf16.mxu0 0
      %7305 = vmatpush1.bf16.msra.mxu0 0
      %7306 = vmatprep.subr.bf16.mxu0 0
      %7307 = vmatpush1.bf16.msra.mxu0 0
      %7308 = vmatprep.subr.bf16.mxu0 0
      %7309 = vmatpush1.bf16.msra.mxu0 0
      %7310 = vmatprep.subr.bf16.mxu0 0
      %7311 = vmatpush1.bf16.msra.mxu0 0
      %7312 = vmatprep.mubr.bf16.mxu0 0
      %7313 = vmatmul.mubr.bf16.gmra.mrb[0].mxu0 %v7224
      %v7314 = vpop.f32.mrb[0].mxu0
      %v7315 = vadd.f32 0.0, %v7314
      %v7316 = vpop.f32.mrb[0].mxu0
      %v7317 = vpop.f32.mrb[0].mxu0
      %v7318 = vadd.f32 0.0, %v7317
      %v7319 = vpop.f32.mrb[0].mxu0
      %7320 = vmatprep.mubr.bf16.mxu0 0
      %7321 = vmatmul.mubr.bf16.gmra.mrb[0].mxu0 %v7227
      %v7322 = vpop.f32.mrb[0].mxu0
      %v7323 = vadd.f32 0.0, %v7322
      %v7324 = vpop.f32.mrb[0].mxu0
      %v7325 = vpop.f32.mrb[0].mxu0
      %v7326 = vadd.f32 0.0, %v7325
      %v7327 = vpop.f32.mrb[0].mxu0
      %7328 = vmatprep.mubr.bf16.mxu0 0
      %7329 = vmatmul.mubr.bf16.gmra.mrb[0].mxu0 %v7230
      %v7330 = vpop.f32.mrb[0].mxu0
      %v7331 = vadd.f32 0.0, %v7330
      %v7332 = vpop.f32.mrb[0].mxu0
      %v7333 = vpop.f32.mrb[0].mxu0
      %v7334 = vadd.f32 0.0, %v7333
      %v7335 = vpop.f32.mrb[0].mxu0
      %7336 = vmatprep.mubr.bf16.mxu0 0
      %7337 = vmatmul.mubr.bf16.gmra.mrb[0].mxu0 %v7233
      %v7338 = vpop.f32.mrb[0].mxu0
      %v7339 = vadd.f32 0.0, %v7338
      %v7340 = vpop.f32.mrb[0].mxu0
      %v7341 = vpop.f32.mrb[0].mxu0
      %v7342 = vadd.f32 0.0, %v7341
      %v7343 = vpop.f32.mrb[0].mxu0
      %7344 = vmatprep.mubr.bf16.mxu0 0
      %7345 = vmatmul.mubr.bf16.gmra.mrb[0].mxu0 %v7236
      %v7346 = vpop.f32.mrb[0].mxu0
      %v7347 = vadd.f32 0.0, %v7346
      %v7348 = vpop.f32.mrb[0].mxu0
      %v7349 = vpop.f32.mrb[0].mxu0
      %v7350 = vadd.f32 0.0, %v7349
      %v7351 = vpop.f32.mrb[0].mxu0
      %7352 = vmatprep.mubr.bf16.mxu0 0
      %7353 = vmatmul.mubr.bf16.gmra.mrb[0].mxu0 %v7239
      %v7354 = vpop.f32.mrb[0].mxu0
      %v7355 = vadd.f32 0.0, %v7354
      %v7356 = vpop.f32.mrb[0].mxu0
      %v7357 = vpop.f32.mrb[0].mxu0
      %v7358 = vadd.f32 0.0, %v7357
      %v7359 = vpop.f32.mrb[0].mxu0
      %7360 = vmatprep.mubr.bf16.mxu0 0
      %7361 = vmatmul.mubr.bf16.gmra.mrb[0].mxu0 %v7242
      %v7362 = vpop.f32.mrb[0].mxu0
      %v7363 = vadd.f32 0.0, %v7362
      %v7364 = vpop.f32.mrb[0].mxu0
      %v7365 = vpop.f32.mrb[0].mxu0
      %v7366 = vadd.f32 0.0, %v7365
      %v7367 = vpop.f32.mrb[0].mxu0
      %7368 = vmatprep.mubr.bf16.mxu0 0
      %7369 = vmatmul.mubr.bf16.gmra.mrb[0].mxu0 %v7245
      %v7370 = vpop.f32.mrb[0].mxu0
      %v7371 = vadd.f32 0.0, %v7370
      %v7372 = vpop.f32.mrb[0].mxu0
      %v7373 = vpop.f32.mrb[0].mxu0
      %v7374 = vadd.f32 0.0, %v7373
      %v7375 = vpop.f32.mrb[0].mxu0
      %7376 = vmatprep.mubr.bf16.mxu0 0
      %7377 = vmatmul.mubr.bf16.gmra.mrb[0].mxu0 %v7248
      %v7378 = vpop.f32.mrb[0].mxu0
      %v7379 = vadd.f32 0.0, %v7378
      %v7380 = vpop.f32.mrb[0].mxu0
      %v7381 = vpop.f32.mrb[0].mxu0
      %v7382 = vadd.f32 0.0, %v7381
      %v7383 = vpop.f32.mrb[0].mxu0
      %7384 = vmatprep.mubr.bf16.mxu0 0
      %7385 = vmatmul.mubr.bf16.gmra.mrb[0].mxu0 %v7251
      %v7386 = vpop.f32.mrb[0].mxu0
      %v7387 = vadd.f32 0.0, %v7386
      %v7388 = vpop.f32.mrb[0].mxu0
      %v7389 = vpop.f32.mrb[0].mxu0
      %v7390 = vadd.f32 0.0, %v7389
      %v7391 = vpop.f32.mrb[0].mxu0
      %7392 = vmatprep.mubr.bf16.mxu0 0
      %7393 = vmatmul.mubr.bf16.gmra.mrb[0].mxu0 %v7254
      %v7394 = vpop.f32.mrb[0].mxu0
      %v7395 = vadd.f32 0.0, %v7394
      %v7396 = vpop.f32.mrb[0].mxu0
      %v7397 = vpop.f32.mrb[0].mxu0
      %v7398 = vadd.f32 0.0, %v7397
      %v7399 = vpop.f32.mrb[0].mxu0
      %7400 = vmatprep.mubr.bf16.mxu0 0
      %7401 = vmatmul.mubr.bf16.gmra.mrb[0].mxu0 %v7257
      %v7402 = vpop.f32.mrb[0].mxu0
      %v7403 = vadd.f32 0.0, %v7402
      %v7404 = vpop.f32.mrb[0].mxu0
      %v7405 = vpop.f32.mrb[0].mxu0
      %v7406 = vadd.f32 0.0, %v7405
      %v7407 = vpop.f32.mrb[0].mxu0
      %7408 = vmatprep.mubr.bf16.mxu0 0
      %7409 = vmatmul.mubr.bf16.gmra.mrb[0].mxu0 %v7260
      %v7410 = vpop.f32.mrb[0].mxu0
      %v7411 = vadd.f32 0.0, %v7410
      %v7412 = vpop.f32.mrb[0].mxu0
      %v7413 = vpop.f32.mrb[0].mxu0
      %v7414 = vadd.f32 0.0, %v7413
      %v7415 = vpop.f32.mrb[0].mxu0
      %7416 = vmatprep.mubr.bf16.mxu0 0
      %7417 = vmatmul.mubr.bf16.gmra.mrb[0].mxu0 %v7263
      %v7418 = vpop.f32.mrb[0].mxu0
      %v7419 = vadd.f32 0.0, %v7418
      %v7420 = vpop.f32.mrb[0].mxu0
      %v7421 = vpop.f32.mrb[0].mxu0
      %v7422 = vadd.f32 0.0, %v7421
      %v7423 = vpop.f32.mrb[0].mxu0
      %7424 = vmatprep.mubr.bf16.mxu0 0
      %7425 = vmatmul.mubr.bf16.gmra.mrb[0].mxu0 %v7266
      %v7426 = vpop.f32.mrb[0].mxu0
      %v7427 = vadd.f32 0.0, %v7426
      %v7428 = vpop.f32.mrb[0].mxu0
      %v7429 = vpop.f32.mrb[0].mxu0
      %v7430 = vadd.f32 0.0, %v7429
      %v7431 = vpop.f32.mrb[0].mxu0
      %7432 = vmatprep.mubr.bf16.mxu0 0
      %7433 = vmatmul.mubr.bf16.gmra.mrb[0].mxu0 %v7269
      %v7434 = vpop.f32.mrb[0].mxu0
      %v7435 = vadd.f32 0.0, %v7434
      %v7436 = vpop.f32.mrb[0].mxu0
      %v7437 = vpop.f32.mrb[0].mxu0
      %v7438 = vadd.f32 0.0, %v7437
      %v7439 = vpop.f32.mrb[0].mxu0
      %7440 = vmatprep.mubr.bf16.mxu0 0
      %7441 = vmatmul.mubr.bf16.gmra.mrb[0].mxu0 %v7272
      %v7442 = vpop.f32.mrb[0].mxu0
      %v7443 = vadd.f32 0.0, %v7442
      %v7444 = vpop.f32.mrb[0].mxu0
      %v7445 = vpop.f32.mrb[0].mxu0
      %v7446 = vadd.f32 0.0, %v7445
      %v7447 = vpop.f32.mrb[0].mxu0
      %7448 = vmatprep.mubr.bf16.mxu0 0
      %7449 = vmatmul.mubr.bf16.gmra.mrb[0].mxu0 %v7275
      %v7450 = vpop.f32.mrb[0].mxu0
      %v7451 = vadd.f32 0.0, %v7450
      %v7452 = vpop.f32.mrb[0].mxu0
      %v7453 = vpop.f32.mrb[0].mxu0
      %v7454 = vadd.f32 0.0, %v7453
      %v7455 = vpop.f32.mrb[0].mxu0
      %7456 = vdwg.mxu0
      %v7457 = vadd.f32 %v7185, %v7315
      %v7458 = vadd.f32 %v7186, %v7318
      %v7459 = vadd.f32 %v7187, %v7323
      %v7460 = vadd.f32 %v7188, %v7326
      %v7461 = vadd.f32 %v7189, %v7331
      %v7462 = vadd.f32 %v7190, %v7334
      %v7463 = vadd.f32 %v7191, %v7339
      %v7464 = vadd.f32 %v7192, %v7342
      %v7465 = vadd.f32 %v7193, %v7347
      %v7466 = vadd.f32 %v7194, %v7350
      %v7467 = vadd.f32 %v7195, %v7355
      %v7468 = vadd.f32 %v7196, %v7358
      %v7469 = vadd.f32 %v7197, %v7363
      %v7470 = vadd.f32 %v7198, %v7366
      %v7471 = vadd.f32 %v7199, %v7371
      %v7472 = vadd.f32 %v7200, %v7374
      %v7473 = vadd.f32 %v7201, %v7379
      %v7474 = vadd.f32 %v7202, %v7382
      %v7475 = vadd.f32 %v7203, %v7387
      %v7476 = vadd.f32 %v7204, %v7390
      %v7477 = vadd.f32 %v7205, %v7395
      %v7478 = vadd.f32 %v7206, %v7398
      %v7479 = vadd.f32 %v7207, %v7403
      %v7480 = vadd.f32 %v7208, %v7406
      %v7481 = vadd.f32 %v7209, %v7411
      %v7482 = vadd.f32 %v7210, %v7414
      %v7483 = vadd.f32 %v7211, %v7419
      %v7484 = vadd.f32 %v7212, %v7422
      %v7485 = vadd.f32 %v7213, %v7427
      %v7486 = vadd.f32 %v7214, %v7430
      %v7487 = vadd.f32 %v7215, %v7435
      %v7488 = vadd.f32 %v7216, %v7438
      %v7489 = vadd.f32 %v7217, %v7443
      %v7490 = vadd.f32 %v7218, %v7446
      %v7491 = vadd.f32 %v7219, %v7451
      %v7492 = vadd.f32 %v7220, %v7454
      %7493 = vst.msk [vmem:[#allocation4] sm:$0xff] %vm435, %v7457
      %7494 = vst.msk [vmem:[#allocation4 + $0x8] sm:$0xff] %vm435, %v7458
      %7495 = vst.msk [vmem:[#allocation4 + $0x10] sm:$0xff] %vm435, %v7459
      %7496 = vst.msk [vmem:[#allocation4 + $0x18] sm:$0xff] %vm435, %v7460
      %7497 = vst.msk [vmem:[#allocation4 + $0x20] sm:$0xff] %vm435, %v7461
      %7498 = vst.msk [vmem:[#allocation4 + $0x28] sm:$0xff] %vm435, %v7462
      %7499 = vst.msk [vmem:[#allocation4 + $0x30] sm:$0xff] %vm435, %v7463
      %7500 = vst.msk [vmem:[#allocation4 + $0x38] sm:$0xff] %vm435, %v7464
      %7501 = vst.msk [vmem:[#allocation4 + $0x40] sm:$0xff] %vm435, %v7465
      %7502 = vst.msk [vmem:[#allocation4 + $0x48] sm:$0xff] %vm435, %v7466
      %7503 = vst.msk [vmem:[#allocation4 + $0x50] sm:$0xff] %vm435, %v7467
      %7504 = vst.msk [vmem:[#allocation4 + $0x58] sm:$0xff] %vm435, %v7468
      %7505 = vst.msk [vmem:[#allocation4 + $0x60] sm:$0xff] %vm435, %v7469
      %7506 = vst.msk [vmem:[#allocation4 + $0x68] sm:$0xff] %vm435, %v7470
      %7507 = vst.msk [vmem:[#allocation4 + $0x70] sm:$0xff] %vm435, %v7471
      %7508 = vst.msk [vmem:[#allocation4 + $0x78] sm:$0xff] %vm435, %v7472
      %7509 = vst.msk [vmem:[#allocation4 + $0x80] sm:$0xff] %vm435, %v7473
      %7510 = vst.msk [vmem:[#allocation4 + $0x88] sm:$0xff] %vm435, %v7474
      %7511 = vst.msk [vmem:[#allocation4 + $0x90] sm:$0xff] %vm435, %v7475
      %7512 = vst.msk [vmem:[#allocation4 + $0x98] sm:$0xff] %vm435, %v7476
      %7513 = vst.msk [vmem:[#allocation4 + $0xa0] sm:$0xff] %vm435, %v7477
      %7514 = vst.msk [vmem:[#allocation4 + $0xa8] sm:$0xff] %vm435, %v7478
      %7515 = vst.msk [vmem:[#allocation4 + $0xb0] sm:$0xff] %vm435, %v7479
      %7516 = vst.msk [vmem:[#allocation4 + $0xb8] sm:$0xff] %vm435, %v7480
      %7517 = vst.msk [vmem:[#allocation4 + $0xc0] sm:$0xff] %vm435, %v7481
      %7518 = vst.msk [vmem:[#allocation4 + $0xc8] sm:$0xff] %vm435, %v7482
      %7519 = vst.msk [vmem:[#allocation4 + $0xd0] sm:$0xff] %vm435, %v7483
      %7520 = vst.msk [vmem:[#allocation4 + $0xd8] sm:$0xff] %vm435, %v7484
      %7521 = vst.msk [vmem:[#allocation4 + $0xe0] sm:$0xff] %vm435, %v7485
      %7522 = vst.msk [vmem:[#allocation4 + $0xe8] sm:$0xff] %vm435, %v7486
      %7523 = vst.msk [vmem:[#allocation4 + $0xf0] sm:$0xff] %vm435, %v7487
      %7524 = vst.msk [vmem:[#allocation4 + $0xf8] sm:$0xff] %vm435, %v7488
      %7525 = vst.msk [vmem:[#allocation4 + $0x100] sm:$0xff] %vm435, %v7489
      %7526 = vst.msk [vmem:[#allocation4 + $0x108] sm:$0xff] %vm435, %v7490
      %7527 = vst.msk [vmem:[#allocation4 + $0x110] sm:$0xff] %vm435, %v7491
      %7528 = vst.msk [vmem:[#allocation4 + $0x118] sm:$0xff] %vm435, %v7492
      %v7529 = vld [vmem:[#allocation3 + $0x2a] sm:$0xff]
      %v7530 = vld [vmem:[#allocation3 + $0x32] sm:$0xff]
      %v7531 = vld [vmem:[#allocation3 + $0x3a] sm:$0xff]
      %v7532 = vld [vmem:[#allocation3 + $0x42] sm:$0xff]
      %v7533 = vld [vmem:[#allocation3 + $0x4a] sm:$0xff]
      %v7534 = vld [vmem:[#allocation3 + $0x52] sm:$0xff]
      %v7535 = vld [vmem:[#allocation3 + $0x5a] sm:$0xff]
      %v7536 = vld [vmem:[#allocation3 + $0x62] sm:$0xff]
      %v7537 = vld [vmem:[#allocation3 + $0x6a] sm:$0xff]
      %v7538 = vld [vmem:[#allocation3 + $0x72] sm:$0xff]
      %v7539 = vld [vmem:[#allocation3 + $0x7a] sm:$0xff]
      %v7540 = vld [vmem:[#allocation3 + $0x82] sm:$0xff]
      %v7541 = vld [vmem:[#allocation3 + $0x8a] sm:$0xff]
      %v7542 = vld [vmem:[#allocation3 + $0x92] sm:$0xff]
      %v7543 = vld [vmem:[#allocation3 + $0x9a] sm:$0xff]
      %v7544 = vld [vmem:[#allocation3 + $0xa2] sm:$0xff]
      %v7545 = vld [vmem:[#allocation3 + $0xaa] sm:$0xff]
      %v7546 = vld [vmem:[#allocation3 + $0xb2] sm:$0xff]
      %v7547 = vld [vmem:[#allocation3 + $0xba] sm:$0xff]
      %v7548 = vld [vmem:[#allocation3 + $0xc2] sm:$0xff]
      %v7549 = vld [vmem:[#allocation3 + $0xca] sm:$0xff]
      %v7550 = vld [vmem:[#allocation3 + $0xd2] sm:$0xff]
      %v7551 = vld [vmem:[#allocation3 + $0xda] sm:$0xff]
      %v7552 = vld [vmem:[#allocation3 + $0xe2] sm:$0xff]
      %v7553 = vld [vmem:[#allocation3 + $0xea] sm:$0xff]
      %v7554 = vld [vmem:[#allocation3 + $0xf2] sm:$0xff]
      %v7555 = vld [vmem:[#allocation3 + $0xfa] sm:$0xff]
      %v7556 = vld [vmem:[#allocation3 + $0x102] sm:$0xff]
      %v7557 = vld [vmem:[#allocation3 + $0x10a] sm:$0xff]
      %v7558 = vld [vmem:[#allocation3 + $0x112] sm:$0xff]
      %v7559 = vld [vmem:[#allocation3 + $0x11a] sm:$0xff]
      %v7560 = vld [vmem:[#allocation3 + $0x122] sm:$0xff]
      %v7561 = vld [vmem:[#allocation3 + $0x12a] sm:$0xff]
      %v7562 = vld [vmem:[#allocation3 + $0x132] sm:$0xff]
      %v7563 = vld [vmem:[#allocation3 + $0x13a] sm:$0xff]
      %v7564 = vld [vmem:[#allocation3 + $0x142] sm:$0xff]
      %v7565 = vpack.c.bf16 %v7530, %v7529
      %v7566 = vpack.c.bf16 %v7532, %v7531
      %v7567 = vpack.c.bf16 %v7534, %v7533
      %v7568 = vpack.c.bf16 %v7536, %v7535
      %v7569 = vpack.c.bf16 %v7538, %v7537
      %v7570 = vpack.c.bf16 %v7540, %v7539
      %v7571 = vpack.c.bf16 %v7542, %v7541
      %v7572 = vpack.c.bf16 %v7544, %v7543
      %v7573 = vpack.c.bf16 %v7546, %v7545
      %v7574 = vpack.c.bf16 %v7548, %v7547
      %v7575 = vpack.c.bf16 %v7550, %v7549
      %v7576 = vpack.c.bf16 %v7552, %v7551
      %v7577 = vpack.c.bf16 %v7554, %v7553
      %v7578 = vpack.c.bf16 %v7556, %v7555
      %v7579 = vpack.c.bf16 %v7558, %v7557
      %v7580 = vpack.c.bf16 %v7560, %v7559
      %v7581 = vpack.c.bf16 %v7562, %v7561
      %v7582 = vpack.c.bf16 %v7564, %v7563
      %v7583 = vld [vmem:[#allocation4] sm:$0xff]
      %v7584 = vld [vmem:[#allocation4 + $0x8] sm:$0xff]
      %v7585 = vld [vmem:[#allocation4 + $0x10] sm:$0xff]
      %v7586 = vld [vmem:[#allocation4 + $0x18] sm:$0xff]
      %v7587 = vld [vmem:[#allocation4 + $0x20] sm:$0xff]
      %v7588 = vld [vmem:[#allocation4 + $0x28] sm:$0xff]
      %v7589 = vld [vmem:[#allocation4 + $0x30] sm:$0xff]
      %v7590 = vld [vmem:[#allocation4 + $0x38] sm:$0xff]
      %v7591 = vld [vmem:[#allocation4 + $0x40] sm:$0xff]
      %v7592 = vld [vmem:[#allocation4 + $0x48] sm:$0xff]
      %v7593 = vld [vmem:[#allocation4 + $0x50] sm:$0xff]
      %v7594 = vld [vmem:[#allocation4 + $0x58] sm:$0xff]
      %v7595 = vld [vmem:[#allocation4 + $0x60] sm:$0xff]
      %v7596 = vld [vmem:[#allocation4 + $0x68] sm:$0xff]
      %v7597 = vld [vmem:[#allocation4 + $0x70] sm:$0xff]
      %v7598 = vld [vmem:[#allocation4 + $0x78] sm:$0xff]
      %v7599 = vld [vmem:[#allocation4 + $0x80] sm:$0xff]
      %v7600 = vld [vmem:[#allocation4 + $0x88] sm:$0xff]
      %v7601 = vld [vmem:[#allocation4 + $0x90] sm:$0xff]
      %v7602 = vld [vmem:[#allocation4 + $0x98] sm:$0xff]
      %v7603 = vld [vmem:[#allocation4 + $0xa0] sm:$0xff]
      %v7604 = vld [vmem:[#allocation4 + $0xa8] sm:$0xff]
      %v7605 = vld [vmem:[#allocation4 + $0xb0] sm:$0xff]
      %v7606 = vld [vmem:[#allocation4 + $0xb8] sm:$0xff]
      %v7607 = vld [vmem:[#allocation4 + $0xc0] sm:$0xff]
      %v7608 = vld [vmem:[#allocation4 + $0xc8] sm:$0xff]
      %v7609 = vld [vmem:[#allocation4 + $0xd0] sm:$0xff]
      %v7610 = vld [vmem:[#allocation4 + $0xd8] sm:$0xff]
      %v7611 = vld [vmem:[#allocation4 + $0xe0] sm:$0xff]
      %v7612 = vld [vmem:[#allocation4 + $0xe8] sm:$0xff]
      %v7613 = vld [vmem:[#allocation4 + $0xf0] sm:$0xff]
      %v7614 = vld [vmem:[#allocation4 + $0xf8] sm:$0xff]
      %v7615 = vld [vmem:[#allocation4 + $0x100] sm:$0xff]
      %v7616 = vld [vmem:[#allocation4 + $0x108] sm:$0xff]
      %v7617 = vld [vmem:[#allocation4 + $0x110] sm:$0xff]
      %v7618 = vld [vmem:[#allocation4 + $0x118] sm:$0xff]
      %s7619 = scalar_lea.vmem %s2, 28
      %v7620 = vld [vmem:[%s7619] sm:$0xf]
      %v7622 = vsel %vm307, %v7565, 0
      %v7625 = vsel %vm307, %v7566, 0
      %v7628 = vsel %vm307, %v7567, 0
      %v7631 = vsel %vm307, %v7568, 0
      %v7634 = vsel %vm307, %v7569, 0
      %v7637 = vsel %vm307, %v7570, 0
      %v7640 = vsel %vm307, %v7571, 0
      %v7643 = vsel %vm307, %v7572, 0
      %v7646 = vsel %vm307, %v7573, 0
      %v7649 = vsel %vm307, %v7574, 0
      %v7652 = vsel %vm307, %v7575, 0
      %v7655 = vsel %vm307, %v7576, 0
      %v7658 = vsel %vm307, %v7577, 0
      %v7661 = vsel %vm307, %v7578, 0
      %v7664 = vsel %vm307, %v7579, 0
      %v7667 = vsel %vm307, %v7580, 0
      %v7670 = vsel %vm307, %v7581, 0
      %v7673 = vsel %vm307, %v7582, 0
      %v7676 = vsel %vm4888, %v7620, 0
      %7678 = vmatprep.subr.bf16.mxu0 0
      %7679 = vmatpush1.bf16.msra.mxu0 %v7676
      %7680 = vmatprep.subr.bf16.mxu0 0
      %7681 = vmatpush1.bf16.msra.mxu0 0
      %7682 = vmatprep.subr.bf16.mxu0 0
      %7683 = vmatpush1.bf16.msra.mxu0 0
      %7684 = vmatprep.subr.bf16.mxu0 0
      %7685 = vmatpush1.bf16.msra.mxu0 0
      %7686 = vmatprep.subr.bf16.mxu0 0
      %7687 = vmatpush1.bf16.msra.mxu0 0
      %7688 = vmatprep.subr.bf16.mxu0 0
      %7689 = vmatpush1.bf16.msra.mxu0 0
      %7690 = vmatprep.subr.bf16.mxu0 0
      %7691 = vmatpush1.bf16.msra.mxu0 0
      %7692 = vmatprep.subr.bf16.mxu0 0
      %7693 = vmatpush1.bf16.msra.mxu0 0
      %7694 = vmatprep.subr.bf16.mxu0 0
      %7695 = vmatpush1.bf16.msra.mxu0 0
      %7696 = vmatprep.subr.bf16.mxu0 0
      %7697 = vmatpush1.bf16.msra.mxu0 0
      %7698 = vmatprep.subr.bf16.mxu0 0
      %7699 = vmatpush1.bf16.msra.mxu0 0
      %7700 = vmatprep.subr.bf16.mxu0 0
      %7701 = vmatpush1.bf16.msra.mxu0 0
      %7702 = vmatprep.subr.bf16.mxu0 0
      %7703 = vmatpush1.bf16.msra.mxu0 0
      %7704 = vmatprep.subr.bf16.mxu0 0
      %7705 = vmatpush1.bf16.msra.mxu0 0
      %7706 = vmatprep.subr.bf16.mxu0 0
      %7707 = vmatpush1.bf16.msra.mxu0 0
      %7708 = vmatprep.subr.bf16.mxu0 0
      %7709 = vmatpush1.bf16.msra.mxu0 0
      %7710 = vmatprep.mubr.bf16.mxu0 0
      %7711 = vmatmul.mubr.bf16.gmra.mrb[0].mxu0 %v7622
      %v7712 = vpop.f32.mrb[0].mxu0
      %v7713 = vadd.f32 0.0, %v7712
      %v7714 = vpop.f32.mrb[0].mxu0
      %v7715 = vpop.f32.mrb[0].mxu0
      %v7716 = vadd.f32 0.0, %v7715
      %v7717 = vpop.f32.mrb[0].mxu0
      %7718 = vmatprep.mubr.bf16.mxu0 0
      %7719 = vmatmul.mubr.bf16.gmra.mrb[0].mxu0 %v7625
      %v7720 = vpop.f32.mrb[0].mxu0
      %v7721 = vadd.f32 0.0, %v7720
      %v7722 = vpop.f32.mrb[0].mxu0
      %v7723 = vpop.f32.mrb[0].mxu0
      %v7724 = vadd.f32 0.0, %v7723
      %v7725 = vpop.f32.mrb[0].mxu0
      %7726 = vmatprep.mubr.bf16.mxu0 0
      %7727 = vmatmul.mubr.bf16.gmra.mrb[0].mxu0 %v7628
      %v7728 = vpop.f32.mrb[0].mxu0
      %v7729 = vadd.f32 0.0, %v7728
      %v7730 = vpop.f32.mrb[0].mxu0
      %v7731 = vpop.f32.mrb[0].mxu0
      %v7732 = vadd.f32 0.0, %v7731
      %v7733 = vpop.f32.mrb[0].mxu0
      %7734 = vmatprep.mubr.bf16.mxu0 0
      %7735 = vmatmul.mubr.bf16.gmra.mrb[0].mxu0 %v7631
      %v7736 = vpop.f32.mrb[0].mxu0
      %v7737 = vadd.f32 0.0, %v7736
      %v7738 = vpop.f32.mrb[0].mxu0
      %v7739 = vpop.f32.mrb[0].mxu0
      %v7740 = vadd.f32 0.0, %v7739
      %v7741 = vpop.f32.mrb[0].mxu0
      %7742 = vmatprep.mubr.bf16.mxu0 0
      %7743 = vmatmul.mubr.bf16.gmra.mrb[0].mxu0 %v7634
      %v7744 = vpop.f32.mrb[0].mxu0
      %v7745 = vadd.f32 0.0, %v7744
      %v7746 = vpop.f32.mrb[0].mxu0
      %v7747 = vpop.f32.mrb[0].mxu0
      %v7748 = vadd.f32 0.0, %v7747
      %v7749 = vpop.f32.mrb[0].mxu0
      %7750 = vmatprep.mubr.bf16.mxu0 0
      %7751 = vmatmul.mubr.bf16.gmra.mrb[0].mxu0 %v7637
      %v7752 = vpop.f32.mrb[0].mxu0
      %v7753 = vadd.f32 0.0, %v7752
      %v7754 = vpop.f32.mrb[0].mxu0
      %v7755 = vpop.f32.mrb[0].mxu0
      %v7756 = vadd.f32 0.0, %v7755
      %v7757 = vpop.f32.mrb[0].mxu0
      %7758 = vmatprep.mubr.bf16.mxu0 0
      %7759 = vmatmul.mubr.bf16.gmra.mrb[0].mxu0 %v7640
      %v7760 = vpop.f32.mrb[0].mxu0
      %v7761 = vadd.f32 0.0, %v7760
      %v7762 = vpop.f32.mrb[0].mxu0
      %v7763 = vpop.f32.mrb[0].mxu0
      %v7764 = vadd.f32 0.0, %v7763
      %v7765 = vpop.f32.mrb[0].mxu0
      %7766 = vmatprep.mubr.bf16.mxu0 0
      %7767 = vmatmul.mubr.bf16.gmra.mrb[0].mxu0 %v7643
      %v7768 = vpop.f32.mrb[0].mxu0
      %v7769 = vadd.f32 0.0, %v7768
      %v7770 = vpop.f32.mrb[0].mxu0
      %v7771 = vpop.f32.mrb[0].mxu0
      %v7772 = vadd.f32 0.0, %v7771
      %v7773 = vpop.f32.mrb[0].mxu0
      %7774 = vmatprep.mubr.bf16.mxu0 0
      %7775 = vmatmul.mubr.bf16.gmra.mrb[0].mxu0 %v7646
      %v7776 = vpop.f32.mrb[0].mxu0
      %v7777 = vadd.f32 0.0, %v7776
      %v7778 = vpop.f32.mrb[0].mxu0
      %v7779 = vpop.f32.mrb[0].mxu0
      %v7780 = vadd.f32 0.0, %v7779
      %v7781 = vpop.f32.mrb[0].mxu0
      %7782 = vmatprep.mubr.bf16.mxu0 0
      %7783 = vmatmul.mubr.bf16.gmra.mrb[0].mxu0 %v7649
      %v7784 = vpop.f32.mrb[0].mxu0
      %v7785 = vadd.f32 0.0, %v7784
      %v7786 = vpop.f32.mrb[0].mxu0
      %v7787 = vpop.f32.mrb[0].mxu0
      %v7788 = vadd.f32 0.0, %v7787
      %v7789 = vpop.f32.mrb[0].mxu0
      %7790 = vmatprep.mubr.bf16.mxu0 0
      %7791 = vmatmul.mubr.bf16.gmra.mrb[0].mxu0 %v7652
      %v7792 = vpop.f32.mrb[0].mxu0
      %v7793 = vadd.f32 0.0, %v7792
      %v7794 = vpop.f32.mrb[0].mxu0
      %v7795 = vpop.f32.mrb[0].mxu0
      %v7796 = vadd.f32 0.0, %v7795
      %v7797 = vpop.f32.mrb[0].mxu0
      %7798 = vmatprep.mubr.bf16.mxu0 0
      %7799 = vmatmul.mubr.bf16.gmra.mrb[0].mxu0 %v7655
      %v7800 = vpop.f32.mrb[0].mxu0
      %v7801 = vadd.f32 0.0, %v7800
      %v7802 = vpop.f32.mrb[0].mxu0
      %v7803 = vpop.f32.mrb[0].mxu0
      %v7804 = vadd.f32 0.0, %v7803
      %v7805 = vpop.f32.mrb[0].mxu0
      %7806 = vmatprep.mubr.bf16.mxu0 0
      %7807 = vmatmul.mubr.bf16.gmra.mrb[0].mxu0 %v7658
      %v7808 = vpop.f32.mrb[0].mxu0
      %v7809 = vadd.f32 0.0, %v7808
      %v7810 = vpop.f32.mrb[0].mxu0
      %v7811 = vpop.f32.mrb[0].mxu0
      %v7812 = vadd.f32 0.0, %v7811
      %v7813 = vpop.f32.mrb[0].mxu0
      %7814 = vmatprep.mubr.bf16.mxu0 0
      %7815 = vmatmul.mubr.bf16.gmra.mrb[0].mxu0 %v7661
      %v7816 = vpop.f32.mrb[0].mxu0
      %v7817 = vadd.f32 0.0, %v7816
      %v7818 = vpop.f32.mrb[0].mxu0
      %v7819 = vpop.f32.mrb[0].mxu0
      %v7820 = vadd.f32 0.0, %v7819
      %v7821 = vpop.f32.mrb[0].mxu0
      %7822 = vmatprep.mubr.bf16.mxu0 0
      %7823 = vmatmul.mubr.bf16.gmra.mrb[0].mxu0 %v7664
      %v7824 = vpop.f32.mrb[0].mxu0
      %v7825 = vadd.f32 0.0, %v7824
      %v7826 = vpop.f32.mrb[0].mxu0
      %v7827 = vpop.f32.mrb[0].mxu0
      %v7828 = vadd.f32 0.0, %v7827
      %v7829 = vpop.f32.mrb[0].mxu0
      %7830 = vmatprep.mubr.bf16.mxu0 0
      %7831 = vmatmul.mubr.bf16.gmra.mrb[0].mxu0 %v7667
      %v7832 = vpop.f32.mrb[0].mxu0
      %v7833 = vadd.f32 0.0, %v7832
      %v7834 = vpop.f32.mrb[0].mxu0
      %v7835 = vpop.f32.mrb[0].mxu0
      %v7836 = vadd.f32 0.0, %v7835
      %v7837 = vpop.f32.mrb[0].mxu0
      %7838 = vmatprep.mubr.bf16.mxu0 0
      %7839 = vmatmul.mubr.bf16.gmra.mrb[0].mxu0 %v7670
      %v7840 = vpop.f32.mrb[0].mxu0
      %v7841 = vadd.f32 0.0, %v7840
      %v7842 = vpop.f32.mrb[0].mxu0
      %v7843 = vpop.f32.mrb[0].mxu0
      %v7844 = vadd.f32 0.0, %v7843
      %v7845 = vpop.f32.mrb[0].mxu0
      %7846 = vmatprep.mubr.bf16.mxu0 0
      %7847 = vmatmul.mubr.bf16.gmra.mrb[0].mxu0 %v7673
      %v7848 = vpop.f32.mrb[0].mxu0
      %v7849 = vadd.f32 0.0, %v7848
      %v7850 = vpop.f32.mrb[0].mxu0
      %v7851 = vpop.f32.mrb[0].mxu0
      %v7852 = vadd.f32 0.0, %v7851
      %v7853 = vpop.f32.mrb[0].mxu0
      %7854 = vdwg.mxu0
      %v7855 = vadd.f32 %v7583, %v7713
      %v7856 = vadd.f32 %v7584, %v7716
      %v7857 = vadd.f32 %v7585, %v7721
      %v7858 = vadd.f32 %v7586, %v7724
      %v7859 = vadd.f32 %v7587, %v7729
      %v7860 = vadd.f32 %v7588, %v7732
      %v7861 = vadd.f32 %v7589, %v7737
      %v7862 = vadd.f32 %v7590, %v7740
      %v7863 = vadd.f32 %v7591, %v7745
      %v7864 = vadd.f32 %v7592, %v7748
      %v7865 = vadd.f32 %v7593, %v7753
      %v7866 = vadd.f32 %v7594, %v7756
      %v7867 = vadd.f32 %v7595, %v7761
      %v7868 = vadd.f32 %v7596, %v7764
      %v7869 = vadd.f32 %v7597, %v7769
      %v7870 = vadd.f32 %v7598, %v7772
      %v7871 = vadd.f32 %v7599, %v7777
      %v7872 = vadd.f32 %v7600, %v7780
      %v7873 = vadd.f32 %v7601, %v7785
      %v7874 = vadd.f32 %v7602, %v7788
      %v7875 = vadd.f32 %v7603, %v7793
      %v7876 = vadd.f32 %v7604, %v7796
      %v7877 = vadd.f32 %v7605, %v7801
      %v7878 = vadd.f32 %v7606, %v7804
      %v7879 = vadd.f32 %v7607, %v7809
      %v7880 = vadd.f32 %v7608, %v7812
      %v7881 = vadd.f32 %v7609, %v7817
      %v7882 = vadd.f32 %v7610, %v7820
      %v7883 = vadd.f32 %v7611, %v7825
      %v7884 = vadd.f32 %v7612, %v7828
      %v7885 = vadd.f32 %v7613, %v7833
      %v7886 = vadd.f32 %v7614, %v7836
      %v7887 = vadd.f32 %v7615, %v7841
      %v7888 = vadd.f32 %v7616, %v7844
      %v7889 = vadd.f32 %v7617, %v7849
      %v7890 = vadd.f32 %v7618, %v7852
      %7891 = vst.msk [vmem:[#allocation4] sm:$0xff] %vm435, %v7855
      %7892 = vst.msk [vmem:[#allocation4 + $0x8] sm:$0xff] %vm435, %v7856
      %7893 = vst.msk [vmem:[#allocation4 + $0x10] sm:$0xff] %vm435, %v7857
      %7894 = vst.msk [vmem:[#allocation4 + $0x18] sm:$0xff] %vm435, %v7858
      %7895 = vst.msk [vmem:[#allocation4 + $0x20] sm:$0xff] %vm435, %v7859
      %7896 = vst.msk [vmem:[#allocation4 + $0x28] sm:$0xff] %vm435, %v7860
      %7897 = vst.msk [vmem:[#allocation4 + $0x30] sm:$0xff] %vm435, %v7861
      %7898 = vst.msk [vmem:[#allocation4 + $0x38] sm:$0xff] %vm435, %v7862
      %7899 = vst.msk [vmem:[#allocation4 + $0x40] sm:$0xff] %vm435, %v7863
      %7900 = vst.msk [vmem:[#allocation4 + $0x48] sm:$0xff] %vm435, %v7864
      %7901 = vst.msk [vmem:[#allocation4 + $0x50] sm:$0xff] %vm435, %v7865
      %7902 = vst.msk [vmem:[#allocation4 + $0x58] sm:$0xff] %vm435, %v7866
      %7903 = vst.msk [vmem:[#allocation4 + $0x60] sm:$0xff] %vm435, %v7867
      %7904 = vst.msk [vmem:[#allocation4 + $0x68] sm:$0xff] %vm435, %v7868
      %7905 = vst.msk [vmem:[#allocation4 + $0x70] sm:$0xff] %vm435, %v7869
      %7906 = vst.msk [vmem:[#allocation4 + $0x78] sm:$0xff] %vm435, %v7870
      %7907 = vst.msk [vmem:[#allocation4 + $0x80] sm:$0xff] %vm435, %v7871
      %7908 = vst.msk [vmem:[#allocation4 + $0x88] sm:$0xff] %vm435, %v7872
      %7909 = vst.msk [vmem:[#allocation4 + $0x90] sm:$0xff] %vm435, %v7873
      %7910 = vst.msk [vmem:[#allocation4 + $0x98] sm:$0xff] %vm435, %v7874
      %7911 = vst.msk [vmem:[#allocation4 + $0xa0] sm:$0xff] %vm435, %v7875
      %7912 = vst.msk [vmem:[#allocation4 + $0xa8] sm:$0xff] %vm435, %v7876
      %7913 = vst.msk [vmem:[#allocation4 + $0xb0] sm:$0xff] %vm435, %v7877
      %7914 = vst.msk [vmem:[#allocation4 + $0xb8] sm:$0xff] %vm435, %v7878
      %7915 = vst.msk [vmem:[#allocation4 + $0xc0] sm:$0xff] %vm435, %v7879
      %7916 = vst.msk [vmem:[#allocation4 + $0xc8] sm:$0xff] %vm435, %v7880
      %7917 = vst.msk [vmem:[#allocation4 + $0xd0] sm:$0xff] %vm435, %v7881
      %7918 = vst.msk [vmem:[#allocation4 + $0xd8] sm:$0xff] %vm435, %v7882
      %7919 = vst.msk [vmem:[#allocation4 + $0xe0] sm:$0xff] %vm435, %v7883
      %7920 = vst.msk [vmem:[#allocation4 + $0xe8] sm:$0xff] %vm435, %v7884
      %7921 = vst.msk [vmem:[#allocation4 + $0xf0] sm:$0xff] %vm435, %v7885
      %7922 = vst.msk [vmem:[#allocation4 + $0xf8] sm:$0xff] %vm435, %v7886
      %7923 = vst.msk [vmem:[#allocation4 + $0x100] sm:$0xff] %vm435, %v7887
      %7924 = vst.msk [vmem:[#allocation4 + $0x108] sm:$0xff] %vm435, %v7888
      %7925 = vst.msk [vmem:[#allocation4 + $0x110] sm:$0xff] %vm435, %v7889
      %7926 = vst.msk [vmem:[#allocation4 + $0x118] sm:$0xff] %vm435, %v7890
      %v7927 = vld [vmem:[#allocation3 + $0x2b] sm:$0xff]
      %v7928 = vld [vmem:[#allocation3 + $0x33] sm:$0xff]
      %v7929 = vld [vmem:[#allocation3 + $0x3b] sm:$0xff]
      %v7930 = vld [vmem:[#allocation3 + $0x43] sm:$0xff]
      %v7931 = vld [vmem:[#allocation3 + $0x4b] sm:$0xff]
      %v7932 = vld [vmem:[#allocation3 + $0x53] sm:$0xff]
      %v7933 = vld [vmem:[#allocation3 + $0x5b] sm:$0xff]
      %v7934 = vld [vmem:[#allocation3 + $0x63] sm:$0xff]
      %v7935 = vld [vmem:[#allocation3 + $0x6b] sm:$0xff]
      %v7936 = vld [vmem:[#allocation3 + $0x73] sm:$0xff]
      %v7937 = vld [vmem:[#allocation3 + $0x7b] sm:$0xff]
      %v7938 = vld [vmem:[#allocation3 + $0x83] sm:$0xff]
      %v7939 = vld [vmem:[#allocation3 + $0x8b] sm:$0xff]
      %v7940 = vld [vmem:[#allocation3 + $0x93] sm:$0xff]
      %v7941 = vld [vmem:[#allocation3 + $0x9b] sm:$0xff]
      %v7942 = vld [vmem:[#allocation3 + $0xa3] sm:$0xff]
      %v7943 = vld [vmem:[#allocation3 + $0xab] sm:$0xff]
      %v7944 = vld [vmem:[#allocation3 + $0xb3] sm:$0xff]
      %v7945 = vld [vmem:[#allocation3 + $0xbb] sm:$0xff]
      %v7946 = vld [vmem:[#allocation3 + $0xc3] sm:$0xff]
      %v7947 = vld [vmem:[#allocation3 + $0xcb] sm:$0xff]
      %v7948 = vld [vmem:[#allocation3 + $0xd3] sm:$0xff]
      %v7949 = vld [vmem:[#allocation3 + $0xdb] sm:$0xff]
      %v7950 = vld [vmem:[#allocation3 + $0xe3] sm:$0xff]
      %v7951 = vld [vmem:[#allocation3 + $0xeb] sm:$0xff]
      %v7952 = vld [vmem:[#allocation3 + $0xf3] sm:$0xff]
      %v7953 = vld [vmem:[#allocation3 + $0xfb] sm:$0xff]
      %v7954 = vld [vmem:[#allocation3 + $0x103] sm:$0xff]
      %v7955 = vld [vmem:[#allocation3 + $0x10b] sm:$0xff]
      %v7956 = vld [vmem:[#allocation3 + $0x113] sm:$0xff]
      %v7957 = vld [vmem:[#allocation3 + $0x11b] sm:$0xff]
      %v7958 = vld [vmem:[#allocation3 + $0x123] sm:$0xff]
      %v7959 = vld [vmem:[#allocation3 + $0x12b] sm:$0xff]
      %v7960 = vld [vmem:[#allocation3 + $0x133] sm:$0xff]
      %v7961 = vld [vmem:[#allocation3 + $0x13b] sm:$0xff]
      %v7962 = vld [vmem:[#allocation3 + $0x143] sm:$0xff]
      %v7963 = vpack.c.bf16 %v7928, %v7927
      %v7964 = vpack.c.bf16 %v7930, %v7929
      %v7965 = vpack.c.bf16 %v7932, %v7931
      %v7966 = vpack.c.bf16 %v7934, %v7933
      %v7967 = vpack.c.bf16 %v7936, %v7935
      %v7968 = vpack.c.bf16 %v7938, %v7937
      %v7969 = vpack.c.bf16 %v7940, %v7939
      %v7970 = vpack.c.bf16 %v7942, %v7941
      %v7971 = vpack.c.bf16 %v7944, %v7943
      %v7972 = vpack.c.bf16 %v7946, %v7945
      %v7973 = vpack.c.bf16 %v7948, %v7947
      %v7974 = vpack.c.bf16 %v7950, %v7949
      %v7975 = vpack.c.bf16 %v7952, %v7951
      %v7976 = vpack.c.bf16 %v7954, %v7953
      %v7977 = vpack.c.bf16 %v7956, %v7955
      %v7978 = vpack.c.bf16 %v7958, %v7957
      %v7979 = vpack.c.bf16 %v7960, %v7959
      %v7980 = vpack.c.bf16 %v7962, %v7961
      %v7981 = vld [vmem:[#allocation4] sm:$0xff]
      %v7982 = vld [vmem:[#allocation4 + $0x8] sm:$0xff]
      %v7983 = vld [vmem:[#allocation4 + $0x10] sm:$0xff]
      %v7984 = vld [vmem:[#allocation4 + $0x18] sm:$0xff]
      %v7985 = vld [vmem:[#allocation4 + $0x20] sm:$0xff]
      %v7986 = vld [vmem:[#allocation4 + $0x28] sm:$0xff]
      %v7987 = vld [vmem:[#allocation4 + $0x30] sm:$0xff]
      %v7988 = vld [vmem:[#allocation4 + $0x38] sm:$0xff]
      %v7989 = vld [vmem:[#allocation4 + $0x40] sm:$0xff]
      %v7990 = vld [vmem:[#allocation4 + $0x48] sm:$0xff]
      %v7991 = vld [vmem:[#allocation4 + $0x50] sm:$0xff]
      %v7992 = vld [vmem:[#allocation4 + $0x58] sm:$0xff]
      %v7993 = vld [vmem:[#allocation4 + $0x60] sm:$0xff]
      %v7994 = vld [vmem:[#allocation4 + $0x68] sm:$0xff]
      %v7995 = vld [vmem:[#allocation4 + $0x70] sm:$0xff]
      %v7996 = vld [vmem:[#allocation4 + $0x78] sm:$0xff]
      %v7997 = vld [vmem:[#allocation4 + $0x80] sm:$0xff]
      %v7998 = vld [vmem:[#allocation4 + $0x88] sm:$0xff]
      %v7999 = vld [vmem:[#allocation4 + $0x90] sm:$0xff]
      %v8000 = vld [vmem:[#allocation4 + $0x98] sm:$0xff]
      %v8001 = vld [vmem:[#allocation4 + $0xa0] sm:$0xff]
      %v8002 = vld [vmem:[#allocation4 + $0xa8] sm:$0xff]
      %v8003 = vld [vmem:[#allocation4 + $0xb0] sm:$0xff]
      %v8004 = vld [vmem:[#allocation4 + $0xb8] sm:$0xff]
      %v8005 = vld [vmem:[#allocation4 + $0xc0] sm:$0xff]
      %v8006 = vld [vmem:[#allocation4 + $0xc8] sm:$0xff]
      %v8007 = vld [vmem:[#allocation4 + $0xd0] sm:$0xff]
      %v8008 = vld [vmem:[#allocation4 + $0xd8] sm:$0xff]
      %v8009 = vld [vmem:[#allocation4 + $0xe0] sm:$0xff]
      %v8010 = vld [vmem:[#allocation4 + $0xe8] sm:$0xff]
      %v8011 = vld [vmem:[#allocation4 + $0xf0] sm:$0xff]
      %v8012 = vld [vmem:[#allocation4 + $0xf8] sm:$0xff]
      %v8013 = vld [vmem:[#allocation4 + $0x100] sm:$0xff]
      %v8014 = vld [vmem:[#allocation4 + $0x108] sm:$0xff]
      %v8015 = vld [vmem:[#allocation4 + $0x110] sm:$0xff]
      %v8016 = vld [vmem:[#allocation4 + $0x118] sm:$0xff]
      %s8017 = scalar_lea.vmem %s2, 32
      %v8018 = vld [vmem:[%s8017] sm:$0xf]
      %v8020 = vsel %vm307, %v7963, 0
      %v8023 = vsel %vm307, %v7964, 0
      %v8026 = vsel %vm307, %v7965, 0
      %v8029 = vsel %vm307, %v7966, 0
      %v8032 = vsel %vm307, %v7967, 0
      %v8035 = vsel %vm307, %v7968, 0
      %v8038 = vsel %vm307, %v7969, 0
      %v8041 = vsel %vm307, %v7970, 0
      %v8044 = vsel %vm307, %v7971, 0
      %v8047 = vsel %vm307, %v7972, 0
      %v8050 = vsel %vm307, %v7973, 0
      %v8053 = vsel %vm307, %v7974, 0
      %v8056 = vsel %vm307, %v7975, 0
      %v8059 = vsel %vm307, %v7976, 0
      %v8062 = vsel %vm307, %v7977, 0
      %v8065 = vsel %vm307, %v7978, 0
      %v8068 = vsel %vm307, %v7979, 0
      %v8071 = vsel %vm307, %v7980, 0
      %v8074 = vsel %vm4888, %v8018, 0
      %8076 = vmatprep.subr.bf16.mxu0 0
      %8077 = vmatpush1.bf16.msra.mxu0 %v8074
      %8078 = vmatprep.subr.bf16.mxu0 0
      %8079 = vmatpush1.bf16.msra.mxu0 0
      %8080 = vmatprep.subr.bf16.mxu0 0
      %8081 = vmatpush1.bf16.msra.mxu0 0
      %8082 = vmatprep.subr.bf16.mxu0 0
      %8083 = vmatpush1.bf16.msra.mxu0 0
      %8084 = vmatprep.subr.bf16.mxu0 0
      %8085 = vmatpush1.bf16.msra.mxu0 0
      %8086 = vmatprep.subr.bf16.mxu0 0
      %8087 = vmatpush1.bf16.msra.mxu0 0
      %8088 = vmatprep.subr.bf16.mxu0 0
      %8089 = vmatpush1.bf16.msra.mxu0 0
      %8090 = vmatprep.subr.bf16.mxu0 0
      %8091 = vmatpush1.bf16.msra.mxu0 0
      %8092 = vmatprep.subr.bf16.mxu0 0
      %8093 = vmatpush1.bf16.msra.mxu0 0
      %8094 = vmatprep.subr.bf16.mxu0 0
      %8095 = vmatpush1.bf16.msra.mxu0 0
      %8096 = vmatprep.subr.bf16.mxu0 0
      %8097 = vmatpush1.bf16.msra.mxu0 0
      %8098 = vmatprep.subr.bf16.mxu0 0
      %8099 = vmatpush1.bf16.msra.mxu0 0
      %8100 = vmatprep.subr.bf16.mxu0 0
      %8101 = vmatpush1.bf16.msra.mxu0 0
      %8102 = vmatprep.subr.bf16.mxu0 0
      %8103 = vmatpush1.bf16.msra.mxu0 0
      %8104 = vmatprep.subr.bf16.mxu0 0
      %8105 = vmatpush1.bf16.msra.mxu0 0
      %8106 = vmatprep.subr.bf16.mxu0 0
      %8107 = vmatpush1.bf16.msra.mxu0 0
      %8108 = vmatprep.mubr.bf16.mxu0 0
      %8109 = vmatmul.mubr.bf16.gmra.mrb[0].mxu0 %v8020
      %v8110 = vpop.f32.mrb[0].mxu0
      %v8111 = vadd.f32 0.0, %v8110
      %v8112 = vpop.f32.mrb[0].mxu0
      %v8113 = vpop.f32.mrb[0].mxu0
      %v8114 = vadd.f32 0.0, %v8113
      %v8115 = vpop.f32.mrb[0].mxu0
      %8116 = vmatprep.mubr.bf16.mxu0 0
      %8117 = vmatmul.mubr.bf16.gmra.mrb[0].mxu0 %v8023
      %v8118 = vpop.f32.mrb[0].mxu0
      %v8119 = vadd.f32 0.0, %v8118
      %v8120 = vpop.f32.mrb[0].mxu0
      %v8121 = vpop.f32.mrb[0].mxu0
      %v8122 = vadd.f32 0.0, %v8121
      %v8123 = vpop.f32.mrb[0].mxu0
      %8124 = vmatprep.mubr.bf16.mxu0 0
      %8125 = vmatmul.mubr.bf16.gmra.mrb[0].mxu0 %v8026
      %v8126 = vpop.f32.mrb[0].mxu0
      %v8127 = vadd.f32 0.0, %v8126
      %v8128 = vpop.f32.mrb[0].mxu0
      %v8129 = vpop.f32.mrb[0].mxu0
      %v8130 = vadd.f32 0.0, %v8129
      %v8131 = vpop.f32.mrb[0].mxu0
      %8132 = vmatprep.mubr.bf16.mxu0 0
      %8133 = vmatmul.mubr.bf16.gmra.mrb[0].mxu0 %v8029
      %v8134 = vpop.f32.mrb[0].mxu0
      %v8135 = vadd.f32 0.0, %v8134
      %v8136 = vpop.f32.mrb[0].mxu0
      %v8137 = vpop.f32.mrb[0].mxu0
      %v8138 = vadd.f32 0.0, %v8137
      %v8139 = vpop.f32.mrb[0].mxu0
      %8140 = vmatprep.mubr.bf16.mxu0 0
      %8141 = vmatmul.mubr.bf16.gmra.mrb[0].mxu0 %v8032
      %v8142 = vpop.f32.mrb[0].mxu0
      %v8143 = vadd.f32 0.0, %v8142
      %v8144 = vpop.f32.mrb[0].mxu0
      %v8145 = vpop.f32.mrb[0].mxu0
      %v8146 = vadd.f32 0.0, %v8145
      %v8147 = vpop.f32.mrb[0].mxu0
      %8148 = vmatprep.mubr.bf16.mxu0 0
      %8149 = vmatmul.mubr.bf16.gmra.mrb[0].mxu0 %v8035
      %v8150 = vpop.f32.mrb[0].mxu0
      %v8151 = vadd.f32 0.0, %v8150
      %v8152 = vpop.f32.mrb[0].mxu0
      %v8153 = vpop.f32.mrb[0].mxu0
      %v8154 = vadd.f32 0.0, %v8153
      %v8155 = vpop.f32.mrb[0].mxu0
      %8156 = vmatprep.mubr.bf16.mxu0 0
      %8157 = vmatmul.mubr.bf16.gmra.mrb[0].mxu0 %v8038
      %v8158 = vpop.f32.mrb[0].mxu0
      %v8159 = vadd.f32 0.0, %v8158
      %v8160 = vpop.f32.mrb[0].mxu0
      %v8161 = vpop.f32.mrb[0].mxu0
      %v8162 = vadd.f32 0.0, %v8161
      %v8163 = vpop.f32.mrb[0].mxu0
      %8164 = vmatprep.mubr.bf16.mxu0 0
      %8165 = vmatmul.mubr.bf16.gmra.mrb[0].mxu0 %v8041
      %v8166 = vpop.f32.mrb[0].mxu0
      %v8167 = vadd.f32 0.0, %v8166
      %v8168 = vpop.f32.mrb[0].mxu0
      %v8169 = vpop.f32.mrb[0].mxu0
      %v8170 = vadd.f32 0.0, %v8169
      %v8171 = vpop.f32.mrb[0].mxu0
      %8172 = vmatprep.mubr.bf16.mxu0 0
      %8173 = vmatmul.mubr.bf16.gmra.mrb[0].mxu0 %v8044
      %v8174 = vpop.f32.mrb[0].mxu0
      %v8175 = vadd.f32 0.0, %v8174
      %v8176 = vpop.f32.mrb[0].mxu0
      %v8177 = vpop.f32.mrb[0].mxu0
      %v8178 = vadd.f32 0.0, %v8177
      %v8179 = vpop.f32.mrb[0].mxu0
      %8180 = vmatprep.mubr.bf16.mxu0 0
      %8181 = vmatmul.mubr.bf16.gmra.mrb[0].mxu0 %v8047
      %v8182 = vpop.f32.mrb[0].mxu0
      %v8183 = vadd.f32 0.0, %v8182
      %v8184 = vpop.f32.mrb[0].mxu0
      %v8185 = vpop.f32.mrb[0].mxu0
      %v8186 = vadd.f32 0.0, %v8185
      %v8187 = vpop.f32.mrb[0].mxu0
      %8188 = vmatprep.mubr.bf16.mxu0 0
      %8189 = vmatmul.mubr.bf16.gmra.mrb[0].mxu0 %v8050
      %v8190 = vpop.f32.mrb[0].mxu0
      %v8191 = vadd.f32 0.0, %v8190
      %v8192 = vpop.f32.mrb[0].mxu0
      %v8193 = vpop.f32.mrb[0].mxu0
      %v8194 = vadd.f32 0.0, %v8193
      %v8195 = vpop.f32.mrb[0].mxu0
      %8196 = vmatprep.mubr.bf16.mxu0 0
      %8197 = vmatmul.mubr.bf16.gmra.mrb[0].mxu0 %v8053
      %v8198 = vpop.f32.mrb[0].mxu0
      %v8199 = vadd.f32 0.0, %v8198
      %v8200 = vpop.f32.mrb[0].mxu0
      %v8201 = vpop.f32.mrb[0].mxu0
      %v8202 = vadd.f32 0.0, %v8201
      %v8203 = vpop.f32.mrb[0].mxu0
      %8204 = vmatprep.mubr.bf16.mxu0 0
      %8205 = vmatmul.mubr.bf16.gmra.mrb[0].mxu0 %v8056
      %v8206 = vpop.f32.mrb[0].mxu0
      %v8207 = vadd.f32 0.0, %v8206
      %v8208 = vpop.f32.mrb[0].mxu0
      %v8209 = vpop.f32.mrb[0].mxu0
      %v8210 = vadd.f32 0.0, %v8209
      %v8211 = vpop.f32.mrb[0].mxu0
      %8212 = vmatprep.mubr.bf16.mxu0 0
      %8213 = vmatmul.mubr.bf16.gmra.mrb[0].mxu0 %v8059
      %v8214 = vpop.f32.mrb[0].mxu0
      %v8215 = vadd.f32 0.0, %v8214
      %v8216 = vpop.f32.mrb[0].mxu0
      %v8217 = vpop.f32.mrb[0].mxu0
      %v8218 = vadd.f32 0.0, %v8217
      %v8219 = vpop.f32.mrb[0].mxu0
      %8220 = vmatprep.mubr.bf16.mxu0 0
      %8221 = vmatmul.mubr.bf16.gmra.mrb[0].mxu0 %v8062
      %v8222 = vpop.f32.mrb[0].mxu0
      %v8223 = vadd.f32 0.0, %v8222
      %v8224 = vpop.f32.mrb[0].mxu0
      %v8225 = vpop.f32.mrb[0].mxu0
      %v8226 = vadd.f32 0.0, %v8225
      %v8227 = vpop.f32.mrb[0].mxu0
      %8228 = vmatprep.mubr.bf16.mxu0 0
      %8229 = vmatmul.mubr.bf16.gmra.mrb[0].mxu0 %v8065
      %v8230 = vpop.f32.mrb[0].mxu0
      %v8231 = vadd.f32 0.0, %v8230
      %v8232 = vpop.f32.mrb[0].mxu0
      %v8233 = vpop.f32.mrb[0].mxu0
      %v8234 = vadd.f32 0.0, %v8233
      %v8235 = vpop.f32.mrb[0].mxu0
      %8236 = vmatprep.mubr.bf16.mxu0 0
      %8237 = vmatmul.mubr.bf16.gmra.mrb[0].mxu0 %v8068
      %v8238 = vpop.f32.mrb[0].mxu0
      %v8239 = vadd.f32 0.0, %v8238
      %v8240 = vpop.f32.mrb[0].mxu0
      %v8241 = vpop.f32.mrb[0].mxu0
      %v8242 = vadd.f32 0.0, %v8241
      %v8243 = vpop.f32.mrb[0].mxu0
      %8244 = vmatprep.mubr.bf16.mxu0 0
      %8245 = vmatmul.mubr.bf16.gmra.mrb[0].mxu0 %v8071
      %v8246 = vpop.f32.mrb[0].mxu0
      %v8247 = vadd.f32 0.0, %v8246
      %v8248 = vpop.f32.mrb[0].mxu0
      %v8249 = vpop.f32.mrb[0].mxu0
      %v8250 = vadd.f32 0.0, %v8249
      %v8251 = vpop.f32.mrb[0].mxu0
      %8252 = vdwg.mxu0
      %v8253 = vadd.f32 %v7981, %v8111
      %v8254 = vadd.f32 %v7982, %v8114
      %v8255 = vadd.f32 %v7983, %v8119
      %v8256 = vadd.f32 %v7984, %v8122
      %v8257 = vadd.f32 %v7985, %v8127
      %v8258 = vadd.f32 %v7986, %v8130
      %v8259 = vadd.f32 %v7987, %v8135
      %v8260 = vadd.f32 %v7988, %v8138
      %v8261 = vadd.f32 %v7989, %v8143
      %v8262 = vadd.f32 %v7990, %v8146
      %v8263 = vadd.f32 %v7991, %v8151
      %v8264 = vadd.f32 %v7992, %v8154
      %v8265 = vadd.f32 %v7993, %v8159
      %v8266 = vadd.f32 %v7994, %v8162
      %v8267 = vadd.f32 %v7995, %v8167
      %v8268 = vadd.f32 %v7996, %v8170
      %v8269 = vadd.f32 %v7997, %v8175
      %v8270 = vadd.f32 %v7998, %v8178
      %v8271 = vadd.f32 %v7999, %v8183
      %v8272 = vadd.f32 %v8000, %v8186
      %v8273 = vadd.f32 %v8001, %v8191
      %v8274 = vadd.f32 %v8002, %v8194
      %v8275 = vadd.f32 %v8003, %v8199
      %v8276 = vadd.f32 %v8004, %v8202
      %v8277 = vadd.f32 %v8005, %v8207
      %v8278 = vadd.f32 %v8006, %v8210
      %v8279 = vadd.f32 %v8007, %v8215
      %v8280 = vadd.f32 %v8008, %v8218
      %v8281 = vadd.f32 %v8009, %v8223
      %v8282 = vadd.f32 %v8010, %v8226
      %v8283 = vadd.f32 %v8011, %v8231
      %v8284 = vadd.f32 %v8012, %v8234
      %v8285 = vadd.f32 %v8013, %v8239
      %v8286 = vadd.f32 %v8014, %v8242
      %v8287 = vadd.f32 %v8015, %v8247
      %v8288 = vadd.f32 %v8016, %v8250
      %8289 = vst.msk [vmem:[#allocation4] sm:$0xff] %vm435, %v8253
      %8290 = vst.msk [vmem:[#allocation4 + $0x8] sm:$0xff] %vm435, %v8254
      %8291 = vst.msk [vmem:[#allocation4 + $0x10] sm:$0xff] %vm435, %v8255
      %8292 = vst.msk [vmem:[#allocation4 + $0x18] sm:$0xff] %vm435, %v8256
      %8293 = vst.msk [vmem:[#allocation4 + $0x20] sm:$0xff] %vm435, %v8257
      %8294 = vst.msk [vmem:[#allocation4 + $0x28] sm:$0xff] %vm435, %v8258
      %8295 = vst.msk [vmem:[#allocation4 + $0x30] sm:$0xff] %vm435, %v8259
      %8296 = vst.msk [vmem:[#allocation4 + $0x38] sm:$0xff] %vm435, %v8260
      %8297 = vst.msk [vmem:[#allocation4 + $0x40] sm:$0xff] %vm435, %v8261
      %8298 = vst.msk [vmem:[#allocation4 + $0x48] sm:$0xff] %vm435, %v8262
      %8299 = vst.msk [vmem:[#allocation4 + $0x50] sm:$0xff] %vm435, %v8263
      %8300 = vst.msk [vmem:[#allocation4 + $0x58] sm:$0xff] %vm435, %v8264
      %8301 = vst.msk [vmem:[#allocation4 + $0x60] sm:$0xff] %vm435, %v8265
      %8302 = vst.msk [vmem:[#allocation4 + $0x68] sm:$0xff] %vm435, %v8266
      %8303 = vst.msk [vmem:[#allocation4 + $0x70] sm:$0xff] %vm435, %v8267
      %8304 = vst.msk [vmem:[#allocation4 + $0x78] sm:$0xff] %vm435, %v8268
      %8305 = vst.msk [vmem:[#allocation4 + $0x80] sm:$0xff] %vm435, %v8269
      %8306 = vst.msk [vmem:[#allocation4 + $0x88] sm:$0xff] %vm435, %v8270
      %8307 = vst.msk [vmem:[#allocation4 + $0x90] sm:$0xff] %vm435, %v8271
      %8308 = vst.msk [vmem:[#allocation4 + $0x98] sm:$0xff] %vm435, %v8272
      %8309 = vst.msk [vmem:[#allocation4 + $0xa0] sm:$0xff] %vm435, %v8273
      %8310 = vst.msk [vmem:[#allocation4 + $0xa8] sm:$0xff] %vm435, %v8274
      %8311 = vst.msk [vmem:[#allocation4 + $0xb0] sm:$0xff] %vm435, %v8275
      %8312 = vst.msk [vmem:[#allocation4 + $0xb8] sm:$0xff] %vm435, %v8276
      %8313 = vst.msk [vmem:[#allocation4 + $0xc0] sm:$0xff] %vm435, %v8277
      %8314 = vst.msk [vmem:[#allocation4 + $0xc8] sm:$0xff] %vm435, %v8278
      %8315 = vst.msk [vmem:[#allocation4 + $0xd0] sm:$0xff] %vm435, %v8279
      %8316 = vst.msk [vmem:[#allocation4 + $0xd8] sm:$0xff] %vm435, %v8280
      %8317 = vst.msk [vmem:[#allocation4 + $0xe0] sm:$0xff] %vm435, %v8281
      %8318 = vst.msk [vmem:[#allocation4 + $0xe8] sm:$0xff] %vm435, %v8282
      %8319 = vst.msk [vmem:[#allocation4 + $0xf0] sm:$0xff] %vm435, %v8283
      %8320 = vst.msk [vmem:[#allocation4 + $0xf8] sm:$0xff] %vm435, %v8284
      %8321 = vst.msk [vmem:[#allocation4 + $0x100] sm:$0xff] %vm435, %v8285
      %8322 = vst.msk [vmem:[#allocation4 + $0x108] sm:$0xff] %vm435, %v8286
      %8323 = vst.msk [vmem:[#allocation4 + $0x110] sm:$0xff] %vm435, %v8287
      %8324 = vst.msk [vmem:[#allocation4 + $0x118] sm:$0xff] %vm435, %v8288
      %v8325 = vld [vmem:[#allocation4] sm:$0xff]
      %v8326 = vld [vmem:[#allocation4 + $0x8] sm:$0xff]
      %v8327 = vld [vmem:[#allocation4 + $0x10] sm:$0xff]
      %v8328 = vld [vmem:[#allocation4 + $0x18] sm:$0xff]
      %v8329 = vld [vmem:[#allocation4 + $0x20] sm:$0xff]
      %v8330 = vld [vmem:[#allocation4 + $0x28] sm:$0xff]
      %v8331 = vld [vmem:[#allocation4 + $0x30] sm:$0xff]
      %v8332 = vld [vmem:[#allocation4 + $0x38] sm:$0xff]
      %v8333 = vld [vmem:[#allocation4 + $0x40] sm:$0xff]
      %v8334 = vld [vmem:[#allocation4 + $0x48] sm:$0xff]
      %v8335 = vld [vmem:[#allocation4 + $0x50] sm:$0xff]
      %v8336 = vld [vmem:[#allocation4 + $0x58] sm:$0xff]
      %v8337 = vld [vmem:[#allocation4 + $0x60] sm:$0xff]
      %v8338 = vld [vmem:[#allocation4 + $0x68] sm:$0xff]
      %v8339 = vld [vmem:[#allocation4 + $0x70] sm:$0xff]
      %v8340 = vld [vmem:[#allocation4 + $0x78] sm:$0xff]
      %v8341 = vld [vmem:[#allocation4 + $0x80] sm:$0xff]
      %v8342 = vld [vmem:[#allocation4 + $0x88] sm:$0xff]
      %v8343 = vld [vmem:[#allocation4 + $0x90] sm:$0xff]
      %v8344 = vld [vmem:[#allocation4 + $0x98] sm:$0xff]
      %v8345 = vld [vmem:[#allocation4 + $0xa0] sm:$0xff]
      %v8346 = vld [vmem:[#allocation4 + $0xa8] sm:$0xff]
      %v8347 = vld [vmem:[#allocation4 + $0xb0] sm:$0xff]
      %v8348 = vld [vmem:[#allocation4 + $0xb8] sm:$0xff]
      %v8349 = vld [vmem:[#allocation4 + $0xc0] sm:$0xff]
      %v8350 = vld [vmem:[#allocation4 + $0xc8] sm:$0xff]
      %v8351 = vld [vmem:[#allocation4 + $0xd0] sm:$0xff]
      %v8352 = vld [vmem:[#allocation4 + $0xd8] sm:$0xff]
      %v8353 = vld [vmem:[#allocation4 + $0xe0] sm:$0xff]
      %v8354 = vld [vmem:[#allocation4 + $0xe8] sm:$0xff]
      %v8355 = vld [vmem:[#allocation4 + $0xf0] sm:$0xff]
      %v8356 = vld [vmem:[#allocation4 + $0xf8] sm:$0xff]
      %v8357 = vld [vmem:[#allocation4 + $0x100] sm:$0xff]
      %v8358 = vld [vmem:[#allocation4 + $0x108] sm:$0xff]
      %v8359 = vld [vmem:[#allocation4 + $0x110] sm:$0xff]
      %v8360 = vld [vmem:[#allocation4 + $0x118] sm:$0xff]
      %v8361 = vmul.f32 %v8325, %v8325
      %v8362 = vmul.f32 %v8326, %v8326
      %v8363 = vmul.f32 %v8327, %v8327
      %v8364 = vmul.f32 %v8328, %v8328
      %v8365 = vmul.f32 %v8329, %v8329
      %v8366 = vmul.f32 %v8330, %v8330
      %v8367 = vmul.f32 %v8331, %v8331
      %v8368 = vmul.f32 %v8332, %v8332
      %v8369 = vmul.f32 %v8333, %v8333
      %v8370 = vmul.f32 %v8334, %v8334
      %v8371 = vmul.f32 %v8335, %v8335
      %v8372 = vmul.f32 %v8336, %v8336
      %v8373 = vmul.f32 %v8337, %v8337
      %v8374 = vmul.f32 %v8338, %v8338
      %v8375 = vmul.f32 %v8339, %v8339
      %v8376 = vmul.f32 %v8340, %v8340
      %v8377 = vmul.f32 %v8341, %v8341
      %v8378 = vmul.f32 %v8342, %v8342
      %v8379 = vmul.f32 %v8343, %v8343
      %v8380 = vmul.f32 %v8344, %v8344
      %v8381 = vmul.f32 %v8345, %v8345
      %v8382 = vmul.f32 %v8346, %v8346
      %v8383 = vmul.f32 %v8347, %v8347
      %v8384 = vmul.f32 %v8348, %v8348
      %v8385 = vmul.f32 %v8349, %v8349
      %v8386 = vmul.f32 %v8350, %v8350
      %v8387 = vmul.f32 %v8351, %v8351
      %v8388 = vmul.f32 %v8352, %v8352
      %v8389 = vmul.f32 %v8353, %v8353
      %v8390 = vmul.f32 %v8354, %v8354
      %v8391 = vmul.f32 %v8355, %v8355
      %v8392 = vmul.f32 %v8356, %v8356
      %v8393 = vmul.f32 %v8357, %v8357
      %v8394 = vmul.f32 %v8358, %v8358
      %v8395 = vmul.f32 %v8359, %v8359
      %v8396 = vmul.f32 %v8360, %v8360
      %v8397 = vsel %vm435, %v8361, 0.0
      %8398 = vadd.xlane.f32.xlu0 %v8397
      %v8399 = vpop.xlane.xlu0 %8398
      %v8400 = vsel %vm435, %v8362, 0.0
      %8401 = vadd.xlane.f32.xlu0 %v8400
      %v8402 = vpop.xlane.xlu0 %8401
      %v8403 = vsel %vm435, %v8363, 0.0
      %8404 = vadd.xlane.f32.xlu0 %v8403
      %v8405 = vpop.xlane.xlu0 %8404
      %v8406 = vsel %vm435, %v8364, 0.0
      %8407 = vadd.xlane.f32.xlu0 %v8406
      %v8408 = vpop.xlane.xlu0 %8407
      %v8409 = vsel %vm435, %v8365, 0.0
      %8410 = vadd.xlane.f32.xlu0 %v8409
      %v8411 = vpop.xlane.xlu0 %8410
      %v8412 = vsel %vm435, %v8366, 0.0
      %8413 = vadd.xlane.f32.xlu0 %v8412
      %v8414 = vpop.xlane.xlu0 %8413
      %v8415 = vsel %vm435, %v8367, 0.0
      %8416 = vadd.xlane.f32.xlu0 %v8415
      %v8417 = vpop.xlane.xlu0 %8416
      %v8418 = vsel %vm435, %v8368, 0.0
      %8419 = vadd.xlane.f32.xlu0 %v8418
      %v8420 = vpop.xlane.xlu0 %8419
      %v8421 = vsel %vm435, %v8369, 0.0
      %8422 = vadd.xlane.f32.xlu0 %v8421
      %v8423 = vpop.xlane.xlu0 %8422
      %v8424 = vsel %vm435, %v8370, 0.0
      %8425 = vadd.xlane.f32.xlu0 %v8424
      %v8426 = vpop.xlane.xlu0 %8425
      %v8427 = vsel %vm435, %v8371, 0.0
      %8428 = vadd.xlane.f32.xlu0 %v8427
      %v8429 = vpop.xlane.xlu0 %8428
      %v8430 = vsel %vm435, %v8372, 0.0
      %8431 = vadd.xlane.f32.xlu0 %v8430
      %v8432 = vpop.xlane.xlu0 %8431
      %v8433 = vsel %vm435, %v8373, 0.0
      %8434 = vadd.xlane.f32.xlu0 %v8433
      %v8435 = vpop.xlane.xlu0 %8434
      %v8436 = vsel %vm435, %v8374, 0.0
      %8437 = vadd.xlane.f32.xlu0 %v8436
      %v8438 = vpop.xlane.xlu0 %8437
      %v8439 = vsel %vm435, %v8375, 0.0
      %8440 = vadd.xlane.f32.xlu0 %v8439
      %v8441 = vpop.xlane.xlu0 %8440
      %v8442 = vsel %vm435, %v8376, 0.0
      %8443 = vadd.xlane.f32.xlu0 %v8442
      %v8444 = vpop.xlane.xlu0 %8443
      %v8445 = vsel %vm435, %v8377, 0.0
      %8446 = vadd.xlane.f32.xlu0 %v8445
      %v8447 = vpop.xlane.xlu0 %8446
      %v8448 = vsel %vm435, %v8378, 0.0
      %8449 = vadd.xlane.f32.xlu0 %v8448
      %v8450 = vpop.xlane.xlu0 %8449
      %v8451 = vsel %vm435, %v8379, 0.0
      %8452 = vadd.xlane.f32.xlu0 %v8451
      %v8453 = vpop.xlane.xlu0 %8452
      %v8454 = vsel %vm435, %v8380, 0.0
      %8455 = vadd.xlane.f32.xlu0 %v8454
      %v8456 = vpop.xlane.xlu0 %8455
      %v8457 = vsel %vm435, %v8381, 0.0
      %8458 = vadd.xlane.f32.xlu0 %v8457
      %v8459 = vpop.xlane.xlu0 %8458
      %v8460 = vsel %vm435, %v8382, 0.0
      %8461 = vadd.xlane.f32.xlu0 %v8460
      %v8462 = vpop.xlane.xlu0 %8461
      %v8463 = vsel %vm435, %v8383, 0.0
      %8464 = vadd.xlane.f32.xlu0 %v8463
      %v8465 = vpop.xlane.xlu0 %8464
      %v8466 = vsel %vm435, %v8384, 0.0
      %8467 = vadd.xlane.f32.xlu0 %v8466
      %v8468 = vpop.xlane.xlu0 %8467
      %v8469 = vsel %vm435, %v8385, 0.0
      %8470 = vadd.xlane.f32.xlu0 %v8469
      %v8471 = vpop.xlane.xlu0 %8470
      %v8472 = vsel %vm435, %v8386, 0.0
      %8473 = vadd.xlane.f32.xlu0 %v8472
      %v8474 = vpop.xlane.xlu0 %8473
      %v8475 = vsel %vm435, %v8387, 0.0
      %8476 = vadd.xlane.f32.xlu0 %v8475
      %v8477 = vpop.xlane.xlu0 %8476
      %v8478 = vsel %vm435, %v8388, 0.0
      %8479 = vadd.xlane.f32.xlu0 %v8478
      %v8480 = vpop.xlane.xlu0 %8479
      %v8481 = vsel %vm435, %v8389, 0.0
      %8482 = vadd.xlane.f32.xlu0 %v8481
      %v8483 = vpop.xlane.xlu0 %8482
      %v8484 = vsel %vm435, %v8390, 0.0
      %8485 = vadd.xlane.f32.xlu0 %v8484
      %v8486 = vpop.xlane.xlu0 %8485
      %v8487 = vsel %vm435, %v8391, 0.0
      %8488 = vadd.xlane.f32.xlu0 %v8487
      %v8489 = vpop.xlane.xlu0 %8488
      %v8490 = vsel %vm435, %v8392, 0.0
      %8491 = vadd.xlane.f32.xlu0 %v8490
      %v8492 = vpop.xlane.xlu0 %8491
      %v8493 = vsel %vm435, %v8393, 0.0
      %8494 = vadd.xlane.f32.xlu0 %v8493
      %v8495 = vpop.xlane.xlu0 %8494
      %v8496 = vsel %vm435, %v8394, 0.0
      %8497 = vadd.xlane.f32.xlu0 %v8496
      %v8498 = vpop.xlane.xlu0 %8497
      %v8499 = vsel %vm435, %v8395, 0.0
      %8500 = vadd.xlane.f32.xlu0 %v8499
      %v8501 = vpop.xlane.xlu0 %8500
      %v8502 = vsel %vm435, %v8396, 0.0
      %8503 = vadd.xlane.f32.xlu0 %v8502
      %v8504 = vpop.xlane.xlu0 %8503
      %v8505 = vrcp.pop 4.0
      %v8506 = vmul.f32 %v8399, %v8505
      %v8507 = vmul.f32 %v8402, %v8505
      %v8508 = vmul.f32 %v8405, %v8505
      %v8509 = vmul.f32 %v8408, %v8505
      %v8510 = vmul.f32 %v8411, %v8505
      %v8511 = vmul.f32 %v8414, %v8505
      %v8512 = vmul.f32 %v8417, %v8505
      %v8513 = vmul.f32 %v8420, %v8505
      %v8514 = vmul.f32 %v8423, %v8505
      %v8515 = vmul.f32 %v8426, %v8505
      %v8516 = vmul.f32 %v8429, %v8505
      %v8517 = vmul.f32 %v8432, %v8505
      %v8518 = vmul.f32 %v8435, %v8505
      %v8519 = vmul.f32 %v8438, %v8505
      %v8520 = vmul.f32 %v8441, %v8505
      %v8521 = vmul.f32 %v8444, %v8505
      %v8522 = vmul.f32 %v8447, %v8505
      %v8523 = vmul.f32 %v8450, %v8505
      %v8524 = vmul.f32 %v8453, %v8505
      %v8525 = vmul.f32 %v8456, %v8505
      %v8526 = vmul.f32 %v8459, %v8505
      %v8527 = vmul.f32 %v8462, %v8505
      %v8528 = vmul.f32 %v8465, %v8505
      %v8529 = vmul.f32 %v8468, %v8505
      %v8530 = vmul.f32 %v8471, %v8505
      %v8531 = vmul.f32 %v8474, %v8505
      %v8532 = vmul.f32 %v8477, %v8505
      %v8533 = vmul.f32 %v8480, %v8505
      %v8534 = vmul.f32 %v8483, %v8505
      %v8535 = vmul.f32 %v8486, %v8505
      %v8536 = vmul.f32 %v8489, %v8505
      %v8537 = vmul.f32 %v8492, %v8505
      %v8538 = vmul.f32 %v8495, %v8505
      %v8539 = vmul.f32 %v8498, %v8505
      %v8540 = vmul.f32 %v8501, %v8505
      %v8541 = vmul.f32 %v8504, %v8505
      %v8542 = vadd.f32 %v8506, 1e-05
      %v8543 = vadd.f32 %v8507, 1e-05
      %v8544 = vadd.f32 %v8508, 1e-05
      %v8545 = vadd.f32 %v8509, 1e-05
      %v8546 = vadd.f32 %v8510, 1e-05
      %v8547 = vadd.f32 %v8511, 1e-05
      %v8548 = vadd.f32 %v8512, 1e-05
      %v8549 = vadd.f32 %v8513, 1e-05
      %v8550 = vadd.f32 %v8514, 1e-05
      %v8551 = vadd.f32 %v8515, 1e-05
      %v8552 = vadd.f32 %v8516, 1e-05
      %v8553 = vadd.f32 %v8517, 1e-05
      %v8554 = vadd.f32 %v8518, 1e-05
      %v8555 = vadd.f32 %v8519, 1e-05
      %v8556 = vadd.f32 %v8520, 1e-05
      %v8557 = vadd.f32 %v8521, 1e-05
      %v8558 = vadd.f32 %v8522, 1e-05
      %v8559 = vadd.f32 %v8523, 1e-05
      %v8560 = vadd.f32 %v8524, 1e-05
      %v8561 = vadd.f32 %v8525, 1e-05
      %v8562 = vadd.f32 %v8526, 1e-05
      %v8563 = vadd.f32 %v8527, 1e-05
      %v8564 = vadd.f32 %v8528, 1e-05
      %v8565 = vadd.f32 %v8529, 1e-05
      %v8566 = vadd.f32 %v8530, 1e-05
      %v8567 = vadd.f32 %v8531, 1e-05
      %v8568 = vadd.f32 %v8532, 1e-05
      %v8569 = vadd.f32 %v8533, 1e-05
      %v8570 = vadd.f32 %v8534, 1e-05
      %v8571 = vadd.f32 %v8535, 1e-05
      %v8572 = vadd.f32 %v8536, 1e-05
      %v8573 = vadd.f32 %v8537, 1e-05
      %v8574 = vadd.f32 %v8538, 1e-05
      %v8575 = vadd.f32 %v8539, 1e-05
      %v8576 = vadd.f32 %v8540, 1e-05
      %v8577 = vadd.f32 %v8541, 1e-05
      %v8578 = vrsqrt.pop %v8542
      %v8579 = vrsqrt.pop %v8543
      %v8580 = vrsqrt.pop %v8544
      %v8581 = vrsqrt.pop %v8545
      %v8582 = vrsqrt.pop %v8546
      %v8583 = vrsqrt.pop %v8547
      %v8584 = vrsqrt.pop %v8548
      %v8585 = vrsqrt.pop %v8549
      %v8586 = vrsqrt.pop %v8550
      %v8587 = vrsqrt.pop %v8551
      %v8588 = vrsqrt.pop %v8552
      %v8589 = vrsqrt.pop %v8553
      %v8590 = vrsqrt.pop %v8554
      %v8591 = vrsqrt.pop %v8555
      %v8592 = vrsqrt.pop %v8556
      %v8593 = vrsqrt.pop %v8557
      %v8594 = vrsqrt.pop %v8558
      %v8595 = vrsqrt.pop %v8559
      %v8596 = vrsqrt.pop %v8560
      %v8597 = vrsqrt.pop %v8561
      %v8598 = vrsqrt.pop %v8562
      %v8599 = vrsqrt.pop %v8563
      %v8600 = vrsqrt.pop %v8564
      %v8601 = vrsqrt.pop %v8565
      %v8602 = vrsqrt.pop %v8566
      %v8603 = vrsqrt.pop %v8567
      %v8604 = vrsqrt.pop %v8568
      %v8605 = vrsqrt.pop %v8569
      %v8606 = vrsqrt.pop %v8570
      %v8607 = vrsqrt.pop %v8571
      %v8608 = vrsqrt.pop %v8572
      %v8609 = vrsqrt.pop %v8573
      %v8610 = vrsqrt.pop %v8574
      %v8611 = vrsqrt.pop %v8575
      %v8612 = vrsqrt.pop %v8576
      %v8613 = vrsqrt.pop %v8577
      %v8614 = vmul.f32 %v8325, %v8578
      %v8615 = vmul.f32 %v8326, %v8579
      %v8616 = vmul.f32 %v8327, %v8580
      %v8617 = vmul.f32 %v8328, %v8581
      %v8618 = vmul.f32 %v8329, %v8582
      %v8619 = vmul.f32 %v8330, %v8583
      %v8620 = vmul.f32 %v8331, %v8584
      %v8621 = vmul.f32 %v8332, %v8585
      %v8622 = vmul.f32 %v8333, %v8586
      %v8623 = vmul.f32 %v8334, %v8587
      %v8624 = vmul.f32 %v8335, %v8588
      %v8625 = vmul.f32 %v8336, %v8589
      %v8626 = vmul.f32 %v8337, %v8590
      %v8627 = vmul.f32 %v8338, %v8591
      %v8628 = vmul.f32 %v8339, %v8592
      %v8629 = vmul.f32 %v8340, %v8593
      %v8630 = vmul.f32 %v8341, %v8594
      %v8631 = vmul.f32 %v8342, %v8595
      %v8632 = vmul.f32 %v8343, %v8596
      %v8633 = vmul.f32 %v8344, %v8597
      %v8634 = vmul.f32 %v8345, %v8598
      %v8635 = vmul.f32 %v8346, %v8599
      %v8636 = vmul.f32 %v8347, %v8600
      %v8637 = vmul.f32 %v8348, %v8601
      %v8638 = vmul.f32 %v8349, %v8602
      %v8639 = vmul.f32 %v8350, %v8603
      %v8640 = vmul.f32 %v8351, %v8604
      %v8641 = vmul.f32 %v8352, %v8605
      %v8642 = vmul.f32 %v8353, %v8606
      %v8643 = vmul.f32 %v8354, %v8607
      %v8644 = vmul.f32 %v8355, %v8608
      %v8645 = vmul.f32 %v8356, %v8609
      %v8646 = vmul.f32 %v8357, %v8610
      %v8647 = vmul.f32 %v8358, %v8611
      %v8648 = vmul.f32 %v8359, %v8612
      %v8649 = vmul.f32 %v8360, %v8613
      %v8650 = vld [vmem:[%s5] sm:$0x1]
      %v8652 = vlaneseq
      %v8653 = vshrl.u32 %v8652, 7
      %v8654 = vsub.s32 0, %v8653
      %v8655 = vrot.slane %v8650, %v8654
      %v8657 = vmul.f32 %v8614, %v8655
      %v8658 = vmul.f32 %v8615, %v8655
      %v8659 = vmul.f32 %v8616, %v8655
      %v8660 = vmul.f32 %v8617, %v8655
      %v8661 = vmul.f32 %v8618, %v8655
      %v8662 = vmul.f32 %v8619, %v8655
      %v8663 = vmul.f32 %v8620, %v8655
      %v8664 = vmul.f32 %v8621, %v8655
      %v8665 = vmul.f32 %v8622, %v8655
      %v8666 = vmul.f32 %v8623, %v8655
      %v8667 = vmul.f32 %v8624, %v8655
      %v8668 = vmul.f32 %v8625, %v8655
      %v8669 = vmul.f32 %v8626, %v8655
      %v8670 = vmul.f32 %v8627, %v8655
      %v8671 = vmul.f32 %v8628, %v8655
      %v8672 = vmul.f32 %v8629, %v8655
      %v8673 = vmul.f32 %v8630, %v8655
      %v8674 = vmul.f32 %v8631, %v8655
      %v8675 = vmul.f32 %v8632, %v8655
      %v8676 = vmul.f32 %v8633, %v8655
      %v8677 = vmul.f32 %v8634, %v8655
      %v8678 = vmul.f32 %v8635, %v8655
      %v8679 = vmul.f32 %v8636, %v8655
      %v8680 = vmul.f32 %v8637, %v8655
      %v8681 = vmul.f32 %v8638, %v8655
      %v8682 = vmul.f32 %v8639, %v8655
      %v8683 = vmul.f32 %v8640, %v8655
      %v8684 = vmul.f32 %v8641, %v8655
      %v8685 = vmul.f32 %v8642, %v8655
      %v8686 = vmul.f32 %v8643, %v8655
      %v8687 = vmul.f32 %v8644, %v8655
      %v8688 = vmul.f32 %v8645, %v8655
      %v8689 = vmul.f32 %v8646, %v8655
      %v8690 = vmul.f32 %v8647, %v8655
      %v8691 = vmul.f32 %v8648, %v8655
      %v8692 = vmul.f32 %v8649, %v8655
      %v8693 = vld [vmem:[%s6] sm:$0x1]
      %v8695 = vlaneseq
      %v8696 = vshrl.u32 %v8695, 7
      %v8697 = vsub.s32 0, %v8696
      %v8698 = vrot.slane %v8693, %v8697
      %v8700 = vadd.f32 %v8657, %v8698
      %v8701 = vadd.f32 %v8658, %v8698
      %v8702 = vadd.f32 %v8659, %v8698
      %v8703 = vadd.f32 %v8660, %v8698
      %v8704 = vadd.f32 %v8661, %v8698
      %v8705 = vadd.f32 %v8662, %v8698
      %v8706 = vadd.f32 %v8663, %v8698
      %v8707 = vadd.f32 %v8664, %v8698
      %v8708 = vadd.f32 %v8665, %v8698
      %v8709 = vadd.f32 %v8666, %v8698
      %v8710 = vadd.f32 %v8667, %v8698
      %v8711 = vadd.f32 %v8668, %v8698
      %v8712 = vadd.f32 %v8669, %v8698
      %v8713 = vadd.f32 %v8670, %v8698
      %v8714 = vadd.f32 %v8671, %v8698
      %v8715 = vadd.f32 %v8672, %v8698
      %v8716 = vadd.f32 %v8673, %v8698
      %v8717 = vadd.f32 %v8674, %v8698
      %v8718 = vadd.f32 %v8675, %v8698
      %v8719 = vadd.f32 %v8676, %v8698
      %v8720 = vadd.f32 %v8677, %v8698
      %v8721 = vadd.f32 %v8678, %v8698
      %v8722 = vadd.f32 %v8679, %v8698
      %v8723 = vadd.f32 %v8680, %v8698
      %v8724 = vadd.f32 %v8681, %v8698
      %v8725 = vadd.f32 %v8682, %v8698
      %v8726 = vadd.f32 %v8683, %v8698
      %v8727 = vadd.f32 %v8684, %v8698
      %v8728 = vadd.f32 %v8685, %v8698
      %v8729 = vadd.f32 %v8686, %v8698
      %v8730 = vadd.f32 %v8687, %v8698
      %v8731 = vadd.f32 %v8688, %v8698
      %v8732 = vadd.f32 %v8689, %v8698
      %v8733 = vadd.f32 %v8690, %v8698
      %v8734 = vadd.f32 %v8691, %v8698
      %v8735 = vadd.f32 %v8692, %v8698
      %v8736 = vld [vmem:[%s300 + $0x13] sm:$0xff]
      %v8737 = vld [vmem:[%s300 + $0x1b] sm:$0xff]
      %v8738 = vld [vmem:[%s300 + $0x23] sm:$0xff]
      %v8739 = vld [vmem:[%s300 + $0x2b] sm:$0xff]
      %v8740 = vld [vmem:[%s300 + $0x33] sm:$0xff]
      %v8741 = vld [vmem:[%s300 + $0x3b] sm:$0xff]
      %v8742 = vld [vmem:[%s300 + $0x43] sm:$0xff]
      %v8743 = vld [vmem:[%s300 + $0x4b] sm:$0xff]
      %v8744 = vld [vmem:[%s300 + $0x53] sm:$0xff]
      %v8745 = vld [vmem:[%s300 + $0x5b] sm:$0xff]
      %v8746 = vld [vmem:[%s300 + $0x63] sm:$0xff]
      %v8747 = vld [vmem:[%s300 + $0x6b] sm:$0xff]
      %v8748 = vld [vmem:[%s300 + $0x73] sm:$0xff]
      %v8749 = vld [vmem:[%s300 + $0x7b] sm:$0xff]
      %v8750 = vld [vmem:[%s300 + $0x83] sm:$0xff]
      %v8751 = vld [vmem:[%s300 + $0x8b] sm:$0xff]
      %v8752 = vld [vmem:[%s300 + $0x93] sm:$0xff]
      %v8753 = vld [vmem:[%s300 + $0x9b] sm:$0xff]
      %v8754 = vld [vmem:[%s300 + $0xa3] sm:$0xff]
      %v8755 = vld [vmem:[%s300 + $0xab] sm:$0xff]
      %v8756 = vld [vmem:[%s300 + $0xb3] sm:$0xff]
      %v8757 = vld [vmem:[%s300 + $0xbb] sm:$0xff]
      %v8758 = vld [vmem:[%s300 + $0xc3] sm:$0xff]
      %v8759 = vld [vmem:[%s300 + $0xcb] sm:$0xff]
      %v8760 = vld [vmem:[%s300 + $0xd3] sm:$0xff]
      %v8761 = vld [vmem:[%s300 + $0xdb] sm:$0xff]
      %v8762 = vld [vmem:[%s300 + $0xe3] sm:$0xff]
      %v8763 = vld [vmem:[%s300 + $0xeb] sm:$0xff]
      %v8764 = vld [vmem:[%s300 + $0xf3] sm:$0xff]
      %v8765 = vld [vmem:[%s300 + $0xfb] sm:$0xff]
      %v8766 = vld [vmem:[%s300 + $0x103] sm:$0xff]
      %v8767 = vld [vmem:[%s300 + $0x10b] sm:$0xff]
      %v8768 = vld [vmem:[%s300 + $0x113] sm:$0xff]
      %v8769 = vld [vmem:[%s300 + $0x11b] sm:$0xff]
      %v8770 = vld [vmem:[%s300 + $0x123] sm:$0xff]
      %v8771 = vld [vmem:[%s300 + $0x12b] sm:$0xff]
      %v8772 = vadd.f32 %v8700, %v8736
      %v8773 = vadd.f32 %v8701, %v8737
      %v8774 = vadd.f32 %v8702, %v8738
      %v8775 = vadd.f32 %v8703, %v8739
      %v8776 = vadd.f32 %v8704, %v8740
      %v8777 = vadd.f32 %v8705, %v8741
      %v8778 = vadd.f32 %v8706, %v8742
      %v8779 = vadd.f32 %v8707, %v8743
      %v8780 = vadd.f32 %v8708, %v8744
      %v8781 = vadd.f32 %v8709, %v8745
      %v8782 = vadd.f32 %v8710, %v8746
      %v8783 = vadd.f32 %v8711, %v8747
      %v8784 = vadd.f32 %v8712, %v8748
      %v8785 = vadd.f32 %v8713, %v8749
      %v8786 = vadd.f32 %v8714, %v8750
      %v8787 = vadd.f32 %v8715, %v8751
      %v8788 = vadd.f32 %v8716, %v8752
      %v8789 = vadd.f32 %v8717, %v8753
      %v8790 = vadd.f32 %v8718, %v8754
      %v8791 = vadd.f32 %v8719, %v8755
      %v8792 = vadd.f32 %v8720, %v8756
      %v8793 = vadd.f32 %v8721, %v8757
      %v8794 = vadd.f32 %v8722, %v8758
      %v8795 = vadd.f32 %v8723, %v8759
      %v8796 = vadd.f32 %v8724, %v8760
      %v8797 = vadd.f32 %v8725, %v8761
      %v8798 = vadd.f32 %v8726, %v8762
      %v8799 = vadd.f32 %v8727, %v8763
      %v8800 = vadd.f32 %v8728, %v8764
      %v8801 = vadd.f32 %v8729, %v8765
      %v8802 = vadd.f32 %v8730, %v8766
      %v8803 = vadd.f32 %v8731, %v8767
      %v8804 = vadd.f32 %v8732, %v8768
      %v8805 = vadd.f32 %v8733, %v8769
      %v8806 = vadd.f32 %v8734, %v8770
      %v8807 = vadd.f32 %v8735, %v8771
      %8808 = vst.msk [vmem:[%s305] sm:$0xff] %vm435, %v8772
      %8809 = vst.msk [vmem:[%s305 + $0x8] sm:$0xff] %vm435, %v8773
      %8810 = vst.msk [vmem:[%s305 + $0x10] sm:$0xff] %vm435, %v8774
      %8811 = vst.msk [vmem:[%s305 + $0x18] sm:$0xff] %vm435, %v8775
      %8812 = vst.msk [vmem:[%s305 + $0x20] sm:$0xff] %vm435, %v8776
      %8813 = vst.msk [vmem:[%s305 + $0x28] sm:$0xff] %vm435, %v8777
      %8814 = vst.msk [vmem:[%s305 + $0x30] sm:$0xff] %vm435, %v8778
      %8815 = vst.msk [vmem:[%s305 + $0x38] sm:$0xff] %vm435, %v8779
      %8816 = vst.msk [vmem:[%s305 + $0x40] sm:$0xff] %vm435, %v8780
      %8817 = vst.msk [vmem:[%s305 + $0x48] sm:$0xff] %vm435, %v8781
      %8818 = vst.msk [vmem:[%s305 + $0x50] sm:$0xff] %vm435, %v8782
      %8819 = vst.msk [vmem:[%s305 + $0x58] sm:$0xff] %vm435, %v8783
      %8820 = vst.msk [vmem:[%s305 + $0x60] sm:$0xff] %vm435, %v8784
      %8821 = vst.msk [vmem:[%s305 + $0x68] sm:$0xff] %vm435, %v8785
      %8822 = vst.msk [vmem:[%s305 + $0x70] sm:$0xff] %vm435, %v8786
      %8823 = vst.msk [vmem:[%s305 + $0x78] sm:$0xff] %vm435, %v8787
      %8824 = vst.msk [vmem:[%s305 + $0x80] sm:$0xff] %vm435, %v8788
      %8825 = vst.msk [vmem:[%s305 + $0x88] sm:$0xff] %vm435, %v8789
      %8826 = vst.msk [vmem:[%s305 + $0x90] sm:$0xff] %vm435, %v8790
      %8827 = vst.msk [vmem:[%s305 + $0x98] sm:$0xff] %vm435, %v8791
      %8828 = vst.msk [vmem:[%s305 + $0xa0] sm:$0xff] %vm435, %v8792
      %8829 = vst.msk [vmem:[%s305 + $0xa8] sm:$0xff] %vm435, %v8793
      %8830 = vst.msk [vmem:[%s305 + $0xb0] sm:$0xff] %vm435, %v8794
      %8831 = vst.msk [vmem:[%s305 + $0xb8] sm:$0xff] %vm435, %v8795
      %8832 = vst.msk [vmem:[%s305 + $0xc0] sm:$0xff] %vm435, %v8796
      %8833 = vst.msk [vmem:[%s305 + $0xc8] sm:$0xff] %vm435, %v8797
      %8834 = vst.msk [vmem:[%s305 + $0xd0] sm:$0xff] %vm435, %v8798
      %8835 = vst.msk [vmem:[%s305 + $0xd8] sm:$0xff] %vm435, %v8799
      %8836 = vst.msk [vmem:[%s305 + $0xe0] sm:$0xff] %vm435, %v8800
      %8837 = vst.msk [vmem:[%s305 + $0xe8] sm:$0xff] %vm435, %v8801
      %8838 = vst.msk [vmem:[%s305 + $0xf0] sm:$0xff] %vm435, %v8802
      %8839 = vst.msk [vmem:[%s305 + $0xf8] sm:$0xff] %vm435, %v8803
      %8840 = vst.msk [vmem:[%s305 + $0x100] sm:$0xff] %vm435, %v8804
      %8841 = vst.msk [vmem:[%s305 + $0x108] sm:$0xff] %vm435, %v8805
      %8842 = vst.msk [vmem:[%s305 + $0x110] sm:$0xff] %vm435, %v8806
      %8843 = vst.msk [vmem:[%s305 + $0x118] sm:$0xff] %vm435, %v8807
      %p8844 = scmp.lt.s32.totalorder %s19, 1
      %s8845 = scalar_select %p8844, %s19, 1
      %s8846 = smul.addr %s8845, 36
      %s8847 = smul.addr %s8846, 8
      %s8848 = scalar_lea.vmem %s8, %s8847
      // Predicated region
      $region53: #{tpu_custom_call.1} parent=51 // pred_check
        %p8849 = pneg %p210
      $region54: #{tpu_custom_call.1} parent=51 // pred_check_branch
        %8851 = sbr.rel (%p8849) target = $region56
      $region55: #{tpu_custom_call.1} parent=51 // pred_region
        _
      $region56: #{tpu_custom_call.1} parent=51 // pred_fallthru
        _
    $region52: #{tpu_custom_call.1} parent=5 // pred_fallthru
      _
    %p8852 = scmp.le.s32.totalorder 2, %s14
    // Predicated region
    $region57: #{tpu_custom_call.1} parent=5 // pred_check
      %p8853 = pneg %p8852
    $region58: #{tpu_custom_call.1} parent=5 // pred_check_branch
      %8855 = sbr.rel (%p8853) target = $region60
    $region59: #{tpu_custom_call.1} parent=5 // pred_region
      %s8856 = ssub.s32 %s14, 2
      // Predicated region
      $region61: #{tpu_custom_call.1} parent=59 // pred_check
        %p8857 = pneg %p216
      $region62: #{tpu_custom_call.1} parent=59 // pred_check_branch
        %8859 = sbr.rel (%p8857) target = $region64
      $region63: #{tpu_custom_call.1} parent=59 // pred_region
        %p8860 = scmp.lt.s32.totalorder %s20, 1
        %s8861 = scalar_select %p8860, %s20, 1
        %s8862 = smul.addr %s8861, 36
        %s8863 = smul.addr %s8862, 8
        %s8864 = scalar_lea.vmem %s8, %s8863
      $region64: #{tpu_custom_call.1} parent=59 // pred_fallthru
        _
    $region60: #{tpu_custom_call.1} parent=5 // pred_fallthru
      _
  $region6: #{tpu_custom_call.1} parent=0 // loop_footer
    %s18 = sadd.s32 1, %s14
  $region7: #{tpu_custom_call.1} parent=0 // loop_footer_branch
    %13 = sbr.rel target = $region3
  $region8: #{tpu_custom_call.1} parent=0 // loop_exit
    _

</llo_original>
